<compile_context>
chip_gen: v5e
topology: v5e:2x2
jax: 0.10.0
libtpu: 0.0.40
codegen_flags: <defaults>
</compile_context>

<pallas_src>
import jax
import jax.numpy as jnp
from jax.experimental import pallas as pl
from jax.experimental.pallas import tpu as pltpu

LANE = 128  # padded lane width for all activation slabs


# ----------------------------------------------------------------------------
# The single fused kernel
# ----------------------------------------------------------------------------
def _resgroup_kernel(x_ref, mf_ref, bf_ref, mh_ref, bh_ref, m1_ref, b1_ref,
                     rsel_ref, rsc_ref, maskf_ref, maskh_ref, o_ref):
    f32, bf16 = jnp.float32, jnp.bfloat16

    maskf = maskf_ref[...]          # (Rf, 128)  1 on valid pixels, 0 on halo/pad
    maskh = maskh_ref[...]          # (Rh, 128)

    def conv3(A, w_stacked, bias, mask, act=False, residual=None):
        """3x3 conv on a (rows, 128) padded-grid slab as ONE MXU contraction.

        Row taps come from pltpu.roll; halo rows of A are exactly zero, so rows
        that wrap across image boundaries contribute nothing."""
        R = A.shape[0]
        taps = jnp.concatenate(
            [pltpu.roll(A, 1, axis=0),        # input row r-1  (kernel row 0)
             A,                               # input row r    (kernel row 1)
             pltpu.roll(A, R - 1, axis=0)],   # input row r+1  (kernel row 2)
            axis=1).astype(bf16)              # (R, 3*128), lane-aligned blocks
        acc = jnp.dot(taps, w_stacked, preferred_element_type=f32) + bias
        if act:
            acc = jnp.maximum(acc, 0.0)
        if mask is not None:
            acc = acc * mask                  # halo/pad -> 0 (= padding for next conv)
        if residual is not None:
            acc = acc + residual              # res_scale = 1
        return acc

    def conv_full(A, i, act=False, residual=None, masked=True):
        return conv3(A, mf_ref[i], bf_ref[i], maskf if masked else None,
                     act, residual)

    def conv_half(A, i, act=False, residual=None, masked=True):
        return conv3(A, mh_ref[i], bh_ref[i], maskh if masked else None,
                     act, residual)

    def rb_full(A, i):
        return conv_full(conv_full(A, i, act=True), i + 1, residual=A)

    def rb_half(A, i):
        return conv_half(conv_half(A, i, act=True), i + 1, residual=A)

    x0 = x_ref[0]                                    # (Rf, 128) this grid step

    # ---------------- ResAttModuleDownUpPlus ----------------
    ra1 = rb_full(x0, 0)                             # RA_RB1
    tx = rb_full(rb_full(ra1, 2), 4)                 # RA_TB: trunk, 2 ResBlocks

    # mask branch: MaskBranchDownUp
    xrb1 = rb_full(ra1, 6)                           # MB_RB1
    # MB_Down: stride-2 conv == stride-1 conv with CSEL (column select) folded
    # into the weights, then a small bf16 row-select matmul.  Halo rows of the
    # unmasked output are discarded by RSEL; halo columns are zero via the fold.
    dsel = conv_full(xrb1, 8, masked=False)          # (Rf, 128) half-res lanes
    h = jnp.dot(rsel_ref[...], dsel.astype(bf16), preferred_element_type=f32)
    h = rb_half(rb_half(h, 0), 2)                    # MB_RB2 (half resolution)

    # MB_Up: ConvTranspose2d(6, stride=2, pad=2) as 4 sub-pixel 3x3 phase convs;
    # the column scatter (CSC) is folded into the phase weights, only the small
    # bf16 row-scatter matmul remains.
    up = jnp.zeros_like(x0)
    for p in range(4):
        py = p // 2
        ph = conv_half(h, 4 + p, masked=False)       # (Rh, 128) full-res lanes
        up = up + jnp.dot(rsc_ref[py], ph.astype(bf16),
                          preferred_element_type=f32)
    x_pre = up + xrb1                                # up-sampled + skip (x_RB1)

    xrb3 = rb_full(x_pre, 9)                         # MB_RB3
    mx = jnp.dot(xrb3.astype(bf16), m1_ref[...],
                 preferred_element_type=f32) + b1_ref[...]
    mx = pl.reciprocal(1.0 + jnp.exp(-mx), approx=True) * maskf   # MB_1x1 + Sigmoid

    hx = tx * mx + ra1                               # trunk * mask + skip
    hx = rb_full(rb_full(hx, 11), 13)                # RA_tail: 2 ResBlocks

    o_ref[0] = conv_full(hx, 15)                     # trailing conv of _ResGroup


# ----------------------------------------------------------------------------
# One-time weight preparation (plain JAX, outside the hot path)
# ----------------------------------------------------------------------------
def _band_mats(w_oihw, width):
    """Fold kernel-column taps + channel contraction of a kxk conv into k banded
    matrices of shape (width*Cin, width*Cout) (one per kernel row)."""
    cout, cin, k, _ = w_oihw.shape
    pad = k // 2
    d = jnp.arange(k).reshape(k, 1, 1)
    p = jnp.arange(width).reshape(1, width, 1)
    q = jnp.arange(width).reshape(1, 1, width)
    sel = (p == q - pad + d).astype(jnp.float32)                 # (k, W, W)
    m = jnp.einsum("dpq,ocyd->ypcqo", sel, w_oihw.astype(jnp.float32))
    return m.reshape(k, width * cin, width * cout)


def _stack3(mats):
    """(3, Lin, Lout) banded matrices -> one (3*LANE, LANE) zero-padded matrix
    matching the lane-concatenated [row-1 | row | row+1] tap layout."""
    _, lin, lout = mats.shape
    out = jnp.zeros((3 * LANE, LANE), jnp.float32)
    for dd in range(3):
        out = out.at[dd * LANE:dd * LANE + lin, :lout].set(mats[dd])
    return out


def _bias_row(b, width):
    return jnp.tile(b, width)[None, :].astype(jnp.float32)


def _pad_lanes(row2d):
    return jnp.pad(row2d, ((0, 0), (0, LANE - row2d.shape[1])))


def _convT_phase_weights(wt):
    """Sub-pixel decomposition of ConvTranspose2d(k=6, stride=2, pad=2) into 4
    effective 3x3 conv weights (OIHW), phase order (py,px)=(0,0),(0,1),(1,0),(1,1)."""
    phases = []
    for py in (0, 1):
        for px in (0, 1):
            ky = 4 - 2 * jnp.arange(3) + py
            kx = 4 - 2 * jnp.arange(3) + px
            w = wt[:, :, ky[:, None], kx[None, :]]         # (Cin, Cout, 3, 3)
            phases.append(jnp.transpose(w, (1, 0, 2, 3)))  # -> (Cout, Cin, 3, 3)
    return phases


def prepare_packed(params, C, H, W, images_per_step=1):
    assert H % 2 == 0 and W % 2 == 0, "RNAN down/up path assumes even H, W"
    B = images_per_step
    Hp, Wp = H + 2, W + 2
    H2, W2 = H // 2, W // 2
    Hp2, Wp2 = H2 + 2, W2 + 2
    Lf, Lh = Wp * C, Wp2 * C
    Rf, Rh = B * Hp, B * Hp2
    bf16 = jnp.bfloat16
    # TODO(synk): for real RNAN sizes (n_feats~64) Lf/Lh exceed one 128-lane
    # block and the folded weights grow quadratically; stream per-layer weight
    # tiles over an extra grid axis instead of keeping them all VMEM-resident.
    assert Lf <= LANE and Lh <= LANE, "slab width must fit one 128-lane block"

    # ---- constant 0/1 column select (stride-2 down) / scatter (sub-pixel up) ----
    c = jnp.arange(C)
    xo = jnp.arange(1, Wp2 - 1)
    csel = jnp.zeros((Lf, Lh), jnp.float32)
    csel = csel.at[((2 * xo - 1)[:, None] * C + c).ravel(),
                   (xo[:, None] * C + c).ravel()].set(1.0)

    bb = jnp.arange(W2)
    csc = jnp.zeros((2, Lh, Lf), jnp.float32)
    for px in (0, 1):
        csc = csc.at[px,
                     ((1 + bb)[:, None] * C + c).ravel(),
                     ((1 + 2 * bb + px)[:, None] * C + c).ravel()].set(1.0)

    # ---- full-resolution conv layers (3-tap stacked, lane-padded) ----
    full_w, full_b = [], []

    def add_full(w, b, fold=None):
        m = _band_mats(w, Wp)
        r = _bias_row(b, Wp)
        if fold is not None:                         # fold column select/scatter
            m = jnp.einsum("dio,oj->dij", m, fold)
            r = r @ fold
        full_w.append(_stack3(m))
        full_b.append(_pad_lanes(r))

    def add_rb_full(rb):
        add_full(*rb[0]); add_full(*rb[1])

    add_rb_full(params["RA_RB1"])                 # 0, 1
    for rb in params["RA_TB"]:                    # 2..5
        add_rb_full(rb)
    add_rb_full(params["MB_RB1"])                 # 6, 7
    add_full(*params["MB_Down"], fold=csel)       # 8  (stride-2 column select folded)
    add_rb_full(params["MB_RB3"])                 # 9, 10
    for rb in params["RA_tail"]:                  # 11..14
        add_rb_full(rb)
    add_full(*params["final"])                    # 15

    # ---- half-resolution conv layers ----
    half_w, half_b = [], []

    def add_half(w, b, fold=None):
        m = _band_mats(w, Wp2)
        r = _bias_row(b, Wp2)
        if fold is not None:
            m = jnp.einsum("dio,oj->dij", m, fold)
            r = r @ fold
        half_w.append(_stack3(m))
        half_b.append(_pad_lanes(r))

    for rb in params["MB_RB2"]:                   # 0..3
        add_half(*rb[0]); add_half(*rb[1])
    wt, bt = params["MB_Up"]
    for p, wph in enumerate(_convT_phase_weights(wt)):   # 4..7 (ConvT phases)
        add_half(wph, bt, fold=csc[p % 2])        # sub-pixel column scatter folded

    # ---- 1x1 conv ----
    w1, b1 = params["MB_1x1"]
    m1 = jnp.zeros((LANE, LANE), jnp.float32).at[:Lf, :Lf].set(_band_mats(w1, Wp)[0])
    bias1 = _pad_lanes(_bias_row(b1, Wp))

    # ---- block-diagonal row select / scatter for the per-step image batch ----
    rsel = jnp.zeros((Rh, Rf), jnp.float32)
    yo = jnp.arange(1, Hp2 - 1)
    for b in range(B):
        rsel = rsel.at[b * Hp2 + yo, b * Hp + 2 * yo - 1].set(1.0)

    a = jnp.arange(H2)
    rsc = jnp.zeros((2, Rf, Rh), jnp.float32)
    for py in (0, 1):
        for b in range(B):
            rsc = rsc.at[py, b * Hp + 1 + 2 * a + py, b * Hp2 + 1 + a].set(1.0)

    # ---- valid-pixel masks (rows + columns + lane padding), tiled per batch ----
    maskf = _pad_lanes(jnp.pad(jnp.ones((H, W, C), jnp.float32),
                               ((1, 1), (1, 1), (0, 0))).reshape(Hp, Lf))
    maskh = _pad_lanes(jnp.pad(jnp.ones((H2, W2, C), jnp.float32),
                               ((1, 1), (1, 1), (0, 0))).reshape(Hp2, Lh))

    return {
        "MF": jnp.stack(full_w).astype(bf16),     # (16, 3*128, 128)
        "BF": jnp.stack(full_b),                  # (16, 1, 128)
        "MH": jnp.stack(half_w).astype(bf16),     # (8, 3*128, 128)
        "BH": jnp.stack(half_b),                  # (8, 1, 128)
        "M1": m1.astype(bf16),                    # (128, 128)
        "B1": bias1,                              # (1, 128)
        "RSEL": rsel.astype(bf16),                # (Rh, Rf)
        "RSC": rsc.astype(bf16),                  # (2, Rf, Rh)
        "MASKF": jnp.tile(maskf, (B, 1)),         # (Rf, 128)
        "MASKH": jnp.tile(maskh, (B, 1)),         # (Rh, 128)
    }


# ----------------------------------------------------------------------------
# Forward wrapper (one pallas_call for the whole group)
# ----------------------------------------------------------------------------
def resgroup_forward(x_nchw, packed):
    N, C, H, W = x_nchw.shape
    Hp, Wp = H + 2, W + 2
    Lf = Wp * C
    Rf = packed["MASKF"].shape[0]
    B = Rf // Hp                                   # images per grid step (static)
    assert N % B == 0, "batch must be a multiple of images_per_step"
    G = N // B

    x = jnp.transpose(x_nchw, (0, 2, 3, 1))
    x = jnp.pad(x, ((0, 0), (1, 1), (1, 1), (0, 0))).reshape(N, Hp, Lf)
    x = jnp.pad(x, ((0, 0), (0, 0), (0, LANE - Lf)))      # lane-pad to 128
    x_rep = x.reshape(G, Rf, LANE)                        # stacked-image slab

    def vconst():
        # whole-array, VMEM-resident constant: no double-buffering / pipelining
        return pl.BlockSpec(memory_space=pltpu.MemorySpace.VMEM)

    out_rep = pl.pallas_call(
        _resgroup_kernel,
        out_shape=jax.ShapeDtypeStruct((G, Rf, LANE), jnp.float32),
        grid=(G,),
        in_specs=[pl.BlockSpec((1, Rf, LANE), lambda g: (g, 0, 0))]
                 + [vconst() for _ in range(10)],
        out_specs=pl.BlockSpec((1, Rf, LANE), lambda g: (g, 0, 0)),
        compiler_params=pltpu.CompilerParams(dimension_semantics=("parallel",)),
    )(x_rep, packed["MF"], packed["BF"], packed["MH"], packed["BH"],
      packed["M1"], packed["B1"], packed["RSEL"], packed["RSC"],
      packed["MASKF"], packed["MASKH"])

    out = out_rep.reshape(N, Hp, LANE)[:, 1:H + 1, :Lf]
    out = out.reshape(N, H, Wp, C)[:, :, 1:W + 1, :]
    return jnp.transpose(out, (0, 3, 1, 2))


# ----------------------------------------------------------------------------
# Deterministic parameter init (PyTorch-native layouts)
# ----------------------------------------------------------------------------
def _conv_params(key, cin, cout, k):
    kw, kb = jax.random.split(key)
    fan_in = cin * k * k
    w = jax.random.normal(kw, (cout, cin, k, k), jnp.float32) / jnp.sqrt(float(fan_in))
    b = 0.01 * jax.random.normal(kb, (cout,), jnp.float32)
    return w, b


def _convT_params(key, cin, cout, k):
    kw, kb = jax.random.split(key)
    fan_in = cin * k * k
    w = jax.random.normal(kw, (cin, cout, k, k), jnp.float32) / jnp.sqrt(float(fan_in))
    b = 0.01 * jax.random.normal(kb, (cout,), jnp.float32)
    return w, b


def init_resgroup_params(key, C):
    keys = iter(jax.random.split(key, 32))
    rb = lambda: [_conv_params(next(keys), C, C, 3), _conv_params(next(keys), C, C, 3)]
    return {
        "RA_RB1": rb(),
        "RA_TB": [rb() for _ in range(2)],
        "MB_RB1": rb(),
        "MB_Down": _conv_params(next(keys), C, C, 3),
        "MB_RB2": [rb() for _ in range(2)],
        "MB_Up": _convT_params(next(keys), C, C, 6),
        "MB_RB3": rb(),
        "MB_1x1": _conv_params(next(keys), C, C, 1),
        "RA_tail": [rb() for _ in range(2)],
        "final": _conv_params(next(keys), C, C, 3),
    }


# ----------------------------------------------------------------------------
if __name__ == "__main__":
    key = jax.random.PRNGKey(0)
    k_x, k_p = jax.random.split(key)

    N, C, H, W = 2, 4, 16, 16                     # n_feats = 4
    x_nchw = jax.random.normal(k_x, (N, C, H, W), jnp.float32)
    params = init_resgroup_params(k_p, C)
    # images_per_step=N -> grid=(1,) (best for v5e/v6e single TC).
    # On v7x set images_per_step=N//2 to keep both TensorCores busy.
    packed = prepare_packed(params, C, H, W, images_per_step=N)

    fwd = jax.jit(resgroup_forward)
    out = fwd(x_nchw, packed)
    jax.block_until_ready(out)

    assert out.shape == (N, C, H, W), out.shape
    assert bool(jnp.all(jnp.isfinite(out)))
    print("KERNEL_OK")
</pallas_src>

<mosaic_0001>
module attributes {stable_mosaic.version = 11 : i64} {
  func.func @_resgroup_kernel(%arg0: i32, %arg1: memref<1x36x128xf32, #tpu.memory_space<vmem>>, %arg2: memref<16x384x128xbf16, #tpu.memory_space<vmem>>, %arg3: memref<16x1x128xf32, #tpu.memory_space<vmem>>, %arg4: memref<8x384x128xbf16, #tpu.memory_space<vmem>>, %arg5: memref<8x1x128xf32, #tpu.memory_space<vmem>>, %arg6: memref<128x128xbf16, #tpu.memory_space<vmem>>, %arg7: memref<1x128xf32, #tpu.memory_space<vmem>>, %arg8: memref<20x36xbf16, #tpu.memory_space<vmem>>, %arg9: memref<2x36x20xbf16, #tpu.memory_space<vmem>>, %arg10: memref<36x128xf32, #tpu.memory_space<vmem>>, %arg11: memref<20x128xf32, #tpu.memory_space<vmem>>, %arg12: memref<1x36x128xf32, #tpu.memory_space<vmem>>) attributes {dimension_semantics = [#tpu.dimension_semantics<parallel>], iteration_bounds = array<i64: 1>, scalar_prefetch = 0 : i64, scratch_operands = 0 : i64, tpu.core_type = #tpu.core_type<tc>, window_params = [{transform_indices = @transform_0, window_bounds = array<i64: 1, 36, 128>}, {pipeline_mode = #tpu.pipeline_mode<synchronous>, transform_indices = @transform_1, window_bounds = array<i64: 16, 384, 128>}, {pipeline_mode = #tpu.pipeline_mode<synchronous>, transform_indices = @transform_2, window_bounds = array<i64: 16, 1, 128>}, {pipeline_mode = #tpu.pipeline_mode<synchronous>, transform_indices = @transform_3, window_bounds = array<i64: 8, 384, 128>}, {pipeline_mode = #tpu.pipeline_mode<synchronous>, transform_indices = @transform_4, window_bounds = array<i64: 8, 1, 128>}, {pipeline_mode = #tpu.pipeline_mode<synchronous>, transform_indices = @transform_5, window_bounds = array<i64: 128, 128>}, {pipeline_mode = #tpu.pipeline_mode<synchronous>, transform_indices = @transform_6, window_bounds = array<i64: 1, 128>}, {pipeline_mode = #tpu.pipeline_mode<synchronous>, transform_indices = @transform_7, window_bounds = array<i64: 20, 36>}, {pipeline_mode = #tpu.pipeline_mode<synchronous>, transform_indices = @transform_8, window_bounds = array<i64: 2, 36, 20>}, {pipeline_mode = #tpu.pipeline_mode<synchronous>, transform_indices = @transform_9, window_bounds = array<i64: 36, 128>}, {pipeline_mode = #tpu.pipeline_mode<synchronous>, transform_indices = @transform_10, window_bounds = array<i64: 20, 128>}, {transform_indices = @transform_11, window_bounds = array<i64: 1, 36, 128>}]} {
    %c0 = arith.constant 0 : index
    %c0_0 = arith.constant 0 : index
    %0 = vector.load %arg10[%c0, %c0_0] : memref<36x128xf32, #tpu.memory_space<vmem>>, vector<36x128xf32>
    %c0_1 = arith.constant 0 : index
    %c0_2 = arith.constant 0 : index
    %1 = vector.load %arg11[%c0_1, %c0_2] : memref<20x128xf32, #tpu.memory_space<vmem>>, vector<20x128xf32>
    %c0_3 = arith.constant 0 : index
    %c0_4 = arith.constant 0 : index
    %c0_5 = arith.constant 0 : index
    %2 = vector.load %arg1[%c0_3, %c0_4, %c0_5] : memref<1x36x128xf32, #tpu.memory_space<vmem>>, vector<1x36x128xf32>
    %3 = vector.shape_cast %2 : vector<1x36x128xf32> to vector<36x128xf32>
    %c0_6 = arith.constant 0 : index
    %c0_7 = arith.constant 0 : index
    %c0_8 = arith.constant 0 : index
    %4 = vector.load %arg2[%c0_6, %c0_7, %c0_8] : memref<16x384x128xbf16, #tpu.memory_space<vmem>>, vector<1x384x128xbf16>
    %5 = vector.shape_cast %4 : vector<1x384x128xbf16> to vector<384x128xbf16>
    %c0_9 = arith.constant 0 : index
    %c0_10 = arith.constant 0 : index
    %c0_11 = arith.constant 0 : index
    %6 = vector.load %arg3[%c0_9, %c0_10, %c0_11] : memref<16x1x128xf32, #tpu.memory_space<vmem>>, vector<1x1x128xf32>
    %7 = vector.shape_cast %6 : vector<1x1x128xf32> to vector<1x128xf32>
    %c1_i32 = arith.constant 1 : i32
    %8 = tpu.dynamic_rotate %3 by %c1_i32 dim 0 : vector<36x128xf32>, i32 -> vector<36x128xf32>
    %c35_i32 = arith.constant 35 : i32
    %9 = tpu.dynamic_rotate %3 by %c35_i32 dim 0 : vector<36x128xf32>, i32 -> vector<36x128xf32>
    %10 = tpu.concatenate %8, %3, %9 in 1 : vector<36x128xf32>, vector<36x128xf32>, vector<36x128xf32> -> vector<36x384xf32>
    %11 = arith.truncf %10 : vector<36x384xf32> to vector<36x384xbf16>
    %cst = arith.constant dense<0.000000e+00> : vector<36x128xf32>
    %12 = tpu.matmul %11, %5, %cst {dimension_numbers = #tpu.dot_dimension_numbers<[1], [0], [0], [1], [0, 0, 1, 1], [], []>} : vector<36x384xbf16>, vector<384x128xbf16>, vector<36x128xf32> -> vector<36x128xf32>
    %13 = vector.broadcast %7 : vector<1x128xf32> to vector<36x128xf32>
    %14 = arith.addf %12, %13 : vector<36x128xf32>
    %cst_12 = arith.constant 0.000000e+00 : f32
    %15 = vector.broadcast %cst_12 : f32 to vector<36x128xf32>
    %16 = arith.maximumf %14, %15 : vector<36x128xf32>
    %17 = arith.mulf %16, %0 : vector<36x128xf32>
    %c1 = arith.constant 1 : index
    %c0_13 = arith.constant 0 : index
    %c0_14 = arith.constant 0 : index
    %18 = vector.load %arg2[%c1, %c0_13, %c0_14] : memref<16x384x128xbf16, #tpu.memory_space<vmem>>, vector<1x384x128xbf16>
    %19 = vector.shape_cast %18 : vector<1x384x128xbf16> to vector<384x128xbf16>
    %c1_15 = arith.constant 1 : index
    %c0_16 = arith.constant 0 : index
    %c0_17 = arith.constant 0 : index
    %20 = vector.load %arg3[%c1_15, %c0_16, %c0_17] : memref<16x1x128xf32, #tpu.memory_space<vmem>>, vector<1x1x128xf32>
    %21 = vector.shape_cast %20 : vector<1x1x128xf32> to vector<1x128xf32>
    %c1_i32_18 = arith.constant 1 : i32
    %22 = tpu.dynamic_rotate %17 by %c1_i32_18 dim 0 : vector<36x128xf32>, i32 -> vector<36x128xf32>
    %c35_i32_19 = arith.constant 35 : i32
    %23 = tpu.dynamic_rotate %17 by %c35_i32_19 dim 0 : vector<36x128xf32>, i32 -> vector<36x128xf32>
    %24 = tpu.concatenate %22, %17, %23 in 1 : vector<36x128xf32>, vector<36x128xf32>, vector<36x128xf32> -> vector<36x384xf32>
    %25 = arith.truncf %24 : vector<36x384xf32> to vector<36x384xbf16>
    %cst_20 = arith.constant dense<0.000000e+00> : vector<36x128xf32>
    %26 = tpu.matmul %25, %19, %cst_20 {dimension_numbers = #tpu.dot_dimension_numbers<[1], [0], [0], [1], [0, 0, 1, 1], [], []>} : vector<36x384xbf16>, vector<384x128xbf16>, vector<36x128xf32> -> vector<36x128xf32>
    %27 = vector.broadcast %21 : vector<1x128xf32> to vector<36x128xf32>
    %28 = arith.addf %26, %27 : vector<36x128xf32>
    %29 = arith.mulf %28, %0 : vector<36x128xf32>
    %30 = arith.addf %29, %3 : vector<36x128xf32>
    %c2 = arith.constant 2 : index
    %c0_21 = arith.constant 0 : index
    %c0_22 = arith.constant 0 : index
    %31 = vector.load %arg2[%c2, %c0_21, %c0_22] : memref<16x384x128xbf16, #tpu.memory_space<vmem>>, vector<1x384x128xbf16>
    %32 = vector.shape_cast %31 : vector<1x384x128xbf16> to vector<384x128xbf16>
    %c2_23 = arith.constant 2 : index
    %c0_24 = arith.constant 0 : index
    %c0_25 = arith.constant 0 : index
    %33 = vector.load %arg3[%c2_23, %c0_24, %c0_25] : memref<16x1x128xf32, #tpu.memory_space<vmem>>, vector<1x1x128xf32>
    %34 = vector.shape_cast %33 : vector<1x1x128xf32> to vector<1x128xf32>
    %c1_i32_26 = arith.constant 1 : i32
    %35 = tpu.dynamic_rotate %30 by %c1_i32_26 dim 0 : vector<36x128xf32>, i32 -> vector<36x128xf32>
    %c35_i32_27 = arith.constant 35 : i32
    %36 = tpu.dynamic_rotate %30 by %c35_i32_27 dim 0 : vector<36x128xf32>, i32 -> vector<36x128xf32>
    %37 = tpu.concatenate %35, %30, %36 in 1 : vector<36x128xf32>, vector<36x128xf32>, vector<36x128xf32> -> vector<36x384xf32>
    %38 = arith.truncf %37 : vector<36x384xf32> to vector<36x384xbf16>
    %cst_28 = arith.constant dense<0.000000e+00> : vector<36x128xf32>
    %39 = tpu.matmul %38, %32, %cst_28 {dimension_numbers = #tpu.dot_dimension_numbers<[1], [0], [0], [1], [0, 0, 1, 1], [], []>} : vector<36x384xbf16>, vector<384x128xbf16>, vector<36x128xf32> -> vector<36x128xf32>
    %40 = vector.broadcast %34 : vector<1x128xf32> to vector<36x128xf32>
    %41 = arith.addf %39, %40 : vector<36x128xf32>
    %cst_29 = arith.constant 0.000000e+00 : f32
    %42 = vector.broadcast %cst_29 : f32 to vector<36x128xf32>
    %43 = arith.maximumf %41, %42 : vector<36x128xf32>
    %44 = arith.mulf %43, %0 : vector<36x128xf32>
    %c3 = arith.constant 3 : index
    %c0_30 = arith.constant 0 : index
    %c0_31 = arith.constant 0 : index
    %45 = vector.load %arg2[%c3, %c0_30, %c0_31] : memref<16x384x128xbf16, #tpu.memory_space<vmem>>, vector<1x384x128xbf16>
    %46 = vector.shape_cast %45 : vector<1x384x128xbf16> to vector<384x128xbf16>
    %c3_32 = arith.constant 3 : index
    %c0_33 = arith.constant 0 : index
    %c0_34 = arith.constant 0 : index
    %47 = vector.load %arg3[%c3_32, %c0_33, %c0_34] : memref<16x1x128xf32, #tpu.memory_space<vmem>>, vector<1x1x128xf32>
    %48 = vector.shape_cast %47 : vector<1x1x128xf32> to vector<1x128xf32>
    %c1_i32_35 = arith.constant 1 : i32
    %49 = tpu.dynamic_rotate %44 by %c1_i32_35 dim 0 : vector<36x128xf32>, i32 -> vector<36x128xf32>
    %c35_i32_36 = arith.constant 35 : i32
    %50 = tpu.dynamic_rotate %44 by %c35_i32_36 dim 0 : vector<36x128xf32>, i32 -> vector<36x128xf32>
    %51 = tpu.concatenate %49, %44, %50 in 1 : vector<36x128xf32>, vector<36x128xf32>, vector<36x128xf32> -> vector<36x384xf32>
    %52 = arith.truncf %51 : vector<36x384xf32> to vector<36x384xbf16>
    %cst_37 = arith.constant dense<0.000000e+00> : vector<36x128xf32>
    %53 = tpu.matmul %52, %46, %cst_37 {dimension_numbers = #tpu.dot_dimension_numbers<[1], [0], [0], [1], [0, 0, 1, 1], [], []>} : vector<36x384xbf16>, vector<384x128xbf16>, vector<36x128xf32> -> vector<36x128xf32>
    %54 = vector.broadcast %48 : vector<1x128xf32> to vector<36x128xf32>
    %55 = arith.addf %53, %54 : vector<36x128xf32>
    %56 = arith.mulf %55, %0 : vector<36x128xf32>
    %57 = arith.addf %56, %30 : vector<36x128xf32>
    %c4 = arith.constant 4 : index
    %c0_38 = arith.constant 0 : index
    %c0_39 = arith.constant 0 : index
    %58 = vector.load %arg2[%c4, %c0_38, %c0_39] : memref<16x384x128xbf16, #tpu.memory_space<vmem>>, vector<1x384x128xbf16>
    %59 = vector.shape_cast %58 : vector<1x384x128xbf16> to vector<384x128xbf16>
    %c4_40 = arith.constant 4 : index
    %c0_41 = arith.constant 0 : index
    %c0_42 = arith.constant 0 : index
    %60 = vector.load %arg3[%c4_40, %c0_41, %c0_42] : memref<16x1x128xf32, #tpu.memory_space<vmem>>, vector<1x1x128xf32>
    %61 = vector.shape_cast %60 : vector<1x1x128xf32> to vector<1x128xf32>
    %c1_i32_43 = arith.constant 1 : i32
    %62 = tpu.dynamic_rotate %57 by %c1_i32_43 dim 0 : vector<36x128xf32>, i32 -> vector<36x128xf32>
    %c35_i32_44 = arith.constant 35 : i32
    %63 = tpu.dynamic_rotate %57 by %c35_i32_44 dim 0 : vector<36x128xf32>, i32 -> vector<36x128xf32>
    %64 = tpu.concatenate %62, %57, %63 in 1 : vector<36x128xf32>, vector<36x128xf32>, vector<36x128xf32> -> vector<36x384xf32>
    %65 = arith.truncf %64 : vector<36x384xf32> to vector<36x384xbf16>
    %cst_45 = arith.constant dense<0.000000e+00> : vector<36x128xf32>
    %66 = tpu.matmul %65, %59, %cst_45 {dimension_numbers = #tpu.dot_dimension_numbers<[1], [0], [0], [1], [0, 0, 1, 1], [], []>} : vector<36x384xbf16>, vector<384x128xbf16>, vector<36x128xf32> -> vector<36x128xf32>
    %67 = vector.broadcast %61 : vector<1x128xf32> to vector<36x128xf32>
    %68 = arith.addf %66, %67 : vector<36x128xf32>
    %cst_46 = arith.constant 0.000000e+00 : f32
    %69 = vector.broadcast %cst_46 : f32 to vector<36x128xf32>
    %70 = arith.maximumf %68, %69 : vector<36x128xf32>
    %71 = arith.mulf %70, %0 : vector<36x128xf32>
    %c5 = arith.constant 5 : index
    %c0_47 = arith.constant 0 : index
    %c0_48 = arith.constant 0 : index
    %72 = vector.load %arg2[%c5, %c0_47, %c0_48] : memref<16x384x128xbf16, #tpu.memory_space<vmem>>, vector<1x384x128xbf16>
    %73 = vector.shape_cast %72 : vector<1x384x128xbf16> to vector<384x128xbf16>
    %c5_49 = arith.constant 5 : index
    %c0_50 = arith.constant 0 : index
    %c0_51 = arith.constant 0 : index
    %74 = vector.load %arg3[%c5_49, %c0_50, %c0_51] : memref<16x1x128xf32, #tpu.memory_space<vmem>>, vector<1x1x128xf32>
    %75 = vector.shape_cast %74 : vector<1x1x128xf32> to vector<1x128xf32>
    %c1_i32_52 = arith.constant 1 : i32
    %76 = tpu.dynamic_rotate %71 by %c1_i32_52 dim 0 : vector<36x128xf32>, i32 -> vector<36x128xf32>
    %c35_i32_53 = arith.constant 35 : i32
    %77 = tpu.dynamic_rotate %71 by %c35_i32_53 dim 0 : vector<36x128xf32>, i32 -> vector<36x128xf32>
    %78 = tpu.concatenate %76, %71, %77 in 1 : vector<36x128xf32>, vector<36x128xf32>, vector<36x128xf32> -> vector<36x384xf32>
    %79 = arith.truncf %78 : vector<36x384xf32> to vector<36x384xbf16>
    %cst_54 = arith.constant dense<0.000000e+00> : vector<36x128xf32>
    %80 = tpu.matmul %79, %73, %cst_54 {dimension_numbers = #tpu.dot_dimension_numbers<[1], [0], [0], [1], [0, 0, 1, 1], [], []>} : vector<36x384xbf16>, vector<384x128xbf16>, vector<36x128xf32> -> vector<36x128xf32>
    %81 = vector.broadcast %75 : vector<1x128xf32> to vector<36x128xf32>
    %82 = arith.addf %80, %81 : vector<36x128xf32>
    %83 = arith.mulf %82, %0 : vector<36x128xf32>
    %84 = arith.addf %83, %57 : vector<36x128xf32>
    %c6 = arith.constant 6 : index
    %c0_55 = arith.constant 0 : index
    %c0_56 = arith.constant 0 : index
    %85 = vector.load %arg2[%c6, %c0_55, %c0_56] : memref<16x384x128xbf16, #tpu.memory_space<vmem>>, vector<1x384x128xbf16>
    %86 = vector.shape_cast %85 : vector<1x384x128xbf16> to vector<384x128xbf16>
    %c6_57 = arith.constant 6 : index
    %c0_58 = arith.constant 0 : index
    %c0_59 = arith.constant 0 : index
    %87 = vector.load %arg3[%c6_57, %c0_58, %c0_59] : memref<16x1x128xf32, #tpu.memory_space<vmem>>, vector<1x1x128xf32>
    %88 = vector.shape_cast %87 : vector<1x1x128xf32> to vector<1x128xf32>
    %c1_i32_60 = arith.constant 1 : i32
    %89 = tpu.dynamic_rotate %30 by %c1_i32_60 dim 0 : vector<36x128xf32>, i32 -> vector<36x128xf32>
    %c35_i32_61 = arith.constant 35 : i32
    %90 = tpu.dynamic_rotate %30 by %c35_i32_61 dim 0 : vector<36x128xf32>, i32 -> vector<36x128xf32>
    %91 = tpu.concatenate %89, %30, %90 in 1 : vector<36x128xf32>, vector<36x128xf32>, vector<36x128xf32> -> vector<36x384xf32>
    %92 = arith.truncf %91 : vector<36x384xf32> to vector<36x384xbf16>
    %cst_62 = arith.constant dense<0.000000e+00> : vector<36x128xf32>
    %93 = tpu.matmul %92, %86, %cst_62 {dimension_numbers = #tpu.dot_dimension_numbers<[1], [0], [0], [1], [0, 0, 1, 1], [], []>} : vector<36x384xbf16>, vector<384x128xbf16>, vector<36x128xf32> -> vector<36x128xf32>
    %94 = vector.broadcast %88 : vector<1x128xf32> to vector<36x128xf32>
    %95 = arith.addf %93, %94 : vector<36x128xf32>
    %cst_63 = arith.constant 0.000000e+00 : f32
    %96 = vector.broadcast %cst_63 : f32 to vector<36x128xf32>
    %97 = arith.maximumf %95, %96 : vector<36x128xf32>
    %98 = arith.mulf %97, %0 : vector<36x128xf32>
    %c7 = arith.constant 7 : index
    %c0_64 = arith.constant 0 : index
    %c0_65 = arith.constant 0 : index
    %99 = vector.load %arg2[%c7, %c0_64, %c0_65] : memref<16x384x128xbf16, #tpu.memory_space<vmem>>, vector<1x384x128xbf16>
    %100 = vector.shape_cast %99 : vector<1x384x128xbf16> to vector<384x128xbf16>
    %c7_66 = arith.constant 7 : index
    %c0_67 = arith.constant 0 : index
    %c0_68 = arith.constant 0 : index
    %101 = vector.load %arg3[%c7_66, %c0_67, %c0_68] : memref<16x1x128xf32, #tpu.memory_space<vmem>>, vector<1x1x128xf32>
    %102 = vector.shape_cast %101 : vector<1x1x128xf32> to vector<1x128xf32>
    %c1_i32_69 = arith.constant 1 : i32
    %103 = tpu.dynamic_rotate %98 by %c1_i32_69 dim 0 : vector<36x128xf32>, i32 -> vector<36x128xf32>
    %c35_i32_70 = arith.constant 35 : i32
    %104 = tpu.dynamic_rotate %98 by %c35_i32_70 dim 0 : vector<36x128xf32>, i32 -> vector<36x128xf32>
    %105 = tpu.concatenate %103, %98, %104 in 1 : vector<36x128xf32>, vector<36x128xf32>, vector<36x128xf32> -> vector<36x384xf32>
    %106 = arith.truncf %105 : vector<36x384xf32> to vector<36x384xbf16>
    %cst_71 = arith.constant dense<0.000000e+00> : vector<36x128xf32>
    %107 = tpu.matmul %106, %100, %cst_71 {dimension_numbers = #tpu.dot_dimension_numbers<[1], [0], [0], [1], [0, 0, 1, 1], [], []>} : vector<36x384xbf16>, vector<384x128xbf16>, vector<36x128xf32> -> vector<36x128xf32>
    %108 = vector.broadcast %102 : vector<1x128xf32> to vector<36x128xf32>
    %109 = arith.addf %107, %108 : vector<36x128xf32>
    %110 = arith.mulf %109, %0 : vector<36x128xf32>
    %111 = arith.addf %110, %30 : vector<36x128xf32>
    %c8 = arith.constant 8 : index
    %c0_72 = arith.constant 0 : index
    %c0_73 = arith.constant 0 : index
    %112 = vector.load %arg2[%c8, %c0_72, %c0_73] : memref<16x384x128xbf16, #tpu.memory_space<vmem>>, vector<1x384x128xbf16>
    %113 = vector.shape_cast %112 : vector<1x384x128xbf16> to vector<384x128xbf16>
    %c8_74 = arith.constant 8 : index
    %c0_75 = arith.constant 0 : index
    %c0_76 = arith.constant 0 : index
    %114 = vector.load %arg3[%c8_74, %c0_75, %c0_76] : memref<16x1x128xf32, #tpu.memory_space<vmem>>, vector<1x1x128xf32>
    %115 = vector.shape_cast %114 : vector<1x1x128xf32> to vector<1x128xf32>
    %c1_i32_77 = arith.constant 1 : i32
    %116 = tpu.dynamic_rotate %111 by %c1_i32_77 dim 0 : vector<36x128xf32>, i32 -> vector<36x128xf32>
    %c35_i32_78 = arith.constant 35 : i32
    %117 = tpu.dynamic_rotate %111 by %c35_i32_78 dim 0 : vector<36x128xf32>, i32 -> vector<36x128xf32>
    %118 = tpu.concatenate %116, %111, %117 in 1 : vector<36x128xf32>, vector<36x128xf32>, vector<36x128xf32> -> vector<36x384xf32>
    %119 = arith.truncf %118 : vector<36x384xf32> to vector<36x384xbf16>
    %cst_79 = arith.constant dense<0.000000e+00> : vector<36x128xf32>
    %120 = tpu.matmul %119, %113, %cst_79 {dimension_numbers = #tpu.dot_dimension_numbers<[1], [0], [0], [1], [0, 0, 1, 1], [], []>} : vector<36x384xbf16>, vector<384x128xbf16>, vector<36x128xf32> -> vector<36x128xf32>
    %121 = vector.broadcast %115 : vector<1x128xf32> to vector<36x128xf32>
    %122 = arith.addf %120, %121 : vector<36x128xf32>
    %c0_80 = arith.constant 0 : index
    %c0_81 = arith.constant 0 : index
    %123 = vector.load %arg8[%c0_80, %c0_81] : memref<20x36xbf16, #tpu.memory_space<vmem>>, vector<20x36xbf16>
    %124 = arith.truncf %122 : vector<36x128xf32> to vector<36x128xbf16>
    %cst_82 = arith.constant dense<0.000000e+00> : vector<20x128xf32>
    %125 = tpu.matmul %123, %124, %cst_82 {dimension_numbers = #tpu.dot_dimension_numbers<[1], [0], [0], [1], [0, 0, 1, 1], [], []>} : vector<20x36xbf16>, vector<36x128xbf16>, vector<20x128xf32> -> vector<20x128xf32>
    %c0_83 = arith.constant 0 : index
    %c0_84 = arith.constant 0 : index
    %c0_85 = arith.constant 0 : index
    %126 = vector.load %arg4[%c0_83, %c0_84, %c0_85] : memref<8x384x128xbf16, #tpu.memory_space<vmem>>, vector<1x384x128xbf16>
    %127 = vector.shape_cast %126 : vector<1x384x128xbf16> to vector<384x128xbf16>
    %c0_86 = arith.constant 0 : index
    %c0_87 = arith.constant 0 : index
    %c0_88 = arith.constant 0 : index
    %128 = vector.load %arg5[%c0_86, %c0_87, %c0_88] : memref<8x1x128xf32, #tpu.memory_space<vmem>>, vector<1x1x128xf32>
    %129 = vector.shape_cast %128 : vector<1x1x128xf32> to vector<1x128xf32>
    %c1_i32_89 = arith.constant 1 : i32
    %130 = tpu.dynamic_rotate %125 by %c1_i32_89 dim 0 : vector<20x128xf32>, i32 -> vector<20x128xf32>
    %c19_i32 = arith.constant 19 : i32
    %131 = tpu.dynamic_rotate %125 by %c19_i32 dim 0 : vector<20x128xf32>, i32 -> vector<20x128xf32>
    %132 = tpu.concatenate %130, %125, %131 in 1 : vector<20x128xf32>, vector<20x128xf32>, vector<20x128xf32> -> vector<20x384xf32>
    %133 = arith.truncf %132 : vector<20x384xf32> to vector<20x384xbf16>
    %cst_90 = arith.constant dense<0.000000e+00> : vector<20x128xf32>
    %134 = tpu.matmul %133, %127, %cst_90 {dimension_numbers = #tpu.dot_dimension_numbers<[1], [0], [0], [1], [0, 0, 1, 1], [], []>} : vector<20x384xbf16>, vector<384x128xbf16>, vector<20x128xf32> -> vector<20x128xf32>
    %135 = vector.broadcast %129 : vector<1x128xf32> to vector<20x128xf32>
    %136 = arith.addf %134, %135 : vector<20x128xf32>
    %cst_91 = arith.constant 0.000000e+00 : f32
    %137 = vector.broadcast %cst_91 : f32 to vector<20x128xf32>
    %138 = arith.maximumf %136, %137 : vector<20x128xf32>
    %139 = arith.mulf %138, %1 : vector<20x128xf32>
    %c1_92 = arith.constant 1 : index
    %c0_93 = arith.constant 0 : index
    %c0_94 = arith.constant 0 : index
    %140 = vector.load %arg4[%c1_92, %c0_93, %c0_94] : memref<8x384x128xbf16, #tpu.memory_space<vmem>>, vector<1x384x128xbf16>
    %141 = vector.shape_cast %140 : vector<1x384x128xbf16> to vector<384x128xbf16>
    %c1_95 = arith.constant 1 : index
    %c0_96 = arith.constant 0 : index
    %c0_97 = arith.constant 0 : index
    %142 = vector.load %arg5[%c1_95, %c0_96, %c0_97] : memref<8x1x128xf32, #tpu.memory_space<vmem>>, vector<1x1x128xf32>
    %143 = vector.shape_cast %142 : vector<1x1x128xf32> to vector<1x128xf32>
    %c1_i32_98 = arith.constant 1 : i32
    %144 = tpu.dynamic_rotate %139 by %c1_i32_98 dim 0 : vector<20x128xf32>, i32 -> vector<20x128xf32>
    %c19_i32_99 = arith.constant 19 : i32
    %145 = tpu.dynamic_rotate %139 by %c19_i32_99 dim 0 : vector<20x128xf32>, i32 -> vector<20x128xf32>
    %146 = tpu.concatenate %144, %139, %145 in 1 : vector<20x128xf32>, vector<20x128xf32>, vector<20x128xf32> -> vector<20x384xf32>
    %147 = arith.truncf %146 : vector<20x384xf32> to vector<20x384xbf16>
    %cst_100 = arith.constant dense<0.000000e+00> : vector<20x128xf32>
    %148 = tpu.matmul %147, %141, %cst_100 {dimension_numbers = #tpu.dot_dimension_numbers<[1], [0], [0], [1], [0, 0, 1, 1], [], []>} : vector<20x384xbf16>, vector<384x128xbf16>, vector<20x128xf32> -> vector<20x128xf32>
    %149 = vector.broadcast %143 : vector<1x128xf32> to vector<20x128xf32>
    %150 = arith.addf %148, %149 : vector<20x128xf32>
    %151 = arith.mulf %150, %1 : vector<20x128xf32>
    %152 = arith.addf %151, %125 : vector<20x128xf32>
    %c2_101 = arith.constant 2 : index
    %c0_102 = arith.constant 0 : index
    %c0_103 = arith.constant 0 : index
    %153 = vector.load %arg4[%c2_101, %c0_102, %c0_103] : memref<8x384x128xbf16, #tpu.memory_space<vmem>>, vector<1x384x128xbf16>
    %154 = vector.shape_cast %153 : vector<1x384x128xbf16> to vector<384x128xbf16>
    %c2_104 = arith.constant 2 : index
    %c0_105 = arith.constant 0 : index
    %c0_106 = arith.constant 0 : index
    %155 = vector.load %arg5[%c2_104, %c0_105, %c0_106] : memref<8x1x128xf32, #tpu.memory_space<vmem>>, vector<1x1x128xf32>
    %156 = vector.shape_cast %155 : vector<1x1x128xf32> to vector<1x128xf32>
    %c1_i32_107 = arith.constant 1 : i32
    %157 = tpu.dynamic_rotate %152 by %c1_i32_107 dim 0 : vector<20x128xf32>, i32 -> vector<20x128xf32>
    %c19_i32_108 = arith.constant 19 : i32
    %158 = tpu.dynamic_rotate %152 by %c19_i32_108 dim 0 : vector<20x128xf32>, i32 -> vector<20x128xf32>
    %159 = tpu.concatenate %157, %152, %158 in 1 : vector<20x128xf32>, vector<20x128xf32>, vector<20x128xf32> -> vector<20x384xf32>
    %160 = arith.truncf %159 : vector<20x384xf32> to vector<20x384xbf16>
    %cst_109 = arith.constant dense<0.000000e+00> : vector<20x128xf32>
    %161 = tpu.matmul %160, %154, %cst_109 {dimension_numbers = #tpu.dot_dimension_numbers<[1], [0], [0], [1], [0, 0, 1, 1], [], []>} : vector<20x384xbf16>, vector<384x128xbf16>, vector<20x128xf32> -> vector<20x128xf32>
    %162 = vector.broadcast %156 : vector<1x128xf32> to vector<20x128xf32>
    %163 = arith.addf %161, %162 : vector<20x128xf32>
    %cst_110 = arith.constant 0.000000e+00 : f32
    %164 = vector.broadcast %cst_110 : f32 to vector<20x128xf32>
    %165 = arith.maximumf %163, %164 : vector<20x128xf32>
    %166 = arith.mulf %165, %1 : vector<20x128xf32>
    %c3_111 = arith.constant 3 : index
    %c0_112 = arith.constant 0 : index
    %c0_113 = arith.constant 0 : index
    %167 = vector.load %arg4[%c3_111, %c0_112, %c0_113] : memref<8x384x128xbf16, #tpu.memory_space<vmem>>, vector<1x384x128xbf16>
    %168 = vector.shape_cast %167 : vector<1x384x128xbf16> to vector<384x128xbf16>
    %c3_114 = arith.constant 3 : index
    %c0_115 = arith.constant 0 : index
    %c0_116 = arith.constant 0 : index
    %169 = vector.load %arg5[%c3_114, %c0_115, %c0_116] : memref<8x1x128xf32, #tpu.memory_space<vmem>>, vector<1x1x128xf32>
    %170 = vector.shape_cast %169 : vector<1x1x128xf32> to vector<1x128xf32>
    %c1_i32_117 = arith.constant 1 : i32
    %171 = tpu.dynamic_rotate %166 by %c1_i32_117 dim 0 : vector<20x128xf32>, i32 -> vector<20x128xf32>
    %c19_i32_118 = arith.constant 19 : i32
    %172 = tpu.dynamic_rotate %166 by %c19_i32_118 dim 0 : vector<20x128xf32>, i32 -> vector<20x128xf32>
    %173 = tpu.concatenate %171, %166, %172 in 1 : vector<20x128xf32>, vector<20x128xf32>, vector<20x128xf32> -> vector<20x384xf32>
    %174 = arith.truncf %173 : vector<20x384xf32> to vector<20x384xbf16>
    %cst_119 = arith.constant dense<0.000000e+00> : vector<20x128xf32>
    %175 = tpu.matmul %174, %168, %cst_119 {dimension_numbers = #tpu.dot_dimension_numbers<[1], [0], [0], [1], [0, 0, 1, 1], [], []>} : vector<20x384xbf16>, vector<384x128xbf16>, vector<20x128xf32> -> vector<20x128xf32>
    %176 = vector.broadcast %170 : vector<1x128xf32> to vector<20x128xf32>
    %177 = arith.addf %175, %176 : vector<20x128xf32>
    %178 = arith.mulf %177, %1 : vector<20x128xf32>
    %179 = arith.addf %178, %152 : vector<20x128xf32>
    %cst_120 = arith.constant 0.000000e+00 : f32
    %180 = vector.broadcast %cst_120 : f32 to vector<36x128xf32>
    %c4_121 = arith.constant 4 : index
    %c0_122 = arith.constant 0 : index
    %c0_123 = arith.constant 0 : index
    %181 = vector.load %arg4[%c4_121, %c0_122, %c0_123] : memref<8x384x128xbf16, #tpu.memory_space<vmem>>, vector<1x384x128xbf16>
    %182 = vector.shape_cast %181 : vector<1x384x128xbf16> to vector<384x128xbf16>
    %c4_124 = arith.constant 4 : index
    %c0_125 = arith.constant 0 : index
    %c0_126 = arith.constant 0 : index
    %183 = vector.load %arg5[%c4_124, %c0_125, %c0_126] : memref<8x1x128xf32, #tpu.memory_space<vmem>>, vector<1x1x128xf32>
    %184 = vector.shape_cast %183 : vector<1x1x128xf32> to vector<1x128xf32>
    %c1_i32_127 = arith.constant 1 : i32
    %185 = tpu.dynamic_rotate %179 by %c1_i32_127 dim 0 : vector<20x128xf32>, i32 -> vector<20x128xf32>
    %c19_i32_128 = arith.constant 19 : i32
    %186 = tpu.dynamic_rotate %179 by %c19_i32_128 dim 0 : vector<20x128xf32>, i32 -> vector<20x128xf32>
    %187 = tpu.concatenate %185, %179, %186 in 1 : vector<20x128xf32>, vector<20x128xf32>, vector<20x128xf32> -> vector<20x384xf32>
    %188 = arith.truncf %187 : vector<20x384xf32> to vector<20x384xbf16>
    %cst_129 = arith.constant dense<0.000000e+00> : vector<20x128xf32>
    %189 = tpu.matmul %188, %182, %cst_129 {dimension_numbers = #tpu.dot_dimension_numbers<[1], [0], [0], [1], [0, 0, 1, 1], [], []>} : vector<20x384xbf16>, vector<384x128xbf16>, vector<20x128xf32> -> vector<20x128xf32>
    %190 = vector.broadcast %184 : vector<1x128xf32> to vector<20x128xf32>
    %191 = arith.addf %189, %190 : vector<20x128xf32>
    %c0_130 = arith.constant 0 : index
    %c0_131 = arith.constant 0 : index
    %c0_132 = arith.constant 0 : index
    %192 = vector.load %arg9[%c0_130, %c0_131, %c0_132] : memref<2x36x20xbf16, #tpu.memory_space<vmem>>, vector<1x36x20xbf16>
    %193 = vector.shape_cast %192 : vector<1x36x20xbf16> to vector<36x20xbf16>
    %194 = arith.truncf %191 : vector<20x128xf32> to vector<20x128xbf16>
    %cst_133 = arith.constant dense<0.000000e+00> : vector<36x128xf32>
    %195 = tpu.matmul %193, %194, %cst_133 {dimension_numbers = #tpu.dot_dimension_numbers<[1], [0], [0], [1], [0, 0, 1, 1], [], []>} : vector<36x20xbf16>, vector<20x128xbf16>, vector<36x128xf32> -> vector<36x128xf32>
    %196 = arith.addf %180, %195 : vector<36x128xf32>
    %c5_134 = arith.constant 5 : index
    %c0_135 = arith.constant 0 : index
    %c0_136 = arith.constant 0 : index
    %197 = vector.load %arg4[%c5_134, %c0_135, %c0_136] : memref<8x384x128xbf16, #tpu.memory_space<vmem>>, vector<1x384x128xbf16>
    %198 = vector.shape_cast %197 : vector<1x384x128xbf16> to vector<384x128xbf16>
    %c5_137 = arith.constant 5 : index
    %c0_138 = arith.constant 0 : index
    %c0_139 = arith.constant 0 : index
    %199 = vector.load %arg5[%c5_137, %c0_138, %c0_139] : memref<8x1x128xf32, #tpu.memory_space<vmem>>, vector<1x1x128xf32>
    %200 = vector.shape_cast %199 : vector<1x1x128xf32> to vector<1x128xf32>
    %c1_i32_140 = arith.constant 1 : i32
    %201 = tpu.dynamic_rotate %179 by %c1_i32_140 dim 0 : vector<20x128xf32>, i32 -> vector<20x128xf32>
    %c19_i32_141 = arith.constant 19 : i32
    %202 = tpu.dynamic_rotate %179 by %c19_i32_141 dim 0 : vector<20x128xf32>, i32 -> vector<20x128xf32>
    %203 = tpu.concatenate %201, %179, %202 in 1 : vector<20x128xf32>, vector<20x128xf32>, vector<20x128xf32> -> vector<20x384xf32>
    %204 = arith.truncf %203 : vector<20x384xf32> to vector<20x384xbf16>
    %cst_142 = arith.constant dense<0.000000e+00> : vector<20x128xf32>
    %205 = tpu.matmul %204, %198, %cst_142 {dimension_numbers = #tpu.dot_dimension_numbers<[1], [0], [0], [1], [0, 0, 1, 1], [], []>} : vector<20x384xbf16>, vector<384x128xbf16>, vector<20x128xf32> -> vector<20x128xf32>
    %206 = vector.broadcast %200 : vector<1x128xf32> to vector<20x128xf32>
    %207 = arith.addf %205, %206 : vector<20x128xf32>
    %c0_143 = arith.constant 0 : index
    %c0_144 = arith.constant 0 : index
    %c0_145 = arith.constant 0 : index
    %208 = vector.load %arg9[%c0_143, %c0_144, %c0_145] : memref<2x36x20xbf16, #tpu.memory_space<vmem>>, vector<1x36x20xbf16>
    %209 = vector.shape_cast %208 : vector<1x36x20xbf16> to vector<36x20xbf16>
    %210 = arith.truncf %207 : vector<20x128xf32> to vector<20x128xbf16>
    %cst_146 = arith.constant dense<0.000000e+00> : vector<36x128xf32>
    %211 = tpu.matmul %209, %210, %cst_146 {dimension_numbers = #tpu.dot_dimension_numbers<[1], [0], [0], [1], [0, 0, 1, 1], [], []>} : vector<36x20xbf16>, vector<20x128xbf16>, vector<36x128xf32> -> vector<36x128xf32>
    %212 = arith.addf %196, %211 : vector<36x128xf32>
    %c6_147 = arith.constant 6 : index
    %c0_148 = arith.constant 0 : index
    %c0_149 = arith.constant 0 : index
    %213 = vector.load %arg4[%c6_147, %c0_148, %c0_149] : memref<8x384x128xbf16, #tpu.memory_space<vmem>>, vector<1x384x128xbf16>
    %214 = vector.shape_cast %213 : vector<1x384x128xbf16> to vector<384x128xbf16>
    %c6_150 = arith.constant 6 : index
    %c0_151 = arith.constant 0 : index
    %c0_152 = arith.constant 0 : index
    %215 = vector.load %arg5[%c6_150, %c0_151, %c0_152] : memref<8x1x128xf32, #tpu.memory_space<vmem>>, vector<1x1x128xf32>
    %216 = vector.shape_cast %215 : vector<1x1x128xf32> to vector<1x128xf32>
    %c1_i32_153 = arith.constant 1 : i32
    %217 = tpu.dynamic_rotate %179 by %c1_i32_153 dim 0 : vector<20x128xf32>, i32 -> vector<20x128xf32>
    %c19_i32_154 = arith.constant 19 : i32
    %218 = tpu.dynamic_rotate %179 by %c19_i32_154 dim 0 : vector<20x128xf32>, i32 -> vector<20x128xf32>
    %219 = tpu.concatenate %217, %179, %218 in 1 : vector<20x128xf32>, vector<20x128xf32>, vector<20x128xf32> -> vector<20x384xf32>
    %220 = arith.truncf %219 : vector<20x384xf32> to vector<20x384xbf16>
    %cst_155 = arith.constant dense<0.000000e+00> : vector<20x128xf32>
    %221 = tpu.matmul %220, %214, %cst_155 {dimension_numbers = #tpu.dot_dimension_numbers<[1], [0], [0], [1], [0, 0, 1, 1], [], []>} : vector<20x384xbf16>, vector<384x128xbf16>, vector<20x128xf32> -> vector<20x128xf32>
    %222 = vector.broadcast %216 : vector<1x128xf32> to vector<20x128xf32>
    %223 = arith.addf %221, %222 : vector<20x128xf32>
    %c1_156 = arith.constant 1 : index
    %c0_157 = arith.constant 0 : index
    %c0_158 = arith.constant 0 : index
    %224 = vector.load %arg9[%c1_156, %c0_157, %c0_158] : memref<2x36x20xbf16, #tpu.memory_space<vmem>>, vector<1x36x20xbf16>
    %225 = vector.shape_cast %224 : vector<1x36x20xbf16> to vector<36x20xbf16>
    %226 = arith.truncf %223 : vector<20x128xf32> to vector<20x128xbf16>
    %cst_159 = arith.constant dense<0.000000e+00> : vector<36x128xf32>
    %227 = tpu.matmul %225, %226, %cst_159 {dimension_numbers = #tpu.dot_dimension_numbers<[1], [0], [0], [1], [0, 0, 1, 1], [], []>} : vector<36x20xbf16>, vector<20x128xbf16>, vector<36x128xf32> -> vector<36x128xf32>
    %228 = arith.addf %212, %227 : vector<36x128xf32>
    %c7_160 = arith.constant 7 : index
    %c0_161 = arith.constant 0 : index
    %c0_162 = arith.constant 0 : index
    %229 = vector.load %arg4[%c7_160, %c0_161, %c0_162] : memref<8x384x128xbf16, #tpu.memory_space<vmem>>, vector<1x384x128xbf16>
    %230 = vector.shape_cast %229 : vector<1x384x128xbf16> to vector<384x128xbf16>
    %c7_163 = arith.constant 7 : index
    %c0_164 = arith.constant 0 : index
    %c0_165 = arith.constant 0 : index
    %231 = vector.load %arg5[%c7_163, %c0_164, %c0_165] : memref<8x1x128xf32, #tpu.memory_space<vmem>>, vector<1x1x128xf32>
    %232 = vector.shape_cast %231 : vector<1x1x128xf32> to vector<1x128xf32>
    %c1_i32_166 = arith.constant 1 : i32
    %233 = tpu.dynamic_rotate %179 by %c1_i32_166 dim 0 : vector<20x128xf32>, i32 -> vector<20x128xf32>
    %c19_i32_167 = arith.constant 19 : i32
    %234 = tpu.dynamic_rotate %179 by %c19_i32_167 dim 0 : vector<20x128xf32>, i32 -> vector<20x128xf32>
    %235 = tpu.concatenate %233, %179, %234 in 1 : vector<20x128xf32>, vector<20x128xf32>, vector<20x128xf32> -> vector<20x384xf32>
    %236 = arith.truncf %235 : vector<20x384xf32> to vector<20x384xbf16>
    %cst_168 = arith.constant dense<0.000000e+00> : vector<20x128xf32>
    %237 = tpu.matmul %236, %230, %cst_168 {dimension_numbers = #tpu.dot_dimension_numbers<[1], [0], [0], [1], [0, 0, 1, 1], [], []>} : vector<20x384xbf16>, vector<384x128xbf16>, vector<20x128xf32> -> vector<20x128xf32>
    %238 = vector.broadcast %232 : vector<1x128xf32> to vector<20x128xf32>
    %239 = arith.addf %237, %238 : vector<20x128xf32>
    %c1_169 = arith.constant 1 : index
    %c0_170 = arith.constant 0 : index
    %c0_171 = arith.constant 0 : index
    %240 = vector.load %arg9[%c1_169, %c0_170, %c0_171] : memref<2x36x20xbf16, #tpu.memory_space<vmem>>, vector<1x36x20xbf16>
    %241 = vector.shape_cast %240 : vector<1x36x20xbf16> to vector<36x20xbf16>
    %242 = arith.truncf %239 : vector<20x128xf32> to vector<20x128xbf16>
    %cst_172 = arith.constant dense<0.000000e+00> : vector<36x128xf32>
    %243 = tpu.matmul %241, %242, %cst_172 {dimension_numbers = #tpu.dot_dimension_numbers<[1], [0], [0], [1], [0, 0, 1, 1], [], []>} : vector<36x20xbf16>, vector<20x128xbf16>, vector<36x128xf32> -> vector<36x128xf32>
    %244 = arith.addf %228, %243 : vector<36x128xf32>
    %245 = arith.addf %244, %111 : vector<36x128xf32>
    %c9 = arith.constant 9 : index
    %c0_173 = arith.constant 0 : index
    %c0_174 = arith.constant 0 : index
    %246 = vector.load %arg2[%c9, %c0_173, %c0_174] : memref<16x384x128xbf16, #tpu.memory_space<vmem>>, vector<1x384x128xbf16>
    %247 = vector.shape_cast %246 : vector<1x384x128xbf16> to vector<384x128xbf16>
    %c9_175 = arith.constant 9 : index
    %c0_176 = arith.constant 0 : index
    %c0_177 = arith.constant 0 : index
    %248 = vector.load %arg3[%c9_175, %c0_176, %c0_177] : memref<16x1x128xf32, #tpu.memory_space<vmem>>, vector<1x1x128xf32>
    %249 = vector.shape_cast %248 : vector<1x1x128xf32> to vector<1x128xf32>
    %c1_i32_178 = arith.constant 1 : i32
    %250 = tpu.dynamic_rotate %245 by %c1_i32_178 dim 0 : vector<36x128xf32>, i32 -> vector<36x128xf32>
    %c35_i32_179 = arith.constant 35 : i32
    %251 = tpu.dynamic_rotate %245 by %c35_i32_179 dim 0 : vector<36x128xf32>, i32 -> vector<36x128xf32>
    %252 = tpu.concatenate %250, %245, %251 in 1 : vector<36x128xf32>, vector<36x128xf32>, vector<36x128xf32> -> vector<36x384xf32>
    %253 = arith.truncf %252 : vector<36x384xf32> to vector<36x384xbf16>
    %cst_180 = arith.constant dense<0.000000e+00> : vector<36x128xf32>
    %254 = tpu.matmul %253, %247, %cst_180 {dimension_numbers = #tpu.dot_dimension_numbers<[1], [0], [0], [1], [0, 0, 1, 1], [], []>} : vector<36x384xbf16>, vector<384x128xbf16>, vector<36x128xf32> -> vector<36x128xf32>
    %255 = vector.broadcast %249 : vector<1x128xf32> to vector<36x128xf32>
    %256 = arith.addf %254, %255 : vector<36x128xf32>
    %cst_181 = arith.constant 0.000000e+00 : f32
    %257 = vector.broadcast %cst_181 : f32 to vector<36x128xf32>
    %258 = arith.maximumf %256, %257 : vector<36x128xf32>
    %259 = arith.mulf %258, %0 : vector<36x128xf32>
    %c10 = arith.constant 10 : index
    %c0_182 = arith.constant 0 : index
    %c0_183 = arith.constant 0 : index
    %260 = vector.load %arg2[%c10, %c0_182, %c0_183] : memref<16x384x128xbf16, #tpu.memory_space<vmem>>, vector<1x384x128xbf16>
    %261 = vector.shape_cast %260 : vector<1x384x128xbf16> to vector<384x128xbf16>
    %c10_184 = arith.constant 10 : index
    %c0_185 = arith.constant 0 : index
    %c0_186 = arith.constant 0 : index
    %262 = vector.load %arg3[%c10_184, %c0_185, %c0_186] : memref<16x1x128xf32, #tpu.memory_space<vmem>>, vector<1x1x128xf32>
    %263 = vector.shape_cast %262 : vector<1x1x128xf32> to vector<1x128xf32>
    %c1_i32_187 = arith.constant 1 : i32
    %264 = tpu.dynamic_rotate %259 by %c1_i32_187 dim 0 : vector<36x128xf32>, i32 -> vector<36x128xf32>
    %c35_i32_188 = arith.constant 35 : i32
    %265 = tpu.dynamic_rotate %259 by %c35_i32_188 dim 0 : vector<36x128xf32>, i32 -> vector<36x128xf32>
    %266 = tpu.concatenate %264, %259, %265 in 1 : vector<36x128xf32>, vector<36x128xf32>, vector<36x128xf32> -> vector<36x384xf32>
    %267 = arith.truncf %266 : vector<36x384xf32> to vector<36x384xbf16>
    %cst_189 = arith.constant dense<0.000000e+00> : vector<36x128xf32>
    %268 = tpu.matmul %267, %261, %cst_189 {dimension_numbers = #tpu.dot_dimension_numbers<[1], [0], [0], [1], [0, 0, 1, 1], [], []>} : vector<36x384xbf16>, vector<384x128xbf16>, vector<36x128xf32> -> vector<36x128xf32>
    %269 = vector.broadcast %263 : vector<1x128xf32> to vector<36x128xf32>
    %270 = arith.addf %268, %269 : vector<36x128xf32>
    %271 = arith.mulf %270, %0 : vector<36x128xf32>
    %272 = arith.addf %271, %245 : vector<36x128xf32>
    %273 = arith.truncf %272 : vector<36x128xf32> to vector<36x128xbf16>
    %c0_190 = arith.constant 0 : index
    %c0_191 = arith.constant 0 : index
    %274 = vector.load %arg6[%c0_190, %c0_191] : memref<128x128xbf16, #tpu.memory_space<vmem>>, vector<128x128xbf16>
    %cst_192 = arith.constant dense<0.000000e+00> : vector<36x128xf32>
    %275 = tpu.matmul %273, %274, %cst_192 {dimension_numbers = #tpu.dot_dimension_numbers<[1], [0], [0], [1], [0, 0, 1, 1], [], []>} : vector<36x128xbf16>, vector<128x128xbf16>, vector<36x128xf32> -> vector<36x128xf32>
    %c0_193 = arith.constant 0 : index
    %c0_194 = arith.constant 0 : index
    %276 = vector.load %arg7[%c0_193, %c0_194] : memref<1x128xf32, #tpu.memory_space<vmem>>, vector<1x128xf32>
    %277 = vector.broadcast %276 : vector<1x128xf32> to vector<36x128xf32>
    %278 = arith.addf %275, %277 : vector<36x128xf32>
    %cst_195 = arith.constant 0.000000e+00 : f32
    %279 = vector.broadcast %cst_195 : f32 to vector<36x128xf32>
    %280 = arith.subf %279, %278 : vector<36x128xf32>
    %281 = math.exp %280 : vector<36x128xf32>
    %cst_196 = arith.constant 1.000000e+00 : f32
    %282 = vector.broadcast %cst_196 : f32 to vector<36x128xf32>
    %283 = arith.addf %282, %281 : vector<36x128xf32>
    %284 = tpu.reciprocal %283 {approx = true} : vector<36x128xf32> -> vector<36x128xf32>
    %285 = arith.mulf %284, %0 : vector<36x128xf32>
    %286 = arith.mulf %84, %285 : vector<36x128xf32>
    %287 = arith.addf %286, %30 : vector<36x128xf32>
    %c11 = arith.constant 11 : index
    %c0_197 = arith.constant 0 : index
    %c0_198 = arith.constant 0 : index
    %288 = vector.load %arg2[%c11, %c0_197, %c0_198] : memref<16x384x128xbf16, #tpu.memory_space<vmem>>, vector<1x384x128xbf16>
    %289 = vector.shape_cast %288 : vector<1x384x128xbf16> to vector<384x128xbf16>
    %c11_199 = arith.constant 11 : index
    %c0_200 = arith.constant 0 : index
    %c0_201 = arith.constant 0 : index
    %290 = vector.load %arg3[%c11_199, %c0_200, %c0_201] : memref<16x1x128xf32, #tpu.memory_space<vmem>>, vector<1x1x128xf32>
    %291 = vector.shape_cast %290 : vector<1x1x128xf32> to vector<1x128xf32>
    %c1_i32_202 = arith.constant 1 : i32
    %292 = tpu.dynamic_rotate %287 by %c1_i32_202 dim 0 : vector<36x128xf32>, i32 -> vector<36x128xf32>
    %c35_i32_203 = arith.constant 35 : i32
    %293 = tpu.dynamic_rotate %287 by %c35_i32_203 dim 0 : vector<36x128xf32>, i32 -> vector<36x128xf32>
    %294 = tpu.concatenate %292, %287, %293 in 1 : vector<36x128xf32>, vector<36x128xf32>, vector<36x128xf32> -> vector<36x384xf32>
    %295 = arith.truncf %294 : vector<36x384xf32> to vector<36x384xbf16>
    %cst_204 = arith.constant dense<0.000000e+00> : vector<36x128xf32>
    %296 = tpu.matmul %295, %289, %cst_204 {dimension_numbers = #tpu.dot_dimension_numbers<[1], [0], [0], [1], [0, 0, 1, 1], [], []>} : vector<36x384xbf16>, vector<384x128xbf16>, vector<36x128xf32> -> vector<36x128xf32>
    %297 = vector.broadcast %291 : vector<1x128xf32> to vector<36x128xf32>
    %298 = arith.addf %296, %297 : vector<36x128xf32>
    %cst_205 = arith.constant 0.000000e+00 : f32
    %299 = vector.broadcast %cst_205 : f32 to vector<36x128xf32>
    %300 = arith.maximumf %298, %299 : vector<36x128xf32>
    %301 = arith.mulf %300, %0 : vector<36x128xf32>
    %c12 = arith.constant 12 : index
    %c0_206 = arith.constant 0 : index
    %c0_207 = arith.constant 0 : index
    %302 = vector.load %arg2[%c12, %c0_206, %c0_207] : memref<16x384x128xbf16, #tpu.memory_space<vmem>>, vector<1x384x128xbf16>
    %303 = vector.shape_cast %302 : vector<1x384x128xbf16> to vector<384x128xbf16>
    %c12_208 = arith.constant 12 : index
    %c0_209 = arith.constant 0 : index
    %c0_210 = arith.constant 0 : index
    %304 = vector.load %arg3[%c12_208, %c0_209, %c0_210] : memref<16x1x128xf32, #tpu.memory_space<vmem>>, vector<1x1x128xf32>
    %305 = vector.shape_cast %304 : vector<1x1x128xf32> to vector<1x128xf32>
    %c1_i32_211 = arith.constant 1 : i32
    %306 = tpu.dynamic_rotate %301 by %c1_i32_211 dim 0 : vector<36x128xf32>, i32 -> vector<36x128xf32>
    %c35_i32_212 = arith.constant 35 : i32
    %307 = tpu.dynamic_rotate %301 by %c35_i32_212 dim 0 : vector<36x128xf32>, i32 -> vector<36x128xf32>
    %308 = tpu.concatenate %306, %301, %307 in 1 : vector<36x128xf32>, vector<36x128xf32>, vector<36x128xf32> -> vector<36x384xf32>
    %309 = arith.truncf %308 : vector<36x384xf32> to vector<36x384xbf16>
    %cst_213 = arith.constant dense<0.000000e+00> : vector<36x128xf32>
    %310 = tpu.matmul %309, %303, %cst_213 {dimension_numbers = #tpu.dot_dimension_numbers<[1], [0], [0], [1], [0, 0, 1, 1], [], []>} : vector<36x384xbf16>, vector<384x128xbf16>, vector<36x128xf32> -> vector<36x128xf32>
    %311 = vector.broadcast %305 : vector<1x128xf32> to vector<36x128xf32>
    %312 = arith.addf %310, %311 : vector<36x128xf32>
    %313 = arith.mulf %312, %0 : vector<36x128xf32>
    %314 = arith.addf %313, %287 : vector<36x128xf32>
    %c13 = arith.constant 13 : index
    %c0_214 = arith.constant 0 : index
    %c0_215 = arith.constant 0 : index
    %315 = vector.load %arg2[%c13, %c0_214, %c0_215] : memref<16x384x128xbf16, #tpu.memory_space<vmem>>, vector<1x384x128xbf16>
    %316 = vector.shape_cast %315 : vector<1x384x128xbf16> to vector<384x128xbf16>
    %c13_216 = arith.constant 13 : index
    %c0_217 = arith.constant 0 : index
    %c0_218 = arith.constant 0 : index
    %317 = vector.load %arg3[%c13_216, %c0_217, %c0_218] : memref<16x1x128xf32, #tpu.memory_space<vmem>>, vector<1x1x128xf32>
    %318 = vector.shape_cast %317 : vector<1x1x128xf32> to vector<1x128xf32>
    %c1_i32_219 = arith.constant 1 : i32
    %319 = tpu.dynamic_rotate %314 by %c1_i32_219 dim 0 : vector<36x128xf32>, i32 -> vector<36x128xf32>
    %c35_i32_220 = arith.constant 35 : i32
    %320 = tpu.dynamic_rotate %314 by %c35_i32_220 dim 0 : vector<36x128xf32>, i32 -> vector<36x128xf32>
    %321 = tpu.concatenate %319, %314, %320 in 1 : vector<36x128xf32>, vector<36x128xf32>, vector<36x128xf32> -> vector<36x384xf32>
    %322 = arith.truncf %321 : vector<36x384xf32> to vector<36x384xbf16>
    %cst_221 = arith.constant dense<0.000000e+00> : vector<36x128xf32>
    %323 = tpu.matmul %322, %316, %cst_221 {dimension_numbers = #tpu.dot_dimension_numbers<[1], [0], [0], [1], [0, 0, 1, 1], [], []>} : vector<36x384xbf16>, vector<384x128xbf16>, vector<36x128xf32> -> vector<36x128xf32>
    %324 = vector.broadcast %318 : vector<1x128xf32> to vector<36x128xf32>
    %325 = arith.addf %323, %324 : vector<36x128xf32>
    %cst_222 = arith.constant 0.000000e+00 : f32
    %326 = vector.broadcast %cst_222 : f32 to vector<36x128xf32>
    %327 = arith.maximumf %325, %326 : vector<36x128xf32>
    %328 = arith.mulf %327, %0 : vector<36x128xf32>
    %c14 = arith.constant 14 : index
    %c0_223 = arith.constant 0 : index
    %c0_224 = arith.constant 0 : index
    %329 = vector.load %arg2[%c14, %c0_223, %c0_224] : memref<16x384x128xbf16, #tpu.memory_space<vmem>>, vector<1x384x128xbf16>
    %330 = vector.shape_cast %329 : vector<1x384x128xbf16> to vector<384x128xbf16>
    %c14_225 = arith.constant 14 : index
    %c0_226 = arith.constant 0 : index
    %c0_227 = arith.constant 0 : index
    %331 = vector.load %arg3[%c14_225, %c0_226, %c0_227] : memref<16x1x128xf32, #tpu.memory_space<vmem>>, vector<1x1x128xf32>
    %332 = vector.shape_cast %331 : vector<1x1x128xf32> to vector<1x128xf32>
    %c1_i32_228 = arith.constant 1 : i32
    %333 = tpu.dynamic_rotate %328 by %c1_i32_228 dim 0 : vector<36x128xf32>, i32 -> vector<36x128xf32>
    %c35_i32_229 = arith.constant 35 : i32
    %334 = tpu.dynamic_rotate %328 by %c35_i32_229 dim 0 : vector<36x128xf32>, i32 -> vector<36x128xf32>
    %335 = tpu.concatenate %333, %328, %334 in 1 : vector<36x128xf32>, vector<36x128xf32>, vector<36x128xf32> -> vector<36x384xf32>
    %336 = arith.truncf %335 : vector<36x384xf32> to vector<36x384xbf16>
    %cst_230 = arith.constant dense<0.000000e+00> : vector<36x128xf32>
    %337 = tpu.matmul %336, %330, %cst_230 {dimension_numbers = #tpu.dot_dimension_numbers<[1], [0], [0], [1], [0, 0, 1, 1], [], []>} : vector<36x384xbf16>, vector<384x128xbf16>, vector<36x128xf32> -> vector<36x128xf32>
    %338 = vector.broadcast %332 : vector<1x128xf32> to vector<36x128xf32>
    %339 = arith.addf %337, %338 : vector<36x128xf32>
    %340 = arith.mulf %339, %0 : vector<36x128xf32>
    %341 = arith.addf %340, %314 : vector<36x128xf32>
    %c15 = arith.constant 15 : index
    %c0_231 = arith.constant 0 : index
    %c0_232 = arith.constant 0 : index
    %342 = vector.load %arg2[%c15, %c0_231, %c0_232] : memref<16x384x128xbf16, #tpu.memory_space<vmem>>, vector<1x384x128xbf16>
    %343 = vector.shape_cast %342 : vector<1x384x128xbf16> to vector<384x128xbf16>
    %c15_233 = arith.constant 15 : index
    %c0_234 = arith.constant 0 : index
    %c0_235 = arith.constant 0 : index
    %344 = vector.load %arg3[%c15_233, %c0_234, %c0_235] : memref<16x1x128xf32, #tpu.memory_space<vmem>>, vector<1x1x128xf32>
    %345 = vector.shape_cast %344 : vector<1x1x128xf32> to vector<1x128xf32>
    %c1_i32_236 = arith.constant 1 : i32
    %346 = tpu.dynamic_rotate %341 by %c1_i32_236 dim 0 : vector<36x128xf32>, i32 -> vector<36x128xf32>
    %c35_i32_237 = arith.constant 35 : i32
    %347 = tpu.dynamic_rotate %341 by %c35_i32_237 dim 0 : vector<36x128xf32>, i32 -> vector<36x128xf32>
    %348 = tpu.concatenate %346, %341, %347 in 1 : vector<36x128xf32>, vector<36x128xf32>, vector<36x128xf32> -> vector<36x384xf32>
    %349 = arith.truncf %348 : vector<36x384xf32> to vector<36x384xbf16>
    %cst_238 = arith.constant dense<0.000000e+00> : vector<36x128xf32>
    %350 = tpu.matmul %349, %343, %cst_238 {dimension_numbers = #tpu.dot_dimension_numbers<[1], [0], [0], [1], [0, 0, 1, 1], [], []>} : vector<36x384xbf16>, vector<384x128xbf16>, vector<36x128xf32> -> vector<36x128xf32>
    %351 = vector.broadcast %345 : vector<1x128xf32> to vector<36x128xf32>
    %352 = arith.addf %350, %351 : vector<36x128xf32>
    %353 = arith.mulf %352, %0 : vector<36x128xf32>
    %c0_239 = arith.constant 0 : index
    %c0_240 = arith.constant 0 : index
    %c0_241 = arith.constant 0 : index
    %354 = vector.load %arg12[%c0_239, %c0_240, %c0_241] : memref<1x36x128xf32, #tpu.memory_space<vmem>>, vector<1x36x128xf32>
    %355 = vector.shape_cast %354 : vector<1x36x128xf32> to vector<36x128xf32>
    %356 = vector.shape_cast %353 : vector<36x128xf32> to vector<1x36x128xf32>
    tpu.vector_store %arg12[%c0_239, %c0_240, %c0_241], %356 {strides = array<i32>} : memref<1x36x128xf32, #tpu.memory_space<vmem>>, vector<1x36x128xf32>,
    return
  }
  func.func @transform_0(%arg0: i32) -> (i32, i32, i32) {
    %c0_i32 = arith.constant 0 : i32
    %c0_i32_0 = arith.constant 0 : i32
    %c0_i32_1 = arith.constant 0 : i32
    return %arg0, %c0_i32, %c0_i32_0 : i32, i32, i32
  }
  func.func @transform_1(%arg0: i32) -> (i32, i32, i32) {
    %c0_i32 = arith.constant 0 : i32
    %c0_i32_0 = arith.constant 0 : i32
    %c0_i32_1 = arith.constant 0 : i32
    %c0_i32_2 = arith.constant 0 : i32
    return %c0_i32, %c0_i32_0, %c0_i32_1 : i32, i32, i32
  }
  func.func @transform_2(%arg0: i32) -> (i32, i32, i32) {
    %c0_i32 = arith.constant 0 : i32
    %c0_i32_0 = arith.constant 0 : i32
    %c0_i32_1 = arith.constant 0 : i32
    %c0_i32_2 = arith.constant 0 : i32
    return %c0_i32, %c0_i32_0, %c0_i32_1 : i32, i32, i32
  }
  func.func @transform_3(%arg0: i32) -> (i32, i32, i32) {
    %c0_i32 = arith.constant 0 : i32
    %c0_i32_0 = arith.constant 0 : i32
    %c0_i32_1 = arith.constant 0 : i32
    %c0_i32_2 = arith.constant 0 : i32
    return %c0_i32, %c0_i32_0, %c0_i32_1 : i32, i32, i32
  }
  func.func @transform_4(%arg0: i32) -> (i32, i32, i32) {
    %c0_i32 = arith.constant 0 : i32
    %c0_i32_0 = arith.constant 0 : i32
    %c0_i32_1 = arith.constant 0 : i32
    %c0_i32_2 = arith.constant 0 : i32
    return %c0_i32, %c0_i32_0, %c0_i32_1 : i32, i32, i32
  }
  func.func @transform_5(%arg0: i32) -> (i32, i32) {
    %c0_i32 = arith.constant 0 : i32
    %c0_i32_0 = arith.constant 0 : i32
    %c0_i32_1 = arith.constant 0 : i32
    return %c0_i32, %c0_i32_0 : i32, i32
  }
  func.func @transform_6(%arg0: i32) -> (i32, i32) {
    %c0_i32 = arith.constant 0 : i32
    %c0_i32_0 = arith.constant 0 : i32
    %c0_i32_1 = arith.constant 0 : i32
    return %c0_i32, %c0_i32_0 : i32, i32
  }
  func.func @transform_7(%arg0: i32) -> (i32, i32) {
    %c0_i32 = arith.constant 0 : i32
    %c0_i32_0 = arith.constant 0 : i32
    %c0_i32_1 = arith.constant 0 : i32
    return %c0_i32, %c0_i32_0 : i32, i32
  }
  func.func @transform_8(%arg0: i32) -> (i32, i32, i32) {
    %c0_i32 = arith.constant 0 : i32
    %c0_i32_0 = arith.constant 0 : i32
    %c0_i32_1 = arith.constant 0 : i32
    %c0_i32_2 = arith.constant 0 : i32
    return %c0_i32, %c0_i32_0, %c0_i32_1 : i32, i32, i32
  }
  func.func @transform_9(%arg0: i32) -> (i32, i32) {
    %c0_i32 = arith.constant 0 : i32
    %c0_i32_0 = arith.constant 0 : i32
    %c0_i32_1 = arith.constant 0 : i32
    return %c0_i32, %c0_i32_0 : i32, i32
  }
  func.func @transform_10(%arg0: i32) -> (i32, i32) {
    %c0_i32 = arith.constant 0 : i32
    %c0_i32_0 = arith.constant 0 : i32
    %c0_i32_1 = arith.constant 0 : i32
    return %c0_i32, %c0_i32_0 : i32, i32
  }
  func.func @transform_11(%arg0: i32) -> (i32, i32, i32) {
    %c0_i32 = arith.constant 0 : i32
    %c0_i32_0 = arith.constant 0 : i32
    %c0_i32_1 = arith.constant 0 : i32
    return %arg0, %c0_i32, %c0_i32_0 : i32, i32, i32
  }
}

</mosaic_0001>

<llo_original>
// kernel: resgroup_forward.1
$region0: #{resgroup_forward.1}
  #allocation0 [shape = 'u32[]', space=smem, size = 0x4, offset = 0x4, fixed_abs, tag = 'smem constant byte address 0x4 - core index']
  #allocation1 [shape = 'u32[72,128]{1,0:T(1,128)}', space=vmem, size = 0x9000, scoped, tag = 'internal scratch']
  %s0 = inlined_call_operand.vmem [shape: f32[1,36,128], index: 0, kind: input, shape index: {}]
  %s1 = inlined_call_operand.hbm [shape: bf16[16,384,128], index: 1, kind: input, shape index: {}]
  %s2 = inlined_call_operand.hbm [shape: f32[16,1,128], index: 2, kind: input, shape index: {}]
  %s3 = inlined_call_operand.hbm [shape: bf16[8,384,128], index: 3, kind: input, shape index: {}]
  %s4 = inlined_call_operand.hbm [shape: f32[8,1,128], index: 4, kind: input, shape index: {}]
  %s5 = inlined_call_operand.hbm [shape: bf16[128,128], index: 5, kind: input, shape index: {}]
  %s6 = inlined_call_operand.hbm [shape: f32[1,128], index: 6, kind: input, shape index: {}]
  %s7 = inlined_call_operand.hbm [shape: bf16[20,36], index: 7, kind: input, shape index: {}]
  %s8 = inlined_call_operand.vmem [shape: bf16[2,36,20], index: 8, kind: input, shape index: {}]
  %s9 = inlined_call_operand.hbm [shape: f32[36,128], index: 9, kind: input, shape index: {}]
  %s10 = inlined_call_operand.hbm [shape: f32[20,128], index: 10, kind: input, shape index: {}]
  %s11 = inlined_call_operand.vmem [shape: f32[1,36,128], index: 11, kind: output, shape index: {}]
  %s12 = sld [smem:[#allocation0]]
  $region90: #{resgroup_forward.1} parent=0
    _
  %s14 = ssub.s32 1, %s12
  %s15 = scalar_select 0, %s14, %s12
  $region1: #{resgroup_forward.1} parent=0
    #allocation2 [shape = 'u8[1572864]{0}', space=vmem, size = 0x180000, scoped, tag = 'input window, operand 1, single buffered']
    #allocation3 [shape = 's32[1]{0}', space=sflag, size = 0x4, scoped, tag = 'scoped memory for resgroup_forward.1']
    #allocation4 [shape = 'u8[8192]{0}', space=vmem, size = 0x2000, scoped, tag = 'input window, operand 2, single buffered']
    #allocation5 [shape = 's32[1]{0}', space=sflag, size = 0x4, scoped, tag = 'scoped memory for resgroup_forward.1']
    #allocation6 [shape = 'u8[786432]{0}', space=vmem, size = 0xc0000, scoped, tag = 'input window, operand 3, single buffered']
    #allocation7 [shape = 'u8[4096]{0}', space=vmem, size = 0x1000, scoped, tag = 'input window, operand 4, single buffered']
    #allocation8 [shape = 's32[1]{0}', space=sflag, size = 0x4, scoped, tag = 'scoped memory for resgroup_forward.1']
    #allocation9 [shape = 'u8[32768]{0}', space=vmem, size = 0x8000, scoped, tag = 'input window, operand 5, single buffered']
    #allocation10 [shape = 'u8[512]{0}', space=vmem, size = 0x400, scoped, tag = 'input window, operand 6, single buffered']
    #allocation11 [shape = 's32[1]{0}', space=sflag, size = 0x4, scoped, tag = 'scoped memory for resgroup_forward.1']
    #allocation12 [shape = 'u8[6144]{0}', space=vmem, size = 0x1800, scoped, tag = 'input window, operand 7, single buffered']
    #allocation13 [shape = 'u8[20480]{0}', space=vmem, size = 0x5000, scoped, tag = 'input window, operand 9, single buffered']
    #allocation14 [shape = 's32[1]{0}', space=sflag, size = 0x4, scoped, tag = 'scoped memory for resgroup_forward.1']
    #allocation15 [shape = 'u8[12288]{0}', space=vmem, size = 0x3000, scoped, tag = 'input window, operand 10, single buffered']
    %16 = vsyncpa [#allocation3], 0
    %17 = vsyncpa [#allocation5], 0
    %18 = vsyncpa [#allocation8], 0
    %19 = vsyncpa [#allocation11], 0
    %20 = vsyncpa [#allocation14], 0
    // Predicated region
    $region2: #{resgroup_forward.1} parent=1 // pred_check
      _
    $region3: #{resgroup_forward.1} parent=1 // pred_check_branch
      %22 = sbr.rel (0) target = $region5
    $region4: #{resgroup_forward.1} parent=1 // pred_region
      _
    $region5: #{resgroup_forward.1} parent=1 // pred_fallthru
      _
    // Predicated region
    $region6: #{resgroup_forward.1} parent=1 // pred_check
      _
    $region7: #{resgroup_forward.1} parent=1 // pred_check_branch
      %24 = sbr.rel (0) target = $region9
    $region8: #{resgroup_forward.1} parent=1 // pred_region
      %26 = vsyncadd [#allocation3], 0
      %s27 = sshll.u32 %s1, 4
      %s28 = int_to_ptr.hbm [resolvable:$true] %s27
      %s29 = sshll.u32 [#allocation2], 4
      %s30 = int_to_ptr.vmem [resolvable:$true] %s29
      %35 = dma.hbm_to_vmem [thread:$0]  %s28, 49152, %s30, [#allocation3], 64, 64, 4
    $region9: #{resgroup_forward.1} parent=1 // pred_fallthru
      _
    // Predicated region
    $region10: #{resgroup_forward.1} parent=1 // pred_check
      _
    $region11: #{resgroup_forward.1} parent=1 // pred_check_branch
      %37 = sbr.rel (0) target = $region13
    $region12: #{resgroup_forward.1} parent=1 // pred_region
      %39 = vsyncadd [#allocation5], 0
      %s40 = sshll.u32 %s2, 4
      %s41 = int_to_ptr.hbm [resolvable:$true] %s40
      %s42 = sshll.u32 [#allocation4], 4
      %s43 = int_to_ptr.vmem [resolvable:$true] %s42
      %48 = dma.hbm_to_vmem [thread:$0]  %s41, 256, %s43, [#allocation5], 16, 16, 1
    $region13: #{resgroup_forward.1} parent=1 // pred_fallthru
      _
    // Predicated region
    $region14: #{resgroup_forward.1} parent=1 // pred_check
      _
    $region15: #{resgroup_forward.1} parent=1 // pred_check_branch
      %50 = sbr.rel (0) target = $region17
    $region16: #{resgroup_forward.1} parent=1 // pred_region
      %52 = vsyncadd [#allocation5], 0
      %s53 = sshll.u32 %s3, 4
      %s54 = int_to_ptr.hbm [resolvable:$true] %s53
      %s55 = sshll.u32 [#allocation6], 4
      %s56 = int_to_ptr.vmem [resolvable:$true] %s55
      %61 = dma.hbm_to_vmem [thread:$0]  %s54, 24576, %s56, [#allocation5], 64, 64, 4
    $region17: #{resgroup_forward.1} parent=1 // pred_fallthru
      _
    // Predicated region
    $region18: #{resgroup_forward.1} parent=1 // pred_check
      _
    $region19: #{resgroup_forward.1} parent=1 // pred_check_branch
      %63 = sbr.rel (0) target = $region21
    $region20: #{resgroup_forward.1} parent=1 // pred_region
      %65 = vsyncadd [#allocation8], 0
      %s66 = sshll.u32 %s4, 4
      %s67 = int_to_ptr.hbm [resolvable:$true] %s66
      %s68 = sshll.u32 [#allocation7], 4
      %s69 = int_to_ptr.vmem [resolvable:$true] %s68
      %74 = dma.hbm_to_vmem [thread:$0]  %s67, 128, %s69, [#allocation8], 16, 16, 1
    $region21: #{resgroup_forward.1} parent=1 // pred_fallthru
      _
    // Predicated region
    $region22: #{resgroup_forward.1} parent=1 // pred_check
      _
    $region23: #{resgroup_forward.1} parent=1 // pred_check_branch
      %76 = sbr.rel (0) target = $region25
    $region24: #{resgroup_forward.1} parent=1 // pred_region
      %78 = vsyncadd [#allocation8], 0
      %s79 = sshll.u32 %s5, 4
      %s80 = int_to_ptr.hbm [resolvable:$true] %s79
      %s81 = sshll.u32 [#allocation9], 4
      %s82 = int_to_ptr.vmem [resolvable:$true] %s81
      %87 = dma.hbm_to_vmem [thread:$0]  %s80, 1024, %s82, [#allocation8], 64, 64, 4
    $region25: #{resgroup_forward.1} parent=1 // pred_fallthru
      _
    // Predicated region
    $region26: #{resgroup_forward.1} parent=1 // pred_check
      _
    $region27: #{resgroup_forward.1} parent=1 // pred_check_branch
      %89 = sbr.rel (0) target = $region29
    $region28: #{resgroup_forward.1} parent=1 // pred_region
      %91 = vsyncadd [#allocation11], 0
      %s93 = sshll.u32 %s6, 4
      %s94 = int_to_ptr.hbm [resolvable:$true] %s93
      %s95 = sshll.u32 [#allocation10], 4
      %s96 = int_to_ptr.vmem [resolvable:$true] %s95
      %98 = dma.hbm_to_vmem [thread:$0]  %s94, 16, %s96, [#allocation11]
    $region29: #{resgroup_forward.1} parent=1 // pred_fallthru
      _
    // Predicated region
    $region30: #{resgroup_forward.1} parent=1 // pred_check
      _
    $region31: #{resgroup_forward.1} parent=1 // pred_check_branch
      %100 = sbr.rel (0) target = $region33
    $region32: #{resgroup_forward.1} parent=1 // pred_region
      %102 = vsyncadd [#allocation11], 0
      %s103 = sshll.u32 %s7, 4
      %s104 = int_to_ptr.hbm [resolvable:$true] %s103
      %s105 = sshll.u32 [#allocation12], 4
      %s106 = int_to_ptr.vmem [resolvable:$true] %s105
      %111 = dma.hbm_to_vmem [thread:$0]  %s104, 192, %s106, [#allocation11], 64, 64, 4
    $region33: #{resgroup_forward.1} parent=1 // pred_fallthru
      _
    // Predicated region
    $region34: #{resgroup_forward.1} parent=1 // pred_check
      _
    $region35: #{resgroup_forward.1} parent=1 // pred_check_branch
      %113 = sbr.rel (0) target = $region37
    $region36: #{resgroup_forward.1} parent=1 // pred_region
      _
    $region37: #{resgroup_forward.1} parent=1 // pred_fallthru
      _
    // Predicated region
    $region38: #{resgroup_forward.1} parent=1 // pred_check
      _
    $region39: #{resgroup_forward.1} parent=1 // pred_check_branch
      %115 = sbr.rel (0) target = $region41
    $region40: #{resgroup_forward.1} parent=1 // pred_region
      %117 = vsyncadd [#allocation14], 0
      %s118 = sshll.u32 %s9, 4
      %s119 = int_to_ptr.hbm [resolvable:$true] %s118
      %s120 = sshll.u32 [#allocation13], 4
      %s121 = int_to_ptr.vmem [resolvable:$true] %s120
      %126 = dma.hbm_to_vmem [thread:$0]  %s119, 640, %s121, [#allocation14], 128, 128, 8
    $region41: #{resgroup_forward.1} parent=1 // pred_fallthru
      _
    // Predicated region
    $region42: #{resgroup_forward.1} parent=1 // pred_check
      _
    $region43: #{resgroup_forward.1} parent=1 // pred_check_branch
      %128 = sbr.rel (0) target = $region45
    $region44: #{resgroup_forward.1} parent=1 // pred_region
      %130 = vsyncadd [#allocation14], 0
      %s131 = sshll.u32 %s10, 4
      %s132 = int_to_ptr.hbm [resolvable:$true] %s131
      %s133 = sshll.u32 [#allocation15], 4
      %s134 = int_to_ptr.vmem [resolvable:$true] %s133
      %139 = dma.hbm_to_vmem [thread:$0]  %s132, 384, %s134, [#allocation14], 128, 128, 8
    $region45: #{resgroup_forward.1} parent=1 // pred_fallthru
      _
    // Predicated region
    $region46: #{resgroup_forward.1} parent=1 // pred_check
      _
    $region47: #{resgroup_forward.1} parent=1 // pred_check_branch
      %141 = sbr.rel (0) target = $region49
    $region48: #{resgroup_forward.1} parent=1 // pred_region
      %143 = dma.done [#allocation3], 49152
    $region49: #{resgroup_forward.1} parent=1 // pred_fallthru
      _
    // Predicated region
    $region50: #{resgroup_forward.1} parent=1 // pred_check
      _
    $region51: #{resgroup_forward.1} parent=1 // pred_check_branch
      %145 = sbr.rel (0) target = $region53
    $region52: #{resgroup_forward.1} parent=1 // pred_region
      %147 = dma.done [#allocation5], 256
    $region53: #{resgroup_forward.1} parent=1 // pred_fallthru
      _
    // Predicated region
    $region54: #{resgroup_forward.1} parent=1 // pred_check
      _
    $region55: #{resgroup_forward.1} parent=1 // pred_check_branch
      %149 = sbr.rel (0) target = $region57
    $region56: #{resgroup_forward.1} parent=1 // pred_region
      %151 = dma.done [#allocation5], 24576
    $region57: #{resgroup_forward.1} parent=1 // pred_fallthru
      _
    // Predicated region
    $region58: #{resgroup_forward.1} parent=1 // pred_check
      _
    $region59: #{resgroup_forward.1} parent=1 // pred_check_branch
      %153 = sbr.rel (0) target = $region61
    $region60: #{resgroup_forward.1} parent=1 // pred_region
      %155 = dma.done [#allocation8], 128
    $region61: #{resgroup_forward.1} parent=1 // pred_fallthru
      _
    // Predicated region
    $region62: #{resgroup_forward.1} parent=1 // pred_check
      _
    $region63: #{resgroup_forward.1} parent=1 // pred_check_branch
      %157 = sbr.rel (0) target = $region65
    $region64: #{resgroup_forward.1} parent=1 // pred_region
      %159 = dma.done [#allocation8], 1024
    $region65: #{resgroup_forward.1} parent=1 // pred_fallthru
      _
    // Predicated region
    $region66: #{resgroup_forward.1} parent=1 // pred_check
      _
    $region67: #{resgroup_forward.1} parent=1 // pred_check_branch
      %161 = sbr.rel (0) target = $region69
    $region68: #{resgroup_forward.1} parent=1 // pred_region
      %163 = dma.done [#allocation11], 16
    $region69: #{resgroup_forward.1} parent=1 // pred_fallthru
      _
    // Predicated region
    $region70: #{resgroup_forward.1} parent=1 // pred_check
      _
    $region71: #{resgroup_forward.1} parent=1 // pred_check_branch
      %165 = sbr.rel (0) target = $region73
    $region72: #{resgroup_forward.1} parent=1 // pred_region
      %167 = dma.done [#allocation11], 192
    $region73: #{resgroup_forward.1} parent=1 // pred_fallthru
      _
    // Predicated region
    $region74: #{resgroup_forward.1} parent=1 // pred_check
      _
    $region75: #{resgroup_forward.1} parent=1 // pred_check_branch
      %169 = sbr.rel (0) target = $region77
    $region76: #{resgroup_forward.1} parent=1 // pred_region
      %171 = dma.done [#allocation14], 640
    $region77: #{resgroup_forward.1} parent=1 // pred_fallthru
      _
    // Predicated region
    $region78: #{resgroup_forward.1} parent=1 // pred_check
      _
    $region79: #{resgroup_forward.1} parent=1 // pred_check_branch
      %173 = sbr.rel (0) target = $region81
    $region80: #{resgroup_forward.1} parent=1 // pred_region
      %175 = dma.done [#allocation14], 384
    $region81: #{resgroup_forward.1} parent=1 // pred_fallthru
      _
    %v177 = vld [vmem:[#allocation13] sm:$0xff]
    %v178 = vld [vmem:[#allocation13 + $0x8] sm:$0xff]
    %v179 = vld [vmem:[#allocation13 + $0x10] sm:$0xff]
    %v180 = vld [vmem:[#allocation13 + $0x18] sm:$0xff]
    %v181 = vld [vmem:[#allocation13 + $0x20] sm:$0xf]
    %v182 = vld [vmem:[#allocation15] sm:$0xff]
    %v183 = vld [vmem:[#allocation15 + $0x8] sm:$0xff]
    %v184 = vld [vmem:[#allocation15 + $0x10] sm:$0xf]
    %v185 = vld [vmem:[%s0] sm:$0xff]
    %v186 = vld [vmem:[%s0 + $0x8] sm:$0xff]
    %v187 = vld [vmem:[%s0 + $0x10] sm:$0xff]
    %v188 = vld [vmem:[%s0 + $0x18] sm:$0xff]
    %v189 = vld [vmem:[%s0 + $0x20] sm:$0xf]
    %v190 = vld [vmem:[#allocation2] sm:$0xf]
    %v191 = vld [vmem:[#allocation2 + $0x4] sm:$0xf]
    %v192 = vld [vmem:[#allocation2 + $0x8] sm:$0xf]
    %v193 = vld [vmem:[#allocation2 + $0xc] sm:$0xf]
    %v194 = vld [vmem:[#allocation2 + $0x10] sm:$0xf]
    %v195 = vld [vmem:[#allocation2 + $0x14] sm:$0xf]
    %v196 = vld [vmem:[#allocation2 + $0x18] sm:$0xf]
    %v197 = vld [vmem:[#allocation2 + $0x1c] sm:$0xf]
    %v198 = vld [vmem:[#allocation2 + $0x20] sm:$0xf]
    %v199 = vld [vmem:[#allocation2 + $0x24] sm:$0xf]
    %v200 = vld [vmem:[#allocation2 + $0x28] sm:$0xf]
    %v201 = vld [vmem:[#allocation2 + $0x2c] sm:$0xf]
    %v202 = vld [vmem:[#allocation2 + $0x30] sm:$0xf]
    %v203 = vld [vmem:[#allocation2 + $0x34] sm:$0xf]
    %v204 = vld [vmem:[#allocation2 + $0x38] sm:$0xf]
    %v205 = vld [vmem:[#allocation2 + $0x3c] sm:$0xf]
    %v206 = vld [vmem:[#allocation2 + $0x40] sm:$0xf]
    %v207 = vld [vmem:[#allocation2 + $0x44] sm:$0xf]
    %v208 = vld [vmem:[#allocation2 + $0x48] sm:$0xf]
    %v209 = vld [vmem:[#allocation2 + $0x4c] sm:$0xf]
    %v210 = vld [vmem:[#allocation2 + $0x50] sm:$0xf]
    %v211 = vld [vmem:[#allocation2 + $0x54] sm:$0xf]
    %v212 = vld [vmem:[#allocation2 + $0x58] sm:$0xf]
    %v213 = vld [vmem:[#allocation2 + $0x5c] sm:$0xf]
    %v214 = vld [vmem:[#allocation2 + $0x60] sm:$0xf]
    %v215 = vld [vmem:[#allocation2 + $0x64] sm:$0xf]
    %v216 = vld [vmem:[#allocation2 + $0x68] sm:$0xf]
    %v217 = vld [vmem:[#allocation2 + $0x6c] sm:$0xf]
    %v218 = vld [vmem:[#allocation2 + $0x70] sm:$0xf]
    %v219 = vld [vmem:[#allocation2 + $0x74] sm:$0xf]
    %v220 = vld [vmem:[#allocation2 + $0x78] sm:$0xf]
    %v221 = vld [vmem:[#allocation2 + $0x7c] sm:$0xf]
    %v222 = vld [vmem:[#allocation2 + $0x80] sm:$0xf]
    %v223 = vld [vmem:[#allocation2 + $0x84] sm:$0xf]
    %v224 = vld [vmem:[#allocation2 + $0x88] sm:$0xf]
    %v225 = vld [vmem:[#allocation2 + $0x8c] sm:$0xf]
    %v226 = vld [vmem:[#allocation2 + $0x90] sm:$0xf]
    %v227 = vld [vmem:[#allocation2 + $0x94] sm:$0xf]
    %v228 = vld [vmem:[#allocation2 + $0x98] sm:$0xf]
    %v229 = vld [vmem:[#allocation2 + $0x9c] sm:$0xf]
    %v230 = vld [vmem:[#allocation2 + $0xa0] sm:$0xf]
    %v231 = vld [vmem:[#allocation2 + $0xa4] sm:$0xf]
    %v232 = vld [vmem:[#allocation2 + $0xa8] sm:$0xf]
    %v233 = vld [vmem:[#allocation2 + $0xac] sm:$0xf]
    %v234 = vld [vmem:[#allocation2 + $0xb0] sm:$0xf]
    %v235 = vld [vmem:[#allocation2 + $0xb4] sm:$0xf]
    %v236 = vld [vmem:[#allocation2 + $0xb8] sm:$0xf]
    %v237 = vld [vmem:[#allocation2 + $0xbc] sm:$0xf]
    %v238 = vld [vmem:[#allocation4] sm:$0x1]
    %vm239 = vcmask 1047556
    %v240 = vrot.slane %v185, 4
    %v241 = vsel %vm239, %v240, %v189
    %v242 = vrot.slane %v186, 4
    %v243 = vrot.slane %v187, 4
    %v244 = vrot.slane %v188, 4
    %v245 = vrot.slane %v241, 4
    %v246 = vsel %vm239, %v242, %v240
    %v247 = vsel %vm239, %v243, %v242
    %v248 = vsel %vm239, %v244, %v243
    %v249 = vsel %vm239, %v245, %v244
    %vm255 = vcmask 1042432
    %v256 = vrot.slane %v185, 5
    %v257 = vrot.slane %v186, 5
    %v258 = vsel %vm255, %v256, %v257
    %v259 = vrot.slane %v187, 5
    %v260 = vsel %vm255, %v257, %v259
    %v261 = vrot.slane %v188, 5
    %v262 = vsel %vm255, %v259, %v261
    %v263 = vrot.slane %v189, 5
    %v264 = vsel %vm255, %v261, %v263
    %vm271 = vcmask 1041408
    %v272 = vrot.slane %v185, 6
    %v273 = vrot.slane %v186, 6
    %v274 = vsel %vm271, %v272, %v273
    %v275 = vrot.slane %v187, 6
    %v276 = vsel %vm271, %v273, %v275
    %v277 = vrot.slane %v188, 6
    %v278 = vsel %vm271, %v275, %v277
    %v279 = vrot.slane %v241, 6
    %v280 = vsel %vm271, %v277, %v279
    %v286 = vpack.c.bf16 %v246, %v241
    %v287 = vpack.c.bf16 %v258, %v256
    %v288 = vpack.c.bf16 %v274, %v272
    %v289 = vpack.c.bf16 %v248, %v247
    %v290 = vpack.c.bf16 %v262, %v260
    %v291 = vpack.c.bf16 %v278, %v276
    %v292 = vpack.c.bf16 %v249, %v249
    %v293 = vpack.c.bf16 %v264, %v264
    %v294 = vpack.c.bf16 %v280, %v280
    %v296 = vperm.slane %v238, 0
    %vm298 = vsmask.f32 6400
    %v300 = vshrl.u32 %v286, 16
    %v302 = vrot.slane %v300, 1
    %v303 = vshll.u32 %v286, 16
    %v305 = vrot.slane %v303, 2
    %v306 = vor.u32 %v302, %v305
    %v308 = vshrl.u32 %v289, 16
    %v310 = vrot.slane %v308, 1
    %v311 = vshll.u32 %v289, 16
    %v313 = vrot.slane %v311, 2
    %v314 = vor.u32 %v310, %v313
    %v315 = vsel %vm298, %v306, %v314
    %v317 = vshrl.u32 %v287, 16
    %v319 = vrot.slane %v317, 1
    %v320 = vshll.u32 %v287, 16
    %v322 = vrot.slane %v320, 2
    %v323 = vor.u32 %v319, %v322
    %v325 = vshrl.u32 %v290, 16
    %v327 = vrot.slane %v325, 1
    %v328 = vshll.u32 %v290, 16
    %v330 = vrot.slane %v328, 2
    %v331 = vor.u32 %v327, %v330
    %v332 = vsel %vm298, %v323, %v331
    %v334 = vshrl.u32 %v288, 16
    %v336 = vrot.slane %v334, 1
    %v337 = vshll.u32 %v288, 16
    %v339 = vrot.slane %v337, 2
    %v340 = vor.u32 %v336, %v339
    %v342 = vshrl.u32 %v291, 16
    %v344 = vrot.slane %v342, 1
    %v345 = vshll.u32 %v291, 16
    %v347 = vrot.slane %v345, 2
    %v348 = vor.u32 %v344, %v347
    %v349 = vsel %vm298, %v340, %v348
    %v351 = vshrl.u32 %v292, 16
    %v353 = vrot.slane %v351, 1
    %v354 = vshll.u32 %v292, 16
    %v356 = vrot.slane %v354, 2
    %v357 = vor.u32 %v353, %v356
    %v358 = vsel %vm298, %v314, %v357
    %v360 = vshrl.u32 %v293, 16
    %v362 = vrot.slane %v360, 1
    %v363 = vshll.u32 %v293, 16
    %v365 = vrot.slane %v363, 2
    %v366 = vor.u32 %v362, %v365
    %v367 = vsel %vm298, %v331, %v366
    %v369 = vshrl.u32 %v294, 16
    %v371 = vrot.slane %v369, 1
    %v372 = vshll.u32 %v294, 16
    %v374 = vrot.slane %v372, 2
    %v375 = vor.u32 %v371, %v374
    %v376 = vsel %vm298, %v348, %v375
    %v434 = vunpack.c.l.b16 %v190
    %v435 = vunpack.c.l.b16 %v191
    %v436 = vunpack.c.l.b16 %v192
    %v437 = vunpack.c.l.b16 %v193
    %v438 = vunpack.c.l.b16 %v194
    %v439 = vunpack.c.l.b16 %v195
    %v440 = vunpack.c.l.b16 %v196
    %v441 = vunpack.c.l.b16 %v197
    %v442 = vunpack.c.l.b16 %v198
    %v443 = vunpack.c.l.b16 %v199
    %v444 = vunpack.c.l.b16 %v200
    %v445 = vunpack.c.l.b16 %v201
    %v446 = vunpack.c.l.b16 %v202
    %v447 = vunpack.c.l.b16 %v203
    %v448 = vunpack.c.l.b16 %v204
    %v449 = vunpack.c.l.b16 %v205
    %v450 = vunpack.c.l.b16 %v206
    %v451 = vunpack.c.l.b16 %v207
    %v452 = vunpack.c.l.b16 %v208
    %v453 = vunpack.c.l.b16 %v209
    %v454 = vunpack.c.l.b16 %v210
    %v455 = vunpack.c.l.b16 %v211
    %v456 = vunpack.c.l.b16 %v212
    %v457 = vunpack.c.l.b16 %v213
    %v458 = vunpack.c.l.b16 %v214
    %v459 = vunpack.c.l.b16 %v215
    %v460 = vunpack.c.l.b16 %v216
    %v461 = vunpack.c.l.b16 %v217
    %v462 = vunpack.c.l.b16 %v218
    %v463 = vunpack.c.l.b16 %v219
    %v464 = vunpack.c.l.b16 %v220
    %v465 = vunpack.c.l.b16 %v221
    %v466 = vunpack.c.l.b16 %v222
    %v467 = vunpack.c.l.b16 %v223
    %v468 = vunpack.c.l.b16 %v224
    %v469 = vunpack.c.l.b16 %v225
    %v470 = vunpack.c.l.b16 %v226
    %v471 = vunpack.c.l.b16 %v227
    %v472 = vunpack.c.l.b16 %v228
    %v473 = vunpack.c.l.b16 %v229
    %v474 = vunpack.c.l.b16 %v230
    %v475 = vunpack.c.l.b16 %v231
    %v476 = vunpack.c.l.b16 %v232
    %v477 = vunpack.c.l.b16 %v233
    %v478 = vunpack.c.l.b16 %v234
    %v479 = vunpack.c.l.b16 %v235
    %v480 = vunpack.c.l.b16 %v236
    %v481 = vunpack.c.l.b16 %v237
    %v482 = vpack.c.b16 %v435, %v434
    %v483 = vpack.c.b16 %v437, %v436
    %v484 = vpack.c.b16 %v439, %v438
    %v485 = vpack.c.b16 %v441, %v440
    %v486 = vpack.c.b16 %v443, %v442
    %v487 = vpack.c.b16 %v445, %v444
    %v488 = vpack.c.b16 %v447, %v446
    %v489 = vpack.c.b16 %v449, %v448
    %v490 = vpack.c.b16 %v451, %v450
    %v491 = vpack.c.b16 %v453, %v452
    %v492 = vpack.c.b16 %v455, %v454
    %v493 = vpack.c.b16 %v457, %v456
    %v494 = vpack.c.b16 %v459, %v458
    %v495 = vpack.c.b16 %v461, %v460
    %v496 = vpack.c.b16 %v463, %v462
    %v497 = vpack.c.b16 %v465, %v464
    %v498 = vpack.c.b16 %v467, %v466
    %v499 = vpack.c.b16 %v469, %v468
    %v500 = vpack.c.b16 %v471, %v470
    %v501 = vpack.c.b16 %v473, %v472
    %v502 = vpack.c.b16 %v475, %v474
    %v503 = vpack.c.b16 %v477, %v476
    %v504 = vpack.c.b16 %v479, %v478
    %v505 = vpack.c.b16 %v481, %v480
    %530 = vmatpush.bf16.msra.mxu0 %v489
    %531 = vmatpush.bf16.msra.mxu0 %v488
    %532 = vmatpush.bf16.msra.mxu0 %v487
    %533 = vmatpush.bf16.msra.mxu0 %v486
    %534 = vmatpush.bf16.msra.mxu0 %v485
    %535 = vmatpush.bf16.msra.mxu0 %v484
    %536 = vmatpush.bf16.msra.mxu0 %v483
    %537 = vmatpush.bf16.msra.mxu0 %v482
    %538 = vmatmul.bf16.gmra.mxu0 %v315
    %v539 = vpop.f32.mrf.mxu0
    %v540 = vadd.f32 %v296, %v539
    %v541 = vpop.f32.mrf.mxu0
    %v542 = vadd.f32 %v296, %v541
    %543 = vmatmul.bf16.gmra.mxu0 %v358
    %v544 = vpop.f32.mrf.mxu0
    %v545 = vadd.f32 %v296, %v544
    %v546 = vpop.f32.mrf.mxu0
    %v547 = vadd.f32 %v296, %v546
    %548 = vmatmul.bf16.gmra.mxu0 %v357
    %v549 = vpop.f32.mrf.mxu0
    %v550 = vadd.f32 %v296, %v549
    %v551 = vpop.f32.mrf.mxu0
    %552 = vdwg.mxu0
    %553 = vmatpush.bf16.msra.mxu0 %v497
    %554 = vmatpush.bf16.msra.mxu0 %v496
    %555 = vmatpush.bf16.msra.mxu0 %v495
    %556 = vmatpush.bf16.msra.mxu0 %v494
    %557 = vmatpush.bf16.msra.mxu0 %v493
    %558 = vmatpush.bf16.msra.mxu0 %v492
    %559 = vmatpush.bf16.msra.mxu0 %v491
    %560 = vmatpush.bf16.msra.mxu0 %v490
    %561 = vmatmul.bf16.gmra.mxu0 %v332
    %v562 = vpop.f32.mrf.mxu0
    %v563 = vadd.f32 %v540, %v562
    %v564 = vpop.f32.mrf.mxu0
    %v565 = vadd.f32 %v542, %v564
    %566 = vmatmul.bf16.gmra.mxu0 %v367
    %v567 = vpop.f32.mrf.mxu0
    %v568 = vadd.f32 %v545, %v567
    %v569 = vpop.f32.mrf.mxu0
    %v570 = vadd.f32 %v547, %v569
    %571 = vmatmul.bf16.gmra.mxu0 %v366
    %v572 = vpop.f32.mrf.mxu0
    %v573 = vadd.f32 %v550, %v572
    %v574 = vpop.f32.mrf.mxu0
    %575 = vdwg.mxu0
    %576 = vmatpush.bf16.msra.mxu0 %v505
    %577 = vmatpush.bf16.msra.mxu0 %v504
    %578 = vmatpush.bf16.msra.mxu0 %v503
    %579 = vmatpush.bf16.msra.mxu0 %v502
    %580 = vmatpush.bf16.msra.mxu0 %v501
    %581 = vmatpush.bf16.msra.mxu0 %v500
    %582 = vmatpush.bf16.msra.mxu0 %v499
    %583 = vmatpush.bf16.msra.mxu0 %v498
    %584 = vmatmul.bf16.gmra.mxu0 %v349
    %v585 = vpop.f32.mrf.mxu0
    %v586 = vadd.f32 %v563, %v585
    %v587 = vpop.f32.mrf.mxu0
    %v588 = vadd.f32 %v565, %v587
    %589 = vmatmul.bf16.gmra.mxu0 %v376
    %v590 = vpop.f32.mrf.mxu0
    %v591 = vadd.f32 %v568, %v590
    %v592 = vpop.f32.mrf.mxu0
    %v593 = vadd.f32 %v570, %v592
    %594 = vmatmul.bf16.gmra.mxu0 %v375
    %v595 = vpop.f32.mrf.mxu0
    %v596 = vadd.f32 %v573, %v595
    %v597 = vpop.f32.mrf.mxu0
    %598 = vdwg.mxu0
    %v599 = vmax.f32 %v586, 0.0
    %v600 = vmax.f32 %v588, 0.0
    %v601 = vmax.f32 %v591, 0.0
    %v602 = vmax.f32 %v593, 0.0
    %v603 = vmax.f32 %v596, 0.0
    %v604 = vmul.f32 %v599, %v177
    %v605 = vmul.f32 %v600, %v178
    %v606 = vmul.f32 %v601, %v179
    %v607 = vmul.f32 %v602, %v180
    %v608 = vmul.f32 %v603, %v181
    %s609 = scalar_lea.vmem [#allocation2], 192
    %v610 = vld [vmem:[%s609] sm:$0xf]
    %v611 = vld [vmem:[%s609 + $0x4] sm:$0xf]
    %v612 = vld [vmem:[%s609 + $0x8] sm:$0xf]
    %v613 = vld [vmem:[%s609 + $0xc] sm:$0xf]
    %v614 = vld [vmem:[%s609 + $0x10] sm:$0xf]
    %v615 = vld [vmem:[%s609 + $0x14] sm:$0xf]
    %v616 = vld [vmem:[%s609 + $0x18] sm:$0xf]
    %v617 = vld [vmem:[%s609 + $0x1c] sm:$0xf]
    %v618 = vld [vmem:[%s609 + $0x20] sm:$0xf]
    %v619 = vld [vmem:[%s609 + $0x24] sm:$0xf]
    %v620 = vld [vmem:[%s609 + $0x28] sm:$0xf]
    %v621 = vld [vmem:[%s609 + $0x2c] sm:$0xf]
    %v622 = vld [vmem:[%s609 + $0x30] sm:$0xf]
    %v623 = vld [vmem:[%s609 + $0x34] sm:$0xf]
    %v624 = vld [vmem:[%s609 + $0x38] sm:$0xf]
    %v625 = vld [vmem:[%s609 + $0x3c] sm:$0xf]
    %v626 = vld [vmem:[%s609 + $0x40] sm:$0xf]
    %v627 = vld [vmem:[%s609 + $0x44] sm:$0xf]
    %v628 = vld [vmem:[%s609 + $0x48] sm:$0xf]
    %v629 = vld [vmem:[%s609 + $0x4c] sm:$0xf]
    %v630 = vld [vmem:[%s609 + $0x50] sm:$0xf]
    %v631 = vld [vmem:[%s609 + $0x54] sm:$0xf]
    %v632 = vld [vmem:[%s609 + $0x58] sm:$0xf]
    %v633 = vld [vmem:[%s609 + $0x5c] sm:$0xf]
    %v634 = vld [vmem:[%s609 + $0x60] sm:$0xf]
    %v635 = vld [vmem:[%s609 + $0x64] sm:$0xf]
    %v636 = vld [vmem:[%s609 + $0x68] sm:$0xf]
    %v637 = vld [vmem:[%s609 + $0x6c] sm:$0xf]
    %v638 = vld [vmem:[%s609 + $0x70] sm:$0xf]
    %v639 = vld [vmem:[%s609 + $0x74] sm:$0xf]
    %v640 = vld [vmem:[%s609 + $0x78] sm:$0xf]
    %v641 = vld [vmem:[%s609 + $0x7c] sm:$0xf]
    %v642 = vld [vmem:[%s609 + $0x80] sm:$0xf]
    %v643 = vld [vmem:[%s609 + $0x84] sm:$0xf]
    %v644 = vld [vmem:[%s609 + $0x88] sm:$0xf]
    %v645 = vld [vmem:[%s609 + $0x8c] sm:$0xf]
    %v646 = vld [vmem:[%s609 + $0x90] sm:$0xf]
    %v647 = vld [vmem:[%s609 + $0x94] sm:$0xf]
    %v648 = vld [vmem:[%s609 + $0x98] sm:$0xf]
    %v649 = vld [vmem:[%s609 + $0x9c] sm:$0xf]
    %v650 = vld [vmem:[%s609 + $0xa0] sm:$0xf]
    %v651 = vld [vmem:[%s609 + $0xa4] sm:$0xf]
    %v652 = vld [vmem:[%s609 + $0xa8] sm:$0xf]
    %v653 = vld [vmem:[%s609 + $0xac] sm:$0xf]
    %v654 = vld [vmem:[%s609 + $0xb0] sm:$0xf]
    %v655 = vld [vmem:[%s609 + $0xb4] sm:$0xf]
    %v656 = vld [vmem:[%s609 + $0xb8] sm:$0xf]
    %v657 = vld [vmem:[%s609 + $0xbc] sm:$0xf]
    %s658 = scalar_lea.vmem [#allocation4], 1
    %v659 = vld [vmem:[%s658] sm:$0x1]
    %v660 = vrot.slane %v604, 4
    %v661 = vsel %vm239, %v660, %v608
    %v662 = vrot.slane %v605, 4
    %v663 = vrot.slane %v606, 4
    %v664 = vrot.slane %v607, 4
    %v665 = vrot.slane %v661, 4
    %v666 = vsel %vm239, %v662, %v660
    %v667 = vsel %vm239, %v663, %v662
    %v668 = vsel %vm239, %v664, %v663
    %v669 = vsel %vm239, %v665, %v664
    %v675 = vrot.slane %v604, 5
    %v676 = vrot.slane %v605, 5
    %v677 = vsel %vm255, %v675, %v676
    %v678 = vrot.slane %v606, 5
    %v679 = vsel %vm255, %v676, %v678
    %v680 = vrot.slane %v607, 5
    %v681 = vsel %vm255, %v678, %v680
    %v682 = vrot.slane %v608, 5
    %v683 = vsel %vm255, %v680, %v682
    %v690 = vrot.slane %v604, 6
    %v691 = vrot.slane %v605, 6
    %v692 = vsel %vm271, %v690, %v691
    %v693 = vrot.slane %v606, 6
    %v694 = vsel %vm271, %v691, %v693
    %v695 = vrot.slane %v607, 6
    %v696 = vsel %vm271, %v693, %v695
    %v697 = vrot.slane %v661, 6
    %v698 = vsel %vm271, %v695, %v697
    %v704 = vpack.c.bf16 %v666, %v661
    %v705 = vpack.c.bf16 %v677, %v675
    %v706 = vpack.c.bf16 %v692, %v690
    %v707 = vpack.c.bf16 %v668, %v667
    %v708 = vpack.c.bf16 %v681, %v679
    %v709 = vpack.c.bf16 %v696, %v694
    %v710 = vpack.c.bf16 %v669, %v669
    %v711 = vpack.c.bf16 %v683, %v683
    %v712 = vpack.c.bf16 %v698, %v698
    %v714 = vperm.slane %v659, 0
    %v717 = vshrl.u32 %v704, 16
    %v719 = vrot.slane %v717, 1
    %v720 = vshll.u32 %v704, 16
    %v722 = vrot.slane %v720, 2
    %v723 = vor.u32 %v719, %v722
    %v725 = vshrl.u32 %v707, 16
    %v727 = vrot.slane %v725, 1
    %v728 = vshll.u32 %v707, 16
    %v730 = vrot.slane %v728, 2
    %v731 = vor.u32 %v727, %v730
    %v732 = vsel %vm298, %v723, %v731
    %v734 = vshrl.u32 %v705, 16
    %v736 = vrot.slane %v734, 1
    %v737 = vshll.u32 %v705, 16
    %v739 = vrot.slane %v737, 2
    %v740 = vor.u32 %v736, %v739
    %v742 = vshrl.u32 %v708, 16
    %v744 = vrot.slane %v742, 1
    %v745 = vshll.u32 %v708, 16
    %v747 = vrot.slane %v745, 2
    %v748 = vor.u32 %v744, %v747
    %v749 = vsel %vm298, %v740, %v748
    %v751 = vshrl.u32 %v706, 16
    %v753 = vrot.slane %v751, 1
    %v754 = vshll.u32 %v706, 16
    %v756 = vrot.slane %v754, 2
    %v757 = vor.u32 %v753, %v756
    %v759 = vshrl.u32 %v709, 16
    %v761 = vrot.slane %v759, 1
    %v762 = vshll.u32 %v709, 16
    %v764 = vrot.slane %v762, 2
    %v765 = vor.u32 %v761, %v764
    %v766 = vsel %vm298, %v757, %v765
    %v768 = vshrl.u32 %v710, 16
    %v770 = vrot.slane %v768, 1
    %v771 = vshll.u32 %v710, 16
    %v773 = vrot.slane %v771, 2
    %v774 = vor.u32 %v770, %v773
    %v775 = vsel %vm298, %v731, %v774
    %v777 = vshrl.u32 %v711, 16
    %v779 = vrot.slane %v777, 1
    %v780 = vshll.u32 %v711, 16
    %v782 = vrot.slane %v780, 2
    %v783 = vor.u32 %v779, %v782
    %v784 = vsel %vm298, %v748, %v783
    %v786 = vshrl.u32 %v712, 16
    %v788 = vrot.slane %v786, 1
    %v789 = vshll.u32 %v712, 16
    %v791 = vrot.slane %v789, 2
    %v792 = vor.u32 %v788, %v791
    %v793 = vsel %vm298, %v765, %v792
    %v851 = vunpack.c.l.b16 %v610
    %v852 = vunpack.c.l.b16 %v611
    %v853 = vunpack.c.l.b16 %v612
    %v854 = vunpack.c.l.b16 %v613
    %v855 = vunpack.c.l.b16 %v614
    %v856 = vunpack.c.l.b16 %v615
    %v857 = vunpack.c.l.b16 %v616
    %v858 = vunpack.c.l.b16 %v617
    %v859 = vunpack.c.l.b16 %v618
    %v860 = vunpack.c.l.b16 %v619
    %v861 = vunpack.c.l.b16 %v620
    %v862 = vunpack.c.l.b16 %v621
    %v863 = vunpack.c.l.b16 %v622
    %v864 = vunpack.c.l.b16 %v623
    %v865 = vunpack.c.l.b16 %v624
    %v866 = vunpack.c.l.b16 %v625
    %v867 = vunpack.c.l.b16 %v626
    %v868 = vunpack.c.l.b16 %v627
    %v869 = vunpack.c.l.b16 %v628
    %v870 = vunpack.c.l.b16 %v629
    %v871 = vunpack.c.l.b16 %v630
    %v872 = vunpack.c.l.b16 %v631
    %v873 = vunpack.c.l.b16 %v632
    %v874 = vunpack.c.l.b16 %v633
    %v875 = vunpack.c.l.b16 %v634
    %v876 = vunpack.c.l.b16 %v635
    %v877 = vunpack.c.l.b16 %v636
    %v878 = vunpack.c.l.b16 %v637
    %v879 = vunpack.c.l.b16 %v638
    %v880 = vunpack.c.l.b16 %v639
    %v881 = vunpack.c.l.b16 %v640
    %v882 = vunpack.c.l.b16 %v641
    %v883 = vunpack.c.l.b16 %v642
    %v884 = vunpack.c.l.b16 %v643
    %v885 = vunpack.c.l.b16 %v644
    %v886 = vunpack.c.l.b16 %v645
    %v887 = vunpack.c.l.b16 %v646
    %v888 = vunpack.c.l.b16 %v647
    %v889 = vunpack.c.l.b16 %v648
    %v890 = vunpack.c.l.b16 %v649
    %v891 = vunpack.c.l.b16 %v650
    %v892 = vunpack.c.l.b16 %v651
    %v893 = vunpack.c.l.b16 %v652
    %v894 = vunpack.c.l.b16 %v653
    %v895 = vunpack.c.l.b16 %v654
    %v896 = vunpack.c.l.b16 %v655
    %v897 = vunpack.c.l.b16 %v656
    %v898 = vunpack.c.l.b16 %v657
    %v899 = vpack.c.b16 %v852, %v851
    %v900 = vpack.c.b16 %v854, %v853
    %v901 = vpack.c.b16 %v856, %v855
    %v902 = vpack.c.b16 %v858, %v857
    %v903 = vpack.c.b16 %v860, %v859
    %v904 = vpack.c.b16 %v862, %v861
    %v905 = vpack.c.b16 %v864, %v863
    %v906 = vpack.c.b16 %v866, %v865
    %v907 = vpack.c.b16 %v868, %v867
    %v908 = vpack.c.b16 %v870, %v869
    %v909 = vpack.c.b16 %v872, %v871
    %v910 = vpack.c.b16 %v874, %v873
    %v911 = vpack.c.b16 %v876, %v875
    %v912 = vpack.c.b16 %v878, %v877
    %v913 = vpack.c.b16 %v880, %v879
    %v914 = vpack.c.b16 %v882, %v881
    %v915 = vpack.c.b16 %v884, %v883
    %v916 = vpack.c.b16 %v886, %v885
    %v917 = vpack.c.b16 %v888, %v887
    %v918 = vpack.c.b16 %v890, %v889
    %v919 = vpack.c.b16 %v892, %v891
    %v920 = vpack.c.b16 %v894, %v893
    %v921 = vpack.c.b16 %v896, %v895
    %v922 = vpack.c.b16 %v898, %v897
    %947 = vmatpush.bf16.msra.mxu0 %v906
    %948 = vmatpush.bf16.msra.mxu0 %v905
    %949 = vmatpush.bf16.msra.mxu0 %v904
    %950 = vmatpush.bf16.msra.mxu0 %v903
    %951 = vmatpush.bf16.msra.mxu0 %v902
    %952 = vmatpush.bf16.msra.mxu0 %v901
    %953 = vmatpush.bf16.msra.mxu0 %v900
    %954 = vmatpush.bf16.msra.mxu0 %v899
    %955 = vmatmul.bf16.gmra.mxu0 %v732
    %v956 = vpop.f32.mrf.mxu0
    %v957 = vadd.f32 %v714, %v956
    %v958 = vpop.f32.mrf.mxu0
    %v959 = vadd.f32 %v714, %v958
    %960 = vmatmul.bf16.gmra.mxu0 %v775
    %v961 = vpop.f32.mrf.mxu0
    %v962 = vadd.f32 %v714, %v961
    %v963 = vpop.f32.mrf.mxu0
    %v964 = vadd.f32 %v714, %v963
    %965 = vmatmul.bf16.gmra.mxu0 %v774
    %v966 = vpop.f32.mrf.mxu0
    %v967 = vadd.f32 %v714, %v966
    %v968 = vpop.f32.mrf.mxu0
    %969 = vdwg.mxu0
    %970 = vmatpush.bf16.msra.mxu0 %v914
    %971 = vmatpush.bf16.msra.mxu0 %v913
    %972 = vmatpush.bf16.msra.mxu0 %v912
    %973 = vmatpush.bf16.msra.mxu0 %v911
    %974 = vmatpush.bf16.msra.mxu0 %v910
    %975 = vmatpush.bf16.msra.mxu0 %v909
    %976 = vmatpush.bf16.msra.mxu0 %v908
    %977 = vmatpush.bf16.msra.mxu0 %v907
    %978 = vmatmul.bf16.gmra.mxu0 %v749
    %v979 = vpop.f32.mrf.mxu0
    %v980 = vadd.f32 %v957, %v979
    %v981 = vpop.f32.mrf.mxu0
    %v982 = vadd.f32 %v959, %v981
    %983 = vmatmul.bf16.gmra.mxu0 %v784
    %v984 = vpop.f32.mrf.mxu0
    %v985 = vadd.f32 %v962, %v984
    %v986 = vpop.f32.mrf.mxu0
    %v987 = vadd.f32 %v964, %v986
    %988 = vmatmul.bf16.gmra.mxu0 %v783
    %v989 = vpop.f32.mrf.mxu0
    %v990 = vadd.f32 %v967, %v989
    %v991 = vpop.f32.mrf.mxu0
    %992 = vdwg.mxu0
    %993 = vmatpush.bf16.msra.mxu0 %v922
    %994 = vmatpush.bf16.msra.mxu0 %v921
    %995 = vmatpush.bf16.msra.mxu0 %v920
    %996 = vmatpush.bf16.msra.mxu0 %v919
    %997 = vmatpush.bf16.msra.mxu0 %v918
    %998 = vmatpush.bf16.msra.mxu0 %v917
    %999 = vmatpush.bf16.msra.mxu0 %v916
    %1000 = vmatpush.bf16.msra.mxu0 %v915
    %1001 = vmatmul.bf16.gmra.mxu0 %v766
    %v1002 = vpop.f32.mrf.mxu0
    %v1003 = vadd.f32 %v980, %v1002
    %v1004 = vpop.f32.mrf.mxu0
    %v1005 = vadd.f32 %v982, %v1004
    %1006 = vmatmul.bf16.gmra.mxu0 %v793
    %v1007 = vpop.f32.mrf.mxu0
    %v1008 = vadd.f32 %v985, %v1007
    %v1009 = vpop.f32.mrf.mxu0
    %v1010 = vadd.f32 %v987, %v1009
    %1011 = vmatmul.bf16.gmra.mxu0 %v792
    %v1012 = vpop.f32.mrf.mxu0
    %v1013 = vadd.f32 %v990, %v1012
    %v1014 = vpop.f32.mrf.mxu0
    %1015 = vdwg.mxu0
    %v1016 = vmul.f32 %v1003, %v177
    %v1017 = vmul.f32 %v1005, %v178
    %v1018 = vmul.f32 %v1008, %v179
    %v1019 = vmul.f32 %v1010, %v180
    %v1020 = vmul.f32 %v1013, %v181
    %v1021 = vadd.f32 %v1016, %v185
    %v1022 = vadd.f32 %v1017, %v186
    %v1023 = vadd.f32 %v1018, %v187
    %v1024 = vadd.f32 %v1019, %v188
    %v1025 = vadd.f32 %v1020, %v189
    %s1026 = scalar_lea.vmem [#allocation2], 384
    %v1027 = vld [vmem:[%s1026] sm:$0xf]
    %v1028 = vld [vmem:[%s1026 + $0x4] sm:$0xf]
    %v1029 = vld [vmem:[%s1026 + $0x8] sm:$0xf]
    %v1030 = vld [vmem:[%s1026 + $0xc] sm:$0xf]
    %v1031 = vld [vmem:[%s1026 + $0x10] sm:$0xf]
    %v1032 = vld [vmem:[%s1026 + $0x14] sm:$0xf]
    %v1033 = vld [vmem:[%s1026 + $0x18] sm:$0xf]
    %v1034 = vld [vmem:[%s1026 + $0x1c] sm:$0xf]
    %v1035 = vld [vmem:[%s1026 + $0x20] sm:$0xf]
    %v1036 = vld [vmem:[%s1026 + $0x24] sm:$0xf]
    %v1037 = vld [vmem:[%s1026 + $0x28] sm:$0xf]
    %v1038 = vld [vmem:[%s1026 + $0x2c] sm:$0xf]
    %v1039 = vld [vmem:[%s1026 + $0x30] sm:$0xf]
    %v1040 = vld [vmem:[%s1026 + $0x34] sm:$0xf]
    %v1041 = vld [vmem:[%s1026 + $0x38] sm:$0xf]
    %v1042 = vld [vmem:[%s1026 + $0x3c] sm:$0xf]
    %v1043 = vld [vmem:[%s1026 + $0x40] sm:$0xf]
    %v1044 = vld [vmem:[%s1026 + $0x44] sm:$0xf]
    %v1045 = vld [vmem:[%s1026 + $0x48] sm:$0xf]
    %v1046 = vld [vmem:[%s1026 + $0x4c] sm:$0xf]
    %v1047 = vld [vmem:[%s1026 + $0x50] sm:$0xf]
    %v1048 = vld [vmem:[%s1026 + $0x54] sm:$0xf]
    %v1049 = vld [vmem:[%s1026 + $0x58] sm:$0xf]
    %v1050 = vld [vmem:[%s1026 + $0x5c] sm:$0xf]
    %v1051 = vld [vmem:[%s1026 + $0x60] sm:$0xf]
    %v1052 = vld [vmem:[%s1026 + $0x64] sm:$0xf]
    %v1053 = vld [vmem:[%s1026 + $0x68] sm:$0xf]
    %v1054 = vld [vmem:[%s1026 + $0x6c] sm:$0xf]
    %v1055 = vld [vmem:[%s1026 + $0x70] sm:$0xf]
    %v1056 = vld [vmem:[%s1026 + $0x74] sm:$0xf]
    %v1057 = vld [vmem:[%s1026 + $0x78] sm:$0xf]
    %v1058 = vld [vmem:[%s1026 + $0x7c] sm:$0xf]
    %v1059 = vld [vmem:[%s1026 + $0x80] sm:$0xf]
    %v1060 = vld [vmem:[%s1026 + $0x84] sm:$0xf]
    %v1061 = vld [vmem:[%s1026 + $0x88] sm:$0xf]
    %v1062 = vld [vmem:[%s1026 + $0x8c] sm:$0xf]
    %v1063 = vld [vmem:[%s1026 + $0x90] sm:$0xf]
    %v1064 = vld [vmem:[%s1026 + $0x94] sm:$0xf]
    %v1065 = vld [vmem:[%s1026 + $0x98] sm:$0xf]
    %v1066 = vld [vmem:[%s1026 + $0x9c] sm:$0xf]
    %v1067 = vld [vmem:[%s1026 + $0xa0] sm:$0xf]
    %v1068 = vld [vmem:[%s1026 + $0xa4] sm:$0xf]
    %v1069 = vld [vmem:[%s1026 + $0xa8] sm:$0xf]
    %v1070 = vld [vmem:[%s1026 + $0xac] sm:$0xf]
    %v1071 = vld [vmem:[%s1026 + $0xb0] sm:$0xf]
    %v1072 = vld [vmem:[%s1026 + $0xb4] sm:$0xf]
    %v1073 = vld [vmem:[%s1026 + $0xb8] sm:$0xf]
    %v1074 = vld [vmem:[%s1026 + $0xbc] sm:$0xf]
    %s1075 = scalar_lea.vmem [#allocation4], 2
    %v1076 = vld [vmem:[%s1075] sm:$0x1]
    %v1077 = vrot.slane %v1021, 4
    %v1078 = vsel %vm239, %v1077, %v1025
    %v1079 = vrot.slane %v1022, 4
    %v1080 = vrot.slane %v1023, 4
    %v1081 = vrot.slane %v1024, 4
    %v1082 = vrot.slane %v1078, 4
    %v1083 = vsel %vm239, %v1079, %v1077
    %v1084 = vsel %vm239, %v1080, %v1079
    %v1085 = vsel %vm239, %v1081, %v1080
    %v1086 = vsel %vm239, %v1082, %v1081
    %v1092 = vrot.slane %v1021, 5
    %v1093 = vrot.slane %v1022, 5
    %v1094 = vsel %vm255, %v1092, %v1093
    %v1095 = vrot.slane %v1023, 5
    %v1096 = vsel %vm255, %v1093, %v1095
    %v1097 = vrot.slane %v1024, 5
    %v1098 = vsel %vm255, %v1095, %v1097
    %v1099 = vrot.slane %v1025, 5
    %v1100 = vsel %vm255, %v1097, %v1099
    %v1107 = vrot.slane %v1021, 6
    %v1108 = vrot.slane %v1022, 6
    %v1109 = vsel %vm271, %v1107, %v1108
    %v1110 = vrot.slane %v1023, 6
    %v1111 = vsel %vm271, %v1108, %v1110
    %v1112 = vrot.slane %v1024, 6
    %v1113 = vsel %vm271, %v1110, %v1112
    %v1114 = vrot.slane %v1078, 6
    %v1115 = vsel %vm271, %v1112, %v1114
    %v1121 = vpack.c.bf16 %v1083, %v1078
    %v1122 = vpack.c.bf16 %v1094, %v1092
    %v1123 = vpack.c.bf16 %v1109, %v1107
    %v1124 = vpack.c.bf16 %v1085, %v1084
    %v1125 = vpack.c.bf16 %v1098, %v1096
    %v1126 = vpack.c.bf16 %v1113, %v1111
    %v1127 = vpack.c.bf16 %v1086, %v1086
    %v1128 = vpack.c.bf16 %v1100, %v1100
    %v1129 = vpack.c.bf16 %v1115, %v1115
    %v1131 = vperm.slane %v1076, 0
    %v1134 = vshrl.u32 %v1121, 16
    %v1136 = vrot.slane %v1134, 1
    %v1137 = vshll.u32 %v1121, 16
    %v1139 = vrot.slane %v1137, 2
    %v1140 = vor.u32 %v1136, %v1139
    %v1142 = vshrl.u32 %v1124, 16
    %v1144 = vrot.slane %v1142, 1
    %v1145 = vshll.u32 %v1124, 16
    %v1147 = vrot.slane %v1145, 2
    %v1148 = vor.u32 %v1144, %v1147
    %v1149 = vsel %vm298, %v1140, %v1148
    %v1151 = vshrl.u32 %v1122, 16
    %v1153 = vrot.slane %v1151, 1
    %v1154 = vshll.u32 %v1122, 16
    %v1156 = vrot.slane %v1154, 2
    %v1157 = vor.u32 %v1153, %v1156
    %v1159 = vshrl.u32 %v1125, 16
    %v1161 = vrot.slane %v1159, 1
    %v1162 = vshll.u32 %v1125, 16
    %v1164 = vrot.slane %v1162, 2
    %v1165 = vor.u32 %v1161, %v1164
    %v1166 = vsel %vm298, %v1157, %v1165
    %v1168 = vshrl.u32 %v1123, 16
    %v1170 = vrot.slane %v1168, 1
    %v1171 = vshll.u32 %v1123, 16
    %v1173 = vrot.slane %v1171, 2
    %v1174 = vor.u32 %v1170, %v1173
    %v1176 = vshrl.u32 %v1126, 16
    %v1178 = vrot.slane %v1176, 1
    %v1179 = vshll.u32 %v1126, 16
    %v1181 = vrot.slane %v1179, 2
    %v1182 = vor.u32 %v1178, %v1181
    %v1183 = vsel %vm298, %v1174, %v1182
    %v1185 = vshrl.u32 %v1127, 16
    %v1187 = vrot.slane %v1185, 1
    %v1188 = vshll.u32 %v1127, 16
    %v1190 = vrot.slane %v1188, 2
    %v1191 = vor.u32 %v1187, %v1190
    %v1192 = vsel %vm298, %v1148, %v1191
    %v1194 = vshrl.u32 %v1128, 16
    %v1196 = vrot.slane %v1194, 1
    %v1197 = vshll.u32 %v1128, 16
    %v1199 = vrot.slane %v1197, 2
    %v1200 = vor.u32 %v1196, %v1199
    %v1201 = vsel %vm298, %v1165, %v1200
    %v1203 = vshrl.u32 %v1129, 16
    %v1205 = vrot.slane %v1203, 1
    %v1206 = vshll.u32 %v1129, 16
    %v1208 = vrot.slane %v1206, 2
    %v1209 = vor.u32 %v1205, %v1208
    %v1210 = vsel %vm298, %v1182, %v1209
    %v1268 = vunpack.c.l.b16 %v1027
    %v1269 = vunpack.c.l.b16 %v1028
    %v1270 = vunpack.c.l.b16 %v1029
    %v1271 = vunpack.c.l.b16 %v1030
    %v1272 = vunpack.c.l.b16 %v1031
    %v1273 = vunpack.c.l.b16 %v1032
    %v1274 = vunpack.c.l.b16 %v1033
    %v1275 = vunpack.c.l.b16 %v1034
    %v1276 = vunpack.c.l.b16 %v1035
    %v1277 = vunpack.c.l.b16 %v1036
    %v1278 = vunpack.c.l.b16 %v1037
    %v1279 = vunpack.c.l.b16 %v1038
    %v1280 = vunpack.c.l.b16 %v1039
    %v1281 = vunpack.c.l.b16 %v1040
    %v1282 = vunpack.c.l.b16 %v1041
    %v1283 = vunpack.c.l.b16 %v1042
    %v1284 = vunpack.c.l.b16 %v1043
    %v1285 = vunpack.c.l.b16 %v1044
    %v1286 = vunpack.c.l.b16 %v1045
    %v1287 = vunpack.c.l.b16 %v1046
    %v1288 = vunpack.c.l.b16 %v1047
    %v1289 = vunpack.c.l.b16 %v1048
    %v1290 = vunpack.c.l.b16 %v1049
    %v1291 = vunpack.c.l.b16 %v1050
    %v1292 = vunpack.c.l.b16 %v1051
    %v1293 = vunpack.c.l.b16 %v1052
    %v1294 = vunpack.c.l.b16 %v1053
    %v1295 = vunpack.c.l.b16 %v1054
    %v1296 = vunpack.c.l.b16 %v1055
    %v1297 = vunpack.c.l.b16 %v1056
    %v1298 = vunpack.c.l.b16 %v1057
    %v1299 = vunpack.c.l.b16 %v1058
    %v1300 = vunpack.c.l.b16 %v1059
    %v1301 = vunpack.c.l.b16 %v1060
    %v1302 = vunpack.c.l.b16 %v1061
    %v1303 = vunpack.c.l.b16 %v1062
    %v1304 = vunpack.c.l.b16 %v1063
    %v1305 = vunpack.c.l.b16 %v1064
    %v1306 = vunpack.c.l.b16 %v1065
    %v1307 = vunpack.c.l.b16 %v1066
    %v1308 = vunpack.c.l.b16 %v1067
    %v1309 = vunpack.c.l.b16 %v1068
    %v1310 = vunpack.c.l.b16 %v1069
    %v1311 = vunpack.c.l.b16 %v1070
    %v1312 = vunpack.c.l.b16 %v1071
    %v1313 = vunpack.c.l.b16 %v1072
    %v1314 = vunpack.c.l.b16 %v1073
    %v1315 = vunpack.c.l.b16 %v1074
    %v1316 = vpack.c.b16 %v1269, %v1268
    %v1317 = vpack.c.b16 %v1271, %v1270
    %v1318 = vpack.c.b16 %v1273, %v1272
    %v1319 = vpack.c.b16 %v1275, %v1274
    %v1320 = vpack.c.b16 %v1277, %v1276
    %v1321 = vpack.c.b16 %v1279, %v1278
    %v1322 = vpack.c.b16 %v1281, %v1280
    %v1323 = vpack.c.b16 %v1283, %v1282
    %v1324 = vpack.c.b16 %v1285, %v1284
    %v1325 = vpack.c.b16 %v1287, %v1286
    %v1326 = vpack.c.b16 %v1289, %v1288
    %v1327 = vpack.c.b16 %v1291, %v1290
    %v1328 = vpack.c.b16 %v1293, %v1292
    %v1329 = vpack.c.b16 %v1295, %v1294
    %v1330 = vpack.c.b16 %v1297, %v1296
    %v1331 = vpack.c.b16 %v1299, %v1298
    %v1332 = vpack.c.b16 %v1301, %v1300
    %v1333 = vpack.c.b16 %v1303, %v1302
    %v1334 = vpack.c.b16 %v1305, %v1304
    %v1335 = vpack.c.b16 %v1307, %v1306
    %v1336 = vpack.c.b16 %v1309, %v1308
    %v1337 = vpack.c.b16 %v1311, %v1310
    %v1338 = vpack.c.b16 %v1313, %v1312
    %v1339 = vpack.c.b16 %v1315, %v1314
    %1364 = vmatpush.bf16.msra.mxu0 %v1323
    %1365 = vmatpush.bf16.msra.mxu0 %v1322
    %1366 = vmatpush.bf16.msra.mxu0 %v1321
    %1367 = vmatpush.bf16.msra.mxu0 %v1320
    %1368 = vmatpush.bf16.msra.mxu0 %v1319
    %1369 = vmatpush.bf16.msra.mxu0 %v1318
    %1370 = vmatpush.bf16.msra.mxu0 %v1317
    %1371 = vmatpush.bf16.msra.mxu0 %v1316
    %1372 = vmatmul.bf16.gmra.mxu0 %v1149
    %v1373 = vpop.f32.mrf.mxu0
    %v1374 = vadd.f32 %v1131, %v1373
    %v1375 = vpop.f32.mrf.mxu0
    %v1376 = vadd.f32 %v1131, %v1375
    %1377 = vmatmul.bf16.gmra.mxu0 %v1192
    %v1378 = vpop.f32.mrf.mxu0
    %v1379 = vadd.f32 %v1131, %v1378
    %v1380 = vpop.f32.mrf.mxu0
    %v1381 = vadd.f32 %v1131, %v1380
    %1382 = vmatmul.bf16.gmra.mxu0 %v1191
    %v1383 = vpop.f32.mrf.mxu0
    %v1384 = vadd.f32 %v1131, %v1383
    %v1385 = vpop.f32.mrf.mxu0
    %1386 = vdwg.mxu0
    %1387 = vmatpush.bf16.msra.mxu0 %v1331
    %1388 = vmatpush.bf16.msra.mxu0 %v1330
    %1389 = vmatpush.bf16.msra.mxu0 %v1329
    %1390 = vmatpush.bf16.msra.mxu0 %v1328
    %1391 = vmatpush.bf16.msra.mxu0 %v1327
    %1392 = vmatpush.bf16.msra.mxu0 %v1326
    %1393 = vmatpush.bf16.msra.mxu0 %v1325
    %1394 = vmatpush.bf16.msra.mxu0 %v1324
    %1395 = vmatmul.bf16.gmra.mxu0 %v1166
    %v1396 = vpop.f32.mrf.mxu0
    %v1397 = vadd.f32 %v1374, %v1396
    %v1398 = vpop.f32.mrf.mxu0
    %v1399 = vadd.f32 %v1376, %v1398
    %1400 = vmatmul.bf16.gmra.mxu0 %v1201
    %v1401 = vpop.f32.mrf.mxu0
    %v1402 = vadd.f32 %v1379, %v1401
    %v1403 = vpop.f32.mrf.mxu0
    %v1404 = vadd.f32 %v1381, %v1403
    %1405 = vmatmul.bf16.gmra.mxu0 %v1200
    %v1406 = vpop.f32.mrf.mxu0
    %v1407 = vadd.f32 %v1384, %v1406
    %v1408 = vpop.f32.mrf.mxu0
    %1409 = vdwg.mxu0
    %1410 = vmatpush.bf16.msra.mxu0 %v1339
    %1411 = vmatpush.bf16.msra.mxu0 %v1338
    %1412 = vmatpush.bf16.msra.mxu0 %v1337
    %1413 = vmatpush.bf16.msra.mxu0 %v1336
    %1414 = vmatpush.bf16.msra.mxu0 %v1335
    %1415 = vmatpush.bf16.msra.mxu0 %v1334
    %1416 = vmatpush.bf16.msra.mxu0 %v1333
    %1417 = vmatpush.bf16.msra.mxu0 %v1332
    %1418 = vmatmul.bf16.gmra.mxu0 %v1183
    %v1419 = vpop.f32.mrf.mxu0
    %v1420 = vadd.f32 %v1397, %v1419
    %v1421 = vpop.f32.mrf.mxu0
    %v1422 = vadd.f32 %v1399, %v1421
    %1423 = vmatmul.bf16.gmra.mxu0 %v1210
    %v1424 = vpop.f32.mrf.mxu0
    %v1425 = vadd.f32 %v1402, %v1424
    %v1426 = vpop.f32.mrf.mxu0
    %v1427 = vadd.f32 %v1404, %v1426
    %1428 = vmatmul.bf16.gmra.mxu0 %v1209
    %v1429 = vpop.f32.mrf.mxu0
    %v1430 = vadd.f32 %v1407, %v1429
    %v1431 = vpop.f32.mrf.mxu0
    %1432 = vdwg.mxu0
    %v1433 = vmax.f32 %v1420, 0.0
    %v1434 = vmax.f32 %v1422, 0.0
    %v1435 = vmax.f32 %v1425, 0.0
    %v1436 = vmax.f32 %v1427, 0.0
    %v1437 = vmax.f32 %v1430, 0.0
    %v1438 = vmul.f32 %v1433, %v177
    %v1439 = vmul.f32 %v1434, %v178
    %v1440 = vmul.f32 %v1435, %v179
    %v1441 = vmul.f32 %v1436, %v180
    %v1442 = vmul.f32 %v1437, %v181
    %s1443 = scalar_lea.vmem [#allocation2], 576
    %v1444 = vld [vmem:[%s1443] sm:$0xf]
    %v1445 = vld [vmem:[%s1443 + $0x4] sm:$0xf]
    %v1446 = vld [vmem:[%s1443 + $0x8] sm:$0xf]
    %v1447 = vld [vmem:[%s1443 + $0xc] sm:$0xf]
    %v1448 = vld [vmem:[%s1443 + $0x10] sm:$0xf]
    %v1449 = vld [vmem:[%s1443 + $0x14] sm:$0xf]
    %v1450 = vld [vmem:[%s1443 + $0x18] sm:$0xf]
    %v1451 = vld [vmem:[%s1443 + $0x1c] sm:$0xf]
    %v1452 = vld [vmem:[%s1443 + $0x20] sm:$0xf]
    %v1453 = vld [vmem:[%s1443 + $0x24] sm:$0xf]
    %v1454 = vld [vmem:[%s1443 + $0x28] sm:$0xf]
    %v1455 = vld [vmem:[%s1443 + $0x2c] sm:$0xf]
    %v1456 = vld [vmem:[%s1443 + $0x30] sm:$0xf]
    %v1457 = vld [vmem:[%s1443 + $0x34] sm:$0xf]
    %v1458 = vld [vmem:[%s1443 + $0x38] sm:$0xf]
    %v1459 = vld [vmem:[%s1443 + $0x3c] sm:$0xf]
    %v1460 = vld [vmem:[%s1443 + $0x40] sm:$0xf]
    %v1461 = vld [vmem:[%s1443 + $0x44] sm:$0xf]
    %v1462 = vld [vmem:[%s1443 + $0x48] sm:$0xf]
    %v1463 = vld [vmem:[%s1443 + $0x4c] sm:$0xf]
    %v1464 = vld [vmem:[%s1443 + $0x50] sm:$0xf]
    %v1465 = vld [vmem:[%s1443 + $0x54] sm:$0xf]
    %v1466 = vld [vmem:[%s1443 + $0x58] sm:$0xf]
    %v1467 = vld [vmem:[%s1443 + $0x5c] sm:$0xf]
    %v1468 = vld [vmem:[%s1443 + $0x60] sm:$0xf]
    %v1469 = vld [vmem:[%s1443 + $0x64] sm:$0xf]
    %v1470 = vld [vmem:[%s1443 + $0x68] sm:$0xf]
    %v1471 = vld [vmem:[%s1443 + $0x6c] sm:$0xf]
    %v1472 = vld [vmem:[%s1443 + $0x70] sm:$0xf]
    %v1473 = vld [vmem:[%s1443 + $0x74] sm:$0xf]
    %v1474 = vld [vmem:[%s1443 + $0x78] sm:$0xf]
    %v1475 = vld [vmem:[%s1443 + $0x7c] sm:$0xf]
    %v1476 = vld [vmem:[%s1443 + $0x80] sm:$0xf]
    %v1477 = vld [vmem:[%s1443 + $0x84] sm:$0xf]
    %v1478 = vld [vmem:[%s1443 + $0x88] sm:$0xf]
    %v1479 = vld [vmem:[%s1443 + $0x8c] sm:$0xf]
    %v1480 = vld [vmem:[%s1443 + $0x90] sm:$0xf]
    %v1481 = vld [vmem:[%s1443 + $0x94] sm:$0xf]
    %v1482 = vld [vmem:[%s1443 + $0x98] sm:$0xf]
    %v1483 = vld [vmem:[%s1443 + $0x9c] sm:$0xf]
    %v1484 = vld [vmem:[%s1443 + $0xa0] sm:$0xf]
    %v1485 = vld [vmem:[%s1443 + $0xa4] sm:$0xf]
    %v1486 = vld [vmem:[%s1443 + $0xa8] sm:$0xf]
    %v1487 = vld [vmem:[%s1443 + $0xac] sm:$0xf]
    %v1488 = vld [vmem:[%s1443 + $0xb0] sm:$0xf]
    %v1489 = vld [vmem:[%s1443 + $0xb4] sm:$0xf]
    %v1490 = vld [vmem:[%s1443 + $0xb8] sm:$0xf]
    %v1491 = vld [vmem:[%s1443 + $0xbc] sm:$0xf]
    %s1492 = scalar_lea.vmem [#allocation4], 3
    %v1493 = vld [vmem:[%s1492] sm:$0x1]
    %v1494 = vrot.slane %v1438, 4
    %v1495 = vsel %vm239, %v1494, %v1442
    %v1496 = vrot.slane %v1439, 4
    %v1497 = vrot.slane %v1440, 4
    %v1498 = vrot.slane %v1441, 4
    %v1499 = vrot.slane %v1495, 4
    %v1500 = vsel %vm239, %v1496, %v1494
    %v1501 = vsel %vm239, %v1497, %v1496
    %v1502 = vsel %vm239, %v1498, %v1497
    %v1503 = vsel %vm239, %v1499, %v1498
    %v1509 = vrot.slane %v1438, 5
    %v1510 = vrot.slane %v1439, 5
    %v1511 = vsel %vm255, %v1509, %v1510
    %v1512 = vrot.slane %v1440, 5
    %v1513 = vsel %vm255, %v1510, %v1512
    %v1514 = vrot.slane %v1441, 5
    %v1515 = vsel %vm255, %v1512, %v1514
    %v1516 = vrot.slane %v1442, 5
    %v1517 = vsel %vm255, %v1514, %v1516
    %v1524 = vrot.slane %v1438, 6
    %v1525 = vrot.slane %v1439, 6
    %v1526 = vsel %vm271, %v1524, %v1525
    %v1527 = vrot.slane %v1440, 6
    %v1528 = vsel %vm271, %v1525, %v1527
    %v1529 = vrot.slane %v1441, 6
    %v1530 = vsel %vm271, %v1527, %v1529
    %v1531 = vrot.slane %v1495, 6
    %v1532 = vsel %vm271, %v1529, %v1531
    %v1538 = vpack.c.bf16 %v1500, %v1495
    %v1539 = vpack.c.bf16 %v1511, %v1509
    %v1540 = vpack.c.bf16 %v1526, %v1524
    %v1541 = vpack.c.bf16 %v1502, %v1501
    %v1542 = vpack.c.bf16 %v1515, %v1513
    %v1543 = vpack.c.bf16 %v1530, %v1528
    %v1544 = vpack.c.bf16 %v1503, %v1503
    %v1545 = vpack.c.bf16 %v1517, %v1517
    %v1546 = vpack.c.bf16 %v1532, %v1532
    %v1548 = vperm.slane %v1493, 0
    %v1551 = vshrl.u32 %v1538, 16
    %v1553 = vrot.slane %v1551, 1
    %v1554 = vshll.u32 %v1538, 16
    %v1556 = vrot.slane %v1554, 2
    %v1557 = vor.u32 %v1553, %v1556
    %v1559 = vshrl.u32 %v1541, 16
    %v1561 = vrot.slane %v1559, 1
    %v1562 = vshll.u32 %v1541, 16
    %v1564 = vrot.slane %v1562, 2
    %v1565 = vor.u32 %v1561, %v1564
    %v1566 = vsel %vm298, %v1557, %v1565
    %v1568 = vshrl.u32 %v1539, 16
    %v1570 = vrot.slane %v1568, 1
    %v1571 = vshll.u32 %v1539, 16
    %v1573 = vrot.slane %v1571, 2
    %v1574 = vor.u32 %v1570, %v1573
    %v1576 = vshrl.u32 %v1542, 16
    %v1578 = vrot.slane %v1576, 1
    %v1579 = vshll.u32 %v1542, 16
    %v1581 = vrot.slane %v1579, 2
    %v1582 = vor.u32 %v1578, %v1581
    %v1583 = vsel %vm298, %v1574, %v1582
    %v1585 = vshrl.u32 %v1540, 16
    %v1587 = vrot.slane %v1585, 1
    %v1588 = vshll.u32 %v1540, 16
    %v1590 = vrot.slane %v1588, 2
    %v1591 = vor.u32 %v1587, %v1590
    %v1593 = vshrl.u32 %v1543, 16
    %v1595 = vrot.slane %v1593, 1
    %v1596 = vshll.u32 %v1543, 16
    %v1598 = vrot.slane %v1596, 2
    %v1599 = vor.u32 %v1595, %v1598
    %v1600 = vsel %vm298, %v1591, %v1599
    %v1602 = vshrl.u32 %v1544, 16
    %v1604 = vrot.slane %v1602, 1
    %v1605 = vshll.u32 %v1544, 16
    %v1607 = vrot.slane %v1605, 2
    %v1608 = vor.u32 %v1604, %v1607
    %v1609 = vsel %vm298, %v1565, %v1608
    %v1611 = vshrl.u32 %v1545, 16
    %v1613 = vrot.slane %v1611, 1
    %v1614 = vshll.u32 %v1545, 16
    %v1616 = vrot.slane %v1614, 2
    %v1617 = vor.u32 %v1613, %v1616
    %v1618 = vsel %vm298, %v1582, %v1617
    %v1620 = vshrl.u32 %v1546, 16
    %v1622 = vrot.slane %v1620, 1
    %v1623 = vshll.u32 %v1546, 16
    %v1625 = vrot.slane %v1623, 2
    %v1626 = vor.u32 %v1622, %v1625
    %v1627 = vsel %vm298, %v1599, %v1626
    %v1685 = vunpack.c.l.b16 %v1444
    %v1686 = vunpack.c.l.b16 %v1445
    %v1687 = vunpack.c.l.b16 %v1446
    %v1688 = vunpack.c.l.b16 %v1447
    %v1689 = vunpack.c.l.b16 %v1448
    %v1690 = vunpack.c.l.b16 %v1449
    %v1691 = vunpack.c.l.b16 %v1450
    %v1692 = vunpack.c.l.b16 %v1451
    %v1693 = vunpack.c.l.b16 %v1452
    %v1694 = vunpack.c.l.b16 %v1453
    %v1695 = vunpack.c.l.b16 %v1454
    %v1696 = vunpack.c.l.b16 %v1455
    %v1697 = vunpack.c.l.b16 %v1456
    %v1698 = vunpack.c.l.b16 %v1457
    %v1699 = vunpack.c.l.b16 %v1458
    %v1700 = vunpack.c.l.b16 %v1459
    %v1701 = vunpack.c.l.b16 %v1460
    %v1702 = vunpack.c.l.b16 %v1461
    %v1703 = vunpack.c.l.b16 %v1462
    %v1704 = vunpack.c.l.b16 %v1463
    %v1705 = vunpack.c.l.b16 %v1464
    %v1706 = vunpack.c.l.b16 %v1465
    %v1707 = vunpack.c.l.b16 %v1466
    %v1708 = vunpack.c.l.b16 %v1467
    %v1709 = vunpack.c.l.b16 %v1468
    %v1710 = vunpack.c.l.b16 %v1469
    %v1711 = vunpack.c.l.b16 %v1470
    %v1712 = vunpack.c.l.b16 %v1471
    %v1713 = vunpack.c.l.b16 %v1472
    %v1714 = vunpack.c.l.b16 %v1473
    %v1715 = vunpack.c.l.b16 %v1474
    %v1716 = vunpack.c.l.b16 %v1475
    %v1717 = vunpack.c.l.b16 %v1476
    %v1718 = vunpack.c.l.b16 %v1477
    %v1719 = vunpack.c.l.b16 %v1478
    %v1720 = vunpack.c.l.b16 %v1479
    %v1721 = vunpack.c.l.b16 %v1480
    %v1722 = vunpack.c.l.b16 %v1481
    %v1723 = vunpack.c.l.b16 %v1482
    %v1724 = vunpack.c.l.b16 %v1483
    %v1725 = vunpack.c.l.b16 %v1484
    %v1726 = vunpack.c.l.b16 %v1485
    %v1727 = vunpack.c.l.b16 %v1486
    %v1728 = vunpack.c.l.b16 %v1487
    %v1729 = vunpack.c.l.b16 %v1488
    %v1730 = vunpack.c.l.b16 %v1489
    %v1731 = vunpack.c.l.b16 %v1490
    %v1732 = vunpack.c.l.b16 %v1491
    %v1733 = vpack.c.b16 %v1686, %v1685
    %v1734 = vpack.c.b16 %v1688, %v1687
    %v1735 = vpack.c.b16 %v1690, %v1689
    %v1736 = vpack.c.b16 %v1692, %v1691
    %v1737 = vpack.c.b16 %v1694, %v1693
    %v1738 = vpack.c.b16 %v1696, %v1695
    %v1739 = vpack.c.b16 %v1698, %v1697
    %v1740 = vpack.c.b16 %v1700, %v1699
    %v1741 = vpack.c.b16 %v1702, %v1701
    %v1742 = vpack.c.b16 %v1704, %v1703
    %v1743 = vpack.c.b16 %v1706, %v1705
    %v1744 = vpack.c.b16 %v1708, %v1707
    %v1745 = vpack.c.b16 %v1710, %v1709
    %v1746 = vpack.c.b16 %v1712, %v1711
    %v1747 = vpack.c.b16 %v1714, %v1713
    %v1748 = vpack.c.b16 %v1716, %v1715
    %v1749 = vpack.c.b16 %v1718, %v1717
    %v1750 = vpack.c.b16 %v1720, %v1719
    %v1751 = vpack.c.b16 %v1722, %v1721
    %v1752 = vpack.c.b16 %v1724, %v1723
    %v1753 = vpack.c.b16 %v1726, %v1725
    %v1754 = vpack.c.b16 %v1728, %v1727
    %v1755 = vpack.c.b16 %v1730, %v1729
    %v1756 = vpack.c.b16 %v1732, %v1731
    %1781 = vmatpush.bf16.msra.mxu0 %v1740
    %1782 = vmatpush.bf16.msra.mxu0 %v1739
    %1783 = vmatpush.bf16.msra.mxu0 %v1738
    %1784 = vmatpush.bf16.msra.mxu0 %v1737
    %1785 = vmatpush.bf16.msra.mxu0 %v1736
    %1786 = vmatpush.bf16.msra.mxu0 %v1735
    %1787 = vmatpush.bf16.msra.mxu0 %v1734
    %1788 = vmatpush.bf16.msra.mxu0 %v1733
    %1789 = vmatmul.bf16.gmra.mxu0 %v1566
    %v1790 = vpop.f32.mrf.mxu0
    %v1791 = vadd.f32 %v1548, %v1790
    %v1792 = vpop.f32.mrf.mxu0
    %v1793 = vadd.f32 %v1548, %v1792
    %1794 = vmatmul.bf16.gmra.mxu0 %v1609
    %v1795 = vpop.f32.mrf.mxu0
    %v1796 = vadd.f32 %v1548, %v1795
    %v1797 = vpop.f32.mrf.mxu0
    %v1798 = vadd.f32 %v1548, %v1797
    %1799 = vmatmul.bf16.gmra.mxu0 %v1608
    %v1800 = vpop.f32.mrf.mxu0
    %v1801 = vadd.f32 %v1548, %v1800
    %v1802 = vpop.f32.mrf.mxu0
    %1803 = vdwg.mxu0
    %1804 = vmatpush.bf16.msra.mxu0 %v1748
    %1805 = vmatpush.bf16.msra.mxu0 %v1747
    %1806 = vmatpush.bf16.msra.mxu0 %v1746
    %1807 = vmatpush.bf16.msra.mxu0 %v1745
    %1808 = vmatpush.bf16.msra.mxu0 %v1744
    %1809 = vmatpush.bf16.msra.mxu0 %v1743
    %1810 = vmatpush.bf16.msra.mxu0 %v1742
    %1811 = vmatpush.bf16.msra.mxu0 %v1741
    %1812 = vmatmul.bf16.gmra.mxu0 %v1583
    %v1813 = vpop.f32.mrf.mxu0
    %v1814 = vadd.f32 %v1791, %v1813
    %v1815 = vpop.f32.mrf.mxu0
    %v1816 = vadd.f32 %v1793, %v1815
    %1817 = vmatmul.bf16.gmra.mxu0 %v1618
    %v1818 = vpop.f32.mrf.mxu0
    %v1819 = vadd.f32 %v1796, %v1818
    %v1820 = vpop.f32.mrf.mxu0
    %v1821 = vadd.f32 %v1798, %v1820
    %1822 = vmatmul.bf16.gmra.mxu0 %v1617
    %v1823 = vpop.f32.mrf.mxu0
    %v1824 = vadd.f32 %v1801, %v1823
    %v1825 = vpop.f32.mrf.mxu0
    %1826 = vdwg.mxu0
    %1827 = vmatpush.bf16.msra.mxu0 %v1756
    %1828 = vmatpush.bf16.msra.mxu0 %v1755
    %1829 = vmatpush.bf16.msra.mxu0 %v1754
    %1830 = vmatpush.bf16.msra.mxu0 %v1753
    %1831 = vmatpush.bf16.msra.mxu0 %v1752
    %1832 = vmatpush.bf16.msra.mxu0 %v1751
    %1833 = vmatpush.bf16.msra.mxu0 %v1750
    %1834 = vmatpush.bf16.msra.mxu0 %v1749
    %1835 = vmatmul.bf16.gmra.mxu0 %v1600
    %v1836 = vpop.f32.mrf.mxu0
    %v1837 = vadd.f32 %v1814, %v1836
    %v1838 = vpop.f32.mrf.mxu0
    %v1839 = vadd.f32 %v1816, %v1838
    %1840 = vmatmul.bf16.gmra.mxu0 %v1627
    %v1841 = vpop.f32.mrf.mxu0
    %v1842 = vadd.f32 %v1819, %v1841
    %v1843 = vpop.f32.mrf.mxu0
    %v1844 = vadd.f32 %v1821, %v1843
    %1845 = vmatmul.bf16.gmra.mxu0 %v1626
    %v1846 = vpop.f32.mrf.mxu0
    %v1847 = vadd.f32 %v1824, %v1846
    %v1848 = vpop.f32.mrf.mxu0
    %1849 = vdwg.mxu0
    %v1850 = vmul.f32 %v1837, %v177
    %v1851 = vmul.f32 %v1839, %v178
    %v1852 = vmul.f32 %v1842, %v179
    %v1853 = vmul.f32 %v1844, %v180
    %v1854 = vmul.f32 %v1847, %v181
    %v1855 = vadd.f32 %v1850, %v1021
    %v1856 = vadd.f32 %v1851, %v1022
    %v1857 = vadd.f32 %v1852, %v1023
    %v1858 = vadd.f32 %v1853, %v1024
    %v1859 = vadd.f32 %v1854, %v1025
    %s1860 = scalar_lea.vmem [#allocation2], 768
    %v1861 = vld [vmem:[%s1860] sm:$0xf]
    %v1862 = vld [vmem:[%s1860 + $0x4] sm:$0xf]
    %v1863 = vld [vmem:[%s1860 + $0x8] sm:$0xf]
    %v1864 = vld [vmem:[%s1860 + $0xc] sm:$0xf]
    %v1865 = vld [vmem:[%s1860 + $0x10] sm:$0xf]
    %v1866 = vld [vmem:[%s1860 + $0x14] sm:$0xf]
    %v1867 = vld [vmem:[%s1860 + $0x18] sm:$0xf]
    %v1868 = vld [vmem:[%s1860 + $0x1c] sm:$0xf]
    %v1869 = vld [vmem:[%s1860 + $0x20] sm:$0xf]
    %v1870 = vld [vmem:[%s1860 + $0x24] sm:$0xf]
    %v1871 = vld [vmem:[%s1860 + $0x28] sm:$0xf]
    %v1872 = vld [vmem:[%s1860 + $0x2c] sm:$0xf]
    %v1873 = vld [vmem:[%s1860 + $0x30] sm:$0xf]
    %v1874 = vld [vmem:[%s1860 + $0x34] sm:$0xf]
    %v1875 = vld [vmem:[%s1860 + $0x38] sm:$0xf]
    %v1876 = vld [vmem:[%s1860 + $0x3c] sm:$0xf]
    %v1877 = vld [vmem:[%s1860 + $0x40] sm:$0xf]
    %v1878 = vld [vmem:[%s1860 + $0x44] sm:$0xf]
    %v1879 = vld [vmem:[%s1860 + $0x48] sm:$0xf]
    %v1880 = vld [vmem:[%s1860 + $0x4c] sm:$0xf]
    %v1881 = vld [vmem:[%s1860 + $0x50] sm:$0xf]
    %v1882 = vld [vmem:[%s1860 + $0x54] sm:$0xf]
    %v1883 = vld [vmem:[%s1860 + $0x58] sm:$0xf]
    %v1884 = vld [vmem:[%s1860 + $0x5c] sm:$0xf]
    %v1885 = vld [vmem:[%s1860 + $0x60] sm:$0xf]
    %v1886 = vld [vmem:[%s1860 + $0x64] sm:$0xf]
    %v1887 = vld [vmem:[%s1860 + $0x68] sm:$0xf]
    %v1888 = vld [vmem:[%s1860 + $0x6c] sm:$0xf]
    %v1889 = vld [vmem:[%s1860 + $0x70] sm:$0xf]
    %v1890 = vld [vmem:[%s1860 + $0x74] sm:$0xf]
    %v1891 = vld [vmem:[%s1860 + $0x78] sm:$0xf]
    %v1892 = vld [vmem:[%s1860 + $0x7c] sm:$0xf]
    %v1893 = vld [vmem:[%s1860 + $0x80] sm:$0xf]
    %v1894 = vld [vmem:[%s1860 + $0x84] sm:$0xf]
    %v1895 = vld [vmem:[%s1860 + $0x88] sm:$0xf]
    %v1896 = vld [vmem:[%s1860 + $0x8c] sm:$0xf]
    %v1897 = vld [vmem:[%s1860 + $0x90] sm:$0xf]
    %v1898 = vld [vmem:[%s1860 + $0x94] sm:$0xf]
    %v1899 = vld [vmem:[%s1860 + $0x98] sm:$0xf]
    %v1900 = vld [vmem:[%s1860 + $0x9c] sm:$0xf]
    %v1901 = vld [vmem:[%s1860 + $0xa0] sm:$0xf]
    %v1902 = vld [vmem:[%s1860 + $0xa4] sm:$0xf]
    %v1903 = vld [vmem:[%s1860 + $0xa8] sm:$0xf]
    %v1904 = vld [vmem:[%s1860 + $0xac] sm:$0xf]
    %v1905 = vld [vmem:[%s1860 + $0xb0] sm:$0xf]
    %v1906 = vld [vmem:[%s1860 + $0xb4] sm:$0xf]
    %v1907 = vld [vmem:[%s1860 + $0xb8] sm:$0xf]
    %v1908 = vld [vmem:[%s1860 + $0xbc] sm:$0xf]
    %s1909 = scalar_lea.vmem [#allocation4], 4
    %v1910 = vld [vmem:[%s1909] sm:$0x1]
    %v1911 = vrot.slane %v1855, 4
    %v1912 = vsel %vm239, %v1911, %v1859
    %v1913 = vrot.slane %v1856, 4
    %v1914 = vrot.slane %v1857, 4
    %v1915 = vrot.slane %v1858, 4
    %v1916 = vrot.slane %v1912, 4
    %v1917 = vsel %vm239, %v1913, %v1911
    %v1918 = vsel %vm239, %v1914, %v1913
    %v1919 = vsel %vm239, %v1915, %v1914
    %v1920 = vsel %vm239, %v1916, %v1915
    %v1926 = vrot.slane %v1855, 5
    %v1927 = vrot.slane %v1856, 5
    %v1928 = vsel %vm255, %v1926, %v1927
    %v1929 = vrot.slane %v1857, 5
    %v1930 = vsel %vm255, %v1927, %v1929
    %v1931 = vrot.slane %v1858, 5
    %v1932 = vsel %vm255, %v1929, %v1931
    %v1933 = vrot.slane %v1859, 5
    %v1934 = vsel %vm255, %v1931, %v1933
    %v1941 = vrot.slane %v1855, 6
    %v1942 = vrot.slane %v1856, 6
    %v1943 = vsel %vm271, %v1941, %v1942
    %v1944 = vrot.slane %v1857, 6
    %v1945 = vsel %vm271, %v1942, %v1944
    %v1946 = vrot.slane %v1858, 6
    %v1947 = vsel %vm271, %v1944, %v1946
    %v1948 = vrot.slane %v1912, 6
    %v1949 = vsel %vm271, %v1946, %v1948
    %v1955 = vpack.c.bf16 %v1917, %v1912
    %v1956 = vpack.c.bf16 %v1928, %v1926
    %v1957 = vpack.c.bf16 %v1943, %v1941
    %v1958 = vpack.c.bf16 %v1919, %v1918
    %v1959 = vpack.c.bf16 %v1932, %v1930
    %v1960 = vpack.c.bf16 %v1947, %v1945
    %v1961 = vpack.c.bf16 %v1920, %v1920
    %v1962 = vpack.c.bf16 %v1934, %v1934
    %v1963 = vpack.c.bf16 %v1949, %v1949
    %v1965 = vperm.slane %v1910, 0
    %v1968 = vshrl.u32 %v1955, 16
    %v1970 = vrot.slane %v1968, 1
    %v1971 = vshll.u32 %v1955, 16
    %v1973 = vrot.slane %v1971, 2
    %v1974 = vor.u32 %v1970, %v1973
    %v1976 = vshrl.u32 %v1958, 16
    %v1978 = vrot.slane %v1976, 1
    %v1979 = vshll.u32 %v1958, 16
    %v1981 = vrot.slane %v1979, 2
    %v1982 = vor.u32 %v1978, %v1981
    %v1983 = vsel %vm298, %v1974, %v1982
    %v1985 = vshrl.u32 %v1956, 16
    %v1987 = vrot.slane %v1985, 1
    %v1988 = vshll.u32 %v1956, 16
    %v1990 = vrot.slane %v1988, 2
    %v1991 = vor.u32 %v1987, %v1990
    %v1993 = vshrl.u32 %v1959, 16
    %v1995 = vrot.slane %v1993, 1
    %v1996 = vshll.u32 %v1959, 16
    %v1998 = vrot.slane %v1996, 2
    %v1999 = vor.u32 %v1995, %v1998
    %v2000 = vsel %vm298, %v1991, %v1999
    %v2002 = vshrl.u32 %v1957, 16
    %v2004 = vrot.slane %v2002, 1
    %v2005 = vshll.u32 %v1957, 16
    %v2007 = vrot.slane %v2005, 2
    %v2008 = vor.u32 %v2004, %v2007
    %v2010 = vshrl.u32 %v1960, 16
    %v2012 = vrot.slane %v2010, 1
    %v2013 = vshll.u32 %v1960, 16
    %v2015 = vrot.slane %v2013, 2
    %v2016 = vor.u32 %v2012, %v2015
    %v2017 = vsel %vm298, %v2008, %v2016
    %v2019 = vshrl.u32 %v1961, 16
    %v2021 = vrot.slane %v2019, 1
    %v2022 = vshll.u32 %v1961, 16
    %v2024 = vrot.slane %v2022, 2
    %v2025 = vor.u32 %v2021, %v2024
    %v2026 = vsel %vm298, %v1982, %v2025
    %v2028 = vshrl.u32 %v1962, 16
    %v2030 = vrot.slane %v2028, 1
    %v2031 = vshll.u32 %v1962, 16
    %v2033 = vrot.slane %v2031, 2
    %v2034 = vor.u32 %v2030, %v2033
    %v2035 = vsel %vm298, %v1999, %v2034
    %v2037 = vshrl.u32 %v1963, 16
    %v2039 = vrot.slane %v2037, 1
    %v2040 = vshll.u32 %v1963, 16
    %v2042 = vrot.slane %v2040, 2
    %v2043 = vor.u32 %v2039, %v2042
    %v2044 = vsel %vm298, %v2016, %v2043
    %v2102 = vunpack.c.l.b16 %v1861
    %v2103 = vunpack.c.l.b16 %v1862
    %v2104 = vunpack.c.l.b16 %v1863
    %v2105 = vunpack.c.l.b16 %v1864
    %v2106 = vunpack.c.l.b16 %v1865
    %v2107 = vunpack.c.l.b16 %v1866
    %v2108 = vunpack.c.l.b16 %v1867
    %v2109 = vunpack.c.l.b16 %v1868
    %v2110 = vunpack.c.l.b16 %v1869
    %v2111 = vunpack.c.l.b16 %v1870
    %v2112 = vunpack.c.l.b16 %v1871
    %v2113 = vunpack.c.l.b16 %v1872
    %v2114 = vunpack.c.l.b16 %v1873
    %v2115 = vunpack.c.l.b16 %v1874
    %v2116 = vunpack.c.l.b16 %v1875
    %v2117 = vunpack.c.l.b16 %v1876
    %v2118 = vunpack.c.l.b16 %v1877
    %v2119 = vunpack.c.l.b16 %v1878
    %v2120 = vunpack.c.l.b16 %v1879
    %v2121 = vunpack.c.l.b16 %v1880
    %v2122 = vunpack.c.l.b16 %v1881
    %v2123 = vunpack.c.l.b16 %v1882
    %v2124 = vunpack.c.l.b16 %v1883
    %v2125 = vunpack.c.l.b16 %v1884
    %v2126 = vunpack.c.l.b16 %v1885
    %v2127 = vunpack.c.l.b16 %v1886
    %v2128 = vunpack.c.l.b16 %v1887
    %v2129 = vunpack.c.l.b16 %v1888
    %v2130 = vunpack.c.l.b16 %v1889
    %v2131 = vunpack.c.l.b16 %v1890
    %v2132 = vunpack.c.l.b16 %v1891
    %v2133 = vunpack.c.l.b16 %v1892
    %v2134 = vunpack.c.l.b16 %v1893
    %v2135 = vunpack.c.l.b16 %v1894
    %v2136 = vunpack.c.l.b16 %v1895
    %v2137 = vunpack.c.l.b16 %v1896
    %v2138 = vunpack.c.l.b16 %v1897
    %v2139 = vunpack.c.l.b16 %v1898
    %v2140 = vunpack.c.l.b16 %v1899
    %v2141 = vunpack.c.l.b16 %v1900
    %v2142 = vunpack.c.l.b16 %v1901
    %v2143 = vunpack.c.l.b16 %v1902
    %v2144 = vunpack.c.l.b16 %v1903
    %v2145 = vunpack.c.l.b16 %v1904
    %v2146 = vunpack.c.l.b16 %v1905
    %v2147 = vunpack.c.l.b16 %v1906
    %v2148 = vunpack.c.l.b16 %v1907
    %v2149 = vunpack.c.l.b16 %v1908
    %v2150 = vpack.c.b16 %v2103, %v2102
    %v2151 = vpack.c.b16 %v2105, %v2104
    %v2152 = vpack.c.b16 %v2107, %v2106
    %v2153 = vpack.c.b16 %v2109, %v2108
    %v2154 = vpack.c.b16 %v2111, %v2110
    %v2155 = vpack.c.b16 %v2113, %v2112
    %v2156 = vpack.c.b16 %v2115, %v2114
    %v2157 = vpack.c.b16 %v2117, %v2116
    %v2158 = vpack.c.b16 %v2119, %v2118
    %v2159 = vpack.c.b16 %v2121, %v2120
    %v2160 = vpack.c.b16 %v2123, %v2122
    %v2161 = vpack.c.b16 %v2125, %v2124
    %v2162 = vpack.c.b16 %v2127, %v2126
    %v2163 = vpack.c.b16 %v2129, %v2128
    %v2164 = vpack.c.b16 %v2131, %v2130
    %v2165 = vpack.c.b16 %v2133, %v2132
    %v2166 = vpack.c.b16 %v2135, %v2134
    %v2167 = vpack.c.b16 %v2137, %v2136
    %v2168 = vpack.c.b16 %v2139, %v2138
    %v2169 = vpack.c.b16 %v2141, %v2140
    %v2170 = vpack.c.b16 %v2143, %v2142
    %v2171 = vpack.c.b16 %v2145, %v2144
    %v2172 = vpack.c.b16 %v2147, %v2146
    %v2173 = vpack.c.b16 %v2149, %v2148
    %2198 = vmatpush.bf16.msra.mxu0 %v2157
    %2199 = vmatpush.bf16.msra.mxu0 %v2156
    %2200 = vmatpush.bf16.msra.mxu0 %v2155
    %2201 = vmatpush.bf16.msra.mxu0 %v2154
    %2202 = vmatpush.bf16.msra.mxu0 %v2153
    %2203 = vmatpush.bf16.msra.mxu0 %v2152
    %2204 = vmatpush.bf16.msra.mxu0 %v2151
    %2205 = vmatpush.bf16.msra.mxu0 %v2150
    %2206 = vmatmul.bf16.gmra.mxu0 %v1983
    %v2207 = vpop.f32.mrf.mxu0
    %v2208 = vadd.f32 %v1965, %v2207
    %v2209 = vpop.f32.mrf.mxu0
    %v2210 = vadd.f32 %v1965, %v2209
    %2211 = vmatmul.bf16.gmra.mxu0 %v2026
    %v2212 = vpop.f32.mrf.mxu0
    %v2213 = vadd.f32 %v1965, %v2212
    %v2214 = vpop.f32.mrf.mxu0
    %v2215 = vadd.f32 %v1965, %v2214
    %2216 = vmatmul.bf16.gmra.mxu0 %v2025
    %v2217 = vpop.f32.mrf.mxu0
    %v2218 = vadd.f32 %v1965, %v2217
    %v2219 = vpop.f32.mrf.mxu0
    %2220 = vdwg.mxu0
    %2221 = vmatpush.bf16.msra.mxu0 %v2165
    %2222 = vmatpush.bf16.msra.mxu0 %v2164
    %2223 = vmatpush.bf16.msra.mxu0 %v2163
    %2224 = vmatpush.bf16.msra.mxu0 %v2162
    %2225 = vmatpush.bf16.msra.mxu0 %v2161
    %2226 = vmatpush.bf16.msra.mxu0 %v2160
    %2227 = vmatpush.bf16.msra.mxu0 %v2159
    %2228 = vmatpush.bf16.msra.mxu0 %v2158
    %2229 = vmatmul.bf16.gmra.mxu0 %v2000
    %v2230 = vpop.f32.mrf.mxu0
    %v2231 = vadd.f32 %v2208, %v2230
    %v2232 = vpop.f32.mrf.mxu0
    %v2233 = vadd.f32 %v2210, %v2232
    %2234 = vmatmul.bf16.gmra.mxu0 %v2035
    %v2235 = vpop.f32.mrf.mxu0
    %v2236 = vadd.f32 %v2213, %v2235
    %v2237 = vpop.f32.mrf.mxu0
    %v2238 = vadd.f32 %v2215, %v2237
    %2239 = vmatmul.bf16.gmra.mxu0 %v2034
    %v2240 = vpop.f32.mrf.mxu0
    %v2241 = vadd.f32 %v2218, %v2240
    %v2242 = vpop.f32.mrf.mxu0
    %2243 = vdwg.mxu0
    %2244 = vmatpush.bf16.msra.mxu0 %v2173
    %2245 = vmatpush.bf16.msra.mxu0 %v2172
    %2246 = vmatpush.bf16.msra.mxu0 %v2171
    %2247 = vmatpush.bf16.msra.mxu0 %v2170
    %2248 = vmatpush.bf16.msra.mxu0 %v2169
    %2249 = vmatpush.bf16.msra.mxu0 %v2168
    %2250 = vmatpush.bf16.msra.mxu0 %v2167
    %2251 = vmatpush.bf16.msra.mxu0 %v2166
    %2252 = vmatmul.bf16.gmra.mxu0 %v2017
    %v2253 = vpop.f32.mrf.mxu0
    %v2254 = vadd.f32 %v2231, %v2253
    %v2255 = vpop.f32.mrf.mxu0
    %v2256 = vadd.f32 %v2233, %v2255
    %2257 = vmatmul.bf16.gmra.mxu0 %v2044
    %v2258 = vpop.f32.mrf.mxu0
    %v2259 = vadd.f32 %v2236, %v2258
    %v2260 = vpop.f32.mrf.mxu0
    %v2261 = vadd.f32 %v2238, %v2260
    %2262 = vmatmul.bf16.gmra.mxu0 %v2043
    %v2263 = vpop.f32.mrf.mxu0
    %v2264 = vadd.f32 %v2241, %v2263
    %v2265 = vpop.f32.mrf.mxu0
    %2266 = vdwg.mxu0
    %v2267 = vmax.f32 %v2254, 0.0
    %v2268 = vmax.f32 %v2256, 0.0
    %v2269 = vmax.f32 %v2259, 0.0
    %v2270 = vmax.f32 %v2261, 0.0
    %v2271 = vmax.f32 %v2264, 0.0
    %v2272 = vmul.f32 %v2267, %v177
    %v2273 = vmul.f32 %v2268, %v178
    %v2274 = vmul.f32 %v2269, %v179
    %v2275 = vmul.f32 %v2270, %v180
    %v2276 = vmul.f32 %v2271, %v181
    %s2277 = scalar_lea.vmem [#allocation2], 960
    %v2278 = vld [vmem:[%s2277] sm:$0xf]
    %v2279 = vld [vmem:[%s2277 + $0x4] sm:$0xf]
    %v2280 = vld [vmem:[%s2277 + $0x8] sm:$0xf]
    %v2281 = vld [vmem:[%s2277 + $0xc] sm:$0xf]
    %v2282 = vld [vmem:[%s2277 + $0x10] sm:$0xf]
    %v2283 = vld [vmem:[%s2277 + $0x14] sm:$0xf]
    %v2284 = vld [vmem:[%s2277 + $0x18] sm:$0xf]
    %v2285 = vld [vmem:[%s2277 + $0x1c] sm:$0xf]
    %v2286 = vld [vmem:[%s2277 + $0x20] sm:$0xf]
    %v2287 = vld [vmem:[%s2277 + $0x24] sm:$0xf]
    %v2288 = vld [vmem:[%s2277 + $0x28] sm:$0xf]
    %v2289 = vld [vmem:[%s2277 + $0x2c] sm:$0xf]
    %v2290 = vld [vmem:[%s2277 + $0x30] sm:$0xf]
    %v2291 = vld [vmem:[%s2277 + $0x34] sm:$0xf]
    %v2292 = vld [vmem:[%s2277 + $0x38] sm:$0xf]
    %v2293 = vld [vmem:[%s2277 + $0x3c] sm:$0xf]
    %v2294 = vld [vmem:[%s2277 + $0x40] sm:$0xf]
    %v2295 = vld [vmem:[%s2277 + $0x44] sm:$0xf]
    %v2296 = vld [vmem:[%s2277 + $0x48] sm:$0xf]
    %v2297 = vld [vmem:[%s2277 + $0x4c] sm:$0xf]
    %v2298 = vld [vmem:[%s2277 + $0x50] sm:$0xf]
    %v2299 = vld [vmem:[%s2277 + $0x54] sm:$0xf]
    %v2300 = vld [vmem:[%s2277 + $0x58] sm:$0xf]
    %v2301 = vld [vmem:[%s2277 + $0x5c] sm:$0xf]
    %v2302 = vld [vmem:[%s2277 + $0x60] sm:$0xf]
    %v2303 = vld [vmem:[%s2277 + $0x64] sm:$0xf]
    %v2304 = vld [vmem:[%s2277 + $0x68] sm:$0xf]
    %v2305 = vld [vmem:[%s2277 + $0x6c] sm:$0xf]
    %v2306 = vld [vmem:[%s2277 + $0x70] sm:$0xf]
    %v2307 = vld [vmem:[%s2277 + $0x74] sm:$0xf]
    %v2308 = vld [vmem:[%s2277 + $0x78] sm:$0xf]
    %v2309 = vld [vmem:[%s2277 + $0x7c] sm:$0xf]
    %v2310 = vld [vmem:[%s2277 + $0x80] sm:$0xf]
    %v2311 = vld [vmem:[%s2277 + $0x84] sm:$0xf]
    %v2312 = vld [vmem:[%s2277 + $0x88] sm:$0xf]
    %v2313 = vld [vmem:[%s2277 + $0x8c] sm:$0xf]
    %v2314 = vld [vmem:[%s2277 + $0x90] sm:$0xf]
    %v2315 = vld [vmem:[%s2277 + $0x94] sm:$0xf]
    %v2316 = vld [vmem:[%s2277 + $0x98] sm:$0xf]
    %v2317 = vld [vmem:[%s2277 + $0x9c] sm:$0xf]
    %v2318 = vld [vmem:[%s2277 + $0xa0] sm:$0xf]
    %v2319 = vld [vmem:[%s2277 + $0xa4] sm:$0xf]
    %v2320 = vld [vmem:[%s2277 + $0xa8] sm:$0xf]
    %v2321 = vld [vmem:[%s2277 + $0xac] sm:$0xf]
    %v2322 = vld [vmem:[%s2277 + $0xb0] sm:$0xf]
    %v2323 = vld [vmem:[%s2277 + $0xb4] sm:$0xf]
    %v2324 = vld [vmem:[%s2277 + $0xb8] sm:$0xf]
    %v2325 = vld [vmem:[%s2277 + $0xbc] sm:$0xf]
    %s2326 = scalar_lea.vmem [#allocation4], 5
    %v2327 = vld [vmem:[%s2326] sm:$0x1]
    %v2328 = vrot.slane %v2272, 4
    %v2329 = vsel %vm239, %v2328, %v2276
    %v2330 = vrot.slane %v2273, 4
    %v2331 = vrot.slane %v2274, 4
    %v2332 = vrot.slane %v2275, 4
    %v2333 = vrot.slane %v2329, 4
    %v2334 = vsel %vm239, %v2330, %v2328
    %v2335 = vsel %vm239, %v2331, %v2330
    %v2336 = vsel %vm239, %v2332, %v2331
    %v2337 = vsel %vm239, %v2333, %v2332
    %v2343 = vrot.slane %v2272, 5
    %v2344 = vrot.slane %v2273, 5
    %v2345 = vsel %vm255, %v2343, %v2344
    %v2346 = vrot.slane %v2274, 5
    %v2347 = vsel %vm255, %v2344, %v2346
    %v2348 = vrot.slane %v2275, 5
    %v2349 = vsel %vm255, %v2346, %v2348
    %v2350 = vrot.slane %v2276, 5
    %v2351 = vsel %vm255, %v2348, %v2350
    %v2358 = vrot.slane %v2272, 6
    %v2359 = vrot.slane %v2273, 6
    %v2360 = vsel %vm271, %v2358, %v2359
    %v2361 = vrot.slane %v2274, 6
    %v2362 = vsel %vm271, %v2359, %v2361
    %v2363 = vrot.slane %v2275, 6
    %v2364 = vsel %vm271, %v2361, %v2363
    %v2365 = vrot.slane %v2329, 6
    %v2366 = vsel %vm271, %v2363, %v2365
    %v2372 = vpack.c.bf16 %v2334, %v2329
    %v2373 = vpack.c.bf16 %v2345, %v2343
    %v2374 = vpack.c.bf16 %v2360, %v2358
    %v2375 = vpack.c.bf16 %v2336, %v2335
    %v2376 = vpack.c.bf16 %v2349, %v2347
    %v2377 = vpack.c.bf16 %v2364, %v2362
    %v2378 = vpack.c.bf16 %v2337, %v2337
    %v2379 = vpack.c.bf16 %v2351, %v2351
    %v2380 = vpack.c.bf16 %v2366, %v2366
    %v2382 = vperm.slane %v2327, 0
    %v2385 = vshrl.u32 %v2372, 16
    %v2387 = vrot.slane %v2385, 1
    %v2388 = vshll.u32 %v2372, 16
    %v2390 = vrot.slane %v2388, 2
    %v2391 = vor.u32 %v2387, %v2390
    %v2393 = vshrl.u32 %v2375, 16
    %v2395 = vrot.slane %v2393, 1
    %v2396 = vshll.u32 %v2375, 16
    %v2398 = vrot.slane %v2396, 2
    %v2399 = vor.u32 %v2395, %v2398
    %v2400 = vsel %vm298, %v2391, %v2399
    %v2402 = vshrl.u32 %v2373, 16
    %v2404 = vrot.slane %v2402, 1
    %v2405 = vshll.u32 %v2373, 16
    %v2407 = vrot.slane %v2405, 2
    %v2408 = vor.u32 %v2404, %v2407
    %v2410 = vshrl.u32 %v2376, 16
    %v2412 = vrot.slane %v2410, 1
    %v2413 = vshll.u32 %v2376, 16
    %v2415 = vrot.slane %v2413, 2
    %v2416 = vor.u32 %v2412, %v2415
    %v2417 = vsel %vm298, %v2408, %v2416
    %v2419 = vshrl.u32 %v2374, 16
    %v2421 = vrot.slane %v2419, 1
    %v2422 = vshll.u32 %v2374, 16
    %v2424 = vrot.slane %v2422, 2
    %v2425 = vor.u32 %v2421, %v2424
    %v2427 = vshrl.u32 %v2377, 16
    %v2429 = vrot.slane %v2427, 1
    %v2430 = vshll.u32 %v2377, 16
    %v2432 = vrot.slane %v2430, 2
    %v2433 = vor.u32 %v2429, %v2432
    %v2434 = vsel %vm298, %v2425, %v2433
    %v2436 = vshrl.u32 %v2378, 16
    %v2438 = vrot.slane %v2436, 1
    %v2439 = vshll.u32 %v2378, 16
    %v2441 = vrot.slane %v2439, 2
    %v2442 = vor.u32 %v2438, %v2441
    %v2443 = vsel %vm298, %v2399, %v2442
    %v2445 = vshrl.u32 %v2379, 16
    %v2447 = vrot.slane %v2445, 1
    %v2448 = vshll.u32 %v2379, 16
    %v2450 = vrot.slane %v2448, 2
    %v2451 = vor.u32 %v2447, %v2450
    %v2452 = vsel %vm298, %v2416, %v2451
    %v2454 = vshrl.u32 %v2380, 16
    %v2456 = vrot.slane %v2454, 1
    %v2457 = vshll.u32 %v2380, 16
    %v2459 = vrot.slane %v2457, 2
    %v2460 = vor.u32 %v2456, %v2459
    %v2461 = vsel %vm298, %v2433, %v2460
    %v2519 = vunpack.c.l.b16 %v2278
    %v2520 = vunpack.c.l.b16 %v2279
    %v2521 = vunpack.c.l.b16 %v2280
    %v2522 = vunpack.c.l.b16 %v2281
    %v2523 = vunpack.c.l.b16 %v2282
    %v2524 = vunpack.c.l.b16 %v2283
    %v2525 = vunpack.c.l.b16 %v2284
    %v2526 = vunpack.c.l.b16 %v2285
    %v2527 = vunpack.c.l.b16 %v2286
    %v2528 = vunpack.c.l.b16 %v2287
    %v2529 = vunpack.c.l.b16 %v2288
    %v2530 = vunpack.c.l.b16 %v2289
    %v2531 = vunpack.c.l.b16 %v2290
    %v2532 = vunpack.c.l.b16 %v2291
    %v2533 = vunpack.c.l.b16 %v2292
    %v2534 = vunpack.c.l.b16 %v2293
    %v2535 = vunpack.c.l.b16 %v2294
    %v2536 = vunpack.c.l.b16 %v2295
    %v2537 = vunpack.c.l.b16 %v2296
    %v2538 = vunpack.c.l.b16 %v2297
    %v2539 = vunpack.c.l.b16 %v2298
    %v2540 = vunpack.c.l.b16 %v2299
    %v2541 = vunpack.c.l.b16 %v2300
    %v2542 = vunpack.c.l.b16 %v2301
    %v2543 = vunpack.c.l.b16 %v2302
    %v2544 = vunpack.c.l.b16 %v2303
    %v2545 = vunpack.c.l.b16 %v2304
    %v2546 = vunpack.c.l.b16 %v2305
    %v2547 = vunpack.c.l.b16 %v2306
    %v2548 = vunpack.c.l.b16 %v2307
    %v2549 = vunpack.c.l.b16 %v2308
    %v2550 = vunpack.c.l.b16 %v2309
    %v2551 = vunpack.c.l.b16 %v2310
    %v2552 = vunpack.c.l.b16 %v2311
    %v2553 = vunpack.c.l.b16 %v2312
    %v2554 = vunpack.c.l.b16 %v2313
    %v2555 = vunpack.c.l.b16 %v2314
    %v2556 = vunpack.c.l.b16 %v2315
    %v2557 = vunpack.c.l.b16 %v2316
    %v2558 = vunpack.c.l.b16 %v2317
    %v2559 = vunpack.c.l.b16 %v2318
    %v2560 = vunpack.c.l.b16 %v2319
    %v2561 = vunpack.c.l.b16 %v2320
    %v2562 = vunpack.c.l.b16 %v2321
    %v2563 = vunpack.c.l.b16 %v2322
    %v2564 = vunpack.c.l.b16 %v2323
    %v2565 = vunpack.c.l.b16 %v2324
    %v2566 = vunpack.c.l.b16 %v2325
    %v2567 = vpack.c.b16 %v2520, %v2519
    %v2568 = vpack.c.b16 %v2522, %v2521
    %v2569 = vpack.c.b16 %v2524, %v2523
    %v2570 = vpack.c.b16 %v2526, %v2525
    %v2571 = vpack.c.b16 %v2528, %v2527
    %v2572 = vpack.c.b16 %v2530, %v2529
    %v2573 = vpack.c.b16 %v2532, %v2531
    %v2574 = vpack.c.b16 %v2534, %v2533
    %v2575 = vpack.c.b16 %v2536, %v2535
    %v2576 = vpack.c.b16 %v2538, %v2537
    %v2577 = vpack.c.b16 %v2540, %v2539
    %v2578 = vpack.c.b16 %v2542, %v2541
    %v2579 = vpack.c.b16 %v2544, %v2543
    %v2580 = vpack.c.b16 %v2546, %v2545
    %v2581 = vpack.c.b16 %v2548, %v2547
    %v2582 = vpack.c.b16 %v2550, %v2549
    %v2583 = vpack.c.b16 %v2552, %v2551
    %v2584 = vpack.c.b16 %v2554, %v2553
    %v2585 = vpack.c.b16 %v2556, %v2555
    %v2586 = vpack.c.b16 %v2558, %v2557
    %v2587 = vpack.c.b16 %v2560, %v2559
    %v2588 = vpack.c.b16 %v2562, %v2561
    %v2589 = vpack.c.b16 %v2564, %v2563
    %v2590 = vpack.c.b16 %v2566, %v2565
    %2615 = vmatpush.bf16.msra.mxu0 %v2574
    %2616 = vmatpush.bf16.msra.mxu0 %v2573
    %2617 = vmatpush.bf16.msra.mxu0 %v2572
    %2618 = vmatpush.bf16.msra.mxu0 %v2571
    %2619 = vmatpush.bf16.msra.mxu0 %v2570
    %2620 = vmatpush.bf16.msra.mxu0 %v2569
    %2621 = vmatpush.bf16.msra.mxu0 %v2568
    %2622 = vmatpush.bf16.msra.mxu0 %v2567
    %2623 = vmatmul.bf16.gmra.mxu0 %v2400
    %v2624 = vpop.f32.mrf.mxu0
    %v2625 = vadd.f32 %v2382, %v2624
    %v2626 = vpop.f32.mrf.mxu0
    %v2627 = vadd.f32 %v2382, %v2626
    %2628 = vmatmul.bf16.gmra.mxu0 %v2443
    %v2629 = vpop.f32.mrf.mxu0
    %v2630 = vadd.f32 %v2382, %v2629
    %v2631 = vpop.f32.mrf.mxu0
    %v2632 = vadd.f32 %v2382, %v2631
    %2633 = vmatmul.bf16.gmra.mxu0 %v2442
    %v2634 = vpop.f32.mrf.mxu0
    %v2635 = vadd.f32 %v2382, %v2634
    %v2636 = vpop.f32.mrf.mxu0
    %2637 = vdwg.mxu0
    %2638 = vmatpush.bf16.msra.mxu0 %v2582
    %2639 = vmatpush.bf16.msra.mxu0 %v2581
    %2640 = vmatpush.bf16.msra.mxu0 %v2580
    %2641 = vmatpush.bf16.msra.mxu0 %v2579
    %2642 = vmatpush.bf16.msra.mxu0 %v2578
    %2643 = vmatpush.bf16.msra.mxu0 %v2577
    %2644 = vmatpush.bf16.msra.mxu0 %v2576
    %2645 = vmatpush.bf16.msra.mxu0 %v2575
    %2646 = vmatmul.bf16.gmra.mxu0 %v2417
    %v2647 = vpop.f32.mrf.mxu0
    %v2648 = vadd.f32 %v2625, %v2647
    %v2649 = vpop.f32.mrf.mxu0
    %v2650 = vadd.f32 %v2627, %v2649
    %2651 = vmatmul.bf16.gmra.mxu0 %v2452
    %v2652 = vpop.f32.mrf.mxu0
    %v2653 = vadd.f32 %v2630, %v2652
    %v2654 = vpop.f32.mrf.mxu0
    %v2655 = vadd.f32 %v2632, %v2654
    %2656 = vmatmul.bf16.gmra.mxu0 %v2451
    %v2657 = vpop.f32.mrf.mxu0
    %v2658 = vadd.f32 %v2635, %v2657
    %v2659 = vpop.f32.mrf.mxu0
    %2660 = vdwg.mxu0
    %2661 = vmatpush.bf16.msra.mxu0 %v2590
    %2662 = vmatpush.bf16.msra.mxu0 %v2589
    %2663 = vmatpush.bf16.msra.mxu0 %v2588
    %2664 = vmatpush.bf16.msra.mxu0 %v2587
    %2665 = vmatpush.bf16.msra.mxu0 %v2586
    %2666 = vmatpush.bf16.msra.mxu0 %v2585
    %2667 = vmatpush.bf16.msra.mxu0 %v2584
    %2668 = vmatpush.bf16.msra.mxu0 %v2583
    %2669 = vmatmul.bf16.gmra.mxu0 %v2434
    %v2670 = vpop.f32.mrf.mxu0
    %v2671 = vadd.f32 %v2648, %v2670
    %v2672 = vpop.f32.mrf.mxu0
    %v2673 = vadd.f32 %v2650, %v2672
    %2674 = vmatmul.bf16.gmra.mxu0 %v2461
    %v2675 = vpop.f32.mrf.mxu0
    %v2676 = vadd.f32 %v2653, %v2675
    %v2677 = vpop.f32.mrf.mxu0
    %v2678 = vadd.f32 %v2655, %v2677
    %2679 = vmatmul.bf16.gmra.mxu0 %v2460
    %v2680 = vpop.f32.mrf.mxu0
    %v2681 = vadd.f32 %v2658, %v2680
    %v2682 = vpop.f32.mrf.mxu0
    %2683 = vdwg.mxu0
    %v2684 = vmul.f32 %v2671, %v177
    %v2685 = vmul.f32 %v2673, %v178
    %v2686 = vmul.f32 %v2676, %v179
    %v2687 = vmul.f32 %v2678, %v180
    %v2688 = vmul.f32 %v2681, %v181
    %v2689 = vadd.f32 %v2684, %v1855
    %v2690 = vadd.f32 %v2685, %v1856
    %v2691 = vadd.f32 %v2686, %v1857
    %v2692 = vadd.f32 %v2687, %v1858
    %v2693 = vadd.f32 %v2688, %v1859
    %s2694 = scalar_lea.vmem [#allocation2], 1152
    %v2695 = vld [vmem:[%s2694] sm:$0xf]
    %v2696 = vld [vmem:[%s2694 + $0x4] sm:$0xf]
    %v2697 = vld [vmem:[%s2694 + $0x8] sm:$0xf]
    %v2698 = vld [vmem:[%s2694 + $0xc] sm:$0xf]
    %v2699 = vld [vmem:[%s2694 + $0x10] sm:$0xf]
    %v2700 = vld [vmem:[%s2694 + $0x14] sm:$0xf]
    %v2701 = vld [vmem:[%s2694 + $0x18] sm:$0xf]
    %v2702 = vld [vmem:[%s2694 + $0x1c] sm:$0xf]
    %v2703 = vld [vmem:[%s2694 + $0x20] sm:$0xf]
    %v2704 = vld [vmem:[%s2694 + $0x24] sm:$0xf]
    %v2705 = vld [vmem:[%s2694 + $0x28] sm:$0xf]
    %v2706 = vld [vmem:[%s2694 + $0x2c] sm:$0xf]
    %v2707 = vld [vmem:[%s2694 + $0x30] sm:$0xf]
    %v2708 = vld [vmem:[%s2694 + $0x34] sm:$0xf]
    %v2709 = vld [vmem:[%s2694 + $0x38] sm:$0xf]
    %v2710 = vld [vmem:[%s2694 + $0x3c] sm:$0xf]
    %v2711 = vld [vmem:[%s2694 + $0x40] sm:$0xf]
    %v2712 = vld [vmem:[%s2694 + $0x44] sm:$0xf]
    %v2713 = vld [vmem:[%s2694 + $0x48] sm:$0xf]
    %v2714 = vld [vmem:[%s2694 + $0x4c] sm:$0xf]
    %v2715 = vld [vmem:[%s2694 + $0x50] sm:$0xf]
    %v2716 = vld [vmem:[%s2694 + $0x54] sm:$0xf]
    %v2717 = vld [vmem:[%s2694 + $0x58] sm:$0xf]
    %v2718 = vld [vmem:[%s2694 + $0x5c] sm:$0xf]
    %v2719 = vld [vmem:[%s2694 + $0x60] sm:$0xf]
    %v2720 = vld [vmem:[%s2694 + $0x64] sm:$0xf]
    %v2721 = vld [vmem:[%s2694 + $0x68] sm:$0xf]
    %v2722 = vld [vmem:[%s2694 + $0x6c] sm:$0xf]
    %v2723 = vld [vmem:[%s2694 + $0x70] sm:$0xf]
    %v2724 = vld [vmem:[%s2694 + $0x74] sm:$0xf]
    %v2725 = vld [vmem:[%s2694 + $0x78] sm:$0xf]
    %v2726 = vld [vmem:[%s2694 + $0x7c] sm:$0xf]
    %v2727 = vld [vmem:[%s2694 + $0x80] sm:$0xf]
    %v2728 = vld [vmem:[%s2694 + $0x84] sm:$0xf]
    %v2729 = vld [vmem:[%s2694 + $0x88] sm:$0xf]
    %v2730 = vld [vmem:[%s2694 + $0x8c] sm:$0xf]
    %v2731 = vld [vmem:[%s2694 + $0x90] sm:$0xf]
    %v2732 = vld [vmem:[%s2694 + $0x94] sm:$0xf]
    %v2733 = vld [vmem:[%s2694 + $0x98] sm:$0xf]
    %v2734 = vld [vmem:[%s2694 + $0x9c] sm:$0xf]
    %v2735 = vld [vmem:[%s2694 + $0xa0] sm:$0xf]
    %v2736 = vld [vmem:[%s2694 + $0xa4] sm:$0xf]
    %v2737 = vld [vmem:[%s2694 + $0xa8] sm:$0xf]
    %v2738 = vld [vmem:[%s2694 + $0xac] sm:$0xf]
    %v2739 = vld [vmem:[%s2694 + $0xb0] sm:$0xf]
    %v2740 = vld [vmem:[%s2694 + $0xb4] sm:$0xf]
    %v2741 = vld [vmem:[%s2694 + $0xb8] sm:$0xf]
    %v2742 = vld [vmem:[%s2694 + $0xbc] sm:$0xf]
    %s2743 = scalar_lea.vmem [#allocation4], 6
    %v2744 = vld [vmem:[%s2743] sm:$0x1]
    %v2746 = vperm.slane %v2744, 0
    %v2796 = vunpack.c.l.b16 %v2695
    %v2797 = vunpack.c.l.b16 %v2696
    %v2798 = vunpack.c.l.b16 %v2697
    %v2799 = vunpack.c.l.b16 %v2698
    %v2800 = vunpack.c.l.b16 %v2699
    %v2801 = vunpack.c.l.b16 %v2700
    %v2802 = vunpack.c.l.b16 %v2701
    %v2803 = vunpack.c.l.b16 %v2702
    %v2804 = vunpack.c.l.b16 %v2703
    %v2805 = vunpack.c.l.b16 %v2704
    %v2806 = vunpack.c.l.b16 %v2705
    %v2807 = vunpack.c.l.b16 %v2706
    %v2808 = vunpack.c.l.b16 %v2707
    %v2809 = vunpack.c.l.b16 %v2708
    %v2810 = vunpack.c.l.b16 %v2709
    %v2811 = vunpack.c.l.b16 %v2710
    %v2812 = vunpack.c.l.b16 %v2711
    %v2813 = vunpack.c.l.b16 %v2712
    %v2814 = vunpack.c.l.b16 %v2713
    %v2815 = vunpack.c.l.b16 %v2714
    %v2816 = vunpack.c.l.b16 %v2715
    %v2817 = vunpack.c.l.b16 %v2716
    %v2818 = vunpack.c.l.b16 %v2717
    %v2819 = vunpack.c.l.b16 %v2718
    %v2820 = vunpack.c.l.b16 %v2719
    %v2821 = vunpack.c.l.b16 %v2720
    %v2822 = vunpack.c.l.b16 %v2721
    %v2823 = vunpack.c.l.b16 %v2722
    %v2824 = vunpack.c.l.b16 %v2723
    %v2825 = vunpack.c.l.b16 %v2724
    %v2826 = vunpack.c.l.b16 %v2725
    %v2827 = vunpack.c.l.b16 %v2726
    %v2828 = vunpack.c.l.b16 %v2727
    %v2829 = vunpack.c.l.b16 %v2728
    %v2830 = vunpack.c.l.b16 %v2729
    %v2831 = vunpack.c.l.b16 %v2730
    %v2832 = vunpack.c.l.b16 %v2731
    %v2833 = vunpack.c.l.b16 %v2732
    %v2834 = vunpack.c.l.b16 %v2733
    %v2835 = vunpack.c.l.b16 %v2734
    %v2836 = vunpack.c.l.b16 %v2735
    %v2837 = vunpack.c.l.b16 %v2736
    %v2838 = vunpack.c.l.b16 %v2737
    %v2839 = vunpack.c.l.b16 %v2738
    %v2840 = vunpack.c.l.b16 %v2739
    %v2841 = vunpack.c.l.b16 %v2740
    %v2842 = vunpack.c.l.b16 %v2741
    %v2843 = vunpack.c.l.b16 %v2742
    %v2844 = vpack.c.b16 %v2797, %v2796
    %v2845 = vpack.c.b16 %v2799, %v2798
    %v2846 = vpack.c.b16 %v2801, %v2800
    %v2847 = vpack.c.b16 %v2803, %v2802
    %v2848 = vpack.c.b16 %v2805, %v2804
    %v2849 = vpack.c.b16 %v2807, %v2806
    %v2850 = vpack.c.b16 %v2809, %v2808
    %v2851 = vpack.c.b16 %v2811, %v2810
    %v2852 = vpack.c.b16 %v2813, %v2812
    %v2853 = vpack.c.b16 %v2815, %v2814
    %v2854 = vpack.c.b16 %v2817, %v2816
    %v2855 = vpack.c.b16 %v2819, %v2818
    %v2856 = vpack.c.b16 %v2821, %v2820
    %v2857 = vpack.c.b16 %v2823, %v2822
    %v2858 = vpack.c.b16 %v2825, %v2824
    %v2859 = vpack.c.b16 %v2827, %v2826
    %v2860 = vpack.c.b16 %v2829, %v2828
    %v2861 = vpack.c.b16 %v2831, %v2830
    %v2862 = vpack.c.b16 %v2833, %v2832
    %v2863 = vpack.c.b16 %v2835, %v2834
    %v2864 = vpack.c.b16 %v2837, %v2836
    %v2865 = vpack.c.b16 %v2839, %v2838
    %v2866 = vpack.c.b16 %v2841, %v2840
    %v2867 = vpack.c.b16 %v2843, %v2842
    %2892 = vmatpush.bf16.msra.mxu0 %v2851
    %2893 = vmatpush.bf16.msra.mxu0 %v2850
    %2894 = vmatpush.bf16.msra.mxu0 %v2849
    %2895 = vmatpush.bf16.msra.mxu0 %v2848
    %2896 = vmatpush.bf16.msra.mxu0 %v2847
    %2897 = vmatpush.bf16.msra.mxu0 %v2846
    %2898 = vmatpush.bf16.msra.mxu0 %v2845
    %2899 = vmatpush.bf16.msra.mxu0 %v2844
    %2900 = vmatmul.bf16.gmra.mxu0 %v1149
    %v2901 = vpop.f32.mrf.mxu0
    %v2902 = vadd.f32 %v2746, %v2901
    %v2903 = vpop.f32.mrf.mxu0
    %v2904 = vadd.f32 %v2746, %v2903
    %2905 = vmatmul.bf16.gmra.mxu0 %v1192
    %v2906 = vpop.f32.mrf.mxu0
    %v2907 = vadd.f32 %v2746, %v2906
    %v2908 = vpop.f32.mrf.mxu0
    %v2909 = vadd.f32 %v2746, %v2908
    %2910 = vmatmul.bf16.gmra.mxu0 %v1191
    %v2911 = vpop.f32.mrf.mxu0
    %v2912 = vadd.f32 %v2746, %v2911
    %v2913 = vpop.f32.mrf.mxu0
    %2914 = vdwg.mxu0
    %2915 = vmatpush.bf16.msra.mxu0 %v2859
    %2916 = vmatpush.bf16.msra.mxu0 %v2858
    %2917 = vmatpush.bf16.msra.mxu0 %v2857
    %2918 = vmatpush.bf16.msra.mxu0 %v2856
    %2919 = vmatpush.bf16.msra.mxu0 %v2855
    %2920 = vmatpush.bf16.msra.mxu0 %v2854
    %2921 = vmatpush.bf16.msra.mxu0 %v2853
    %2922 = vmatpush.bf16.msra.mxu0 %v2852
    %2923 = vmatmul.bf16.gmra.mxu0 %v1166
    %v2924 = vpop.f32.mrf.mxu0
    %v2925 = vadd.f32 %v2902, %v2924
    %v2926 = vpop.f32.mrf.mxu0
    %v2927 = vadd.f32 %v2904, %v2926
    %2928 = vmatmul.bf16.gmra.mxu0 %v1201
    %v2929 = vpop.f32.mrf.mxu0
    %v2930 = vadd.f32 %v2907, %v2929
    %v2931 = vpop.f32.mrf.mxu0
    %v2932 = vadd.f32 %v2909, %v2931
    %2933 = vmatmul.bf16.gmra.mxu0 %v1200
    %v2934 = vpop.f32.mrf.mxu0
    %v2935 = vadd.f32 %v2912, %v2934
    %v2936 = vpop.f32.mrf.mxu0
    %2937 = vdwg.mxu0
    %2938 = vmatpush.bf16.msra.mxu0 %v2867
    %2939 = vmatpush.bf16.msra.mxu0 %v2866
    %2940 = vmatpush.bf16.msra.mxu0 %v2865
    %2941 = vmatpush.bf16.msra.mxu0 %v2864
    %2942 = vmatpush.bf16.msra.mxu0 %v2863
    %2943 = vmatpush.bf16.msra.mxu0 %v2862
    %2944 = vmatpush.bf16.msra.mxu0 %v2861
    %2945 = vmatpush.bf16.msra.mxu0 %v2860
    %2946 = vmatmul.bf16.gmra.mxu0 %v1183
    %v2947 = vpop.f32.mrf.mxu0
    %v2948 = vadd.f32 %v2925, %v2947
    %v2949 = vpop.f32.mrf.mxu0
    %v2950 = vadd.f32 %v2927, %v2949
    %2951 = vmatmul.bf16.gmra.mxu0 %v1210
    %v2952 = vpop.f32.mrf.mxu0
    %v2953 = vadd.f32 %v2930, %v2952
    %v2954 = vpop.f32.mrf.mxu0
    %v2955 = vadd.f32 %v2932, %v2954
    %2956 = vmatmul.bf16.gmra.mxu0 %v1209
    %v2957 = vpop.f32.mrf.mxu0
    %v2958 = vadd.f32 %v2935, %v2957
    %v2959 = vpop.f32.mrf.mxu0
    %2960 = vdwg.mxu0
    %v2961 = vmax.f32 %v2948, 0.0
    %v2962 = vmax.f32 %v2950, 0.0
    %v2963 = vmax.f32 %v2953, 0.0
    %v2964 = vmax.f32 %v2955, 0.0
    %v2965 = vmax.f32 %v2958, 0.0
    %v2966 = vmul.f32 %v2961, %v177
    %v2967 = vmul.f32 %v2962, %v178
    %v2968 = vmul.f32 %v2963, %v179
    %v2969 = vmul.f32 %v2964, %v180
    %v2970 = vmul.f32 %v2965, %v181
    %s2971 = scalar_lea.vmem [#allocation2], 1344
    %v2972 = vld [vmem:[%s2971] sm:$0xf]
    %v2973 = vld [vmem:[%s2971 + $0x4] sm:$0xf]
    %v2974 = vld [vmem:[%s2971 + $0x8] sm:$0xf]
    %v2975 = vld [vmem:[%s2971 + $0xc] sm:$0xf]
    %v2976 = vld [vmem:[%s2971 + $0x10] sm:$0xf]
    %v2977 = vld [vmem:[%s2971 + $0x14] sm:$0xf]
    %v2978 = vld [vmem:[%s2971 + $0x18] sm:$0xf]
    %v2979 = vld [vmem:[%s2971 + $0x1c] sm:$0xf]
    %v2980 = vld [vmem:[%s2971 + $0x20] sm:$0xf]
    %v2981 = vld [vmem:[%s2971 + $0x24] sm:$0xf]
    %v2982 = vld [vmem:[%s2971 + $0x28] sm:$0xf]
    %v2983 = vld [vmem:[%s2971 + $0x2c] sm:$0xf]
    %v2984 = vld [vmem:[%s2971 + $0x30] sm:$0xf]
    %v2985 = vld [vmem:[%s2971 + $0x34] sm:$0xf]
    %v2986 = vld [vmem:[%s2971 + $0x38] sm:$0xf]
    %v2987 = vld [vmem:[%s2971 + $0x3c] sm:$0xf]
    %v2988 = vld [vmem:[%s2971 + $0x40] sm:$0xf]
    %v2989 = vld [vmem:[%s2971 + $0x44] sm:$0xf]
    %v2990 = vld [vmem:[%s2971 + $0x48] sm:$0xf]
    %v2991 = vld [vmem:[%s2971 + $0x4c] sm:$0xf]
    %v2992 = vld [vmem:[%s2971 + $0x50] sm:$0xf]
    %v2993 = vld [vmem:[%s2971 + $0x54] sm:$0xf]
    %v2994 = vld [vmem:[%s2971 + $0x58] sm:$0xf]
    %v2995 = vld [vmem:[%s2971 + $0x5c] sm:$0xf]
    %v2996 = vld [vmem:[%s2971 + $0x60] sm:$0xf]
    %v2997 = vld [vmem:[%s2971 + $0x64] sm:$0xf]
    %v2998 = vld [vmem:[%s2971 + $0x68] sm:$0xf]
    %v2999 = vld [vmem:[%s2971 + $0x6c] sm:$0xf]
    %v3000 = vld [vmem:[%s2971 + $0x70] sm:$0xf]
    %v3001 = vld [vmem:[%s2971 + $0x74] sm:$0xf]
    %v3002 = vld [vmem:[%s2971 + $0x78] sm:$0xf]
    %v3003 = vld [vmem:[%s2971 + $0x7c] sm:$0xf]
    %v3004 = vld [vmem:[%s2971 + $0x80] sm:$0xf]
    %v3005 = vld [vmem:[%s2971 + $0x84] sm:$0xf]
    %v3006 = vld [vmem:[%s2971 + $0x88] sm:$0xf]
    %v3007 = vld [vmem:[%s2971 + $0x8c] sm:$0xf]
    %v3008 = vld [vmem:[%s2971 + $0x90] sm:$0xf]
    %v3009 = vld [vmem:[%s2971 + $0x94] sm:$0xf]
    %v3010 = vld [vmem:[%s2971 + $0x98] sm:$0xf]
    %v3011 = vld [vmem:[%s2971 + $0x9c] sm:$0xf]
    %v3012 = vld [vmem:[%s2971 + $0xa0] sm:$0xf]
    %v3013 = vld [vmem:[%s2971 + $0xa4] sm:$0xf]
    %v3014 = vld [vmem:[%s2971 + $0xa8] sm:$0xf]
    %v3015 = vld [vmem:[%s2971 + $0xac] sm:$0xf]
    %v3016 = vld [vmem:[%s2971 + $0xb0] sm:$0xf]
    %v3017 = vld [vmem:[%s2971 + $0xb4] sm:$0xf]
    %v3018 = vld [vmem:[%s2971 + $0xb8] sm:$0xf]
    %v3019 = vld [vmem:[%s2971 + $0xbc] sm:$0xf]
    %s3020 = scalar_lea.vmem [#allocation4], 7
    %v3021 = vld [vmem:[%s3020] sm:$0x1]
    %v3022 = vrot.slane %v2966, 4
    %v3023 = vsel %vm239, %v3022, %v2970
    %v3024 = vrot.slane %v2967, 4
    %v3025 = vrot.slane %v2968, 4
    %v3026 = vrot.slane %v2969, 4
    %v3027 = vrot.slane %v3023, 4
    %v3028 = vsel %vm239, %v3024, %v3022
    %v3029 = vsel %vm239, %v3025, %v3024
    %v3030 = vsel %vm239, %v3026, %v3025
    %v3031 = vsel %vm239, %v3027, %v3026
    %v3037 = vrot.slane %v2966, 5
    %v3038 = vrot.slane %v2967, 5
    %v3039 = vsel %vm255, %v3037, %v3038
    %v3040 = vrot.slane %v2968, 5
    %v3041 = vsel %vm255, %v3038, %v3040
    %v3042 = vrot.slane %v2969, 5
    %v3043 = vsel %vm255, %v3040, %v3042
    %v3044 = vrot.slane %v2970, 5
    %v3045 = vsel %vm255, %v3042, %v3044
    %v3052 = vrot.slane %v2966, 6
    %v3053 = vrot.slane %v2967, 6
    %v3054 = vsel %vm271, %v3052, %v3053
    %v3055 = vrot.slane %v2968, 6
    %v3056 = vsel %vm271, %v3053, %v3055
    %v3057 = vrot.slane %v2969, 6
    %v3058 = vsel %vm271, %v3055, %v3057
    %v3059 = vrot.slane %v3023, 6
    %v3060 = vsel %vm271, %v3057, %v3059
    %v3066 = vpack.c.bf16 %v3028, %v3023
    %v3067 = vpack.c.bf16 %v3039, %v3037
    %v3068 = vpack.c.bf16 %v3054, %v3052
    %v3069 = vpack.c.bf16 %v3030, %v3029
    %v3070 = vpack.c.bf16 %v3043, %v3041
    %v3071 = vpack.c.bf16 %v3058, %v3056
    %v3072 = vpack.c.bf16 %v3031, %v3031
    %v3073 = vpack.c.bf16 %v3045, %v3045
    %v3074 = vpack.c.bf16 %v3060, %v3060
    %v3076 = vperm.slane %v3021, 0
    %v3079 = vshrl.u32 %v3066, 16
    %v3081 = vrot.slane %v3079, 1
    %v3082 = vshll.u32 %v3066, 16
    %v3084 = vrot.slane %v3082, 2
    %v3085 = vor.u32 %v3081, %v3084
    %v3087 = vshrl.u32 %v3069, 16
    %v3089 = vrot.slane %v3087, 1
    %v3090 = vshll.u32 %v3069, 16
    %v3092 = vrot.slane %v3090, 2
    %v3093 = vor.u32 %v3089, %v3092
    %v3094 = vsel %vm298, %v3085, %v3093
    %v3096 = vshrl.u32 %v3067, 16
    %v3098 = vrot.slane %v3096, 1
    %v3099 = vshll.u32 %v3067, 16
    %v3101 = vrot.slane %v3099, 2
    %v3102 = vor.u32 %v3098, %v3101
    %v3104 = vshrl.u32 %v3070, 16
    %v3106 = vrot.slane %v3104, 1
    %v3107 = vshll.u32 %v3070, 16
    %v3109 = vrot.slane %v3107, 2
    %v3110 = vor.u32 %v3106, %v3109
    %v3111 = vsel %vm298, %v3102, %v3110
    %v3113 = vshrl.u32 %v3068, 16
    %v3115 = vrot.slane %v3113, 1
    %v3116 = vshll.u32 %v3068, 16
    %v3118 = vrot.slane %v3116, 2
    %v3119 = vor.u32 %v3115, %v3118
    %v3121 = vshrl.u32 %v3071, 16
    %v3123 = vrot.slane %v3121, 1
    %v3124 = vshll.u32 %v3071, 16
    %v3126 = vrot.slane %v3124, 2
    %v3127 = vor.u32 %v3123, %v3126
    %v3128 = vsel %vm298, %v3119, %v3127
    %v3130 = vshrl.u32 %v3072, 16
    %v3132 = vrot.slane %v3130, 1
    %v3133 = vshll.u32 %v3072, 16
    %v3135 = vrot.slane %v3133, 2
    %v3136 = vor.u32 %v3132, %v3135
    %v3137 = vsel %vm298, %v3093, %v3136
    %v3139 = vshrl.u32 %v3073, 16
    %v3141 = vrot.slane %v3139, 1
    %v3142 = vshll.u32 %v3073, 16
    %v3144 = vrot.slane %v3142, 2
    %v3145 = vor.u32 %v3141, %v3144
    %v3146 = vsel %vm298, %v3110, %v3145
    %v3148 = vshrl.u32 %v3074, 16
    %v3150 = vrot.slane %v3148, 1
    %v3151 = vshll.u32 %v3074, 16
    %v3153 = vrot.slane %v3151, 2
    %v3154 = vor.u32 %v3150, %v3153
    %v3155 = vsel %vm298, %v3127, %v3154
    %v3213 = vunpack.c.l.b16 %v2972
    %v3214 = vunpack.c.l.b16 %v2973
    %v3215 = vunpack.c.l.b16 %v2974
    %v3216 = vunpack.c.l.b16 %v2975
    %v3217 = vunpack.c.l.b16 %v2976
    %v3218 = vunpack.c.l.b16 %v2977
    %v3219 = vunpack.c.l.b16 %v2978
    %v3220 = vunpack.c.l.b16 %v2979
    %v3221 = vunpack.c.l.b16 %v2980
    %v3222 = vunpack.c.l.b16 %v2981
    %v3223 = vunpack.c.l.b16 %v2982
    %v3224 = vunpack.c.l.b16 %v2983
    %v3225 = vunpack.c.l.b16 %v2984
    %v3226 = vunpack.c.l.b16 %v2985
    %v3227 = vunpack.c.l.b16 %v2986
    %v3228 = vunpack.c.l.b16 %v2987
    %v3229 = vunpack.c.l.b16 %v2988
    %v3230 = vunpack.c.l.b16 %v2989
    %v3231 = vunpack.c.l.b16 %v2990
    %v3232 = vunpack.c.l.b16 %v2991
    %v3233 = vunpack.c.l.b16 %v2992
    %v3234 = vunpack.c.l.b16 %v2993
    %v3235 = vunpack.c.l.b16 %v2994
    %v3236 = vunpack.c.l.b16 %v2995
    %v3237 = vunpack.c.l.b16 %v2996
    %v3238 = vunpack.c.l.b16 %v2997
    %v3239 = vunpack.c.l.b16 %v2998
    %v3240 = vunpack.c.l.b16 %v2999
    %v3241 = vunpack.c.l.b16 %v3000
    %v3242 = vunpack.c.l.b16 %v3001
    %v3243 = vunpack.c.l.b16 %v3002
    %v3244 = vunpack.c.l.b16 %v3003
    %v3245 = vunpack.c.l.b16 %v3004
    %v3246 = vunpack.c.l.b16 %v3005
    %v3247 = vunpack.c.l.b16 %v3006
    %v3248 = vunpack.c.l.b16 %v3007
    %v3249 = vunpack.c.l.b16 %v3008
    %v3250 = vunpack.c.l.b16 %v3009
    %v3251 = vunpack.c.l.b16 %v3010
    %v3252 = vunpack.c.l.b16 %v3011
    %v3253 = vunpack.c.l.b16 %v3012
    %v3254 = vunpack.c.l.b16 %v3013
    %v3255 = vunpack.c.l.b16 %v3014
    %v3256 = vunpack.c.l.b16 %v3015
    %v3257 = vunpack.c.l.b16 %v3016
    %v3258 = vunpack.c.l.b16 %v3017
    %v3259 = vunpack.c.l.b16 %v3018
    %v3260 = vunpack.c.l.b16 %v3019
    %v3261 = vpack.c.b16 %v3214, %v3213
    %v3262 = vpack.c.b16 %v3216, %v3215
    %v3263 = vpack.c.b16 %v3218, %v3217
    %v3264 = vpack.c.b16 %v3220, %v3219
    %v3265 = vpack.c.b16 %v3222, %v3221
    %v3266 = vpack.c.b16 %v3224, %v3223
    %v3267 = vpack.c.b16 %v3226, %v3225
    %v3268 = vpack.c.b16 %v3228, %v3227
    %v3269 = vpack.c.b16 %v3230, %v3229
    %v3270 = vpack.c.b16 %v3232, %v3231
    %v3271 = vpack.c.b16 %v3234, %v3233
    %v3272 = vpack.c.b16 %v3236, %v3235
    %v3273 = vpack.c.b16 %v3238, %v3237
    %v3274 = vpack.c.b16 %v3240, %v3239
    %v3275 = vpack.c.b16 %v3242, %v3241
    %v3276 = vpack.c.b16 %v3244, %v3243
    %v3277 = vpack.c.b16 %v3246, %v3245
    %v3278 = vpack.c.b16 %v3248, %v3247
    %v3279 = vpack.c.b16 %v3250, %v3249
    %v3280 = vpack.c.b16 %v3252, %v3251
    %v3281 = vpack.c.b16 %v3254, %v3253
    %v3282 = vpack.c.b16 %v3256, %v3255
    %v3283 = vpack.c.b16 %v3258, %v3257
    %v3284 = vpack.c.b16 %v3260, %v3259
    %3309 = vmatpush.bf16.msra.mxu0 %v3268
    %3310 = vmatpush.bf16.msra.mxu0 %v3267
    %3311 = vmatpush.bf16.msra.mxu0 %v3266
    %3312 = vmatpush.bf16.msra.mxu0 %v3265
    %3313 = vmatpush.bf16.msra.mxu0 %v3264
    %3314 = vmatpush.bf16.msra.mxu0 %v3263
    %3315 = vmatpush.bf16.msra.mxu0 %v3262
    %3316 = vmatpush.bf16.msra.mxu0 %v3261
    %3317 = vmatmul.bf16.gmra.mxu0 %v3094
    %v3318 = vpop.f32.mrf.mxu0
    %v3319 = vadd.f32 %v3076, %v3318
    %v3320 = vpop.f32.mrf.mxu0
    %v3321 = vadd.f32 %v3076, %v3320
    %3322 = vmatmul.bf16.gmra.mxu0 %v3137
    %v3323 = vpop.f32.mrf.mxu0
    %v3324 = vadd.f32 %v3076, %v3323
    %v3325 = vpop.f32.mrf.mxu0
    %v3326 = vadd.f32 %v3076, %v3325
    %3327 = vmatmul.bf16.gmra.mxu0 %v3136
    %v3328 = vpop.f32.mrf.mxu0
    %v3329 = vadd.f32 %v3076, %v3328
    %v3330 = vpop.f32.mrf.mxu0
    %3331 = vdwg.mxu0
    %3332 = vmatpush.bf16.msra.mxu0 %v3276
    %3333 = vmatpush.bf16.msra.mxu0 %v3275
    %3334 = vmatpush.bf16.msra.mxu0 %v3274
    %3335 = vmatpush.bf16.msra.mxu0 %v3273
    %3336 = vmatpush.bf16.msra.mxu0 %v3272
    %3337 = vmatpush.bf16.msra.mxu0 %v3271
    %3338 = vmatpush.bf16.msra.mxu0 %v3270
    %3339 = vmatpush.bf16.msra.mxu0 %v3269
    %3340 = vmatmul.bf16.gmra.mxu0 %v3111
    %v3341 = vpop.f32.mrf.mxu0
    %v3342 = vadd.f32 %v3319, %v3341
    %v3343 = vpop.f32.mrf.mxu0
    %v3344 = vadd.f32 %v3321, %v3343
    %3345 = vmatmul.bf16.gmra.mxu0 %v3146
    %v3346 = vpop.f32.mrf.mxu0
    %v3347 = vadd.f32 %v3324, %v3346
    %v3348 = vpop.f32.mrf.mxu0
    %v3349 = vadd.f32 %v3326, %v3348
    %3350 = vmatmul.bf16.gmra.mxu0 %v3145
    %v3351 = vpop.f32.mrf.mxu0
    %v3352 = vadd.f32 %v3329, %v3351
    %v3353 = vpop.f32.mrf.mxu0
    %3354 = vdwg.mxu0
    %3355 = vmatpush.bf16.msra.mxu0 %v3284
    %3356 = vmatpush.bf16.msra.mxu0 %v3283
    %3357 = vmatpush.bf16.msra.mxu0 %v3282
    %3358 = vmatpush.bf16.msra.mxu0 %v3281
    %3359 = vmatpush.bf16.msra.mxu0 %v3280
    %3360 = vmatpush.bf16.msra.mxu0 %v3279
    %3361 = vmatpush.bf16.msra.mxu0 %v3278
    %3362 = vmatpush.bf16.msra.mxu0 %v3277
    %3363 = vmatmul.bf16.gmra.mxu0 %v3128
    %v3364 = vpop.f32.mrf.mxu0
    %v3365 = vadd.f32 %v3342, %v3364
    %v3366 = vpop.f32.mrf.mxu0
    %v3367 = vadd.f32 %v3344, %v3366
    %3368 = vmatmul.bf16.gmra.mxu0 %v3155
    %v3369 = vpop.f32.mrf.mxu0
    %v3370 = vadd.f32 %v3347, %v3369
    %v3371 = vpop.f32.mrf.mxu0
    %v3372 = vadd.f32 %v3349, %v3371
    %3373 = vmatmul.bf16.gmra.mxu0 %v3154
    %v3374 = vpop.f32.mrf.mxu0
    %v3375 = vadd.f32 %v3352, %v3374
    %v3376 = vpop.f32.mrf.mxu0
    %3377 = vdwg.mxu0
    %v3378 = vmul.f32 %v3365, %v177
    %v3379 = vmul.f32 %v3367, %v178
    %v3380 = vmul.f32 %v3370, %v179
    %v3381 = vmul.f32 %v3372, %v180
    %v3382 = vmul.f32 %v3375, %v181
    %v3383 = vadd.f32 %v3378, %v1021
    %v3384 = vadd.f32 %v3379, %v1022
    %v3385 = vadd.f32 %v3380, %v1023
    %v3386 = vadd.f32 %v3381, %v1024
    %v3387 = vadd.f32 %v3382, %v1025
    %s3388 = scalar_lea.vmem [#allocation2], 1536
    %v3389 = vld [vmem:[%s3388] sm:$0xf]
    %v3390 = vld [vmem:[%s3388 + $0x4] sm:$0xf]
    %v3391 = vld [vmem:[%s3388 + $0x8] sm:$0xf]
    %v3392 = vld [vmem:[%s3388 + $0xc] sm:$0xf]
    %v3393 = vld [vmem:[%s3388 + $0x10] sm:$0xf]
    %v3394 = vld [vmem:[%s3388 + $0x14] sm:$0xf]
    %v3395 = vld [vmem:[%s3388 + $0x18] sm:$0xf]
    %v3396 = vld [vmem:[%s3388 + $0x1c] sm:$0xf]
    %v3397 = vld [vmem:[%s3388 + $0x20] sm:$0xf]
    %v3398 = vld [vmem:[%s3388 + $0x24] sm:$0xf]
    %v3399 = vld [vmem:[%s3388 + $0x28] sm:$0xf]
    %v3400 = vld [vmem:[%s3388 + $0x2c] sm:$0xf]
    %v3401 = vld [vmem:[%s3388 + $0x30] sm:$0xf]
    %v3402 = vld [vmem:[%s3388 + $0x34] sm:$0xf]
    %v3403 = vld [vmem:[%s3388 + $0x38] sm:$0xf]
    %v3404 = vld [vmem:[%s3388 + $0x3c] sm:$0xf]
    %v3405 = vld [vmem:[%s3388 + $0x40] sm:$0xf]
    %v3406 = vld [vmem:[%s3388 + $0x44] sm:$0xf]
    %v3407 = vld [vmem:[%s3388 + $0x48] sm:$0xf]
    %v3408 = vld [vmem:[%s3388 + $0x4c] sm:$0xf]
    %v3409 = vld [vmem:[%s3388 + $0x50] sm:$0xf]
    %v3410 = vld [vmem:[%s3388 + $0x54] sm:$0xf]
    %v3411 = vld [vmem:[%s3388 + $0x58] sm:$0xf]
    %v3412 = vld [vmem:[%s3388 + $0x5c] sm:$0xf]
    %v3413 = vld [vmem:[%s3388 + $0x60] sm:$0xf]
    %v3414 = vld [vmem:[%s3388 + $0x64] sm:$0xf]
    %v3415 = vld [vmem:[%s3388 + $0x68] sm:$0xf]
    %v3416 = vld [vmem:[%s3388 + $0x6c] sm:$0xf]
    %v3417 = vld [vmem:[%s3388 + $0x70] sm:$0xf]
    %v3418 = vld [vmem:[%s3388 + $0x74] sm:$0xf]
    %v3419 = vld [vmem:[%s3388 + $0x78] sm:$0xf]
    %v3420 = vld [vmem:[%s3388 + $0x7c] sm:$0xf]
    %v3421 = vld [vmem:[%s3388 + $0x80] sm:$0xf]
    %v3422 = vld [vmem:[%s3388 + $0x84] sm:$0xf]
    %v3423 = vld [vmem:[%s3388 + $0x88] sm:$0xf]
    %v3424 = vld [vmem:[%s3388 + $0x8c] sm:$0xf]
    %v3425 = vld [vmem:[%s3388 + $0x90] sm:$0xf]
    %v3426 = vld [vmem:[%s3388 + $0x94] sm:$0xf]
    %v3427 = vld [vmem:[%s3388 + $0x98] sm:$0xf]
    %v3428 = vld [vmem:[%s3388 + $0x9c] sm:$0xf]
    %v3429 = vld [vmem:[%s3388 + $0xa0] sm:$0xf]
    %v3430 = vld [vmem:[%s3388 + $0xa4] sm:$0xf]
    %v3431 = vld [vmem:[%s3388 + $0xa8] sm:$0xf]
    %v3432 = vld [vmem:[%s3388 + $0xac] sm:$0xf]
    %v3433 = vld [vmem:[%s3388 + $0xb0] sm:$0xf]
    %v3434 = vld [vmem:[%s3388 + $0xb4] sm:$0xf]
    %v3435 = vld [vmem:[%s3388 + $0xb8] sm:$0xf]
    %v3436 = vld [vmem:[%s3388 + $0xbc] sm:$0xf]
    %s3437 = scalar_lea.vmem [#allocation4], 8
    %v3438 = vld [vmem:[%s3437] sm:$0x1]
    %v3439 = vrot.slane %v3383, 4
    %v3440 = vsel %vm239, %v3439, %v3387
    %v3441 = vrot.slane %v3384, 4
    %v3442 = vrot.slane %v3385, 4
    %v3443 = vrot.slane %v3386, 4
    %v3444 = vrot.slane %v3440, 4
    %v3445 = vsel %vm239, %v3441, %v3439
    %v3446 = vsel %vm239, %v3442, %v3441
    %v3447 = vsel %vm239, %v3443, %v3442
    %v3448 = vsel %vm239, %v3444, %v3443
    %v3454 = vrot.slane %v3383, 5
    %v3455 = vrot.slane %v3384, 5
    %v3456 = vsel %vm255, %v3454, %v3455
    %v3457 = vrot.slane %v3385, 5
    %v3458 = vsel %vm255, %v3455, %v3457
    %v3459 = vrot.slane %v3386, 5
    %v3460 = vsel %vm255, %v3457, %v3459
    %v3461 = vrot.slane %v3387, 5
    %v3462 = vsel %vm255, %v3459, %v3461
    %v3469 = vrot.slane %v3383, 6
    %v3470 = vrot.slane %v3384, 6
    %v3471 = vsel %vm271, %v3469, %v3470
    %v3472 = vrot.slane %v3385, 6
    %v3473 = vsel %vm271, %v3470, %v3472
    %v3474 = vrot.slane %v3386, 6
    %v3475 = vsel %vm271, %v3472, %v3474
    %v3476 = vrot.slane %v3440, 6
    %v3477 = vsel %vm271, %v3474, %v3476
    %v3483 = vpack.c.bf16 %v3445, %v3440
    %v3484 = vpack.c.bf16 %v3456, %v3454
    %v3485 = vpack.c.bf16 %v3471, %v3469
    %v3486 = vpack.c.bf16 %v3447, %v3446
    %v3487 = vpack.c.bf16 %v3460, %v3458
    %v3488 = vpack.c.bf16 %v3475, %v3473
    %v3489 = vpack.c.bf16 %v3448, %v3448
    %v3490 = vpack.c.bf16 %v3462, %v3462
    %v3491 = vpack.c.bf16 %v3477, %v3477
    %v3493 = vperm.slane %v3438, 0
    %v3496 = vshrl.u32 %v3483, 16
    %v3498 = vrot.slane %v3496, 1
    %v3499 = vshll.u32 %v3483, 16
    %v3501 = vrot.slane %v3499, 2
    %v3502 = vor.u32 %v3498, %v3501
    %v3504 = vshrl.u32 %v3486, 16
    %v3506 = vrot.slane %v3504, 1
    %v3507 = vshll.u32 %v3486, 16
    %v3509 = vrot.slane %v3507, 2
    %v3510 = vor.u32 %v3506, %v3509
    %v3511 = vsel %vm298, %v3502, %v3510
    %v3513 = vshrl.u32 %v3484, 16
    %v3515 = vrot.slane %v3513, 1
    %v3516 = vshll.u32 %v3484, 16
    %v3518 = vrot.slane %v3516, 2
    %v3519 = vor.u32 %v3515, %v3518
    %v3521 = vshrl.u32 %v3487, 16
    %v3523 = vrot.slane %v3521, 1
    %v3524 = vshll.u32 %v3487, 16
    %v3526 = vrot.slane %v3524, 2
    %v3527 = vor.u32 %v3523, %v3526
    %v3528 = vsel %vm298, %v3519, %v3527
    %v3530 = vshrl.u32 %v3485, 16
    %v3532 = vrot.slane %v3530, 1
    %v3533 = vshll.u32 %v3485, 16
    %v3535 = vrot.slane %v3533, 2
    %v3536 = vor.u32 %v3532, %v3535
    %v3538 = vshrl.u32 %v3488, 16
    %v3540 = vrot.slane %v3538, 1
    %v3541 = vshll.u32 %v3488, 16
    %v3543 = vrot.slane %v3541, 2
    %v3544 = vor.u32 %v3540, %v3543
    %v3545 = vsel %vm298, %v3536, %v3544
    %v3547 = vshrl.u32 %v3489, 16
    %v3549 = vrot.slane %v3547, 1
    %v3550 = vshll.u32 %v3489, 16
    %v3552 = vrot.slane %v3550, 2
    %v3553 = vor.u32 %v3549, %v3552
    %v3554 = vsel %vm298, %v3510, %v3553
    %v3556 = vshrl.u32 %v3490, 16
    %v3558 = vrot.slane %v3556, 1
    %v3559 = vshll.u32 %v3490, 16
    %v3561 = vrot.slane %v3559, 2
    %v3562 = vor.u32 %v3558, %v3561
    %v3563 = vsel %vm298, %v3527, %v3562
    %v3565 = vshrl.u32 %v3491, 16
    %v3567 = vrot.slane %v3565, 1
    %v3568 = vshll.u32 %v3491, 16
    %v3570 = vrot.slane %v3568, 2
    %v3571 = vor.u32 %v3567, %v3570
    %v3572 = vsel %vm298, %v3544, %v3571
    %v3630 = vunpack.c.l.b16 %v3389
    %v3631 = vunpack.c.l.b16 %v3390
    %v3632 = vunpack.c.l.b16 %v3391
    %v3633 = vunpack.c.l.b16 %v3392
    %v3634 = vunpack.c.l.b16 %v3393
    %v3635 = vunpack.c.l.b16 %v3394
    %v3636 = vunpack.c.l.b16 %v3395
    %v3637 = vunpack.c.l.b16 %v3396
    %v3638 = vunpack.c.l.b16 %v3397
    %v3639 = vunpack.c.l.b16 %v3398
    %v3640 = vunpack.c.l.b16 %v3399
    %v3641 = vunpack.c.l.b16 %v3400
    %v3642 = vunpack.c.l.b16 %v3401
    %v3643 = vunpack.c.l.b16 %v3402
    %v3644 = vunpack.c.l.b16 %v3403
    %v3645 = vunpack.c.l.b16 %v3404
    %v3646 = vunpack.c.l.b16 %v3405
    %v3647 = vunpack.c.l.b16 %v3406
    %v3648 = vunpack.c.l.b16 %v3407
    %v3649 = vunpack.c.l.b16 %v3408
    %v3650 = vunpack.c.l.b16 %v3409
    %v3651 = vunpack.c.l.b16 %v3410
    %v3652 = vunpack.c.l.b16 %v3411
    %v3653 = vunpack.c.l.b16 %v3412
    %v3654 = vunpack.c.l.b16 %v3413
    %v3655 = vunpack.c.l.b16 %v3414
    %v3656 = vunpack.c.l.b16 %v3415
    %v3657 = vunpack.c.l.b16 %v3416
    %v3658 = vunpack.c.l.b16 %v3417
    %v3659 = vunpack.c.l.b16 %v3418
    %v3660 = vunpack.c.l.b16 %v3419
    %v3661 = vunpack.c.l.b16 %v3420
    %v3662 = vunpack.c.l.b16 %v3421
    %v3663 = vunpack.c.l.b16 %v3422
    %v3664 = vunpack.c.l.b16 %v3423
    %v3665 = vunpack.c.l.b16 %v3424
    %v3666 = vunpack.c.l.b16 %v3425
    %v3667 = vunpack.c.l.b16 %v3426
    %v3668 = vunpack.c.l.b16 %v3427
    %v3669 = vunpack.c.l.b16 %v3428
    %v3670 = vunpack.c.l.b16 %v3429
    %v3671 = vunpack.c.l.b16 %v3430
    %v3672 = vunpack.c.l.b16 %v3431
    %v3673 = vunpack.c.l.b16 %v3432
    %v3674 = vunpack.c.l.b16 %v3433
    %v3675 = vunpack.c.l.b16 %v3434
    %v3676 = vunpack.c.l.b16 %v3435
    %v3677 = vunpack.c.l.b16 %v3436
    %v3678 = vpack.c.b16 %v3631, %v3630
    %v3679 = vpack.c.b16 %v3633, %v3632
    %v3680 = vpack.c.b16 %v3635, %v3634
    %v3681 = vpack.c.b16 %v3637, %v3636
    %v3682 = vpack.c.b16 %v3639, %v3638
    %v3683 = vpack.c.b16 %v3641, %v3640
    %v3684 = vpack.c.b16 %v3643, %v3642
    %v3685 = vpack.c.b16 %v3645, %v3644
    %v3686 = vpack.c.b16 %v3647, %v3646
    %v3687 = vpack.c.b16 %v3649, %v3648
    %v3688 = vpack.c.b16 %v3651, %v3650
    %v3689 = vpack.c.b16 %v3653, %v3652
    %v3690 = vpack.c.b16 %v3655, %v3654
    %v3691 = vpack.c.b16 %v3657, %v3656
    %v3692 = vpack.c.b16 %v3659, %v3658
    %v3693 = vpack.c.b16 %v3661, %v3660
    %v3694 = vpack.c.b16 %v3663, %v3662
    %v3695 = vpack.c.b16 %v3665, %v3664
    %v3696 = vpack.c.b16 %v3667, %v3666
    %v3697 = vpack.c.b16 %v3669, %v3668
    %v3698 = vpack.c.b16 %v3671, %v3670
    %v3699 = vpack.c.b16 %v3673, %v3672
    %v3700 = vpack.c.b16 %v3675, %v3674
    %v3701 = vpack.c.b16 %v3677, %v3676
    %3726 = vmatpush.bf16.msra.mxu0 %v3685
    %3727 = vmatpush.bf16.msra.mxu0 %v3684
    %3728 = vmatpush.bf16.msra.mxu0 %v3683
    %3729 = vmatpush.bf16.msra.mxu0 %v3682
    %3730 = vmatpush.bf16.msra.mxu0 %v3681
    %3731 = vmatpush.bf16.msra.mxu0 %v3680
    %3732 = vmatpush.bf16.msra.mxu0 %v3679
    %3733 = vmatpush.bf16.msra.mxu0 %v3678
    %3734 = vmatmul.bf16.gmra.mxu0 %v3511
    %v3735 = vpop.f32.mrf.mxu0
    %v3736 = vadd.f32 %v3493, %v3735
    %v3737 = vpop.f32.mrf.mxu0
    %v3738 = vadd.f32 %v3493, %v3737
    %3739 = vmatmul.bf16.gmra.mxu0 %v3554
    %v3740 = vpop.f32.mrf.mxu0
    %v3741 = vadd.f32 %v3493, %v3740
    %v3742 = vpop.f32.mrf.mxu0
    %v3743 = vadd.f32 %v3493, %v3742
    %3744 = vmatmul.bf16.gmra.mxu0 %v3553
    %v3745 = vpop.f32.mrf.mxu0
    %v3746 = vadd.f32 %v3493, %v3745
    %v3747 = vpop.f32.mrf.mxu0
    %3748 = vdwg.mxu0
    %3749 = vmatpush.bf16.msra.mxu0 %v3693
    %3750 = vmatpush.bf16.msra.mxu0 %v3692
    %3751 = vmatpush.bf16.msra.mxu0 %v3691
    %3752 = vmatpush.bf16.msra.mxu0 %v3690
    %3753 = vmatpush.bf16.msra.mxu0 %v3689
    %3754 = vmatpush.bf16.msra.mxu0 %v3688
    %3755 = vmatpush.bf16.msra.mxu0 %v3687
    %3756 = vmatpush.bf16.msra.mxu0 %v3686
    %3757 = vmatmul.bf16.gmra.mxu0 %v3528
    %v3758 = vpop.f32.mrf.mxu0
    %v3759 = vadd.f32 %v3736, %v3758
    %v3760 = vpop.f32.mrf.mxu0
    %v3761 = vadd.f32 %v3738, %v3760
    %3762 = vmatmul.bf16.gmra.mxu0 %v3563
    %v3763 = vpop.f32.mrf.mxu0
    %v3764 = vadd.f32 %v3741, %v3763
    %v3765 = vpop.f32.mrf.mxu0
    %v3766 = vadd.f32 %v3743, %v3765
    %3767 = vmatmul.bf16.gmra.mxu0 %v3562
    %v3768 = vpop.f32.mrf.mxu0
    %v3769 = vadd.f32 %v3746, %v3768
    %v3770 = vpop.f32.mrf.mxu0
    %3771 = vdwg.mxu0
    %3772 = vmatpush.bf16.msra.mxu0 %v3701
    %3773 = vmatpush.bf16.msra.mxu0 %v3700
    %3774 = vmatpush.bf16.msra.mxu0 %v3699
    %3775 = vmatpush.bf16.msra.mxu0 %v3698
    %3776 = vmatpush.bf16.msra.mxu0 %v3697
    %3777 = vmatpush.bf16.msra.mxu0 %v3696
    %3778 = vmatpush.bf16.msra.mxu0 %v3695
    %3779 = vmatpush.bf16.msra.mxu0 %v3694
    %3780 = vmatmul.bf16.gmra.mxu0 %v3545
    %v3781 = vpop.f32.mrf.mxu0
    %v3782 = vadd.f32 %v3759, %v3781
    %v3783 = vpop.f32.mrf.mxu0
    %v3784 = vadd.f32 %v3761, %v3783
    %3785 = vmatmul.bf16.gmra.mxu0 %v3572
    %v3786 = vpop.f32.mrf.mxu0
    %v3787 = vadd.f32 %v3764, %v3786
    %v3788 = vpop.f32.mrf.mxu0
    %v3789 = vadd.f32 %v3766, %v3788
    %3790 = vmatmul.bf16.gmra.mxu0 %v3571
    %v3791 = vpop.f32.mrf.mxu0
    %v3792 = vadd.f32 %v3769, %v3791
    %v3793 = vpop.f32.mrf.mxu0
    %3794 = vdwg.mxu0
    %v3795 = vld [vmem:[#allocation12] sm:$0xf]
    %v3796 = vld [vmem:[#allocation12 + $0x4] sm:$0xf]
    %v3797 = vld [vmem:[#allocation12 + $0x8] sm:$0x3]
    %v3798 = vpack.c.bf16 %v3784, %v3782
    %v3799 = vpack.c.bf16 %v3789, %v3787
    %v3800 = vpack.c.bf16 %v3792, %v3792
    %v3804 = vunpack.c.l.b16 %v3795
    %v3805 = vunpack.c.l.b16 %v3796
    %v3806 = vunpack.c.l.b16 %v3797
    %v3807 = vpack.c.b16 %v3805, %v3804
    %v3808 = vpack.c.b16 %v3806, %v3806
    %vm3809 = vcmask 293888
    %v3811 = vsel %vm3809, %v3807, 0
    %v3814 = vsel %vm3809, %v3808, 0
    %v3817 = vsel %vm271, %v3800, 0
    %3819 = vmatpush.bf16.msra.mxu0 0
    %3820 = vmatpush.bf16.msra.mxu0 0
    %3821 = vmatpush.bf16.msra.mxu0 0
    %3822 = vmatpush.bf16.msra.mxu0 0
    %3823 = vmatpush.bf16.msra.mxu0 0
    %3824 = vmatpush.bf16.msra.mxu0 %v3817
    %3825 = vmatpush.bf16.msra.mxu0 %v3799
    %3826 = vmatpush.bf16.msra.mxu0 %v3798
    %3827 = vmatmul.bf16.gmra.mxu0 %v3811
    %v3828 = vpop.f32.mrf.mxu0
    %v3829 = vadd.f32 0.0, %v3828
    %v3830 = vpop.f32.mrf.mxu0
    %v3831 = vadd.f32 0.0, %v3830
    %3832 = vmatmul.bf16.gmra.mxu0 %v3814
    %v3833 = vpop.f32.mrf.mxu0
    %v3834 = vadd.f32 0.0, %v3833
    %v3835 = vpop.f32.mrf.mxu0
    %3836 = vdwg.mxu0
    %v3837 = vld [vmem:[#allocation6] sm:$0xf]
    %v3838 = vld [vmem:[#allocation6 + $0x4] sm:$0xf]
    %v3839 = vld [vmem:[#allocation6 + $0x8] sm:$0xf]
    %v3840 = vld [vmem:[#allocation6 + $0xc] sm:$0xf]
    %v3841 = vld [vmem:[#allocation6 + $0x10] sm:$0xf]
    %v3842 = vld [vmem:[#allocation6 + $0x14] sm:$0xf]
    %v3843 = vld [vmem:[#allocation6 + $0x18] sm:$0xf]
    %v3844 = vld [vmem:[#allocation6 + $0x1c] sm:$0xf]
    %v3845 = vld [vmem:[#allocation6 + $0x20] sm:$0xf]
    %v3846 = vld [vmem:[#allocation6 + $0x24] sm:$0xf]
    %v3847 = vld [vmem:[#allocation6 + $0x28] sm:$0xf]
    %v3848 = vld [vmem:[#allocation6 + $0x2c] sm:$0xf]
    %v3849 = vld [vmem:[#allocation6 + $0x30] sm:$0xf]
    %v3850 = vld [vmem:[#allocation6 + $0x34] sm:$0xf]
    %v3851 = vld [vmem:[#allocation6 + $0x38] sm:$0xf]
    %v3852 = vld [vmem:[#allocation6 + $0x3c] sm:$0xf]
    %v3853 = vld [vmem:[#allocation6 + $0x40] sm:$0xf]
    %v3854 = vld [vmem:[#allocation6 + $0x44] sm:$0xf]
    %v3855 = vld [vmem:[#allocation6 + $0x48] sm:$0xf]
    %v3856 = vld [vmem:[#allocation6 + $0x4c] sm:$0xf]
    %v3857 = vld [vmem:[#allocation6 + $0x50] sm:$0xf]
    %v3858 = vld [vmem:[#allocation6 + $0x54] sm:$0xf]
    %v3859 = vld [vmem:[#allocation6 + $0x58] sm:$0xf]
    %v3860 = vld [vmem:[#allocation6 + $0x5c] sm:$0xf]
    %v3861 = vld [vmem:[#allocation6 + $0x60] sm:$0xf]
    %v3862 = vld [vmem:[#allocation6 + $0x64] sm:$0xf]
    %v3863 = vld [vmem:[#allocation6 + $0x68] sm:$0xf]
    %v3864 = vld [vmem:[#allocation6 + $0x6c] sm:$0xf]
    %v3865 = vld [vmem:[#allocation6 + $0x70] sm:$0xf]
    %v3866 = vld [vmem:[#allocation6 + $0x74] sm:$0xf]
    %v3867 = vld [vmem:[#allocation6 + $0x78] sm:$0xf]
    %v3868 = vld [vmem:[#allocation6 + $0x7c] sm:$0xf]
    %v3869 = vld [vmem:[#allocation6 + $0x80] sm:$0xf]
    %v3870 = vld [vmem:[#allocation6 + $0x84] sm:$0xf]
    %v3871 = vld [vmem:[#allocation6 + $0x88] sm:$0xf]
    %v3872 = vld [vmem:[#allocation6 + $0x8c] sm:$0xf]
    %v3873 = vld [vmem:[#allocation6 + $0x90] sm:$0xf]
    %v3874 = vld [vmem:[#allocation6 + $0x94] sm:$0xf]
    %v3875 = vld [vmem:[#allocation6 + $0x98] sm:$0xf]
    %v3876 = vld [vmem:[#allocation6 + $0x9c] sm:$0xf]
    %v3877 = vld [vmem:[#allocation6 + $0xa0] sm:$0xf]
    %v3878 = vld [vmem:[#allocation6 + $0xa4] sm:$0xf]
    %v3879 = vld [vmem:[#allocation6 + $0xa8] sm:$0xf]
    %v3880 = vld [vmem:[#allocation6 + $0xac] sm:$0xf]
    %v3881 = vld [vmem:[#allocation6 + $0xb0] sm:$0xf]
    %v3882 = vld [vmem:[#allocation6 + $0xb4] sm:$0xf]
    %v3883 = vld [vmem:[#allocation6 + $0xb8] sm:$0xf]
    %v3884 = vld [vmem:[#allocation6 + $0xbc] sm:$0xf]
    %v3885 = vld [vmem:[#allocation7] sm:$0x1]
    %v3886 = vrot.slane %v3829, 4
    %v3887 = vsel %vm239, %v3886, %v3834
    %v3888 = vrot.slane %v3831, 4
    %v3889 = vrot.slane %v3887, 4
    %v3890 = vsel %vm239, %v3888, %v3886
    %v3891 = vsel %vm239, %v3889, %v3888
    %v3895 = vrot.slane %v3829, 5
    %v3896 = vrot.slane %v3831, 5
    %v3897 = vsel %vm255, %v3895, %v3896
    %v3898 = vrot.slane %v3834, 5
    %v3899 = vsel %vm255, %v3896, %v3898
    %v3904 = vrot.slane %v3829, 6
    %v3905 = vrot.slane %v3831, 6
    %v3906 = vsel %vm271, %v3904, %v3905
    %v3907 = vrot.slane %v3887, 6
    %v3908 = vsel %vm271, %v3905, %v3907
    %v3912 = vpack.c.bf16 %v3890, %v3887
    %v3913 = vpack.c.bf16 %v3897, %v3895
    %v3914 = vpack.c.bf16 %v3906, %v3904
    %v3915 = vpack.c.bf16 %v3891, %v3891
    %v3916 = vpack.c.bf16 %v3899, %v3899
    %v3917 = vpack.c.bf16 %v3908, %v3908
    %v3919 = vperm.slane %v3885, 0
    %v3922 = vshrl.u32 %v3912, 16
    %v3924 = vrot.slane %v3922, 1
    %v3925 = vshll.u32 %v3912, 16
    %v3927 = vrot.slane %v3925, 2
    %v3928 = vor.u32 %v3924, %v3927
    %v3930 = vshrl.u32 %v3915, 16
    %v3932 = vrot.slane %v3930, 1
    %v3933 = vshll.u32 %v3915, 16
    %v3935 = vrot.slane %v3933, 2
    %v3936 = vor.u32 %v3932, %v3935
    %v3937 = vsel %vm298, %v3928, %v3936
    %v3939 = vshrl.u32 %v3913, 16
    %v3941 = vrot.slane %v3939, 1
    %v3942 = vshll.u32 %v3913, 16
    %v3944 = vrot.slane %v3942, 2
    %v3945 = vor.u32 %v3941, %v3944
    %v3947 = vshrl.u32 %v3916, 16
    %v3949 = vrot.slane %v3947, 1
    %v3950 = vshll.u32 %v3916, 16
    %v3952 = vrot.slane %v3950, 2
    %v3953 = vor.u32 %v3949, %v3952
    %v3954 = vsel %vm298, %v3945, %v3953
    %v3956 = vshrl.u32 %v3914, 16
    %v3958 = vrot.slane %v3956, 1
    %v3959 = vshll.u32 %v3914, 16
    %v3961 = vrot.slane %v3959, 2
    %v3962 = vor.u32 %v3958, %v3961
    %v3964 = vshrl.u32 %v3917, 16
    %v3966 = vrot.slane %v3964, 1
    %v3967 = vshll.u32 %v3917, 16
    %v3969 = vrot.slane %v3967, 2
    %v3970 = vor.u32 %v3966, %v3969
    %v3971 = vsel %vm298, %v3962, %v3970
    %v4026 = vunpack.c.l.b16 %v3837
    %v4027 = vunpack.c.l.b16 %v3838
    %v4028 = vunpack.c.l.b16 %v3839
    %v4029 = vunpack.c.l.b16 %v3840
    %v4030 = vunpack.c.l.b16 %v3841
    %v4031 = vunpack.c.l.b16 %v3842
    %v4032 = vunpack.c.l.b16 %v3843
    %v4033 = vunpack.c.l.b16 %v3844
    %v4034 = vunpack.c.l.b16 %v3845
    %v4035 = vunpack.c.l.b16 %v3846
    %v4036 = vunpack.c.l.b16 %v3847
    %v4037 = vunpack.c.l.b16 %v3848
    %v4038 = vunpack.c.l.b16 %v3849
    %v4039 = vunpack.c.l.b16 %v3850
    %v4040 = vunpack.c.l.b16 %v3851
    %v4041 = vunpack.c.l.b16 %v3852
    %v4042 = vunpack.c.l.b16 %v3853
    %v4043 = vunpack.c.l.b16 %v3854
    %v4044 = vunpack.c.l.b16 %v3855
    %v4045 = vunpack.c.l.b16 %v3856
    %v4046 = vunpack.c.l.b16 %v3857
    %v4047 = vunpack.c.l.b16 %v3858
    %v4048 = vunpack.c.l.b16 %v3859
    %v4049 = vunpack.c.l.b16 %v3860
    %v4050 = vunpack.c.l.b16 %v3861
    %v4051 = vunpack.c.l.b16 %v3862
    %v4052 = vunpack.c.l.b16 %v3863
    %v4053 = vunpack.c.l.b16 %v3864
    %v4054 = vunpack.c.l.b16 %v3865
    %v4055 = vunpack.c.l.b16 %v3866
    %v4056 = vunpack.c.l.b16 %v3867
    %v4057 = vunpack.c.l.b16 %v3868
    %v4058 = vunpack.c.l.b16 %v3869
    %v4059 = vunpack.c.l.b16 %v3870
    %v4060 = vunpack.c.l.b16 %v3871
    %v4061 = vunpack.c.l.b16 %v3872
    %v4062 = vunpack.c.l.b16 %v3873
    %v4063 = vunpack.c.l.b16 %v3874
    %v4064 = vunpack.c.l.b16 %v3875
    %v4065 = vunpack.c.l.b16 %v3876
    %v4066 = vunpack.c.l.b16 %v3877
    %v4067 = vunpack.c.l.b16 %v3878
    %v4068 = vunpack.c.l.b16 %v3879
    %v4069 = vunpack.c.l.b16 %v3880
    %v4070 = vunpack.c.l.b16 %v3881
    %v4071 = vunpack.c.l.b16 %v3882
    %v4072 = vunpack.c.l.b16 %v3883
    %v4073 = vunpack.c.l.b16 %v3884
    %v4074 = vpack.c.b16 %v4027, %v4026
    %v4075 = vpack.c.b16 %v4029, %v4028
    %v4076 = vpack.c.b16 %v4031, %v4030
    %v4077 = vpack.c.b16 %v4033, %v4032
    %v4078 = vpack.c.b16 %v4035, %v4034
    %v4079 = vpack.c.b16 %v4037, %v4036
    %v4080 = vpack.c.b16 %v4039, %v4038
    %v4081 = vpack.c.b16 %v4041, %v4040
    %v4082 = vpack.c.b16 %v4043, %v4042
    %v4083 = vpack.c.b16 %v4045, %v4044
    %v4084 = vpack.c.b16 %v4047, %v4046
    %v4085 = vpack.c.b16 %v4049, %v4048
    %v4086 = vpack.c.b16 %v4051, %v4050
    %v4087 = vpack.c.b16 %v4053, %v4052
    %v4088 = vpack.c.b16 %v4055, %v4054
    %v4089 = vpack.c.b16 %v4057, %v4056
    %v4090 = vpack.c.b16 %v4059, %v4058
    %v4091 = vpack.c.b16 %v4061, %v4060
    %v4092 = vpack.c.b16 %v4063, %v4062
    %v4093 = vpack.c.b16 %v4065, %v4064
    %v4094 = vpack.c.b16 %v4067, %v4066
    %v4095 = vpack.c.b16 %v4069, %v4068
    %v4096 = vpack.c.b16 %v4071, %v4070
    %v4097 = vpack.c.b16 %v4073, %v4072
    %4122 = vmatpush.bf16.msra.mxu0 %v4081
    %4123 = vmatpush.bf16.msra.mxu0 %v4080
    %4124 = vmatpush.bf16.msra.mxu0 %v4079
    %4125 = vmatpush.bf16.msra.mxu0 %v4078
    %4126 = vmatpush.bf16.msra.mxu0 %v4077
    %4127 = vmatpush.bf16.msra.mxu0 %v4076
    %4128 = vmatpush.bf16.msra.mxu0 %v4075
    %4129 = vmatpush.bf16.msra.mxu0 %v4074
    %4130 = vmatmul.bf16.gmra.mxu0 %v3937
    %v4131 = vpop.f32.mrf.mxu0
    %v4132 = vadd.f32 %v3919, %v4131
    %v4133 = vpop.f32.mrf.mxu0
    %v4134 = vadd.f32 %v3919, %v4133
    %4135 = vmatmul.bf16.gmra.mxu0 %v3936
    %v4136 = vpop.f32.mrf.mxu0
    %v4137 = vadd.f32 %v3919, %v4136
    %v4138 = vpop.f32.mrf.mxu0
    %4139 = vdwg.mxu0
    %4140 = vmatpush.bf16.msra.mxu0 %v4089
    %4141 = vmatpush.bf16.msra.mxu0 %v4088
    %4142 = vmatpush.bf16.msra.mxu0 %v4087
    %4143 = vmatpush.bf16.msra.mxu0 %v4086
    %4144 = vmatpush.bf16.msra.mxu0 %v4085
    %4145 = vmatpush.bf16.msra.mxu0 %v4084
    %4146 = vmatpush.bf16.msra.mxu0 %v4083
    %4147 = vmatpush.bf16.msra.mxu0 %v4082
    %4148 = vmatmul.bf16.gmra.mxu0 %v3954
    %v4149 = vpop.f32.mrf.mxu0
    %v4150 = vadd.f32 %v4132, %v4149
    %v4151 = vpop.f32.mrf.mxu0
    %v4152 = vadd.f32 %v4134, %v4151
    %4153 = vmatmul.bf16.gmra.mxu0 %v3953
    %v4154 = vpop.f32.mrf.mxu0
    %v4155 = vadd.f32 %v4137, %v4154
    %v4156 = vpop.f32.mrf.mxu0
    %4157 = vdwg.mxu0
    %4158 = vmatpush.bf16.msra.mxu0 %v4097
    %4159 = vmatpush.bf16.msra.mxu0 %v4096
    %4160 = vmatpush.bf16.msra.mxu0 %v4095
    %4161 = vmatpush.bf16.msra.mxu0 %v4094
    %4162 = vmatpush.bf16.msra.mxu0 %v4093
    %4163 = vmatpush.bf16.msra.mxu0 %v4092
    %4164 = vmatpush.bf16.msra.mxu0 %v4091
    %4165 = vmatpush.bf16.msra.mxu0 %v4090
    %4166 = vmatmul.bf16.gmra.mxu0 %v3971
    %v4167 = vpop.f32.mrf.mxu0
    %v4168 = vadd.f32 %v4150, %v4167
    %v4169 = vpop.f32.mrf.mxu0
    %v4170 = vadd.f32 %v4152, %v4169
    %4171 = vmatmul.bf16.gmra.mxu0 %v3970
    %v4172 = vpop.f32.mrf.mxu0
    %v4173 = vadd.f32 %v4155, %v4172
    %v4174 = vpop.f32.mrf.mxu0
    %4175 = vdwg.mxu0
    %v4176 = vmax.f32 %v4168, 0.0
    %v4177 = vmax.f32 %v4170, 0.0
    %v4178 = vmax.f32 %v4173, 0.0
    %v4179 = vmul.f32 %v4176, %v182
    %v4180 = vmul.f32 %v4177, %v183
    %v4181 = vmul.f32 %v4178, %v184
    %s4182 = scalar_lea.vmem [#allocation6], 192
    %v4183 = vld [vmem:[%s4182] sm:$0xf]
    %v4184 = vld [vmem:[%s4182 + $0x4] sm:$0xf]
    %v4185 = vld [vmem:[%s4182 + $0x8] sm:$0xf]
    %v4186 = vld [vmem:[%s4182 + $0xc] sm:$0xf]
    %v4187 = vld [vmem:[%s4182 + $0x10] sm:$0xf]
    %v4188 = vld [vmem:[%s4182 + $0x14] sm:$0xf]
    %v4189 = vld [vmem:[%s4182 + $0x18] sm:$0xf]
    %v4190 = vld [vmem:[%s4182 + $0x1c] sm:$0xf]
    %v4191 = vld [vmem:[%s4182 + $0x20] sm:$0xf]
    %v4192 = vld [vmem:[%s4182 + $0x24] sm:$0xf]
    %v4193 = vld [vmem:[%s4182 + $0x28] sm:$0xf]
    %v4194 = vld [vmem:[%s4182 + $0x2c] sm:$0xf]
    %v4195 = vld [vmem:[%s4182 + $0x30] sm:$0xf]
    %v4196 = vld [vmem:[%s4182 + $0x34] sm:$0xf]
    %v4197 = vld [vmem:[%s4182 + $0x38] sm:$0xf]
    %v4198 = vld [vmem:[%s4182 + $0x3c] sm:$0xf]
    %v4199 = vld [vmem:[%s4182 + $0x40] sm:$0xf]
    %v4200 = vld [vmem:[%s4182 + $0x44] sm:$0xf]
    %v4201 = vld [vmem:[%s4182 + $0x48] sm:$0xf]
    %v4202 = vld [vmem:[%s4182 + $0x4c] sm:$0xf]
    %v4203 = vld [vmem:[%s4182 + $0x50] sm:$0xf]
    %v4204 = vld [vmem:[%s4182 + $0x54] sm:$0xf]
    %v4205 = vld [vmem:[%s4182 + $0x58] sm:$0xf]
    %v4206 = vld [vmem:[%s4182 + $0x5c] sm:$0xf]
    %v4207 = vld [vmem:[%s4182 + $0x60] sm:$0xf]
    %v4208 = vld [vmem:[%s4182 + $0x64] sm:$0xf]
    %v4209 = vld [vmem:[%s4182 + $0x68] sm:$0xf]
    %v4210 = vld [vmem:[%s4182 + $0x6c] sm:$0xf]
    %v4211 = vld [vmem:[%s4182 + $0x70] sm:$0xf]
    %v4212 = vld [vmem:[%s4182 + $0x74] sm:$0xf]
    %v4213 = vld [vmem:[%s4182 + $0x78] sm:$0xf]
    %v4214 = vld [vmem:[%s4182 + $0x7c] sm:$0xf]
    %v4215 = vld [vmem:[%s4182 + $0x80] sm:$0xf]
    %v4216 = vld [vmem:[%s4182 + $0x84] sm:$0xf]
    %v4217 = vld [vmem:[%s4182 + $0x88] sm:$0xf]
    %v4218 = vld [vmem:[%s4182 + $0x8c] sm:$0xf]
    %v4219 = vld [vmem:[%s4182 + $0x90] sm:$0xf]
    %v4220 = vld [vmem:[%s4182 + $0x94] sm:$0xf]
    %v4221 = vld [vmem:[%s4182 + $0x98] sm:$0xf]
    %v4222 = vld [vmem:[%s4182 + $0x9c] sm:$0xf]
    %v4223 = vld [vmem:[%s4182 + $0xa0] sm:$0xf]
    %v4224 = vld [vmem:[%s4182 + $0xa4] sm:$0xf]
    %v4225 = vld [vmem:[%s4182 + $0xa8] sm:$0xf]
    %v4226 = vld [vmem:[%s4182 + $0xac] sm:$0xf]
    %v4227 = vld [vmem:[%s4182 + $0xb0] sm:$0xf]
    %v4228 = vld [vmem:[%s4182 + $0xb4] sm:$0xf]
    %v4229 = vld [vmem:[%s4182 + $0xb8] sm:$0xf]
    %v4230 = vld [vmem:[%s4182 + $0xbc] sm:$0xf]
    %s4231 = scalar_lea.vmem [#allocation7], 1
    %v4232 = vld [vmem:[%s4231] sm:$0x1]
    %v4233 = vrot.slane %v4179, 4
    %v4234 = vsel %vm239, %v4233, %v4181
    %v4235 = vrot.slane %v4180, 4
    %v4236 = vrot.slane %v4234, 4
    %v4237 = vsel %vm239, %v4235, %v4233
    %v4238 = vsel %vm239, %v4236, %v4235
    %v4242 = vrot.slane %v4179, 5
    %v4243 = vrot.slane %v4180, 5
    %v4244 = vsel %vm255, %v4242, %v4243
    %v4245 = vrot.slane %v4181, 5
    %v4246 = vsel %vm255, %v4243, %v4245
    %v4251 = vrot.slane %v4179, 6
    %v4252 = vrot.slane %v4180, 6
    %v4253 = vsel %vm271, %v4251, %v4252
    %v4254 = vrot.slane %v4234, 6
    %v4255 = vsel %vm271, %v4252, %v4254
    %v4259 = vpack.c.bf16 %v4237, %v4234
    %v4260 = vpack.c.bf16 %v4244, %v4242
    %v4261 = vpack.c.bf16 %v4253, %v4251
    %v4262 = vpack.c.bf16 %v4238, %v4238
    %v4263 = vpack.c.bf16 %v4246, %v4246
    %v4264 = vpack.c.bf16 %v4255, %v4255
    %v4266 = vperm.slane %v4232, 0
    %v4269 = vshrl.u32 %v4259, 16
    %v4271 = vrot.slane %v4269, 1
    %v4272 = vshll.u32 %v4259, 16
    %v4274 = vrot.slane %v4272, 2
    %v4275 = vor.u32 %v4271, %v4274
    %v4277 = vshrl.u32 %v4262, 16
    %v4279 = vrot.slane %v4277, 1
    %v4280 = vshll.u32 %v4262, 16
    %v4282 = vrot.slane %v4280, 2
    %v4283 = vor.u32 %v4279, %v4282
    %v4284 = vsel %vm298, %v4275, %v4283
    %v4286 = vshrl.u32 %v4260, 16
    %v4288 = vrot.slane %v4286, 1
    %v4289 = vshll.u32 %v4260, 16
    %v4291 = vrot.slane %v4289, 2
    %v4292 = vor.u32 %v4288, %v4291
    %v4294 = vshrl.u32 %v4263, 16
    %v4296 = vrot.slane %v4294, 1
    %v4297 = vshll.u32 %v4263, 16
    %v4299 = vrot.slane %v4297, 2
    %v4300 = vor.u32 %v4296, %v4299
    %v4301 = vsel %vm298, %v4292, %v4300
    %v4303 = vshrl.u32 %v4261, 16
    %v4305 = vrot.slane %v4303, 1
    %v4306 = vshll.u32 %v4261, 16
    %v4308 = vrot.slane %v4306, 2
    %v4309 = vor.u32 %v4305, %v4308
    %v4311 = vshrl.u32 %v4264, 16
    %v4313 = vrot.slane %v4311, 1
    %v4314 = vshll.u32 %v4264, 16
    %v4316 = vrot.slane %v4314, 2
    %v4317 = vor.u32 %v4313, %v4316
    %v4318 = vsel %vm298, %v4309, %v4317
    %v4373 = vunpack.c.l.b16 %v4183
    %v4374 = vunpack.c.l.b16 %v4184
    %v4375 = vunpack.c.l.b16 %v4185
    %v4376 = vunpack.c.l.b16 %v4186
    %v4377 = vunpack.c.l.b16 %v4187
    %v4378 = vunpack.c.l.b16 %v4188
    %v4379 = vunpack.c.l.b16 %v4189
    %v4380 = vunpack.c.l.b16 %v4190
    %v4381 = vunpack.c.l.b16 %v4191
    %v4382 = vunpack.c.l.b16 %v4192
    %v4383 = vunpack.c.l.b16 %v4193
    %v4384 = vunpack.c.l.b16 %v4194
    %v4385 = vunpack.c.l.b16 %v4195
    %v4386 = vunpack.c.l.b16 %v4196
    %v4387 = vunpack.c.l.b16 %v4197
    %v4388 = vunpack.c.l.b16 %v4198
    %v4389 = vunpack.c.l.b16 %v4199
    %v4390 = vunpack.c.l.b16 %v4200
    %v4391 = vunpack.c.l.b16 %v4201
    %v4392 = vunpack.c.l.b16 %v4202
    %v4393 = vunpack.c.l.b16 %v4203
    %v4394 = vunpack.c.l.b16 %v4204
    %v4395 = vunpack.c.l.b16 %v4205
    %v4396 = vunpack.c.l.b16 %v4206
    %v4397 = vunpack.c.l.b16 %v4207
    %v4398 = vunpack.c.l.b16 %v4208
    %v4399 = vunpack.c.l.b16 %v4209
    %v4400 = vunpack.c.l.b16 %v4210
    %v4401 = vunpack.c.l.b16 %v4211
    %v4402 = vunpack.c.l.b16 %v4212
    %v4403 = vunpack.c.l.b16 %v4213
    %v4404 = vunpack.c.l.b16 %v4214
    %v4405 = vunpack.c.l.b16 %v4215
    %v4406 = vunpack.c.l.b16 %v4216
    %v4407 = vunpack.c.l.b16 %v4217
    %v4408 = vunpack.c.l.b16 %v4218
    %v4409 = vunpack.c.l.b16 %v4219
    %v4410 = vunpack.c.l.b16 %v4220
    %v4411 = vunpack.c.l.b16 %v4221
    %v4412 = vunpack.c.l.b16 %v4222
    %v4413 = vunpack.c.l.b16 %v4223
    %v4414 = vunpack.c.l.b16 %v4224
    %v4415 = vunpack.c.l.b16 %v4225
    %v4416 = vunpack.c.l.b16 %v4226
    %v4417 = vunpack.c.l.b16 %v4227
    %v4418 = vunpack.c.l.b16 %v4228
    %v4419 = vunpack.c.l.b16 %v4229
    %v4420 = vunpack.c.l.b16 %v4230
    %v4421 = vpack.c.b16 %v4374, %v4373
    %v4422 = vpack.c.b16 %v4376, %v4375
    %v4423 = vpack.c.b16 %v4378, %v4377
    %v4424 = vpack.c.b16 %v4380, %v4379
    %v4425 = vpack.c.b16 %v4382, %v4381
    %v4426 = vpack.c.b16 %v4384, %v4383
    %v4427 = vpack.c.b16 %v4386, %v4385
    %v4428 = vpack.c.b16 %v4388, %v4387
    %v4429 = vpack.c.b16 %v4390, %v4389
    %v4430 = vpack.c.b16 %v4392, %v4391
    %v4431 = vpack.c.b16 %v4394, %v4393
    %v4432 = vpack.c.b16 %v4396, %v4395
    %v4433 = vpack.c.b16 %v4398, %v4397
    %v4434 = vpack.c.b16 %v4400, %v4399
    %v4435 = vpack.c.b16 %v4402, %v4401
    %v4436 = vpack.c.b16 %v4404, %v4403
    %v4437 = vpack.c.b16 %v4406, %v4405
    %v4438 = vpack.c.b16 %v4408, %v4407
    %v4439 = vpack.c.b16 %v4410, %v4409
    %v4440 = vpack.c.b16 %v4412, %v4411
    %v4441 = vpack.c.b16 %v4414, %v4413
    %v4442 = vpack.c.b16 %v4416, %v4415
    %v4443 = vpack.c.b16 %v4418, %v4417
    %v4444 = vpack.c.b16 %v4420, %v4419
    %4469 = vmatpush.bf16.msra.mxu0 %v4428
    %4470 = vmatpush.bf16.msra.mxu0 %v4427
    %4471 = vmatpush.bf16.msra.mxu0 %v4426
    %4472 = vmatpush.bf16.msra.mxu0 %v4425
    %4473 = vmatpush.bf16.msra.mxu0 %v4424
    %4474 = vmatpush.bf16.msra.mxu0 %v4423
    %4475 = vmatpush.bf16.msra.mxu0 %v4422
    %4476 = vmatpush.bf16.msra.mxu0 %v4421
    %4477 = vmatmul.bf16.gmra.mxu0 %v4284
    %v4478 = vpop.f32.mrf.mxu0
    %v4479 = vadd.f32 %v4266, %v4478
    %v4480 = vpop.f32.mrf.mxu0
    %v4481 = vadd.f32 %v4266, %v4480
    %4482 = vmatmul.bf16.gmra.mxu0 %v4283
    %v4483 = vpop.f32.mrf.mxu0
    %v4484 = vadd.f32 %v4266, %v4483
    %v4485 = vpop.f32.mrf.mxu0
    %4486 = vdwg.mxu0
    %4487 = vmatpush.bf16.msra.mxu0 %v4436
    %4488 = vmatpush.bf16.msra.mxu0 %v4435
    %4489 = vmatpush.bf16.msra.mxu0 %v4434
    %4490 = vmatpush.bf16.msra.mxu0 %v4433
    %4491 = vmatpush.bf16.msra.mxu0 %v4432
    %4492 = vmatpush.bf16.msra.mxu0 %v4431
    %4493 = vmatpush.bf16.msra.mxu0 %v4430
    %4494 = vmatpush.bf16.msra.mxu0 %v4429
    %4495 = vmatmul.bf16.gmra.mxu0 %v4301
    %v4496 = vpop.f32.mrf.mxu0
    %v4497 = vadd.f32 %v4479, %v4496
    %v4498 = vpop.f32.mrf.mxu0
    %v4499 = vadd.f32 %v4481, %v4498
    %4500 = vmatmul.bf16.gmra.mxu0 %v4300
    %v4501 = vpop.f32.mrf.mxu0
    %v4502 = vadd.f32 %v4484, %v4501
    %v4503 = vpop.f32.mrf.mxu0
    %4504 = vdwg.mxu0
    %4505 = vmatpush.bf16.msra.mxu0 %v4444
    %4506 = vmatpush.bf16.msra.mxu0 %v4443
    %4507 = vmatpush.bf16.msra.mxu0 %v4442
    %4508 = vmatpush.bf16.msra.mxu0 %v4441
    %4509 = vmatpush.bf16.msra.mxu0 %v4440
    %4510 = vmatpush.bf16.msra.mxu0 %v4439
    %4511 = vmatpush.bf16.msra.mxu0 %v4438
    %4512 = vmatpush.bf16.msra.mxu0 %v4437
    %4513 = vmatmul.bf16.gmra.mxu0 %v4318
    %v4514 = vpop.f32.mrf.mxu0
    %v4515 = vadd.f32 %v4497, %v4514
    %v4516 = vpop.f32.mrf.mxu0
    %v4517 = vadd.f32 %v4499, %v4516
    %4518 = vmatmul.bf16.gmra.mxu0 %v4317
    %v4519 = vpop.f32.mrf.mxu0
    %v4520 = vadd.f32 %v4502, %v4519
    %v4521 = vpop.f32.mrf.mxu0
    %4522 = vdwg.mxu0
    %v4523 = vmul.f32 %v4515, %v182
    %v4524 = vmul.f32 %v4517, %v183
    %v4525 = vmul.f32 %v4520, %v184
    %v4526 = vadd.f32 %v4523, %v3829
    %v4527 = vadd.f32 %v4524, %v3831
    %v4528 = vadd.f32 %v4525, %v3834
    %s4529 = scalar_lea.vmem [#allocation6], 384
    %v4530 = vld [vmem:[%s4529] sm:$0xf]
    %v4531 = vld [vmem:[%s4529 + $0x4] sm:$0xf]
    %v4532 = vld [vmem:[%s4529 + $0x8] sm:$0xf]
    %v4533 = vld [vmem:[%s4529 + $0xc] sm:$0xf]
    %v4534 = vld [vmem:[%s4529 + $0x10] sm:$0xf]
    %v4535 = vld [vmem:[%s4529 + $0x14] sm:$0xf]
    %v4536 = vld [vmem:[%s4529 + $0x18] sm:$0xf]
    %v4537 = vld [vmem:[%s4529 + $0x1c] sm:$0xf]
    %v4538 = vld [vmem:[%s4529 + $0x20] sm:$0xf]
    %v4539 = vld [vmem:[%s4529 + $0x24] sm:$0xf]
    %v4540 = vld [vmem:[%s4529 + $0x28] sm:$0xf]
    %v4541 = vld [vmem:[%s4529 + $0x2c] sm:$0xf]
    %v4542 = vld [vmem:[%s4529 + $0x30] sm:$0xf]
    %v4543 = vld [vmem:[%s4529 + $0x34] sm:$0xf]
    %v4544 = vld [vmem:[%s4529 + $0x38] sm:$0xf]
    %v4545 = vld [vmem:[%s4529 + $0x3c] sm:$0xf]
    %v4546 = vld [vmem:[%s4529 + $0x40] sm:$0xf]
    %v4547 = vld [vmem:[%s4529 + $0x44] sm:$0xf]
    %v4548 = vld [vmem:[%s4529 + $0x48] sm:$0xf]
    %v4549 = vld [vmem:[%s4529 + $0x4c] sm:$0xf]
    %v4550 = vld [vmem:[%s4529 + $0x50] sm:$0xf]
    %v4551 = vld [vmem:[%s4529 + $0x54] sm:$0xf]
    %v4552 = vld [vmem:[%s4529 + $0x58] sm:$0xf]
    %v4553 = vld [vmem:[%s4529 + $0x5c] sm:$0xf]
    %v4554 = vld [vmem:[%s4529 + $0x60] sm:$0xf]
    %v4555 = vld [vmem:[%s4529 + $0x64] sm:$0xf]
    %v4556 = vld [vmem:[%s4529 + $0x68] sm:$0xf]
    %v4557 = vld [vmem:[%s4529 + $0x6c] sm:$0xf]
    %v4558 = vld [vmem:[%s4529 + $0x70] sm:$0xf]
    %v4559 = vld [vmem:[%s4529 + $0x74] sm:$0xf]
    %v4560 = vld [vmem:[%s4529 + $0x78] sm:$0xf]
    %v4561 = vld [vmem:[%s4529 + $0x7c] sm:$0xf]
    %v4562 = vld [vmem:[%s4529 + $0x80] sm:$0xf]
    %v4563 = vld [vmem:[%s4529 + $0x84] sm:$0xf]
    %v4564 = vld [vmem:[%s4529 + $0x88] sm:$0xf]
    %v4565 = vld [vmem:[%s4529 + $0x8c] sm:$0xf]
    %v4566 = vld [vmem:[%s4529 + $0x90] sm:$0xf]
    %v4567 = vld [vmem:[%s4529 + $0x94] sm:$0xf]
    %v4568 = vld [vmem:[%s4529 + $0x98] sm:$0xf]
    %v4569 = vld [vmem:[%s4529 + $0x9c] sm:$0xf]
    %v4570 = vld [vmem:[%s4529 + $0xa0] sm:$0xf]
    %v4571 = vld [vmem:[%s4529 + $0xa4] sm:$0xf]
    %v4572 = vld [vmem:[%s4529 + $0xa8] sm:$0xf]
    %v4573 = vld [vmem:[%s4529 + $0xac] sm:$0xf]
    %v4574 = vld [vmem:[%s4529 + $0xb0] sm:$0xf]
    %v4575 = vld [vmem:[%s4529 + $0xb4] sm:$0xf]
    %v4576 = vld [vmem:[%s4529 + $0xb8] sm:$0xf]
    %v4577 = vld [vmem:[%s4529 + $0xbc] sm:$0xf]
    %s4578 = scalar_lea.vmem [#allocation7], 2
    %v4579 = vld [vmem:[%s4578] sm:$0x1]
    %v4580 = vrot.slane %v4526, 4
    %v4581 = vsel %vm239, %v4580, %v4528
    %v4582 = vrot.slane %v4527, 4
    %v4583 = vrot.slane %v4581, 4
    %v4584 = vsel %vm239, %v4582, %v4580
    %v4585 = vsel %vm239, %v4583, %v4582
    %v4589 = vrot.slane %v4526, 5
    %v4590 = vrot.slane %v4527, 5
    %v4591 = vsel %vm255, %v4589, %v4590
    %v4592 = vrot.slane %v4528, 5
    %v4593 = vsel %vm255, %v4590, %v4592
    %v4598 = vrot.slane %v4526, 6
    %v4599 = vrot.slane %v4527, 6
    %v4600 = vsel %vm271, %v4598, %v4599
    %v4601 = vrot.slane %v4581, 6
    %v4602 = vsel %vm271, %v4599, %v4601
    %v4606 = vpack.c.bf16 %v4584, %v4581
    %v4607 = vpack.c.bf16 %v4591, %v4589
    %v4608 = vpack.c.bf16 %v4600, %v4598
    %v4609 = vpack.c.bf16 %v4585, %v4585
    %v4610 = vpack.c.bf16 %v4593, %v4593
    %v4611 = vpack.c.bf16 %v4602, %v4602
    %v4613 = vperm.slane %v4579, 0
    %v4616 = vshrl.u32 %v4606, 16
    %v4618 = vrot.slane %v4616, 1
    %v4619 = vshll.u32 %v4606, 16
    %v4621 = vrot.slane %v4619, 2
    %v4622 = vor.u32 %v4618, %v4621
    %v4624 = vshrl.u32 %v4609, 16
    %v4626 = vrot.slane %v4624, 1
    %v4627 = vshll.u32 %v4609, 16
    %v4629 = vrot.slane %v4627, 2
    %v4630 = vor.u32 %v4626, %v4629
    %v4631 = vsel %vm298, %v4622, %v4630
    %v4633 = vshrl.u32 %v4607, 16
    %v4635 = vrot.slane %v4633, 1
    %v4636 = vshll.u32 %v4607, 16
    %v4638 = vrot.slane %v4636, 2
    %v4639 = vor.u32 %v4635, %v4638
    %v4641 = vshrl.u32 %v4610, 16
    %v4643 = vrot.slane %v4641, 1
    %v4644 = vshll.u32 %v4610, 16
    %v4646 = vrot.slane %v4644, 2
    %v4647 = vor.u32 %v4643, %v4646
    %v4648 = vsel %vm298, %v4639, %v4647
    %v4650 = vshrl.u32 %v4608, 16
    %v4652 = vrot.slane %v4650, 1
    %v4653 = vshll.u32 %v4608, 16
    %v4655 = vrot.slane %v4653, 2
    %v4656 = vor.u32 %v4652, %v4655
    %v4658 = vshrl.u32 %v4611, 16
    %v4660 = vrot.slane %v4658, 1
    %v4661 = vshll.u32 %v4611, 16
    %v4663 = vrot.slane %v4661, 2
    %v4664 = vor.u32 %v4660, %v4663
    %v4665 = vsel %vm298, %v4656, %v4664
    %v4720 = vunpack.c.l.b16 %v4530
    %v4721 = vunpack.c.l.b16 %v4531
    %v4722 = vunpack.c.l.b16 %v4532
    %v4723 = vunpack.c.l.b16 %v4533
    %v4724 = vunpack.c.l.b16 %v4534
    %v4725 = vunpack.c.l.b16 %v4535
    %v4726 = vunpack.c.l.b16 %v4536
    %v4727 = vunpack.c.l.b16 %v4537
    %v4728 = vunpack.c.l.b16 %v4538
    %v4729 = vunpack.c.l.b16 %v4539
    %v4730 = vunpack.c.l.b16 %v4540
    %v4731 = vunpack.c.l.b16 %v4541
    %v4732 = vunpack.c.l.b16 %v4542
    %v4733 = vunpack.c.l.b16 %v4543
    %v4734 = vunpack.c.l.b16 %v4544
    %v4735 = vunpack.c.l.b16 %v4545
    %v4736 = vunpack.c.l.b16 %v4546
    %v4737 = vunpack.c.l.b16 %v4547
    %v4738 = vunpack.c.l.b16 %v4548
    %v4739 = vunpack.c.l.b16 %v4549
    %v4740 = vunpack.c.l.b16 %v4550
    %v4741 = vunpack.c.l.b16 %v4551
    %v4742 = vunpack.c.l.b16 %v4552
    %v4743 = vunpack.c.l.b16 %v4553
    %v4744 = vunpack.c.l.b16 %v4554
    %v4745 = vunpack.c.l.b16 %v4555
    %v4746 = vunpack.c.l.b16 %v4556
    %v4747 = vunpack.c.l.b16 %v4557
    %v4748 = vunpack.c.l.b16 %v4558
    %v4749 = vunpack.c.l.b16 %v4559
    %v4750 = vunpack.c.l.b16 %v4560
    %v4751 = vunpack.c.l.b16 %v4561
    %v4752 = vunpack.c.l.b16 %v4562
    %v4753 = vunpack.c.l.b16 %v4563
    %v4754 = vunpack.c.l.b16 %v4564
    %v4755 = vunpack.c.l.b16 %v4565
    %v4756 = vunpack.c.l.b16 %v4566
    %v4757 = vunpack.c.l.b16 %v4567
    %v4758 = vunpack.c.l.b16 %v4568
    %v4759 = vunpack.c.l.b16 %v4569
    %v4760 = vunpack.c.l.b16 %v4570
    %v4761 = vunpack.c.l.b16 %v4571
    %v4762 = vunpack.c.l.b16 %v4572
    %v4763 = vunpack.c.l.b16 %v4573
    %v4764 = vunpack.c.l.b16 %v4574
    %v4765 = vunpack.c.l.b16 %v4575
    %v4766 = vunpack.c.l.b16 %v4576
    %v4767 = vunpack.c.l.b16 %v4577
    %v4768 = vpack.c.b16 %v4721, %v4720
    %v4769 = vpack.c.b16 %v4723, %v4722
    %v4770 = vpack.c.b16 %v4725, %v4724
    %v4771 = vpack.c.b16 %v4727, %v4726
    %v4772 = vpack.c.b16 %v4729, %v4728
    %v4773 = vpack.c.b16 %v4731, %v4730
    %v4774 = vpack.c.b16 %v4733, %v4732
    %v4775 = vpack.c.b16 %v4735, %v4734
    %v4776 = vpack.c.b16 %v4737, %v4736
    %v4777 = vpack.c.b16 %v4739, %v4738
    %v4778 = vpack.c.b16 %v4741, %v4740
    %v4779 = vpack.c.b16 %v4743, %v4742
    %v4780 = vpack.c.b16 %v4745, %v4744
    %v4781 = vpack.c.b16 %v4747, %v4746
    %v4782 = vpack.c.b16 %v4749, %v4748
    %v4783 = vpack.c.b16 %v4751, %v4750
    %v4784 = vpack.c.b16 %v4753, %v4752
    %v4785 = vpack.c.b16 %v4755, %v4754
    %v4786 = vpack.c.b16 %v4757, %v4756
    %v4787 = vpack.c.b16 %v4759, %v4758
    %v4788 = vpack.c.b16 %v4761, %v4760
    %v4789 = vpack.c.b16 %v4763, %v4762
    %v4790 = vpack.c.b16 %v4765, %v4764
    %v4791 = vpack.c.b16 %v4767, %v4766
    %4816 = vmatpush.bf16.msra.mxu0 %v4775
    %4817 = vmatpush.bf16.msra.mxu0 %v4774
    %4818 = vmatpush.bf16.msra.mxu0 %v4773
    %4819 = vmatpush.bf16.msra.mxu0 %v4772
    %4820 = vmatpush.bf16.msra.mxu0 %v4771
    %4821 = vmatpush.bf16.msra.mxu0 %v4770
    %4822 = vmatpush.bf16.msra.mxu0 %v4769
    %4823 = vmatpush.bf16.msra.mxu0 %v4768
    %4824 = vmatmul.bf16.gmra.mxu0 %v4631
    %v4825 = vpop.f32.mrf.mxu0
    %v4826 = vadd.f32 %v4613, %v4825
    %v4827 = vpop.f32.mrf.mxu0
    %v4828 = vadd.f32 %v4613, %v4827
    %4829 = vmatmul.bf16.gmra.mxu0 %v4630
    %v4830 = vpop.f32.mrf.mxu0
    %v4831 = vadd.f32 %v4613, %v4830
    %v4832 = vpop.f32.mrf.mxu0
    %4833 = vdwg.mxu0
    %4834 = vmatpush.bf16.msra.mxu0 %v4783
    %4835 = vmatpush.bf16.msra.mxu0 %v4782
    %4836 = vmatpush.bf16.msra.mxu0 %v4781
    %4837 = vmatpush.bf16.msra.mxu0 %v4780
    %4838 = vmatpush.bf16.msra.mxu0 %v4779
    %4839 = vmatpush.bf16.msra.mxu0 %v4778
    %4840 = vmatpush.bf16.msra.mxu0 %v4777
    %4841 = vmatpush.bf16.msra.mxu0 %v4776
    %4842 = vmatmul.bf16.gmra.mxu0 %v4648
    %v4843 = vpop.f32.mrf.mxu0
    %v4844 = vadd.f32 %v4826, %v4843
    %v4845 = vpop.f32.mrf.mxu0
    %v4846 = vadd.f32 %v4828, %v4845
    %4847 = vmatmul.bf16.gmra.mxu0 %v4647
    %v4848 = vpop.f32.mrf.mxu0
    %v4849 = vadd.f32 %v4831, %v4848
    %v4850 = vpop.f32.mrf.mxu0
    %4851 = vdwg.mxu0
    %4852 = vmatpush.bf16.msra.mxu0 %v4791
    %4853 = vmatpush.bf16.msra.mxu0 %v4790
    %4854 = vmatpush.bf16.msra.mxu0 %v4789
    %4855 = vmatpush.bf16.msra.mxu0 %v4788
    %4856 = vmatpush.bf16.msra.mxu0 %v4787
    %4857 = vmatpush.bf16.msra.mxu0 %v4786
    %4858 = vmatpush.bf16.msra.mxu0 %v4785
    %4859 = vmatpush.bf16.msra.mxu0 %v4784
    %4860 = vmatmul.bf16.gmra.mxu0 %v4665
    %v4861 = vpop.f32.mrf.mxu0
    %v4862 = vadd.f32 %v4844, %v4861
    %v4863 = vpop.f32.mrf.mxu0
    %v4864 = vadd.f32 %v4846, %v4863
    %4865 = vmatmul.bf16.gmra.mxu0 %v4664
    %v4866 = vpop.f32.mrf.mxu0
    %v4867 = vadd.f32 %v4849, %v4866
    %v4868 = vpop.f32.mrf.mxu0
    %4869 = vdwg.mxu0
    %v4870 = vmax.f32 %v4862, 0.0
    %v4871 = vmax.f32 %v4864, 0.0
    %v4872 = vmax.f32 %v4867, 0.0
    %v4873 = vmul.f32 %v4870, %v182
    %v4874 = vmul.f32 %v4871, %v183
    %v4875 = vmul.f32 %v4872, %v184
    %s4876 = scalar_lea.vmem [#allocation6], 576
    %v4877 = vld [vmem:[%s4876] sm:$0xf]
    %v4878 = vld [vmem:[%s4876 + $0x4] sm:$0xf]
    %v4879 = vld [vmem:[%s4876 + $0x8] sm:$0xf]
    %v4880 = vld [vmem:[%s4876 + $0xc] sm:$0xf]
    %v4881 = vld [vmem:[%s4876 + $0x10] sm:$0xf]
    %v4882 = vld [vmem:[%s4876 + $0x14] sm:$0xf]
    %v4883 = vld [vmem:[%s4876 + $0x18] sm:$0xf]
    %v4884 = vld [vmem:[%s4876 + $0x1c] sm:$0xf]
    %v4885 = vld [vmem:[%s4876 + $0x20] sm:$0xf]
    %v4886 = vld [vmem:[%s4876 + $0x24] sm:$0xf]
    %v4887 = vld [vmem:[%s4876 + $0x28] sm:$0xf]
    %v4888 = vld [vmem:[%s4876 + $0x2c] sm:$0xf]
    %v4889 = vld [vmem:[%s4876 + $0x30] sm:$0xf]
    %v4890 = vld [vmem:[%s4876 + $0x34] sm:$0xf]
    %v4891 = vld [vmem:[%s4876 + $0x38] sm:$0xf]
    %v4892 = vld [vmem:[%s4876 + $0x3c] sm:$0xf]
    %v4893 = vld [vmem:[%s4876 + $0x40] sm:$0xf]
    %v4894 = vld [vmem:[%s4876 + $0x44] sm:$0xf]
    %v4895 = vld [vmem:[%s4876 + $0x48] sm:$0xf]
    %v4896 = vld [vmem:[%s4876 + $0x4c] sm:$0xf]
    %v4897 = vld [vmem:[%s4876 + $0x50] sm:$0xf]
    %v4898 = vld [vmem:[%s4876 + $0x54] sm:$0xf]
    %v4899 = vld [vmem:[%s4876 + $0x58] sm:$0xf]
    %v4900 = vld [vmem:[%s4876 + $0x5c] sm:$0xf]
    %v4901 = vld [vmem:[%s4876 + $0x60] sm:$0xf]
    %v4902 = vld [vmem:[%s4876 + $0x64] sm:$0xf]
    %v4903 = vld [vmem:[%s4876 + $0x68] sm:$0xf]
    %v4904 = vld [vmem:[%s4876 + $0x6c] sm:$0xf]
    %v4905 = vld [vmem:[%s4876 + $0x70] sm:$0xf]
    %v4906 = vld [vmem:[%s4876 + $0x74] sm:$0xf]
    %v4907 = vld [vmem:[%s4876 + $0x78] sm:$0xf]
    %v4908 = vld [vmem:[%s4876 + $0x7c] sm:$0xf]
    %v4909 = vld [vmem:[%s4876 + $0x80] sm:$0xf]
    %v4910 = vld [vmem:[%s4876 + $0x84] sm:$0xf]
    %v4911 = vld [vmem:[%s4876 + $0x88] sm:$0xf]
    %v4912 = vld [vmem:[%s4876 + $0x8c] sm:$0xf]
    %v4913 = vld [vmem:[%s4876 + $0x90] sm:$0xf]
    %v4914 = vld [vmem:[%s4876 + $0x94] sm:$0xf]
    %v4915 = vld [vmem:[%s4876 + $0x98] sm:$0xf]
    %v4916 = vld [vmem:[%s4876 + $0x9c] sm:$0xf]
    %v4917 = vld [vmem:[%s4876 + $0xa0] sm:$0xf]
    %v4918 = vld [vmem:[%s4876 + $0xa4] sm:$0xf]
    %v4919 = vld [vmem:[%s4876 + $0xa8] sm:$0xf]
    %v4920 = vld [vmem:[%s4876 + $0xac] sm:$0xf]
    %v4921 = vld [vmem:[%s4876 + $0xb0] sm:$0xf]
    %v4922 = vld [vmem:[%s4876 + $0xb4] sm:$0xf]
    %v4923 = vld [vmem:[%s4876 + $0xb8] sm:$0xf]
    %v4924 = vld [vmem:[%s4876 + $0xbc] sm:$0xf]
    %s4925 = scalar_lea.vmem [#allocation7], 3
    %v4926 = vld [vmem:[%s4925] sm:$0x1]
    %v4927 = vrot.slane %v4873, 4
    %v4928 = vsel %vm239, %v4927, %v4875
    %v4929 = vrot.slane %v4874, 4
    %v4930 = vrot.slane %v4928, 4
    %v4931 = vsel %vm239, %v4929, %v4927
    %v4932 = vsel %vm239, %v4930, %v4929
    %v4936 = vrot.slane %v4873, 5
    %v4937 = vrot.slane %v4874, 5
    %v4938 = vsel %vm255, %v4936, %v4937
    %v4939 = vrot.slane %v4875, 5
    %v4940 = vsel %vm255, %v4937, %v4939
    %v4945 = vrot.slane %v4873, 6
    %v4946 = vrot.slane %v4874, 6
    %v4947 = vsel %vm271, %v4945, %v4946
    %v4948 = vrot.slane %v4928, 6
    %v4949 = vsel %vm271, %v4946, %v4948
    %v4953 = vpack.c.bf16 %v4931, %v4928
    %v4954 = vpack.c.bf16 %v4938, %v4936
    %v4955 = vpack.c.bf16 %v4947, %v4945
    %v4956 = vpack.c.bf16 %v4932, %v4932
    %v4957 = vpack.c.bf16 %v4940, %v4940
    %v4958 = vpack.c.bf16 %v4949, %v4949
    %v4960 = vperm.slane %v4926, 0
    %v4963 = vshrl.u32 %v4953, 16
    %v4965 = vrot.slane %v4963, 1
    %v4966 = vshll.u32 %v4953, 16
    %v4968 = vrot.slane %v4966, 2
    %v4969 = vor.u32 %v4965, %v4968
    %v4971 = vshrl.u32 %v4956, 16
    %v4973 = vrot.slane %v4971, 1
    %v4974 = vshll.u32 %v4956, 16
    %v4976 = vrot.slane %v4974, 2
    %v4977 = vor.u32 %v4973, %v4976
    %v4978 = vsel %vm298, %v4969, %v4977
    %v4980 = vshrl.u32 %v4954, 16
    %v4982 = vrot.slane %v4980, 1
    %v4983 = vshll.u32 %v4954, 16
    %v4985 = vrot.slane %v4983, 2
    %v4986 = vor.u32 %v4982, %v4985
    %v4988 = vshrl.u32 %v4957, 16
    %v4990 = vrot.slane %v4988, 1
    %v4991 = vshll.u32 %v4957, 16
    %v4993 = vrot.slane %v4991, 2
    %v4994 = vor.u32 %v4990, %v4993
    %v4995 = vsel %vm298, %v4986, %v4994
    %v4997 = vshrl.u32 %v4955, 16
    %v4999 = vrot.slane %v4997, 1
    %v5000 = vshll.u32 %v4955, 16
    %v5002 = vrot.slane %v5000, 2
    %v5003 = vor.u32 %v4999, %v5002
    %v5005 = vshrl.u32 %v4958, 16
    %v5007 = vrot.slane %v5005, 1
    %v5008 = vshll.u32 %v4958, 16
    %v5010 = vrot.slane %v5008, 2
    %v5011 = vor.u32 %v5007, %v5010
    %v5012 = vsel %vm298, %v5003, %v5011
    %v5067 = vunpack.c.l.b16 %v4877
    %v5068 = vunpack.c.l.b16 %v4878
    %v5069 = vunpack.c.l.b16 %v4879
    %v5070 = vunpack.c.l.b16 %v4880
    %v5071 = vunpack.c.l.b16 %v4881
    %v5072 = vunpack.c.l.b16 %v4882
    %v5073 = vunpack.c.l.b16 %v4883
    %v5074 = vunpack.c.l.b16 %v4884
    %v5075 = vunpack.c.l.b16 %v4885
    %v5076 = vunpack.c.l.b16 %v4886
    %v5077 = vunpack.c.l.b16 %v4887
    %v5078 = vunpack.c.l.b16 %v4888
    %v5079 = vunpack.c.l.b16 %v4889
    %v5080 = vunpack.c.l.b16 %v4890
    %v5081 = vunpack.c.l.b16 %v4891
    %v5082 = vunpack.c.l.b16 %v4892
    %v5083 = vunpack.c.l.b16 %v4893
    %v5084 = vunpack.c.l.b16 %v4894
    %v5085 = vunpack.c.l.b16 %v4895
    %v5086 = vunpack.c.l.b16 %v4896
    %v5087 = vunpack.c.l.b16 %v4897
    %v5088 = vunpack.c.l.b16 %v4898
    %v5089 = vunpack.c.l.b16 %v4899
    %v5090 = vunpack.c.l.b16 %v4900
    %v5091 = vunpack.c.l.b16 %v4901
    %v5092 = vunpack.c.l.b16 %v4902
    %v5093 = vunpack.c.l.b16 %v4903
    %v5094 = vunpack.c.l.b16 %v4904
    %v5095 = vunpack.c.l.b16 %v4905
    %v5096 = vunpack.c.l.b16 %v4906
    %v5097 = vunpack.c.l.b16 %v4907
    %v5098 = vunpack.c.l.b16 %v4908
    %v5099 = vunpack.c.l.b16 %v4909
    %v5100 = vunpack.c.l.b16 %v4910
    %v5101 = vunpack.c.l.b16 %v4911
    %v5102 = vunpack.c.l.b16 %v4912
    %v5103 = vunpack.c.l.b16 %v4913
    %v5104 = vunpack.c.l.b16 %v4914
    %v5105 = vunpack.c.l.b16 %v4915
    %v5106 = vunpack.c.l.b16 %v4916
    %v5107 = vunpack.c.l.b16 %v4917
    %v5108 = vunpack.c.l.b16 %v4918
    %v5109 = vunpack.c.l.b16 %v4919
    %v5110 = vunpack.c.l.b16 %v4920
    %v5111 = vunpack.c.l.b16 %v4921
    %v5112 = vunpack.c.l.b16 %v4922
    %v5113 = vunpack.c.l.b16 %v4923
    %v5114 = vunpack.c.l.b16 %v4924
    %v5115 = vpack.c.b16 %v5068, %v5067
    %v5116 = vpack.c.b16 %v5070, %v5069
    %v5117 = vpack.c.b16 %v5072, %v5071
    %v5118 = vpack.c.b16 %v5074, %v5073
    %v5119 = vpack.c.b16 %v5076, %v5075
    %v5120 = vpack.c.b16 %v5078, %v5077
    %v5121 = vpack.c.b16 %v5080, %v5079
    %v5122 = vpack.c.b16 %v5082, %v5081
    %v5123 = vpack.c.b16 %v5084, %v5083
    %v5124 = vpack.c.b16 %v5086, %v5085
    %v5125 = vpack.c.b16 %v5088, %v5087
    %v5126 = vpack.c.b16 %v5090, %v5089
    %v5127 = vpack.c.b16 %v5092, %v5091
    %v5128 = vpack.c.b16 %v5094, %v5093
    %v5129 = vpack.c.b16 %v5096, %v5095
    %v5130 = vpack.c.b16 %v5098, %v5097
    %v5131 = vpack.c.b16 %v5100, %v5099
    %v5132 = vpack.c.b16 %v5102, %v5101
    %v5133 = vpack.c.b16 %v5104, %v5103
    %v5134 = vpack.c.b16 %v5106, %v5105
    %v5135 = vpack.c.b16 %v5108, %v5107
    %v5136 = vpack.c.b16 %v5110, %v5109
    %v5137 = vpack.c.b16 %v5112, %v5111
    %v5138 = vpack.c.b16 %v5114, %v5113
    %5163 = vmatpush.bf16.msra.mxu0 %v5122
    %5164 = vmatpush.bf16.msra.mxu0 %v5121
    %5165 = vmatpush.bf16.msra.mxu0 %v5120
    %5166 = vmatpush.bf16.msra.mxu0 %v5119
    %5167 = vmatpush.bf16.msra.mxu0 %v5118
    %5168 = vmatpush.bf16.msra.mxu0 %v5117
    %5169 = vmatpush.bf16.msra.mxu0 %v5116
    %5170 = vmatpush.bf16.msra.mxu0 %v5115
    %5171 = vmatmul.bf16.gmra.mxu0 %v4978
    %v5172 = vpop.f32.mrf.mxu0
    %v5173 = vadd.f32 %v4960, %v5172
    %v5174 = vpop.f32.mrf.mxu0
    %v5175 = vadd.f32 %v4960, %v5174
    %5176 = vmatmul.bf16.gmra.mxu0 %v4977
    %v5177 = vpop.f32.mrf.mxu0
    %v5178 = vadd.f32 %v4960, %v5177
    %v5179 = vpop.f32.mrf.mxu0
    %5180 = vdwg.mxu0
    %5181 = vmatpush.bf16.msra.mxu0 %v5130
    %5182 = vmatpush.bf16.msra.mxu0 %v5129
    %5183 = vmatpush.bf16.msra.mxu0 %v5128
    %5184 = vmatpush.bf16.msra.mxu0 %v5127
    %5185 = vmatpush.bf16.msra.mxu0 %v5126
    %5186 = vmatpush.bf16.msra.mxu0 %v5125
    %5187 = vmatpush.bf16.msra.mxu0 %v5124
    %5188 = vmatpush.bf16.msra.mxu0 %v5123
    %5189 = vmatmul.bf16.gmra.mxu0 %v4995
    %v5190 = vpop.f32.mrf.mxu0
    %v5191 = vadd.f32 %v5173, %v5190
    %v5192 = vpop.f32.mrf.mxu0
    %v5193 = vadd.f32 %v5175, %v5192
    %5194 = vmatmul.bf16.gmra.mxu0 %v4994
    %v5195 = vpop.f32.mrf.mxu0
    %v5196 = vadd.f32 %v5178, %v5195
    %v5197 = vpop.f32.mrf.mxu0
    %5198 = vdwg.mxu0
    %5199 = vmatpush.bf16.msra.mxu0 %v5138
    %5200 = vmatpush.bf16.msra.mxu0 %v5137
    %5201 = vmatpush.bf16.msra.mxu0 %v5136
    %5202 = vmatpush.bf16.msra.mxu0 %v5135
    %5203 = vmatpush.bf16.msra.mxu0 %v5134
    %5204 = vmatpush.bf16.msra.mxu0 %v5133
    %5205 = vmatpush.bf16.msra.mxu0 %v5132
    %5206 = vmatpush.bf16.msra.mxu0 %v5131
    %5207 = vmatmul.bf16.gmra.mxu0 %v5012
    %v5208 = vpop.f32.mrf.mxu0
    %v5209 = vadd.f32 %v5191, %v5208
    %v5210 = vpop.f32.mrf.mxu0
    %v5211 = vadd.f32 %v5193, %v5210
    %5212 = vmatmul.bf16.gmra.mxu0 %v5011
    %v5213 = vpop.f32.mrf.mxu0
    %v5214 = vadd.f32 %v5196, %v5213
    %v5215 = vpop.f32.mrf.mxu0
    %5216 = vdwg.mxu0
    %v5217 = vmul.f32 %v5209, %v182
    %v5218 = vmul.f32 %v5211, %v183
    %v5219 = vmul.f32 %v5214, %v184
    %v5220 = vadd.f32 %v5217, %v4526
    %v5221 = vadd.f32 %v5218, %v4527
    %v5222 = vadd.f32 %v5219, %v4528
    %s5223 = scalar_lea.vmem [#allocation6], 768
    %v5224 = vld [vmem:[%s5223] sm:$0xf]
    %v5225 = vld [vmem:[%s5223 + $0x4] sm:$0xf]
    %v5226 = vld [vmem:[%s5223 + $0x8] sm:$0xf]
    %v5227 = vld [vmem:[%s5223 + $0xc] sm:$0xf]
    %v5228 = vld [vmem:[%s5223 + $0x10] sm:$0xf]
    %v5229 = vld [vmem:[%s5223 + $0x14] sm:$0xf]
    %v5230 = vld [vmem:[%s5223 + $0x18] sm:$0xf]
    %v5231 = vld [vmem:[%s5223 + $0x1c] sm:$0xf]
    %v5232 = vld [vmem:[%s5223 + $0x20] sm:$0xf]
    %v5233 = vld [vmem:[%s5223 + $0x24] sm:$0xf]
    %v5234 = vld [vmem:[%s5223 + $0x28] sm:$0xf]
    %v5235 = vld [vmem:[%s5223 + $0x2c] sm:$0xf]
    %v5236 = vld [vmem:[%s5223 + $0x30] sm:$0xf]
    %v5237 = vld [vmem:[%s5223 + $0x34] sm:$0xf]
    %v5238 = vld [vmem:[%s5223 + $0x38] sm:$0xf]
    %v5239 = vld [vmem:[%s5223 + $0x3c] sm:$0xf]
    %v5240 = vld [vmem:[%s5223 + $0x40] sm:$0xf]
    %v5241 = vld [vmem:[%s5223 + $0x44] sm:$0xf]
    %v5242 = vld [vmem:[%s5223 + $0x48] sm:$0xf]
    %v5243 = vld [vmem:[%s5223 + $0x4c] sm:$0xf]
    %v5244 = vld [vmem:[%s5223 + $0x50] sm:$0xf]
    %v5245 = vld [vmem:[%s5223 + $0x54] sm:$0xf]
    %v5246 = vld [vmem:[%s5223 + $0x58] sm:$0xf]
    %v5247 = vld [vmem:[%s5223 + $0x5c] sm:$0xf]
    %v5248 = vld [vmem:[%s5223 + $0x60] sm:$0xf]
    %v5249 = vld [vmem:[%s5223 + $0x64] sm:$0xf]
    %v5250 = vld [vmem:[%s5223 + $0x68] sm:$0xf]
    %v5251 = vld [vmem:[%s5223 + $0x6c] sm:$0xf]
    %v5252 = vld [vmem:[%s5223 + $0x70] sm:$0xf]
    %v5253 = vld [vmem:[%s5223 + $0x74] sm:$0xf]
    %v5254 = vld [vmem:[%s5223 + $0x78] sm:$0xf]
    %v5255 = vld [vmem:[%s5223 + $0x7c] sm:$0xf]
    %v5256 = vld [vmem:[%s5223 + $0x80] sm:$0xf]
    %v5257 = vld [vmem:[%s5223 + $0x84] sm:$0xf]
    %v5258 = vld [vmem:[%s5223 + $0x88] sm:$0xf]
    %v5259 = vld [vmem:[%s5223 + $0x8c] sm:$0xf]
    %v5260 = vld [vmem:[%s5223 + $0x90] sm:$0xf]
    %v5261 = vld [vmem:[%s5223 + $0x94] sm:$0xf]
    %v5262 = vld [vmem:[%s5223 + $0x98] sm:$0xf]
    %v5263 = vld [vmem:[%s5223 + $0x9c] sm:$0xf]
    %v5264 = vld [vmem:[%s5223 + $0xa0] sm:$0xf]
    %v5265 = vld [vmem:[%s5223 + $0xa4] sm:$0xf]
    %v5266 = vld [vmem:[%s5223 + $0xa8] sm:$0xf]
    %v5267 = vld [vmem:[%s5223 + $0xac] sm:$0xf]
    %v5268 = vld [vmem:[%s5223 + $0xb0] sm:$0xf]
    %v5269 = vld [vmem:[%s5223 + $0xb4] sm:$0xf]
    %v5270 = vld [vmem:[%s5223 + $0xb8] sm:$0xf]
    %v5271 = vld [vmem:[%s5223 + $0xbc] sm:$0xf]
    %s5272 = scalar_lea.vmem [#allocation7], 4
    %v5273 = vld [vmem:[%s5272] sm:$0x1]
    %v5274 = vrot.slane %v5220, 4
    %v5275 = vsel %vm239, %v5274, %v5222
    %v5276 = vrot.slane %v5221, 4
    %v5277 = vrot.slane %v5275, 4
    %v5278 = vsel %vm239, %v5276, %v5274
    %v5279 = vsel %vm239, %v5277, %v5276
    %v5283 = vrot.slane %v5220, 5
    %v5284 = vrot.slane %v5221, 5
    %v5285 = vsel %vm255, %v5283, %v5284
    %v5286 = vrot.slane %v5222, 5
    %v5287 = vsel %vm255, %v5284, %v5286
    %v5292 = vrot.slane %v5220, 6
    %v5293 = vrot.slane %v5221, 6
    %v5294 = vsel %vm271, %v5292, %v5293
    %v5295 = vrot.slane %v5275, 6
    %v5296 = vsel %vm271, %v5293, %v5295
    %v5300 = vpack.c.bf16 %v5278, %v5275
    %v5301 = vpack.c.bf16 %v5285, %v5283
    %v5302 = vpack.c.bf16 %v5294, %v5292
    %v5303 = vpack.c.bf16 %v5279, %v5279
    %v5304 = vpack.c.bf16 %v5287, %v5287
    %v5305 = vpack.c.bf16 %v5296, %v5296
    %v5307 = vperm.slane %v5273, 0
    %v5310 = vshrl.u32 %v5300, 16
    %v5312 = vrot.slane %v5310, 1
    %v5313 = vshll.u32 %v5300, 16
    %v5315 = vrot.slane %v5313, 2
    %v5316 = vor.u32 %v5312, %v5315
    %v5318 = vshrl.u32 %v5303, 16
    %v5320 = vrot.slane %v5318, 1
    %v5321 = vshll.u32 %v5303, 16
    %v5323 = vrot.slane %v5321, 2
    %v5324 = vor.u32 %v5320, %v5323
    %v5325 = vsel %vm298, %v5316, %v5324
    %v5327 = vshrl.u32 %v5301, 16
    %v5329 = vrot.slane %v5327, 1
    %v5330 = vshll.u32 %v5301, 16
    %v5332 = vrot.slane %v5330, 2
    %v5333 = vor.u32 %v5329, %v5332
    %v5335 = vshrl.u32 %v5304, 16
    %v5337 = vrot.slane %v5335, 1
    %v5338 = vshll.u32 %v5304, 16
    %v5340 = vrot.slane %v5338, 2
    %v5341 = vor.u32 %v5337, %v5340
    %v5342 = vsel %vm298, %v5333, %v5341
    %v5344 = vshrl.u32 %v5302, 16
    %v5346 = vrot.slane %v5344, 1
    %v5347 = vshll.u32 %v5302, 16
    %v5349 = vrot.slane %v5347, 2
    %v5350 = vor.u32 %v5346, %v5349
    %v5352 = vshrl.u32 %v5305, 16
    %v5354 = vrot.slane %v5352, 1
    %v5355 = vshll.u32 %v5305, 16
    %v5357 = vrot.slane %v5355, 2
    %v5358 = vor.u32 %v5354, %v5357
    %v5359 = vsel %vm298, %v5350, %v5358
    %v5414 = vunpack.c.l.b16 %v5224
    %v5415 = vunpack.c.l.b16 %v5225
    %v5416 = vunpack.c.l.b16 %v5226
    %v5417 = vunpack.c.l.b16 %v5227
    %v5418 = vunpack.c.l.b16 %v5228
    %v5419 = vunpack.c.l.b16 %v5229
    %v5420 = vunpack.c.l.b16 %v5230
    %v5421 = vunpack.c.l.b16 %v5231
    %v5422 = vunpack.c.l.b16 %v5232
    %v5423 = vunpack.c.l.b16 %v5233
    %v5424 = vunpack.c.l.b16 %v5234
    %v5425 = vunpack.c.l.b16 %v5235
    %v5426 = vunpack.c.l.b16 %v5236
    %v5427 = vunpack.c.l.b16 %v5237
    %v5428 = vunpack.c.l.b16 %v5238
    %v5429 = vunpack.c.l.b16 %v5239
    %v5430 = vunpack.c.l.b16 %v5240
    %v5431 = vunpack.c.l.b16 %v5241
    %v5432 = vunpack.c.l.b16 %v5242
    %v5433 = vunpack.c.l.b16 %v5243
    %v5434 = vunpack.c.l.b16 %v5244
    %v5435 = vunpack.c.l.b16 %v5245
    %v5436 = vunpack.c.l.b16 %v5246
    %v5437 = vunpack.c.l.b16 %v5247
    %v5438 = vunpack.c.l.b16 %v5248
    %v5439 = vunpack.c.l.b16 %v5249
    %v5440 = vunpack.c.l.b16 %v5250
    %v5441 = vunpack.c.l.b16 %v5251
    %v5442 = vunpack.c.l.b16 %v5252
    %v5443 = vunpack.c.l.b16 %v5253
    %v5444 = vunpack.c.l.b16 %v5254
    %v5445 = vunpack.c.l.b16 %v5255
    %v5446 = vunpack.c.l.b16 %v5256
    %v5447 = vunpack.c.l.b16 %v5257
    %v5448 = vunpack.c.l.b16 %v5258
    %v5449 = vunpack.c.l.b16 %v5259
    %v5450 = vunpack.c.l.b16 %v5260
    %v5451 = vunpack.c.l.b16 %v5261
    %v5452 = vunpack.c.l.b16 %v5262
    %v5453 = vunpack.c.l.b16 %v5263
    %v5454 = vunpack.c.l.b16 %v5264
    %v5455 = vunpack.c.l.b16 %v5265
    %v5456 = vunpack.c.l.b16 %v5266
    %v5457 = vunpack.c.l.b16 %v5267
    %v5458 = vunpack.c.l.b16 %v5268
    %v5459 = vunpack.c.l.b16 %v5269
    %v5460 = vunpack.c.l.b16 %v5270
    %v5461 = vunpack.c.l.b16 %v5271
    %v5462 = vpack.c.b16 %v5415, %v5414
    %v5463 = vpack.c.b16 %v5417, %v5416
    %v5464 = vpack.c.b16 %v5419, %v5418
    %v5465 = vpack.c.b16 %v5421, %v5420
    %v5466 = vpack.c.b16 %v5423, %v5422
    %v5467 = vpack.c.b16 %v5425, %v5424
    %v5468 = vpack.c.b16 %v5427, %v5426
    %v5469 = vpack.c.b16 %v5429, %v5428
    %v5470 = vpack.c.b16 %v5431, %v5430
    %v5471 = vpack.c.b16 %v5433, %v5432
    %v5472 = vpack.c.b16 %v5435, %v5434
    %v5473 = vpack.c.b16 %v5437, %v5436
    %v5474 = vpack.c.b16 %v5439, %v5438
    %v5475 = vpack.c.b16 %v5441, %v5440
    %v5476 = vpack.c.b16 %v5443, %v5442
    %v5477 = vpack.c.b16 %v5445, %v5444
    %v5478 = vpack.c.b16 %v5447, %v5446
    %v5479 = vpack.c.b16 %v5449, %v5448
    %v5480 = vpack.c.b16 %v5451, %v5450
    %v5481 = vpack.c.b16 %v5453, %v5452
    %v5482 = vpack.c.b16 %v5455, %v5454
    %v5483 = vpack.c.b16 %v5457, %v5456
    %v5484 = vpack.c.b16 %v5459, %v5458
    %v5485 = vpack.c.b16 %v5461, %v5460
    %5510 = vmatpush.bf16.msra.mxu0 %v5469
    %5511 = vmatpush.bf16.msra.mxu0 %v5468
    %5512 = vmatpush.bf16.msra.mxu0 %v5467
    %5513 = vmatpush.bf16.msra.mxu0 %v5466
    %5514 = vmatpush.bf16.msra.mxu0 %v5465
    %5515 = vmatpush.bf16.msra.mxu0 %v5464
    %5516 = vmatpush.bf16.msra.mxu0 %v5463
    %5517 = vmatpush.bf16.msra.mxu0 %v5462
    %5518 = vmatmul.bf16.gmra.mxu0 %v5325
    %v5519 = vpop.f32.mrf.mxu0
    %v5520 = vadd.f32 %v5307, %v5519
    %v5521 = vpop.f32.mrf.mxu0
    %v5522 = vadd.f32 %v5307, %v5521
    %5523 = vmatmul.bf16.gmra.mxu0 %v5324
    %v5524 = vpop.f32.mrf.mxu0
    %v5525 = vadd.f32 %v5307, %v5524
    %v5526 = vpop.f32.mrf.mxu0
    %5527 = vdwg.mxu0
    %5528 = vmatpush.bf16.msra.mxu0 %v5477
    %5529 = vmatpush.bf16.msra.mxu0 %v5476
    %5530 = vmatpush.bf16.msra.mxu0 %v5475
    %5531 = vmatpush.bf16.msra.mxu0 %v5474
    %5532 = vmatpush.bf16.msra.mxu0 %v5473
    %5533 = vmatpush.bf16.msra.mxu0 %v5472
    %5534 = vmatpush.bf16.msra.mxu0 %v5471
    %5535 = vmatpush.bf16.msra.mxu0 %v5470
    %5536 = vmatmul.bf16.gmra.mxu0 %v5342
    %v5537 = vpop.f32.mrf.mxu0
    %v5538 = vadd.f32 %v5520, %v5537
    %v5539 = vpop.f32.mrf.mxu0
    %v5540 = vadd.f32 %v5522, %v5539
    %5541 = vmatmul.bf16.gmra.mxu0 %v5341
    %v5542 = vpop.f32.mrf.mxu0
    %v5543 = vadd.f32 %v5525, %v5542
    %v5544 = vpop.f32.mrf.mxu0
    %5545 = vdwg.mxu0
    %5546 = vmatpush.bf16.msra.mxu0 %v5485
    %5547 = vmatpush.bf16.msra.mxu0 %v5484
    %5548 = vmatpush.bf16.msra.mxu0 %v5483
    %5549 = vmatpush.bf16.msra.mxu0 %v5482
    %5550 = vmatpush.bf16.msra.mxu0 %v5481
    %5551 = vmatpush.bf16.msra.mxu0 %v5480
    %5552 = vmatpush.bf16.msra.mxu0 %v5479
    %5553 = vmatpush.bf16.msra.mxu0 %v5478
    %5554 = vmatmul.bf16.gmra.mxu0 %v5359
    %v5555 = vpop.f32.mrf.mxu0
    %v5556 = vadd.f32 %v5538, %v5555
    %v5557 = vpop.f32.mrf.mxu0
    %v5558 = vadd.f32 %v5540, %v5557
    %5559 = vmatmul.bf16.gmra.mxu0 %v5358
    %v5560 = vpop.f32.mrf.mxu0
    %v5561 = vadd.f32 %v5543, %v5560
    %v5562 = vpop.f32.mrf.mxu0
    %5563 = vdwg.mxu0
    %v5564 = vld [vmem:[%s8] sm:$0xf]
    %v5565 = vld [vmem:[%s8 + $0x4] sm:$0xf]
    %v5566 = vld [vmem:[%s8 + $0x8] sm:$0xf]
    %v5567 = vld [vmem:[%s8 + $0xc] sm:$0xf]
    %v5568 = vld [vmem:[%s8 + $0x10] sm:$0x3]
    %v5569 = vpack.c.bf16 %v5558, %v5556
    %v5570 = vpack.c.bf16 %v5561, %v5561
    %s5571 = scalar_lea.vmem [#allocation6], 960
    %v5572 = vld [vmem:[%s5571] sm:$0xf]
    %v5573 = vld [vmem:[%s5571 + $0x4] sm:$0xf]
    %v5574 = vld [vmem:[%s5571 + $0x8] sm:$0xf]
    %v5575 = vld [vmem:[%s5571 + $0xc] sm:$0xf]
    %v5576 = vld [vmem:[%s5571 + $0x10] sm:$0xf]
    %v5577 = vld [vmem:[%s5571 + $0x14] sm:$0xf]
    %v5578 = vld [vmem:[%s5571 + $0x18] sm:$0xf]
    %v5579 = vld [vmem:[%s5571 + $0x1c] sm:$0xf]
    %v5580 = vld [vmem:[%s5571 + $0x20] sm:$0xf]
    %v5581 = vld [vmem:[%s5571 + $0x24] sm:$0xf]
    %v5582 = vld [vmem:[%s5571 + $0x28] sm:$0xf]
    %v5583 = vld [vmem:[%s5571 + $0x2c] sm:$0xf]
    %v5584 = vld [vmem:[%s5571 + $0x30] sm:$0xf]
    %v5585 = vld [vmem:[%s5571 + $0x34] sm:$0xf]
    %v5586 = vld [vmem:[%s5571 + $0x38] sm:$0xf]
    %v5587 = vld [vmem:[%s5571 + $0x3c] sm:$0xf]
    %v5588 = vld [vmem:[%s5571 + $0x40] sm:$0xf]
    %v5589 = vld [vmem:[%s5571 + $0x44] sm:$0xf]
    %v5590 = vld [vmem:[%s5571 + $0x48] sm:$0xf]
    %v5591 = vld [vmem:[%s5571 + $0x4c] sm:$0xf]
    %v5592 = vld [vmem:[%s5571 + $0x50] sm:$0xf]
    %v5593 = vld [vmem:[%s5571 + $0x54] sm:$0xf]
    %v5594 = vld [vmem:[%s5571 + $0x58] sm:$0xf]
    %v5595 = vld [vmem:[%s5571 + $0x5c] sm:$0xf]
    %v5596 = vld [vmem:[%s5571 + $0x60] sm:$0xf]
    %v5597 = vld [vmem:[%s5571 + $0x64] sm:$0xf]
    %v5598 = vld [vmem:[%s5571 + $0x68] sm:$0xf]
    %v5599 = vld [vmem:[%s5571 + $0x6c] sm:$0xf]
    %v5600 = vld [vmem:[%s5571 + $0x70] sm:$0xf]
    %v5601 = vld [vmem:[%s5571 + $0x74] sm:$0xf]
    %v5602 = vld [vmem:[%s5571 + $0x78] sm:$0xf]
    %v5603 = vld [vmem:[%s5571 + $0x7c] sm:$0xf]
    %v5604 = vld [vmem:[%s5571 + $0x80] sm:$0xf]
    %v5605 = vld [vmem:[%s5571 + $0x84] sm:$0xf]
    %v5606 = vld [vmem:[%s5571 + $0x88] sm:$0xf]
    %v5607 = vld [vmem:[%s5571 + $0x8c] sm:$0xf]
    %v5608 = vld [vmem:[%s5571 + $0x90] sm:$0xf]
    %v5609 = vld [vmem:[%s5571 + $0x94] sm:$0xf]
    %v5610 = vld [vmem:[%s5571 + $0x98] sm:$0xf]
    %v5611 = vld [vmem:[%s5571 + $0x9c] sm:$0xf]
    %v5612 = vld [vmem:[%s5571 + $0xa0] sm:$0xf]
    %v5613 = vld [vmem:[%s5571 + $0xa4] sm:$0xf]
    %v5614 = vld [vmem:[%s5571 + $0xa8] sm:$0xf]
    %v5615 = vld [vmem:[%s5571 + $0xac] sm:$0xf]
    %v5616 = vld [vmem:[%s5571 + $0xb0] sm:$0xf]
    %v5617 = vld [vmem:[%s5571 + $0xb4] sm:$0xf]
    %v5618 = vld [vmem:[%s5571 + $0xb8] sm:$0xf]
    %v5619 = vld [vmem:[%s5571 + $0xbc] sm:$0xf]
    %s5620 = scalar_lea.vmem [#allocation7], 5
    %v5621 = vld [vmem:[%s5620] sm:$0x1]
    %v5623 = vperm.slane %v5621, 0
    %v5673 = vunpack.c.l.b16 %v5572
    %v5674 = vunpack.c.l.b16 %v5573
    %v5675 = vunpack.c.l.b16 %v5574
    %v5676 = vunpack.c.l.b16 %v5575
    %v5677 = vunpack.c.l.b16 %v5576
    %v5678 = vunpack.c.l.b16 %v5577
    %v5679 = vunpack.c.l.b16 %v5578
    %v5680 = vunpack.c.l.b16 %v5579
    %v5681 = vunpack.c.l.b16 %v5580
    %v5682 = vunpack.c.l.b16 %v5581
    %v5683 = vunpack.c.l.b16 %v5582
    %v5684 = vunpack.c.l.b16 %v5583
    %v5685 = vunpack.c.l.b16 %v5584
    %v5686 = vunpack.c.l.b16 %v5585
    %v5687 = vunpack.c.l.b16 %v5586
    %v5688 = vunpack.c.l.b16 %v5587
    %v5689 = vunpack.c.l.b16 %v5588
    %v5690 = vunpack.c.l.b16 %v5589
    %v5691 = vunpack.c.l.b16 %v5590
    %v5692 = vunpack.c.l.b16 %v5591
    %v5693 = vunpack.c.l.b16 %v5592
    %v5694 = vunpack.c.l.b16 %v5593
    %v5695 = vunpack.c.l.b16 %v5594
    %v5696 = vunpack.c.l.b16 %v5595
    %v5697 = vunpack.c.l.b16 %v5596
    %v5698 = vunpack.c.l.b16 %v5597
    %v5699 = vunpack.c.l.b16 %v5598
    %v5700 = vunpack.c.l.b16 %v5599
    %v5701 = vunpack.c.l.b16 %v5600
    %v5702 = vunpack.c.l.b16 %v5601
    %v5703 = vunpack.c.l.b16 %v5602
    %v5704 = vunpack.c.l.b16 %v5603
    %v5705 = vunpack.c.l.b16 %v5604
    %v5706 = vunpack.c.l.b16 %v5605
    %v5707 = vunpack.c.l.b16 %v5606
    %v5708 = vunpack.c.l.b16 %v5607
    %v5709 = vunpack.c.l.b16 %v5608
    %v5710 = vunpack.c.l.b16 %v5609
    %v5711 = vunpack.c.l.b16 %v5610
    %v5712 = vunpack.c.l.b16 %v5611
    %v5713 = vunpack.c.l.b16 %v5612
    %v5714 = vunpack.c.l.b16 %v5613
    %v5715 = vunpack.c.l.b16 %v5614
    %v5716 = vunpack.c.l.b16 %v5615
    %v5717 = vunpack.c.l.b16 %v5616
    %v5718 = vunpack.c.l.b16 %v5617
    %v5719 = vunpack.c.l.b16 %v5618
    %v5720 = vunpack.c.l.b16 %v5619
    %v5721 = vpack.c.b16 %v5674, %v5673
    %v5722 = vpack.c.b16 %v5676, %v5675
    %v5723 = vpack.c.b16 %v5678, %v5677
    %v5724 = vpack.c.b16 %v5680, %v5679
    %v5725 = vpack.c.b16 %v5682, %v5681
    %v5726 = vpack.c.b16 %v5684, %v5683
    %v5727 = vpack.c.b16 %v5686, %v5685
    %v5728 = vpack.c.b16 %v5688, %v5687
    %v5729 = vpack.c.b16 %v5690, %v5689
    %v5730 = vpack.c.b16 %v5692, %v5691
    %v5731 = vpack.c.b16 %v5694, %v5693
    %v5732 = vpack.c.b16 %v5696, %v5695
    %v5733 = vpack.c.b16 %v5698, %v5697
    %v5734 = vpack.c.b16 %v5700, %v5699
    %v5735 = vpack.c.b16 %v5702, %v5701
    %v5736 = vpack.c.b16 %v5704, %v5703
    %v5737 = vpack.c.b16 %v5706, %v5705
    %v5738 = vpack.c.b16 %v5708, %v5707
    %v5739 = vpack.c.b16 %v5710, %v5709
    %v5740 = vpack.c.b16 %v5712, %v5711
    %v5741 = vpack.c.b16 %v5714, %v5713
    %v5742 = vpack.c.b16 %v5716, %v5715
    %v5743 = vpack.c.b16 %v5718, %v5717
    %v5744 = vpack.c.b16 %v5720, %v5719
    %5769 = vmatpush.bf16.msra.mxu0 %v5728
    %5770 = vmatpush.bf16.msra.mxu0 %v5727
    %5771 = vmatpush.bf16.msra.mxu0 %v5726
    %5772 = vmatpush.bf16.msra.mxu0 %v5725
    %5773 = vmatpush.bf16.msra.mxu0 %v5724
    %5774 = vmatpush.bf16.msra.mxu0 %v5723
    %5775 = vmatpush.bf16.msra.mxu0 %v5722
    %5776 = vmatpush.bf16.msra.mxu0 %v5721
    %5777 = vmatmul.bf16.gmra.mxu0 %v5325
    %v5778 = vpop.f32.mrf.mxu0
    %v5779 = vadd.f32 %v5623, %v5778
    %v5780 = vpop.f32.mrf.mxu0
    %v5781 = vadd.f32 %v5623, %v5780
    %5782 = vmatmul.bf16.gmra.mxu0 %v5324
    %v5783 = vpop.f32.mrf.mxu0
    %v5784 = vadd.f32 %v5623, %v5783
    %v5785 = vpop.f32.mrf.mxu0
    %5786 = vdwg.mxu0
    %5787 = vmatpush.bf16.msra.mxu0 %v5736
    %5788 = vmatpush.bf16.msra.mxu0 %v5735
    %5789 = vmatpush.bf16.msra.mxu0 %v5734
    %5790 = vmatpush.bf16.msra.mxu0 %v5733
    %5791 = vmatpush.bf16.msra.mxu0 %v5732
    %5792 = vmatpush.bf16.msra.mxu0 %v5731
    %5793 = vmatpush.bf16.msra.mxu0 %v5730
    %5794 = vmatpush.bf16.msra.mxu0 %v5729
    %5795 = vmatmul.bf16.gmra.mxu0 %v5342
    %v5796 = vpop.f32.mrf.mxu0
    %v5797 = vadd.f32 %v5779, %v5796
    %v5798 = vpop.f32.mrf.mxu0
    %v5799 = vadd.f32 %v5781, %v5798
    %5800 = vmatmul.bf16.gmra.mxu0 %v5341
    %v5801 = vpop.f32.mrf.mxu0
    %v5802 = vadd.f32 %v5784, %v5801
    %v5803 = vpop.f32.mrf.mxu0
    %5804 = vdwg.mxu0
    %5805 = vmatpush.bf16.msra.mxu0 %v5744
    %5806 = vmatpush.bf16.msra.mxu0 %v5743
    %5807 = vmatpush.bf16.msra.mxu0 %v5742
    %5808 = vmatpush.bf16.msra.mxu0 %v5741
    %5809 = vmatpush.bf16.msra.mxu0 %v5740
    %5810 = vmatpush.bf16.msra.mxu0 %v5739
    %5811 = vmatpush.bf16.msra.mxu0 %v5738
    %5812 = vmatpush.bf16.msra.mxu0 %v5737
    %5813 = vmatmul.bf16.gmra.mxu0 %v5359
    %v5814 = vpop.f32.mrf.mxu0
    %v5815 = vadd.f32 %v5797, %v5814
    %v5816 = vpop.f32.mrf.mxu0
    %v5817 = vadd.f32 %v5799, %v5816
    %5818 = vmatmul.bf16.gmra.mxu0 %v5358
    %v5819 = vpop.f32.mrf.mxu0
    %v5820 = vadd.f32 %v5802, %v5819
    %v5821 = vpop.f32.mrf.mxu0
    %5822 = vdwg.mxu0
    %v5823 = vpack.c.bf16 %v5817, %v5815
    %v5824 = vpack.c.bf16 %v5820, %v5820
    %v5830 = vunpack.c.l.b16 %v5564
    %v5831 = vunpack.c.l.b16 %v5565
    %v5832 = vunpack.c.l.b16 %v5566
    %v5833 = vunpack.c.l.b16 %v5567
    %v5834 = vunpack.c.l.b16 %v5568
    %v5835 = vpack.c.b16 %v5831, %v5830
    %v5836 = vpack.c.b16 %v5833, %v5832
    %v5837 = vpack.c.b16 %v5834, %v5834
    %vm5838 = vcmask 162816
    %v5840 = vsel %vm5838, %v5835, 0
    %v5843 = vsel %vm5838, %v5836, 0
    %v5846 = vsel %vm5838, %v5837, 0
    %v5849 = vsel %vm271, %v5824, 0
    %5851 = vmatpush.bf16.msra.mxu0 0
    %5852 = vmatpush.bf16.msra.mxu0 0
    %5853 = vmatpush.bf16.msra.mxu0 0
    %5854 = vmatpush.bf16.msra.mxu0 0
    %5855 = vmatpush.bf16.msra.mxu0 0
    %5856 = vmatpush.bf16.msra.mxu0 0
    %5857 = vmatpush.bf16.msra.mxu0 %v5849
    %5858 = vmatpush.bf16.msra.mxu0 %v5823
    %5859 = vmatmul.bf16.gmra.mxu0 %v5840
    %v5860 = vpop.f32.mrf.mxu0
    %v5861 = vadd.f32 0.0, %v5860
    %v5862 = vpop.f32.mrf.mxu0
    %v5863 = vadd.f32 0.0, %v5862
    %5864 = vmatmul.bf16.gmra.mxu0 %v5843
    %v5865 = vpop.f32.mrf.mxu0
    %v5866 = vadd.f32 0.0, %v5865
    %v5867 = vpop.f32.mrf.mxu0
    %v5868 = vadd.f32 0.0, %v5867
    %5869 = vmatmul.bf16.gmra.mxu0 %v5846
    %v5870 = vpop.f32.mrf.mxu0
    %v5871 = vadd.f32 0.0, %v5870
    %v5872 = vpop.f32.mrf.mxu0
    %5873 = vdwg.mxu0
    %v5875 = vsel %vm271, %v5570, 0
    %5877 = vmatpush.bf16.msra.mxu0 0
    %5878 = vmatpush.bf16.msra.mxu0 0
    %5879 = vmatpush.bf16.msra.mxu0 0
    %5880 = vmatpush.bf16.msra.mxu0 0
    %5881 = vmatpush.bf16.msra.mxu0 0
    %5882 = vmatpush.bf16.msra.mxu0 0
    %5883 = vmatpush.bf16.msra.mxu0 %v5875
    %5884 = vmatpush.bf16.msra.mxu0 %v5569
    %5885 = vmatmul.bf16.gmra.mxu0 %v5840
    %v5886 = vpop.f32.mrf.mxu0
    %v5887 = vadd.f32 %v5861, %v5886
    %v5888 = vpop.f32.mrf.mxu0
    %v5889 = vadd.f32 %v5863, %v5888
    %5890 = vmatmul.bf16.gmra.mxu0 %v5843
    %v5891 = vpop.f32.mrf.mxu0
    %v5892 = vadd.f32 %v5866, %v5891
    %v5893 = vpop.f32.mrf.mxu0
    %v5894 = vadd.f32 %v5868, %v5893
    %5895 = vmatmul.bf16.gmra.mxu0 %v5846
    %v5896 = vpop.f32.mrf.mxu0
    %v5897 = vadd.f32 %v5871, %v5896
    %v5898 = vpop.f32.mrf.mxu0
    %5899 = vdwg.mxu0
    %s5900 = scalar_lea.vmem [#allocation6], 1152
    %v5901 = vld [vmem:[%s5900] sm:$0xf]
    %v5902 = vld [vmem:[%s5900 + $0x4] sm:$0xf]
    %v5903 = vld [vmem:[%s5900 + $0x8] sm:$0xf]
    %v5904 = vld [vmem:[%s5900 + $0xc] sm:$0xf]
    %v5905 = vld [vmem:[%s5900 + $0x10] sm:$0xf]
    %v5906 = vld [vmem:[%s5900 + $0x14] sm:$0xf]
    %v5907 = vld [vmem:[%s5900 + $0x18] sm:$0xf]
    %v5908 = vld [vmem:[%s5900 + $0x1c] sm:$0xf]
    %v5909 = vld [vmem:[%s5900 + $0x20] sm:$0xf]
    %v5910 = vld [vmem:[%s5900 + $0x24] sm:$0xf]
    %v5911 = vld [vmem:[%s5900 + $0x28] sm:$0xf]
    %v5912 = vld [vmem:[%s5900 + $0x2c] sm:$0xf]
    %v5913 = vld [vmem:[%s5900 + $0x30] sm:$0xf]
    %v5914 = vld [vmem:[%s5900 + $0x34] sm:$0xf]
    %v5915 = vld [vmem:[%s5900 + $0x38] sm:$0xf]
    %v5916 = vld [vmem:[%s5900 + $0x3c] sm:$0xf]
    %v5917 = vld [vmem:[%s5900 + $0x40] sm:$0xf]
    %v5918 = vld [vmem:[%s5900 + $0x44] sm:$0xf]
    %v5919 = vld [vmem:[%s5900 + $0x48] sm:$0xf]
    %v5920 = vld [vmem:[%s5900 + $0x4c] sm:$0xf]
    %v5921 = vld [vmem:[%s5900 + $0x50] sm:$0xf]
    %v5922 = vld [vmem:[%s5900 + $0x54] sm:$0xf]
    %v5923 = vld [vmem:[%s5900 + $0x58] sm:$0xf]
    %v5924 = vld [vmem:[%s5900 + $0x5c] sm:$0xf]
    %v5925 = vld [vmem:[%s5900 + $0x60] sm:$0xf]
    %v5926 = vld [vmem:[%s5900 + $0x64] sm:$0xf]
    %v5927 = vld [vmem:[%s5900 + $0x68] sm:$0xf]
    %v5928 = vld [vmem:[%s5900 + $0x6c] sm:$0xf]
    %v5929 = vld [vmem:[%s5900 + $0x70] sm:$0xf]
    %v5930 = vld [vmem:[%s5900 + $0x74] sm:$0xf]
    %v5931 = vld [vmem:[%s5900 + $0x78] sm:$0xf]
    %v5932 = vld [vmem:[%s5900 + $0x7c] sm:$0xf]
    %v5933 = vld [vmem:[%s5900 + $0x80] sm:$0xf]
    %v5934 = vld [vmem:[%s5900 + $0x84] sm:$0xf]
    %v5935 = vld [vmem:[%s5900 + $0x88] sm:$0xf]
    %v5936 = vld [vmem:[%s5900 + $0x8c] sm:$0xf]
    %v5937 = vld [vmem:[%s5900 + $0x90] sm:$0xf]
    %v5938 = vld [vmem:[%s5900 + $0x94] sm:$0xf]
    %v5939 = vld [vmem:[%s5900 + $0x98] sm:$0xf]
    %v5940 = vld [vmem:[%s5900 + $0x9c] sm:$0xf]
    %v5941 = vld [vmem:[%s5900 + $0xa0] sm:$0xf]
    %v5942 = vld [vmem:[%s5900 + $0xa4] sm:$0xf]
    %v5943 = vld [vmem:[%s5900 + $0xa8] sm:$0xf]
    %v5944 = vld [vmem:[%s5900 + $0xac] sm:$0xf]
    %v5945 = vld [vmem:[%s5900 + $0xb0] sm:$0xf]
    %v5946 = vld [vmem:[%s5900 + $0xb4] sm:$0xf]
    %v5947 = vld [vmem:[%s5900 + $0xb8] sm:$0xf]
    %v5948 = vld [vmem:[%s5900 + $0xbc] sm:$0xf]
    %s5949 = scalar_lea.vmem [#allocation7], 6
    %v5950 = vld [vmem:[%s5949] sm:$0x1]
    %v5952 = vperm.slane %v5950, 0
    %v6002 = vunpack.c.l.b16 %v5901
    %v6003 = vunpack.c.l.b16 %v5902
    %v6004 = vunpack.c.l.b16 %v5903
    %v6005 = vunpack.c.l.b16 %v5904
    %v6006 = vunpack.c.l.b16 %v5905
    %v6007 = vunpack.c.l.b16 %v5906
    %v6008 = vunpack.c.l.b16 %v5907
    %v6009 = vunpack.c.l.b16 %v5908
    %v6010 = vunpack.c.l.b16 %v5909
    %v6011 = vunpack.c.l.b16 %v5910
    %v6012 = vunpack.c.l.b16 %v5911
    %v6013 = vunpack.c.l.b16 %v5912
    %v6014 = vunpack.c.l.b16 %v5913
    %v6015 = vunpack.c.l.b16 %v5914
    %v6016 = vunpack.c.l.b16 %v5915
    %v6017 = vunpack.c.l.b16 %v5916
    %v6018 = vunpack.c.l.b16 %v5917
    %v6019 = vunpack.c.l.b16 %v5918
    %v6020 = vunpack.c.l.b16 %v5919
    %v6021 = vunpack.c.l.b16 %v5920
    %v6022 = vunpack.c.l.b16 %v5921
    %v6023 = vunpack.c.l.b16 %v5922
    %v6024 = vunpack.c.l.b16 %v5923
    %v6025 = vunpack.c.l.b16 %v5924
    %v6026 = vunpack.c.l.b16 %v5925
    %v6027 = vunpack.c.l.b16 %v5926
    %v6028 = vunpack.c.l.b16 %v5927
    %v6029 = vunpack.c.l.b16 %v5928
    %v6030 = vunpack.c.l.b16 %v5929
    %v6031 = vunpack.c.l.b16 %v5930
    %v6032 = vunpack.c.l.b16 %v5931
    %v6033 = vunpack.c.l.b16 %v5932
    %v6034 = vunpack.c.l.b16 %v5933
    %v6035 = vunpack.c.l.b16 %v5934
    %v6036 = vunpack.c.l.b16 %v5935
    %v6037 = vunpack.c.l.b16 %v5936
    %v6038 = vunpack.c.l.b16 %v5937
    %v6039 = vunpack.c.l.b16 %v5938
    %v6040 = vunpack.c.l.b16 %v5939
    %v6041 = vunpack.c.l.b16 %v5940
    %v6042 = vunpack.c.l.b16 %v5941
    %v6043 = vunpack.c.l.b16 %v5942
    %v6044 = vunpack.c.l.b16 %v5943
    %v6045 = vunpack.c.l.b16 %v5944
    %v6046 = vunpack.c.l.b16 %v5945
    %v6047 = vunpack.c.l.b16 %v5946
    %v6048 = vunpack.c.l.b16 %v5947
    %v6049 = vunpack.c.l.b16 %v5948
    %v6050 = vpack.c.b16 %v6003, %v6002
    %v6051 = vpack.c.b16 %v6005, %v6004
    %v6052 = vpack.c.b16 %v6007, %v6006
    %v6053 = vpack.c.b16 %v6009, %v6008
    %v6054 = vpack.c.b16 %v6011, %v6010
    %v6055 = vpack.c.b16 %v6013, %v6012
    %v6056 = vpack.c.b16 %v6015, %v6014
    %v6057 = vpack.c.b16 %v6017, %v6016
    %v6058 = vpack.c.b16 %v6019, %v6018
    %v6059 = vpack.c.b16 %v6021, %v6020
    %v6060 = vpack.c.b16 %v6023, %v6022
    %v6061 = vpack.c.b16 %v6025, %v6024
    %v6062 = vpack.c.b16 %v6027, %v6026
    %v6063 = vpack.c.b16 %v6029, %v6028
    %v6064 = vpack.c.b16 %v6031, %v6030
    %v6065 = vpack.c.b16 %v6033, %v6032
    %v6066 = vpack.c.b16 %v6035, %v6034
    %v6067 = vpack.c.b16 %v6037, %v6036
    %v6068 = vpack.c.b16 %v6039, %v6038
    %v6069 = vpack.c.b16 %v6041, %v6040
    %v6070 = vpack.c.b16 %v6043, %v6042
    %v6071 = vpack.c.b16 %v6045, %v6044
    %v6072 = vpack.c.b16 %v6047, %v6046
    %v6073 = vpack.c.b16 %v6049, %v6048
    %6098 = vmatpush.bf16.msra.mxu0 %v6057
    %6099 = vmatpush.bf16.msra.mxu0 %v6056
    %6100 = vmatpush.bf16.msra.mxu0 %v6055
    %6101 = vmatpush.bf16.msra.mxu0 %v6054
    %6102 = vmatpush.bf16.msra.mxu0 %v6053
    %6103 = vmatpush.bf16.msra.mxu0 %v6052
    %6104 = vmatpush.bf16.msra.mxu0 %v6051
    %6105 = vmatpush.bf16.msra.mxu0 %v6050
    %6106 = vmatmul.bf16.gmra.mxu0 %v5325
    %v6107 = vpop.f32.mrf.mxu0
    %v6108 = vadd.f32 %v5952, %v6107
    %v6109 = vpop.f32.mrf.mxu0
    %v6110 = vadd.f32 %v5952, %v6109
    %6111 = vmatmul.bf16.gmra.mxu0 %v5324
    %v6112 = vpop.f32.mrf.mxu0
    %v6113 = vadd.f32 %v5952, %v6112
    %v6114 = vpop.f32.mrf.mxu0
    %6115 = vdwg.mxu0
    %6116 = vmatpush.bf16.msra.mxu0 %v6065
    %6117 = vmatpush.bf16.msra.mxu0 %v6064
    %6118 = vmatpush.bf16.msra.mxu0 %v6063
    %6119 = vmatpush.bf16.msra.mxu0 %v6062
    %6120 = vmatpush.bf16.msra.mxu0 %v6061
    %6121 = vmatpush.bf16.msra.mxu0 %v6060
    %6122 = vmatpush.bf16.msra.mxu0 %v6059
    %6123 = vmatpush.bf16.msra.mxu0 %v6058
    %6124 = vmatmul.bf16.gmra.mxu0 %v5342
    %v6125 = vpop.f32.mrf.mxu0
    %v6126 = vadd.f32 %v6108, %v6125
    %v6127 = vpop.f32.mrf.mxu0
    %v6128 = vadd.f32 %v6110, %v6127
    %6129 = vmatmul.bf16.gmra.mxu0 %v5341
    %v6130 = vpop.f32.mrf.mxu0
    %v6131 = vadd.f32 %v6113, %v6130
    %v6132 = vpop.f32.mrf.mxu0
    %6133 = vdwg.mxu0
    %6134 = vmatpush.bf16.msra.mxu0 %v6073
    %6135 = vmatpush.bf16.msra.mxu0 %v6072
    %6136 = vmatpush.bf16.msra.mxu0 %v6071
    %6137 = vmatpush.bf16.msra.mxu0 %v6070
    %6138 = vmatpush.bf16.msra.mxu0 %v6069
    %6139 = vmatpush.bf16.msra.mxu0 %v6068
    %6140 = vmatpush.bf16.msra.mxu0 %v6067
    %6141 = vmatpush.bf16.msra.mxu0 %v6066
    %6142 = vmatmul.bf16.gmra.mxu0 %v5359
    %v6143 = vpop.f32.mrf.mxu0
    %v6144 = vadd.f32 %v6126, %v6143
    %v6145 = vpop.f32.mrf.mxu0
    %v6146 = vadd.f32 %v6128, %v6145
    %6147 = vmatmul.bf16.gmra.mxu0 %v5358
    %v6148 = vpop.f32.mrf.mxu0
    %v6149 = vadd.f32 %v6131, %v6148
    %v6150 = vpop.f32.mrf.mxu0
    %6151 = vdwg.mxu0
    %s6152 = scalar_lea.vmem %s8, 20
    %v6153 = vld [vmem:[%s6152] sm:$0xf]
    %v6154 = vld [vmem:[%s6152 + $0x4] sm:$0xf]
    %v6155 = vld [vmem:[%s6152 + $0x8] sm:$0xf]
    %v6156 = vld [vmem:[%s6152 + $0xc] sm:$0xf]
    %v6157 = vld [vmem:[%s6152 + $0x10] sm:$0x3]
    %v6158 = vpack.c.bf16 %v6146, %v6144
    %v6159 = vpack.c.bf16 %v6149, %v6149
    %v6165 = vunpack.c.l.b16 %v6153
    %v6166 = vunpack.c.l.b16 %v6154
    %v6167 = vunpack.c.l.b16 %v6155
    %v6168 = vunpack.c.l.b16 %v6156
    %v6169 = vunpack.c.l.b16 %v6157
    %v6170 = vpack.c.b16 %v6166, %v6165
    %v6171 = vpack.c.b16 %v6168, %v6167
    %v6172 = vpack.c.b16 %v6169, %v6169
    %v6174 = vsel %vm5838, %v6170, 0
    %v6177 = vsel %vm5838, %v6171, 0
    %v6180 = vsel %vm5838, %v6172, 0
    %v6183 = vsel %vm271, %v6159, 0
    %6185 = vmatpush.bf16.msra.mxu0 0
    %6186 = vmatpush.bf16.msra.mxu0 0
    %6187 = vmatpush.bf16.msra.mxu0 0
    %6188 = vmatpush.bf16.msra.mxu0 0
    %6189 = vmatpush.bf16.msra.mxu0 0
    %6190 = vmatpush.bf16.msra.mxu0 0
    %6191 = vmatpush.bf16.msra.mxu0 %v6183
    %6192 = vmatpush.bf16.msra.mxu0 %v6158
    %6193 = vmatmul.bf16.gmra.mxu0 %v6174
    %v6194 = vpop.f32.mrf.mxu0
    %v6195 = vadd.f32 0.0, %v6194
    %v6196 = vpop.f32.mrf.mxu0
    %v6197 = vadd.f32 0.0, %v6196
    %6198 = vmatmul.bf16.gmra.mxu0 %v6177
    %v6199 = vpop.f32.mrf.mxu0
    %v6200 = vadd.f32 0.0, %v6199
    %v6201 = vpop.f32.mrf.mxu0
    %v6202 = vadd.f32 0.0, %v6201
    %6203 = vmatmul.bf16.gmra.mxu0 %v6180
    %v6204 = vpop.f32.mrf.mxu0
    %v6205 = vadd.f32 0.0, %v6204
    %v6206 = vpop.f32.mrf.mxu0
    %6207 = vdwg.mxu0
    %v6208 = vadd.f32 %v5887, %v6195
    %v6209 = vadd.f32 %v5889, %v6197
    %v6210 = vadd.f32 %v5892, %v6200
    %v6211 = vadd.f32 %v5894, %v6202
    %v6212 = vadd.f32 %v5897, %v6205
    %s6213 = scalar_lea.vmem [#allocation6], 1344
    %v6214 = vld [vmem:[%s6213] sm:$0xf]
    %v6215 = vld [vmem:[%s6213 + $0x4] sm:$0xf]
    %v6216 = vld [vmem:[%s6213 + $0x8] sm:$0xf]
    %v6217 = vld [vmem:[%s6213 + $0xc] sm:$0xf]
    %v6218 = vld [vmem:[%s6213 + $0x10] sm:$0xf]
    %v6219 = vld [vmem:[%s6213 + $0x14] sm:$0xf]
    %v6220 = vld [vmem:[%s6213 + $0x18] sm:$0xf]
    %v6221 = vld [vmem:[%s6213 + $0x1c] sm:$0xf]
    %v6222 = vld [vmem:[%s6213 + $0x20] sm:$0xf]
    %v6223 = vld [vmem:[%s6213 + $0x24] sm:$0xf]
    %v6224 = vld [vmem:[%s6213 + $0x28] sm:$0xf]
    %v6225 = vld [vmem:[%s6213 + $0x2c] sm:$0xf]
    %v6226 = vld [vmem:[%s6213 + $0x30] sm:$0xf]
    %v6227 = vld [vmem:[%s6213 + $0x34] sm:$0xf]
    %v6228 = vld [vmem:[%s6213 + $0x38] sm:$0xf]
    %v6229 = vld [vmem:[%s6213 + $0x3c] sm:$0xf]
    %v6230 = vld [vmem:[%s6213 + $0x40] sm:$0xf]
    %v6231 = vld [vmem:[%s6213 + $0x44] sm:$0xf]
    %v6232 = vld [vmem:[%s6213 + $0x48] sm:$0xf]
    %v6233 = vld [vmem:[%s6213 + $0x4c] sm:$0xf]
    %v6234 = vld [vmem:[%s6213 + $0x50] sm:$0xf]
    %v6235 = vld [vmem:[%s6213 + $0x54] sm:$0xf]
    %v6236 = vld [vmem:[%s6213 + $0x58] sm:$0xf]
    %v6237 = vld [vmem:[%s6213 + $0x5c] sm:$0xf]
    %v6238 = vld [vmem:[%s6213 + $0x60] sm:$0xf]
    %v6239 = vld [vmem:[%s6213 + $0x64] sm:$0xf]
    %v6240 = vld [vmem:[%s6213 + $0x68] sm:$0xf]
    %v6241 = vld [vmem:[%s6213 + $0x6c] sm:$0xf]
    %v6242 = vld [vmem:[%s6213 + $0x70] sm:$0xf]
    %v6243 = vld [vmem:[%s6213 + $0x74] sm:$0xf]
    %v6244 = vld [vmem:[%s6213 + $0x78] sm:$0xf]
    %v6245 = vld [vmem:[%s6213 + $0x7c] sm:$0xf]
    %v6246 = vld [vmem:[%s6213 + $0x80] sm:$0xf]
    %v6247 = vld [vmem:[%s6213 + $0x84] sm:$0xf]
    %v6248 = vld [vmem:[%s6213 + $0x88] sm:$0xf]
    %v6249 = vld [vmem:[%s6213 + $0x8c] sm:$0xf]
    %v6250 = vld [vmem:[%s6213 + $0x90] sm:$0xf]
    %v6251 = vld [vmem:[%s6213 + $0x94] sm:$0xf]
    %v6252 = vld [vmem:[%s6213 + $0x98] sm:$0xf]
    %v6253 = vld [vmem:[%s6213 + $0x9c] sm:$0xf]
    %v6254 = vld [vmem:[%s6213 + $0xa0] sm:$0xf]
    %v6255 = vld [vmem:[%s6213 + $0xa4] sm:$0xf]
    %v6256 = vld [vmem:[%s6213 + $0xa8] sm:$0xf]
    %v6257 = vld [vmem:[%s6213 + $0xac] sm:$0xf]
    %v6258 = vld [vmem:[%s6213 + $0xb0] sm:$0xf]
    %v6259 = vld [vmem:[%s6213 + $0xb4] sm:$0xf]
    %v6260 = vld [vmem:[%s6213 + $0xb8] sm:$0xf]
    %v6261 = vld [vmem:[%s6213 + $0xbc] sm:$0xf]
    %s6262 = scalar_lea.vmem [#allocation7], 7
    %v6263 = vld [vmem:[%s6262] sm:$0x1]
    %v6265 = vperm.slane %v6263, 0
    %v6315 = vunpack.c.l.b16 %v6214
    %v6316 = vunpack.c.l.b16 %v6215
    %v6317 = vunpack.c.l.b16 %v6216
    %v6318 = vunpack.c.l.b16 %v6217
    %v6319 = vunpack.c.l.b16 %v6218
    %v6320 = vunpack.c.l.b16 %v6219
    %v6321 = vunpack.c.l.b16 %v6220
    %v6322 = vunpack.c.l.b16 %v6221
    %v6323 = vunpack.c.l.b16 %v6222
    %v6324 = vunpack.c.l.b16 %v6223
    %v6325 = vunpack.c.l.b16 %v6224
    %v6326 = vunpack.c.l.b16 %v6225
    %v6327 = vunpack.c.l.b16 %v6226
    %v6328 = vunpack.c.l.b16 %v6227
    %v6329 = vunpack.c.l.b16 %v6228
    %v6330 = vunpack.c.l.b16 %v6229
    %v6331 = vunpack.c.l.b16 %v6230
    %v6332 = vunpack.c.l.b16 %v6231
    %v6333 = vunpack.c.l.b16 %v6232
    %v6334 = vunpack.c.l.b16 %v6233
    %v6335 = vunpack.c.l.b16 %v6234
    %v6336 = vunpack.c.l.b16 %v6235
    %v6337 = vunpack.c.l.b16 %v6236
    %v6338 = vunpack.c.l.b16 %v6237
    %v6339 = vunpack.c.l.b16 %v6238
    %v6340 = vunpack.c.l.b16 %v6239
    %v6341 = vunpack.c.l.b16 %v6240
    %v6342 = vunpack.c.l.b16 %v6241
    %v6343 = vunpack.c.l.b16 %v6242
    %v6344 = vunpack.c.l.b16 %v6243
    %v6345 = vunpack.c.l.b16 %v6244
    %v6346 = vunpack.c.l.b16 %v6245
    %v6347 = vunpack.c.l.b16 %v6246
    %v6348 = vunpack.c.l.b16 %v6247
    %v6349 = vunpack.c.l.b16 %v6248
    %v6350 = vunpack.c.l.b16 %v6249
    %v6351 = vunpack.c.l.b16 %v6250
    %v6352 = vunpack.c.l.b16 %v6251
    %v6353 = vunpack.c.l.b16 %v6252
    %v6354 = vunpack.c.l.b16 %v6253
    %v6355 = vunpack.c.l.b16 %v6254
    %v6356 = vunpack.c.l.b16 %v6255
    %v6357 = vunpack.c.l.b16 %v6256
    %v6358 = vunpack.c.l.b16 %v6257
    %v6359 = vunpack.c.l.b16 %v6258
    %v6360 = vunpack.c.l.b16 %v6259
    %v6361 = vunpack.c.l.b16 %v6260
    %v6362 = vunpack.c.l.b16 %v6261
    %v6363 = vpack.c.b16 %v6316, %v6315
    %v6364 = vpack.c.b16 %v6318, %v6317
    %v6365 = vpack.c.b16 %v6320, %v6319
    %v6366 = vpack.c.b16 %v6322, %v6321
    %v6367 = vpack.c.b16 %v6324, %v6323
    %v6368 = vpack.c.b16 %v6326, %v6325
    %v6369 = vpack.c.b16 %v6328, %v6327
    %v6370 = vpack.c.b16 %v6330, %v6329
    %v6371 = vpack.c.b16 %v6332, %v6331
    %v6372 = vpack.c.b16 %v6334, %v6333
    %v6373 = vpack.c.b16 %v6336, %v6335
    %v6374 = vpack.c.b16 %v6338, %v6337
    %v6375 = vpack.c.b16 %v6340, %v6339
    %v6376 = vpack.c.b16 %v6342, %v6341
    %v6377 = vpack.c.b16 %v6344, %v6343
    %v6378 = vpack.c.b16 %v6346, %v6345
    %v6379 = vpack.c.b16 %v6348, %v6347
    %v6380 = vpack.c.b16 %v6350, %v6349
    %v6381 = vpack.c.b16 %v6352, %v6351
    %v6382 = vpack.c.b16 %v6354, %v6353
    %v6383 = vpack.c.b16 %v6356, %v6355
    %v6384 = vpack.c.b16 %v6358, %v6357
    %v6385 = vpack.c.b16 %v6360, %v6359
    %v6386 = vpack.c.b16 %v6362, %v6361
    %6411 = vmatpush.bf16.msra.mxu0 %v6370
    %6412 = vmatpush.bf16.msra.mxu0 %v6369
    %6413 = vmatpush.bf16.msra.mxu0 %v6368
    %6414 = vmatpush.bf16.msra.mxu0 %v6367
    %6415 = vmatpush.bf16.msra.mxu0 %v6366
    %6416 = vmatpush.bf16.msra.mxu0 %v6365
    %6417 = vmatpush.bf16.msra.mxu0 %v6364
    %6418 = vmatpush.bf16.msra.mxu0 %v6363
    %6419 = vmatmul.bf16.gmra.mxu0 %v5325
    %v6420 = vpop.f32.mrf.mxu0
    %v6421 = vadd.f32 %v6265, %v6420
    %v6422 = vpop.f32.mrf.mxu0
    %v6423 = vadd.f32 %v6265, %v6422
    %6424 = vmatmul.bf16.gmra.mxu0 %v5324
    %v6425 = vpop.f32.mrf.mxu0
    %v6426 = vadd.f32 %v6265, %v6425
    %v6427 = vpop.f32.mrf.mxu0
    %6428 = vdwg.mxu0
    %6429 = vmatpush.bf16.msra.mxu0 %v6378
    %6430 = vmatpush.bf16.msra.mxu0 %v6377
    %6431 = vmatpush.bf16.msra.mxu0 %v6376
    %6432 = vmatpush.bf16.msra.mxu0 %v6375
    %6433 = vmatpush.bf16.msra.mxu0 %v6374
    %6434 = vmatpush.bf16.msra.mxu0 %v6373
    %6435 = vmatpush.bf16.msra.mxu0 %v6372
    %6436 = vmatpush.bf16.msra.mxu0 %v6371
    %6437 = vmatmul.bf16.gmra.mxu0 %v5342
    %v6438 = vpop.f32.mrf.mxu0
    %v6439 = vadd.f32 %v6421, %v6438
    %v6440 = vpop.f32.mrf.mxu0
    %v6441 = vadd.f32 %v6423, %v6440
    %6442 = vmatmul.bf16.gmra.mxu0 %v5341
    %v6443 = vpop.f32.mrf.mxu0
    %v6444 = vadd.f32 %v6426, %v6443
    %v6445 = vpop.f32.mrf.mxu0
    %6446 = vdwg.mxu0
    %6447 = vmatpush.bf16.msra.mxu0 %v6386
    %6448 = vmatpush.bf16.msra.mxu0 %v6385
    %6449 = vmatpush.bf16.msra.mxu0 %v6384
    %6450 = vmatpush.bf16.msra.mxu0 %v6383
    %6451 = vmatpush.bf16.msra.mxu0 %v6382
    %6452 = vmatpush.bf16.msra.mxu0 %v6381
    %6453 = vmatpush.bf16.msra.mxu0 %v6380
    %6454 = vmatpush.bf16.msra.mxu0 %v6379
    %6455 = vmatmul.bf16.gmra.mxu0 %v5359
    %v6456 = vpop.f32.mrf.mxu0
    %v6457 = vadd.f32 %v6439, %v6456
    %v6458 = vpop.f32.mrf.mxu0
    %v6459 = vadd.f32 %v6441, %v6458
    %6460 = vmatmul.bf16.gmra.mxu0 %v5358
    %v6461 = vpop.f32.mrf.mxu0
    %v6462 = vadd.f32 %v6444, %v6461
    %v6463 = vpop.f32.mrf.mxu0
    %6464 = vdwg.mxu0
    %v6465 = vpack.c.bf16 %v6459, %v6457
    %v6466 = vpack.c.bf16 %v6462, %v6462
    %v6468 = vsel %vm271, %v6466, 0
    %6470 = vmatpush.bf16.msra.mxu0 0
    %6471 = vmatpush.bf16.msra.mxu0 0
    %6472 = vmatpush.bf16.msra.mxu0 0
    %6473 = vmatpush.bf16.msra.mxu0 0
    %6474 = vmatpush.bf16.msra.mxu0 0
    %6475 = vmatpush.bf16.msra.mxu0 0
    %6476 = vmatpush.bf16.msra.mxu0 %v6468
    %6477 = vmatpush.bf16.msra.mxu0 %v6465
    %6478 = vmatmul.bf16.gmra.mxu0 %v6174
    %v6479 = vpop.f32.mrf.mxu0
    %v6480 = vadd.f32 0.0, %v6479
    %v6481 = vpop.f32.mrf.mxu0
    %v6482 = vadd.f32 0.0, %v6481
    %6483 = vmatmul.bf16.gmra.mxu0 %v6177
    %v6484 = vpop.f32.mrf.mxu0
    %v6485 = vadd.f32 0.0, %v6484
    %v6486 = vpop.f32.mrf.mxu0
    %v6487 = vadd.f32 0.0, %v6486
    %6488 = vmatmul.bf16.gmra.mxu0 %v6180
    %v6489 = vpop.f32.mrf.mxu0
    %v6490 = vadd.f32 0.0, %v6489
    %v6491 = vpop.f32.mrf.mxu0
    %6492 = vdwg.mxu0
    %v6493 = vadd.f32 %v6208, %v6480
    %v6494 = vadd.f32 %v6209, %v6482
    %v6495 = vadd.f32 %v6210, %v6485
    %v6496 = vadd.f32 %v6211, %v6487
    %v6497 = vadd.f32 %v6212, %v6490
    %v6498 = vadd.f32 %v6493, %v3383
    %v6499 = vadd.f32 %v6494, %v3384
    %v6500 = vadd.f32 %v6495, %v3385
    %v6501 = vadd.f32 %v6496, %v3386
    %v6502 = vadd.f32 %v6497, %v3387
    %s6503 = scalar_lea.vmem [#allocation2], 1728
    %v6504 = vld [vmem:[%s6503] sm:$0xf]
    %v6505 = vld [vmem:[%s6503 + $0x4] sm:$0xf]
    %v6506 = vld [vmem:[%s6503 + $0x8] sm:$0xf]
    %v6507 = vld [vmem:[%s6503 + $0xc] sm:$0xf]
    %v6508 = vld [vmem:[%s6503 + $0x10] sm:$0xf]
    %v6509 = vld [vmem:[%s6503 + $0x14] sm:$0xf]
    %v6510 = vld [vmem:[%s6503 + $0x18] sm:$0xf]
    %v6511 = vld [vmem:[%s6503 + $0x1c] sm:$0xf]
    %v6512 = vld [vmem:[%s6503 + $0x20] sm:$0xf]
    %v6513 = vld [vmem:[%s6503 + $0x24] sm:$0xf]
    %v6514 = vld [vmem:[%s6503 + $0x28] sm:$0xf]
    %v6515 = vld [vmem:[%s6503 + $0x2c] sm:$0xf]
    %v6516 = vld [vmem:[%s6503 + $0x30] sm:$0xf]
    %v6517 = vld [vmem:[%s6503 + $0x34] sm:$0xf]
    %v6518 = vld [vmem:[%s6503 + $0x38] sm:$0xf]
    %v6519 = vld [vmem:[%s6503 + $0x3c] sm:$0xf]
    %v6520 = vld [vmem:[%s6503 + $0x40] sm:$0xf]
    %v6521 = vld [vmem:[%s6503 + $0x44] sm:$0xf]
    %v6522 = vld [vmem:[%s6503 + $0x48] sm:$0xf]
    %v6523 = vld [vmem:[%s6503 + $0x4c] sm:$0xf]
    %v6524 = vld [vmem:[%s6503 + $0x50] sm:$0xf]
    %v6525 = vld [vmem:[%s6503 + $0x54] sm:$0xf]
    %v6526 = vld [vmem:[%s6503 + $0x58] sm:$0xf]
    %v6527 = vld [vmem:[%s6503 + $0x5c] sm:$0xf]
    %v6528 = vld [vmem:[%s6503 + $0x60] sm:$0xf]
    %v6529 = vld [vmem:[%s6503 + $0x64] sm:$0xf]
    %v6530 = vld [vmem:[%s6503 + $0x68] sm:$0xf]
    %v6531 = vld [vmem:[%s6503 + $0x6c] sm:$0xf]
    %v6532 = vld [vmem:[%s6503 + $0x70] sm:$0xf]
    %v6533 = vld [vmem:[%s6503 + $0x74] sm:$0xf]
    %v6534 = vld [vmem:[%s6503 + $0x78] sm:$0xf]
    %v6535 = vld [vmem:[%s6503 + $0x7c] sm:$0xf]
    %v6536 = vld [vmem:[%s6503 + $0x80] sm:$0xf]
    %v6537 = vld [vmem:[%s6503 + $0x84] sm:$0xf]
    %v6538 = vld [vmem:[%s6503 + $0x88] sm:$0xf]
    %v6539 = vld [vmem:[%s6503 + $0x8c] sm:$0xf]
    %v6540 = vld [vmem:[%s6503 + $0x90] sm:$0xf]
    %v6541 = vld [vmem:[%s6503 + $0x94] sm:$0xf]
    %v6542 = vld [vmem:[%s6503 + $0x98] sm:$0xf]
    %v6543 = vld [vmem:[%s6503 + $0x9c] sm:$0xf]
    %v6544 = vld [vmem:[%s6503 + $0xa0] sm:$0xf]
    %v6545 = vld [vmem:[%s6503 + $0xa4] sm:$0xf]
    %v6546 = vld [vmem:[%s6503 + $0xa8] sm:$0xf]
    %v6547 = vld [vmem:[%s6503 + $0xac] sm:$0xf]
    %v6548 = vld [vmem:[%s6503 + $0xb0] sm:$0xf]
    %v6549 = vld [vmem:[%s6503 + $0xb4] sm:$0xf]
    %v6550 = vld [vmem:[%s6503 + $0xb8] sm:$0xf]
    %v6551 = vld [vmem:[%s6503 + $0xbc] sm:$0xf]
    %s6552 = scalar_lea.vmem [#allocation4], 9
    %v6553 = vld [vmem:[%s6552] sm:$0x1]
    %v6554 = vrot.slane %v6498, 4
    %v6555 = vsel %vm239, %v6554, %v6502
    %v6556 = vrot.slane %v6499, 4
    %v6557 = vrot.slane %v6500, 4
    %v6558 = vrot.slane %v6501, 4
    %v6559 = vrot.slane %v6555, 4
    %v6560 = vsel %vm239, %v6556, %v6554
    %v6561 = vsel %vm239, %v6557, %v6556
    %v6562 = vsel %vm239, %v6558, %v6557
    %v6563 = vsel %vm239, %v6559, %v6558
    %v6569 = vrot.slane %v6498, 5
    %v6570 = vrot.slane %v6499, 5
    %v6571 = vsel %vm255, %v6569, %v6570
    %v6572 = vrot.slane %v6500, 5
    %v6573 = vsel %vm255, %v6570, %v6572
    %v6574 = vrot.slane %v6501, 5
    %v6575 = vsel %vm255, %v6572, %v6574
    %v6576 = vrot.slane %v6502, 5
    %v6577 = vsel %vm255, %v6574, %v6576
    %v6584 = vrot.slane %v6498, 6
    %v6585 = vrot.slane %v6499, 6
    %v6586 = vsel %vm271, %v6584, %v6585
    %v6587 = vrot.slane %v6500, 6
    %v6588 = vsel %vm271, %v6585, %v6587
    %v6589 = vrot.slane %v6501, 6
    %v6590 = vsel %vm271, %v6587, %v6589
    %v6591 = vrot.slane %v6555, 6
    %v6592 = vsel %vm271, %v6589, %v6591
    %v6598 = vpack.c.bf16 %v6560, %v6555
    %v6599 = vpack.c.bf16 %v6571, %v6569
    %v6600 = vpack.c.bf16 %v6586, %v6584
    %v6601 = vpack.c.bf16 %v6562, %v6561
    %v6602 = vpack.c.bf16 %v6575, %v6573
    %v6603 = vpack.c.bf16 %v6590, %v6588
    %v6604 = vpack.c.bf16 %v6563, %v6563
    %v6605 = vpack.c.bf16 %v6577, %v6577
    %v6606 = vpack.c.bf16 %v6592, %v6592
    %v6608 = vperm.slane %v6553, 0
    %v6611 = vshrl.u32 %v6598, 16
    %v6613 = vrot.slane %v6611, 1
    %v6614 = vshll.u32 %v6598, 16
    %v6616 = vrot.slane %v6614, 2
    %v6617 = vor.u32 %v6613, %v6616
    %v6619 = vshrl.u32 %v6601, 16
    %v6621 = vrot.slane %v6619, 1
    %v6622 = vshll.u32 %v6601, 16
    %v6624 = vrot.slane %v6622, 2
    %v6625 = vor.u32 %v6621, %v6624
    %v6626 = vsel %vm298, %v6617, %v6625
    %v6628 = vshrl.u32 %v6599, 16
    %v6630 = vrot.slane %v6628, 1
    %v6631 = vshll.u32 %v6599, 16
    %v6633 = vrot.slane %v6631, 2
    %v6634 = vor.u32 %v6630, %v6633
    %v6636 = vshrl.u32 %v6602, 16
    %v6638 = vrot.slane %v6636, 1
    %v6639 = vshll.u32 %v6602, 16
    %v6641 = vrot.slane %v6639, 2
    %v6642 = vor.u32 %v6638, %v6641
    %v6643 = vsel %vm298, %v6634, %v6642
    %v6645 = vshrl.u32 %v6600, 16
    %v6647 = vrot.slane %v6645, 1
    %v6648 = vshll.u32 %v6600, 16
    %v6650 = vrot.slane %v6648, 2
    %v6651 = vor.u32 %v6647, %v6650
    %v6653 = vshrl.u32 %v6603, 16
    %v6655 = vrot.slane %v6653, 1
    %v6656 = vshll.u32 %v6603, 16
    %v6658 = vrot.slane %v6656, 2
    %v6659 = vor.u32 %v6655, %v6658
    %v6660 = vsel %vm298, %v6651, %v6659
    %v6662 = vshrl.u32 %v6604, 16
    %v6664 = vrot.slane %v6662, 1
    %v6665 = vshll.u32 %v6604, 16
    %v6667 = vrot.slane %v6665, 2
    %v6668 = vor.u32 %v6664, %v6667
    %v6669 = vsel %vm298, %v6625, %v6668
    %v6671 = vshrl.u32 %v6605, 16
    %v6673 = vrot.slane %v6671, 1
    %v6674 = vshll.u32 %v6605, 16
    %v6676 = vrot.slane %v6674, 2
    %v6677 = vor.u32 %v6673, %v6676
    %v6678 = vsel %vm298, %v6642, %v6677
    %v6680 = vshrl.u32 %v6606, 16
    %v6682 = vrot.slane %v6680, 1
    %v6683 = vshll.u32 %v6606, 16
    %v6685 = vrot.slane %v6683, 2
    %v6686 = vor.u32 %v6682, %v6685
    %v6687 = vsel %vm298, %v6659, %v6686
    %v6745 = vunpack.c.l.b16 %v6504
    %v6746 = vunpack.c.l.b16 %v6505
    %v6747 = vunpack.c.l.b16 %v6506
    %v6748 = vunpack.c.l.b16 %v6507
    %v6749 = vunpack.c.l.b16 %v6508
    %v6750 = vunpack.c.l.b16 %v6509
    %v6751 = vunpack.c.l.b16 %v6510
    %v6752 = vunpack.c.l.b16 %v6511
    %v6753 = vunpack.c.l.b16 %v6512
    %v6754 = vunpack.c.l.b16 %v6513
    %v6755 = vunpack.c.l.b16 %v6514
    %v6756 = vunpack.c.l.b16 %v6515
    %v6757 = vunpack.c.l.b16 %v6516
    %v6758 = vunpack.c.l.b16 %v6517
    %v6759 = vunpack.c.l.b16 %v6518
    %v6760 = vunpack.c.l.b16 %v6519
    %v6761 = vunpack.c.l.b16 %v6520
    %v6762 = vunpack.c.l.b16 %v6521
    %v6763 = vunpack.c.l.b16 %v6522
    %v6764 = vunpack.c.l.b16 %v6523
    %v6765 = vunpack.c.l.b16 %v6524
    %v6766 = vunpack.c.l.b16 %v6525
    %v6767 = vunpack.c.l.b16 %v6526
    %v6768 = vunpack.c.l.b16 %v6527
    %v6769 = vunpack.c.l.b16 %v6528
    %v6770 = vunpack.c.l.b16 %v6529
    %v6771 = vunpack.c.l.b16 %v6530
    %v6772 = vunpack.c.l.b16 %v6531
    %v6773 = vunpack.c.l.b16 %v6532
    %v6774 = vunpack.c.l.b16 %v6533
    %v6775 = vunpack.c.l.b16 %v6534
    %v6776 = vunpack.c.l.b16 %v6535
    %v6777 = vunpack.c.l.b16 %v6536
    %v6778 = vunpack.c.l.b16 %v6537
    %v6779 = vunpack.c.l.b16 %v6538
    %v6780 = vunpack.c.l.b16 %v6539
    %v6781 = vunpack.c.l.b16 %v6540
    %v6782 = vunpack.c.l.b16 %v6541
    %v6783 = vunpack.c.l.b16 %v6542
    %v6784 = vunpack.c.l.b16 %v6543
    %v6785 = vunpack.c.l.b16 %v6544
    %v6786 = vunpack.c.l.b16 %v6545
    %v6787 = vunpack.c.l.b16 %v6546
    %v6788 = vunpack.c.l.b16 %v6547
    %v6789 = vunpack.c.l.b16 %v6548
    %v6790 = vunpack.c.l.b16 %v6549
    %v6791 = vunpack.c.l.b16 %v6550
    %v6792 = vunpack.c.l.b16 %v6551
    %v6793 = vpack.c.b16 %v6746, %v6745
    %v6794 = vpack.c.b16 %v6748, %v6747
    %v6795 = vpack.c.b16 %v6750, %v6749
    %v6796 = vpack.c.b16 %v6752, %v6751
    %v6797 = vpack.c.b16 %v6754, %v6753
    %v6798 = vpack.c.b16 %v6756, %v6755
    %v6799 = vpack.c.b16 %v6758, %v6757
    %v6800 = vpack.c.b16 %v6760, %v6759
    %v6801 = vpack.c.b16 %v6762, %v6761
    %v6802 = vpack.c.b16 %v6764, %v6763
    %v6803 = vpack.c.b16 %v6766, %v6765
    %v6804 = vpack.c.b16 %v6768, %v6767
    %v6805 = vpack.c.b16 %v6770, %v6769
    %v6806 = vpack.c.b16 %v6772, %v6771
    %v6807 = vpack.c.b16 %v6774, %v6773
    %v6808 = vpack.c.b16 %v6776, %v6775
    %v6809 = vpack.c.b16 %v6778, %v6777
    %v6810 = vpack.c.b16 %v6780, %v6779
    %v6811 = vpack.c.b16 %v6782, %v6781
    %v6812 = vpack.c.b16 %v6784, %v6783
    %v6813 = vpack.c.b16 %v6786, %v6785
    %v6814 = vpack.c.b16 %v6788, %v6787
    %v6815 = vpack.c.b16 %v6790, %v6789
    %v6816 = vpack.c.b16 %v6792, %v6791
    %6841 = vmatpush.bf16.msra.mxu0 %v6800
    %6842 = vmatpush.bf16.msra.mxu0 %v6799
    %6843 = vmatpush.bf16.msra.mxu0 %v6798
    %6844 = vmatpush.bf16.msra.mxu0 %v6797
    %6845 = vmatpush.bf16.msra.mxu0 %v6796
    %6846 = vmatpush.bf16.msra.mxu0 %v6795
    %6847 = vmatpush.bf16.msra.mxu0 %v6794
    %6848 = vmatpush.bf16.msra.mxu0 %v6793
    %6849 = vmatmul.bf16.gmra.mxu0 %v6626
    %v6850 = vpop.f32.mrf.mxu0
    %v6851 = vadd.f32 %v6608, %v6850
    %v6852 = vpop.f32.mrf.mxu0
    %v6853 = vadd.f32 %v6608, %v6852
    %6854 = vmatmul.bf16.gmra.mxu0 %v6669
    %v6855 = vpop.f32.mrf.mxu0
    %v6856 = vadd.f32 %v6608, %v6855
    %v6857 = vpop.f32.mrf.mxu0
    %v6858 = vadd.f32 %v6608, %v6857
    %6859 = vmatmul.bf16.gmra.mxu0 %v6668
    %v6860 = vpop.f32.mrf.mxu0
    %v6861 = vadd.f32 %v6608, %v6860
    %v6862 = vpop.f32.mrf.mxu0
    %6863 = vdwg.mxu0
    %6864 = vmatpush.bf16.msra.mxu0 %v6808
    %6865 = vmatpush.bf16.msra.mxu0 %v6807
    %6866 = vmatpush.bf16.msra.mxu0 %v6806
    %6867 = vmatpush.bf16.msra.mxu0 %v6805
    %6868 = vmatpush.bf16.msra.mxu0 %v6804
    %6869 = vmatpush.bf16.msra.mxu0 %v6803
    %6870 = vmatpush.bf16.msra.mxu0 %v6802
    %6871 = vmatpush.bf16.msra.mxu0 %v6801
    %6872 = vmatmul.bf16.gmra.mxu0 %v6643
    %v6873 = vpop.f32.mrf.mxu0
    %v6874 = vadd.f32 %v6851, %v6873
    %v6875 = vpop.f32.mrf.mxu0
    %v6876 = vadd.f32 %v6853, %v6875
    %6877 = vmatmul.bf16.gmra.mxu0 %v6678
    %v6878 = vpop.f32.mrf.mxu0
    %v6879 = vadd.f32 %v6856, %v6878
    %v6880 = vpop.f32.mrf.mxu0
    %v6881 = vadd.f32 %v6858, %v6880
    %6882 = vmatmul.bf16.gmra.mxu0 %v6677
    %v6883 = vpop.f32.mrf.mxu0
    %v6884 = vadd.f32 %v6861, %v6883
    %v6885 = vpop.f32.mrf.mxu0
    %6886 = vdwg.mxu0
    %6887 = vmatpush.bf16.msra.mxu0 %v6816
    %6888 = vmatpush.bf16.msra.mxu0 %v6815
    %6889 = vmatpush.bf16.msra.mxu0 %v6814
    %6890 = vmatpush.bf16.msra.mxu0 %v6813
    %6891 = vmatpush.bf16.msra.mxu0 %v6812
    %6892 = vmatpush.bf16.msra.mxu0 %v6811
    %6893 = vmatpush.bf16.msra.mxu0 %v6810
    %6894 = vmatpush.bf16.msra.mxu0 %v6809
    %6895 = vmatmul.bf16.gmra.mxu0 %v6660
    %v6896 = vpop.f32.mrf.mxu0
    %v6897 = vadd.f32 %v6874, %v6896
    %v6898 = vpop.f32.mrf.mxu0
    %v6899 = vadd.f32 %v6876, %v6898
    %6900 = vmatmul.bf16.gmra.mxu0 %v6687
    %v6901 = vpop.f32.mrf.mxu0
    %v6902 = vadd.f32 %v6879, %v6901
    %v6903 = vpop.f32.mrf.mxu0
    %v6904 = vadd.f32 %v6881, %v6903
    %6905 = vmatmul.bf16.gmra.mxu0 %v6686
    %v6906 = vpop.f32.mrf.mxu0
    %v6907 = vadd.f32 %v6884, %v6906
    %v6908 = vpop.f32.mrf.mxu0
    %6909 = vdwg.mxu0
    %v6910 = vmax.f32 %v6897, 0.0
    %v6911 = vmax.f32 %v6899, 0.0
    %v6912 = vmax.f32 %v6902, 0.0
    %v6913 = vmax.f32 %v6904, 0.0
    %v6914 = vmax.f32 %v6907, 0.0
    %v6915 = vmul.f32 %v6910, %v177
    %v6916 = vmul.f32 %v6911, %v178
    %v6917 = vmul.f32 %v6912, %v179
    %v6918 = vmul.f32 %v6913, %v180
    %v6919 = vmul.f32 %v6914, %v181
    %s6920 = scalar_lea.vmem [#allocation2], 1920
    %v6921 = vld [vmem:[%s6920] sm:$0xf]
    %v6922 = vld [vmem:[%s6920 + $0x4] sm:$0xf]
    %v6923 = vld [vmem:[%s6920 + $0x8] sm:$0xf]
    %v6924 = vld [vmem:[%s6920 + $0xc] sm:$0xf]
    %v6925 = vld [vmem:[%s6920 + $0x10] sm:$0xf]
    %v6926 = vld [vmem:[%s6920 + $0x14] sm:$0xf]
    %v6927 = vld [vmem:[%s6920 + $0x18] sm:$0xf]
    %v6928 = vld [vmem:[%s6920 + $0x1c] sm:$0xf]
    %v6929 = vld [vmem:[%s6920 + $0x20] sm:$0xf]
    %v6930 = vld [vmem:[%s6920 + $0x24] sm:$0xf]
    %v6931 = vld [vmem:[%s6920 + $0x28] sm:$0xf]
    %v6932 = vld [vmem:[%s6920 + $0x2c] sm:$0xf]
    %v6933 = vld [vmem:[%s6920 + $0x30] sm:$0xf]
    %v6934 = vld [vmem:[%s6920 + $0x34] sm:$0xf]
    %v6935 = vld [vmem:[%s6920 + $0x38] sm:$0xf]
    %v6936 = vld [vmem:[%s6920 + $0x3c] sm:$0xf]
    %v6937 = vld [vmem:[%s6920 + $0x40] sm:$0xf]
    %v6938 = vld [vmem:[%s6920 + $0x44] sm:$0xf]
    %v6939 = vld [vmem:[%s6920 + $0x48] sm:$0xf]
    %v6940 = vld [vmem:[%s6920 + $0x4c] sm:$0xf]
    %v6941 = vld [vmem:[%s6920 + $0x50] sm:$0xf]
    %v6942 = vld [vmem:[%s6920 + $0x54] sm:$0xf]
    %v6943 = vld [vmem:[%s6920 + $0x58] sm:$0xf]
    %v6944 = vld [vmem:[%s6920 + $0x5c] sm:$0xf]
    %v6945 = vld [vmem:[%s6920 + $0x60] sm:$0xf]
    %v6946 = vld [vmem:[%s6920 + $0x64] sm:$0xf]
    %v6947 = vld [vmem:[%s6920 + $0x68] sm:$0xf]
    %v6948 = vld [vmem:[%s6920 + $0x6c] sm:$0xf]
    %v6949 = vld [vmem:[%s6920 + $0x70] sm:$0xf]
    %v6950 = vld [vmem:[%s6920 + $0x74] sm:$0xf]
    %v6951 = vld [vmem:[%s6920 + $0x78] sm:$0xf]
    %v6952 = vld [vmem:[%s6920 + $0x7c] sm:$0xf]
    %v6953 = vld [vmem:[%s6920 + $0x80] sm:$0xf]
    %v6954 = vld [vmem:[%s6920 + $0x84] sm:$0xf]
    %v6955 = vld [vmem:[%s6920 + $0x88] sm:$0xf]
    %v6956 = vld [vmem:[%s6920 + $0x8c] sm:$0xf]
    %v6957 = vld [vmem:[%s6920 + $0x90] sm:$0xf]
    %v6958 = vld [vmem:[%s6920 + $0x94] sm:$0xf]
    %v6959 = vld [vmem:[%s6920 + $0x98] sm:$0xf]
    %v6960 = vld [vmem:[%s6920 + $0x9c] sm:$0xf]
    %v6961 = vld [vmem:[%s6920 + $0xa0] sm:$0xf]
    %v6962 = vld [vmem:[%s6920 + $0xa4] sm:$0xf]
    %v6963 = vld [vmem:[%s6920 + $0xa8] sm:$0xf]
    %v6964 = vld [vmem:[%s6920 + $0xac] sm:$0xf]
    %v6965 = vld [vmem:[%s6920 + $0xb0] sm:$0xf]
    %v6966 = vld [vmem:[%s6920 + $0xb4] sm:$0xf]
    %v6967 = vld [vmem:[%s6920 + $0xb8] sm:$0xf]
    %v6968 = vld [vmem:[%s6920 + $0xbc] sm:$0xf]
    %s6969 = scalar_lea.vmem [#allocation4], 10
    %v6970 = vld [vmem:[%s6969] sm:$0x1]
    %v6971 = vrot.slane %v6915, 4
    %v6972 = vsel %vm239, %v6971, %v6919
    %v6973 = vrot.slane %v6916, 4
    %v6974 = vrot.slane %v6917, 4
    %v6975 = vrot.slane %v6918, 4
    %v6976 = vrot.slane %v6972, 4
    %v6977 = vsel %vm239, %v6973, %v6971
    %v6978 = vsel %vm239, %v6974, %v6973
    %v6979 = vsel %vm239, %v6975, %v6974
    %v6980 = vsel %vm239, %v6976, %v6975
    %v6986 = vrot.slane %v6915, 5
    %v6987 = vrot.slane %v6916, 5
    %v6988 = vsel %vm255, %v6986, %v6987
    %v6989 = vrot.slane %v6917, 5
    %v6990 = vsel %vm255, %v6987, %v6989
    %v6991 = vrot.slane %v6918, 5
    %v6992 = vsel %vm255, %v6989, %v6991
    %v6993 = vrot.slane %v6919, 5
    %v6994 = vsel %vm255, %v6991, %v6993
    %v7001 = vrot.slane %v6915, 6
    %v7002 = vrot.slane %v6916, 6
    %v7003 = vsel %vm271, %v7001, %v7002
    %v7004 = vrot.slane %v6917, 6
    %v7005 = vsel %vm271, %v7002, %v7004
    %v7006 = vrot.slane %v6918, 6
    %v7007 = vsel %vm271, %v7004, %v7006
    %v7008 = vrot.slane %v6972, 6
    %v7009 = vsel %vm271, %v7006, %v7008
    %v7015 = vpack.c.bf16 %v6977, %v6972
    %v7016 = vpack.c.bf16 %v6988, %v6986
    %v7017 = vpack.c.bf16 %v7003, %v7001
    %v7018 = vpack.c.bf16 %v6979, %v6978
    %v7019 = vpack.c.bf16 %v6992, %v6990
    %v7020 = vpack.c.bf16 %v7007, %v7005
    %v7021 = vpack.c.bf16 %v6980, %v6980
    %v7022 = vpack.c.bf16 %v6994, %v6994
    %v7023 = vpack.c.bf16 %v7009, %v7009
    %v7025 = vperm.slane %v6970, 0
    %v7028 = vshrl.u32 %v7015, 16
    %v7030 = vrot.slane %v7028, 1
    %v7031 = vshll.u32 %v7015, 16
    %v7033 = vrot.slane %v7031, 2
    %v7034 = vor.u32 %v7030, %v7033
    %v7036 = vshrl.u32 %v7018, 16
    %v7038 = vrot.slane %v7036, 1
    %v7039 = vshll.u32 %v7018, 16
    %v7041 = vrot.slane %v7039, 2
    %v7042 = vor.u32 %v7038, %v7041
    %v7043 = vsel %vm298, %v7034, %v7042
    %v7045 = vshrl.u32 %v7016, 16
    %v7047 = vrot.slane %v7045, 1
    %v7048 = vshll.u32 %v7016, 16
    %v7050 = vrot.slane %v7048, 2
    %v7051 = vor.u32 %v7047, %v7050
    %v7053 = vshrl.u32 %v7019, 16
    %v7055 = vrot.slane %v7053, 1
    %v7056 = vshll.u32 %v7019, 16
    %v7058 = vrot.slane %v7056, 2
    %v7059 = vor.u32 %v7055, %v7058
    %v7060 = vsel %vm298, %v7051, %v7059
    %v7062 = vshrl.u32 %v7017, 16
    %v7064 = vrot.slane %v7062, 1
    %v7065 = vshll.u32 %v7017, 16
    %v7067 = vrot.slane %v7065, 2
    %v7068 = vor.u32 %v7064, %v7067
    %v7070 = vshrl.u32 %v7020, 16
    %v7072 = vrot.slane %v7070, 1
    %v7073 = vshll.u32 %v7020, 16
    %v7075 = vrot.slane %v7073, 2
    %v7076 = vor.u32 %v7072, %v7075
    %v7077 = vsel %vm298, %v7068, %v7076
    %v7079 = vshrl.u32 %v7021, 16
    %v7081 = vrot.slane %v7079, 1
    %v7082 = vshll.u32 %v7021, 16
    %v7084 = vrot.slane %v7082, 2
    %v7085 = vor.u32 %v7081, %v7084
    %v7086 = vsel %vm298, %v7042, %v7085
    %v7088 = vshrl.u32 %v7022, 16
    %v7090 = vrot.slane %v7088, 1
    %v7091 = vshll.u32 %v7022, 16
    %v7093 = vrot.slane %v7091, 2
    %v7094 = vor.u32 %v7090, %v7093
    %v7095 = vsel %vm298, %v7059, %v7094
    %v7097 = vshrl.u32 %v7023, 16
    %v7099 = vrot.slane %v7097, 1
    %v7100 = vshll.u32 %v7023, 16
    %v7102 = vrot.slane %v7100, 2
    %v7103 = vor.u32 %v7099, %v7102
    %v7104 = vsel %vm298, %v7076, %v7103
    %v7162 = vunpack.c.l.b16 %v6921
    %v7163 = vunpack.c.l.b16 %v6922
    %v7164 = vunpack.c.l.b16 %v6923
    %v7165 = vunpack.c.l.b16 %v6924
    %v7166 = vunpack.c.l.b16 %v6925
    %v7167 = vunpack.c.l.b16 %v6926
    %v7168 = vunpack.c.l.b16 %v6927
    %v7169 = vunpack.c.l.b16 %v6928
    %v7170 = vunpack.c.l.b16 %v6929
    %v7171 = vunpack.c.l.b16 %v6930
    %v7172 = vunpack.c.l.b16 %v6931
    %v7173 = vunpack.c.l.b16 %v6932
    %v7174 = vunpack.c.l.b16 %v6933
    %v7175 = vunpack.c.l.b16 %v6934
    %v7176 = vunpack.c.l.b16 %v6935
    %v7177 = vunpack.c.l.b16 %v6936
    %v7178 = vunpack.c.l.b16 %v6937
    %v7179 = vunpack.c.l.b16 %v6938
    %v7180 = vunpack.c.l.b16 %v6939
    %v7181 = vunpack.c.l.b16 %v6940
    %v7182 = vunpack.c.l.b16 %v6941
    %v7183 = vunpack.c.l.b16 %v6942
    %v7184 = vunpack.c.l.b16 %v6943
    %v7185 = vunpack.c.l.b16 %v6944
    %v7186 = vunpack.c.l.b16 %v6945
    %v7187 = vunpack.c.l.b16 %v6946
    %v7188 = vunpack.c.l.b16 %v6947
    %v7189 = vunpack.c.l.b16 %v6948
    %v7190 = vunpack.c.l.b16 %v6949
    %v7191 = vunpack.c.l.b16 %v6950
    %v7192 = vunpack.c.l.b16 %v6951
    %v7193 = vunpack.c.l.b16 %v6952
    %v7194 = vunpack.c.l.b16 %v6953
    %v7195 = vunpack.c.l.b16 %v6954
    %v7196 = vunpack.c.l.b16 %v6955
    %v7197 = vunpack.c.l.b16 %v6956
    %v7198 = vunpack.c.l.b16 %v6957
    %v7199 = vunpack.c.l.b16 %v6958
    %v7200 = vunpack.c.l.b16 %v6959
    %v7201 = vunpack.c.l.b16 %v6960
    %v7202 = vunpack.c.l.b16 %v6961
    %v7203 = vunpack.c.l.b16 %v6962
    %v7204 = vunpack.c.l.b16 %v6963
    %v7205 = vunpack.c.l.b16 %v6964
    %v7206 = vunpack.c.l.b16 %v6965
    %v7207 = vunpack.c.l.b16 %v6966
    %v7208 = vunpack.c.l.b16 %v6967
    %v7209 = vunpack.c.l.b16 %v6968
    %v7210 = vpack.c.b16 %v7163, %v7162
    %v7211 = vpack.c.b16 %v7165, %v7164
    %v7212 = vpack.c.b16 %v7167, %v7166
    %v7213 = vpack.c.b16 %v7169, %v7168
    %v7214 = vpack.c.b16 %v7171, %v7170
    %v7215 = vpack.c.b16 %v7173, %v7172
    %v7216 = vpack.c.b16 %v7175, %v7174
    %v7217 = vpack.c.b16 %v7177, %v7176
    %v7218 = vpack.c.b16 %v7179, %v7178
    %v7219 = vpack.c.b16 %v7181, %v7180
    %v7220 = vpack.c.b16 %v7183, %v7182
    %v7221 = vpack.c.b16 %v7185, %v7184
    %v7222 = vpack.c.b16 %v7187, %v7186
    %v7223 = vpack.c.b16 %v7189, %v7188
    %v7224 = vpack.c.b16 %v7191, %v7190
    %v7225 = vpack.c.b16 %v7193, %v7192
    %v7226 = vpack.c.b16 %v7195, %v7194
    %v7227 = vpack.c.b16 %v7197, %v7196
    %v7228 = vpack.c.b16 %v7199, %v7198
    %v7229 = vpack.c.b16 %v7201, %v7200
    %v7230 = vpack.c.b16 %v7203, %v7202
    %v7231 = vpack.c.b16 %v7205, %v7204
    %v7232 = vpack.c.b16 %v7207, %v7206
    %v7233 = vpack.c.b16 %v7209, %v7208
    %7258 = vmatpush.bf16.msra.mxu0 %v7217
    %7259 = vmatpush.bf16.msra.mxu0 %v7216
    %7260 = vmatpush.bf16.msra.mxu0 %v7215
    %7261 = vmatpush.bf16.msra.mxu0 %v7214
    %7262 = vmatpush.bf16.msra.mxu0 %v7213
    %7263 = vmatpush.bf16.msra.mxu0 %v7212
    %7264 = vmatpush.bf16.msra.mxu0 %v7211
    %7265 = vmatpush.bf16.msra.mxu0 %v7210
    %7266 = vmatmul.bf16.gmra.mxu0 %v7043
    %v7267 = vpop.f32.mrf.mxu0
    %v7268 = vadd.f32 %v7025, %v7267
    %v7269 = vpop.f32.mrf.mxu0
    %v7270 = vadd.f32 %v7025, %v7269
    %7271 = vmatmul.bf16.gmra.mxu0 %v7086
    %v7272 = vpop.f32.mrf.mxu0
    %v7273 = vadd.f32 %v7025, %v7272
    %v7274 = vpop.f32.mrf.mxu0
    %v7275 = vadd.f32 %v7025, %v7274
    %7276 = vmatmul.bf16.gmra.mxu0 %v7085
    %v7277 = vpop.f32.mrf.mxu0
    %v7278 = vadd.f32 %v7025, %v7277
    %v7279 = vpop.f32.mrf.mxu0
    %7280 = vdwg.mxu0
    %7281 = vmatpush.bf16.msra.mxu0 %v7225
    %7282 = vmatpush.bf16.msra.mxu0 %v7224
    %7283 = vmatpush.bf16.msra.mxu0 %v7223
    %7284 = vmatpush.bf16.msra.mxu0 %v7222
    %7285 = vmatpush.bf16.msra.mxu0 %v7221
    %7286 = vmatpush.bf16.msra.mxu0 %v7220
    %7287 = vmatpush.bf16.msra.mxu0 %v7219
    %7288 = vmatpush.bf16.msra.mxu0 %v7218
    %7289 = vmatmul.bf16.gmra.mxu0 %v7060
    %v7290 = vpop.f32.mrf.mxu0
    %v7291 = vadd.f32 %v7268, %v7290
    %v7292 = vpop.f32.mrf.mxu0
    %v7293 = vadd.f32 %v7270, %v7292
    %7294 = vmatmul.bf16.gmra.mxu0 %v7095
    %v7295 = vpop.f32.mrf.mxu0
    %v7296 = vadd.f32 %v7273, %v7295
    %v7297 = vpop.f32.mrf.mxu0
    %v7298 = vadd.f32 %v7275, %v7297
    %7299 = vmatmul.bf16.gmra.mxu0 %v7094
    %v7300 = vpop.f32.mrf.mxu0
    %v7301 = vadd.f32 %v7278, %v7300
    %v7302 = vpop.f32.mrf.mxu0
    %7303 = vdwg.mxu0
    %7304 = vmatpush.bf16.msra.mxu0 %v7233
    %7305 = vmatpush.bf16.msra.mxu0 %v7232
    %7306 = vmatpush.bf16.msra.mxu0 %v7231
    %7307 = vmatpush.bf16.msra.mxu0 %v7230
    %7308 = vmatpush.bf16.msra.mxu0 %v7229
    %7309 = vmatpush.bf16.msra.mxu0 %v7228
    %7310 = vmatpush.bf16.msra.mxu0 %v7227
    %7311 = vmatpush.bf16.msra.mxu0 %v7226
    %7312 = vmatmul.bf16.gmra.mxu0 %v7077
    %v7313 = vpop.f32.mrf.mxu0
    %v7314 = vadd.f32 %v7291, %v7313
    %v7315 = vpop.f32.mrf.mxu0
    %v7316 = vadd.f32 %v7293, %v7315
    %7317 = vmatmul.bf16.gmra.mxu0 %v7104
    %v7318 = vpop.f32.mrf.mxu0
    %v7319 = vadd.f32 %v7296, %v7318
    %v7320 = vpop.f32.mrf.mxu0
    %v7321 = vadd.f32 %v7298, %v7320
    %7322 = vmatmul.bf16.gmra.mxu0 %v7103
    %v7323 = vpop.f32.mrf.mxu0
    %v7324 = vadd.f32 %v7301, %v7323
    %v7325 = vpop.f32.mrf.mxu0
    %7326 = vdwg.mxu0
    %v7327 = vmul.f32 %v7314, %v177
    %v7328 = vmul.f32 %v7316, %v178
    %v7329 = vmul.f32 %v7319, %v179
    %v7330 = vmul.f32 %v7321, %v180
    %v7331 = vmul.f32 %v7324, %v181
    %v7332 = vadd.f32 %v7327, %v6498
    %v7333 = vadd.f32 %v7328, %v6499
    %v7334 = vadd.f32 %v7329, %v6500
    %v7335 = vadd.f32 %v7330, %v6501
    %v7336 = vadd.f32 %v7331, %v6502
    %v7337 = vpack.c.bf16 %v7333, %v7332
    %v7338 = vpack.c.bf16 %v7335, %v7334
    %v7339 = vpack.c.bf16 %v7336, %v7336
    %v7340 = vld [vmem:[#allocation9] sm:$0xf]
    %v7341 = vld [vmem:[#allocation9 + $0x4] sm:$0xf]
    %v7342 = vld [vmem:[#allocation9 + $0x8] sm:$0xf]
    %v7343 = vld [vmem:[#allocation9 + $0xc] sm:$0xf]
    %v7344 = vld [vmem:[#allocation9 + $0x10] sm:$0xf]
    %v7345 = vld [vmem:[#allocation9 + $0x14] sm:$0xf]
    %v7346 = vld [vmem:[#allocation9 + $0x18] sm:$0xf]
    %v7347 = vld [vmem:[#allocation9 + $0x1c] sm:$0xf]
    %v7348 = vld [vmem:[#allocation9 + $0x20] sm:$0xf]
    %v7349 = vld [vmem:[#allocation9 + $0x24] sm:$0xf]
    %v7350 = vld [vmem:[#allocation9 + $0x28] sm:$0xf]
    %v7351 = vld [vmem:[#allocation9 + $0x2c] sm:$0xf]
    %v7352 = vld [vmem:[#allocation9 + $0x30] sm:$0xf]
    %v7353 = vld [vmem:[#allocation9 + $0x34] sm:$0xf]
    %v7354 = vld [vmem:[#allocation9 + $0x38] sm:$0xf]
    %v7355 = vld [vmem:[#allocation9 + $0x3c] sm:$0xf]
    %v7356 = vld [vmem:[#allocation10] sm:$0x1]
    %v7358 = vperm.slane %v7356, 0
    %v7376 = vunpack.c.l.b16 %v7340
    %v7377 = vunpack.c.l.b16 %v7341
    %v7378 = vunpack.c.l.b16 %v7342
    %v7379 = vunpack.c.l.b16 %v7343
    %v7380 = vunpack.c.l.b16 %v7344
    %v7381 = vunpack.c.l.b16 %v7345
    %v7382 = vunpack.c.l.b16 %v7346
    %v7383 = vunpack.c.l.b16 %v7347
    %v7384 = vunpack.c.l.b16 %v7348
    %v7385 = vunpack.c.l.b16 %v7349
    %v7386 = vunpack.c.l.b16 %v7350
    %v7387 = vunpack.c.l.b16 %v7351
    %v7388 = vunpack.c.l.b16 %v7352
    %v7389 = vunpack.c.l.b16 %v7353
    %v7390 = vunpack.c.l.b16 %v7354
    %v7391 = vunpack.c.l.b16 %v7355
    %v7392 = vpack.c.b16 %v7377, %v7376
    %v7393 = vpack.c.b16 %v7379, %v7378
    %v7394 = vpack.c.b16 %v7381, %v7380
    %v7395 = vpack.c.b16 %v7383, %v7382
    %v7396 = vpack.c.b16 %v7385, %v7384
    %v7397 = vpack.c.b16 %v7387, %v7386
    %v7398 = vpack.c.b16 %v7389, %v7388
    %v7399 = vpack.c.b16 %v7391, %v7390
    %7408 = vmatpush.bf16.msra.mxu0 %v7399
    %7409 = vmatpush.bf16.msra.mxu0 %v7398
    %7410 = vmatpush.bf16.msra.mxu0 %v7397
    %7411 = vmatpush.bf16.msra.mxu0 %v7396
    %7412 = vmatpush.bf16.msra.mxu0 %v7395
    %7413 = vmatpush.bf16.msra.mxu0 %v7394
    %7414 = vmatpush.bf16.msra.mxu0 %v7393
    %7415 = vmatpush.bf16.msra.mxu0 %v7392
    %7416 = vmatmul.bf16.gmra.mxu0 %v7337
    %v7417 = vpop.f32.mrf.mxu0
    %v7418 = vadd.f32 %v7358, %v7417
    %v7419 = vpop.f32.mrf.mxu0
    %v7420 = vadd.f32 %v7358, %v7419
    %7421 = vmatmul.bf16.gmra.mxu0 %v7338
    %v7422 = vpop.f32.mrf.mxu0
    %v7423 = vadd.f32 %v7358, %v7422
    %v7424 = vpop.f32.mrf.mxu0
    %v7425 = vadd.f32 %v7358, %v7424
    %7426 = vmatmul.bf16.gmra.mxu0 %v7339
    %v7427 = vpop.f32.mrf.mxu0
    %v7428 = vadd.f32 %v7358, %v7427
    %v7429 = vpop.f32.mrf.mxu0
    %7430 = vdwg.mxu0
    %v7431 = vsub.f32 0.0, %v7418
    %v7432 = vsub.f32 0.0, %v7420
    %v7433 = vsub.f32 0.0, %v7423
    %v7434 = vsub.f32 0.0, %v7425
    %v7435 = vsub.f32 0.0, %v7428
    %v7436 = vmul.f32 %v7431, 1.442695
    %v7437 = vpow.pop %v7436
    %v7438 = vmul.f32 %v7432, 1.442695
    %v7439 = vpow.pop %v7438
    %v7440 = vmul.f32 %v7433, 1.442695
    %v7441 = vpow.pop %v7440
    %v7442 = vmul.f32 %v7434, 1.442695
    %v7443 = vpow.pop %v7442
    %v7444 = vmul.f32 %v7435, 1.442695
    %v7445 = vpow.pop %v7444
    %v7446 = vadd.f32 %v7437, 1.0
    %v7447 = vadd.f32 %v7439, 1.0
    %v7448 = vadd.f32 %v7441, 1.0
    %v7449 = vadd.f32 %v7443, 1.0
    %v7450 = vadd.f32 %v7445, 1.0
    %v7451 = vrcp.pop %v7446
    %v7452 = vrcp.pop %v7447
    %v7453 = vrcp.pop %v7448
    %v7454 = vrcp.pop %v7449
    %v7455 = vrcp.pop %v7450
    %v7456 = vmul.f32 %v7451, %v177
    %v7457 = vmul.f32 %v7452, %v178
    %v7458 = vmul.f32 %v7453, %v179
    %v7459 = vmul.f32 %v7454, %v180
    %v7460 = vmul.f32 %v7455, %v181
    %v7461 = vmul.f32 %v2689, %v7456
    %v7462 = vmul.f32 %v2690, %v7457
    %v7463 = vmul.f32 %v2691, %v7458
    %v7464 = vmul.f32 %v2692, %v7459
    %v7465 = vmul.f32 %v2693, %v7460
    %v7466 = vadd.f32 %v7461, %v1021
    %v7467 = vadd.f32 %v7462, %v1022
    %v7468 = vadd.f32 %v7463, %v1023
    %v7469 = vadd.f32 %v7464, %v1024
    %v7470 = vadd.f32 %v7465, %v1025
    %s7471 = scalar_lea.vmem [#allocation2], 2112
    %v7472 = vld [vmem:[%s7471] sm:$0xf]
    %v7473 = vld [vmem:[%s7471 + $0x4] sm:$0xf]
    %v7474 = vld [vmem:[%s7471 + $0x8] sm:$0xf]
    %v7475 = vld [vmem:[%s7471 + $0xc] sm:$0xf]
    %v7476 = vld [vmem:[%s7471 + $0x10] sm:$0xf]
    %v7477 = vld [vmem:[%s7471 + $0x14] sm:$0xf]
    %v7478 = vld [vmem:[%s7471 + $0x18] sm:$0xf]
    %v7479 = vld [vmem:[%s7471 + $0x1c] sm:$0xf]
    %v7480 = vld [vmem:[%s7471 + $0x20] sm:$0xf]
    %v7481 = vld [vmem:[%s7471 + $0x24] sm:$0xf]
    %v7482 = vld [vmem:[%s7471 + $0x28] sm:$0xf]
    %v7483 = vld [vmem:[%s7471 + $0x2c] sm:$0xf]
    %v7484 = vld [vmem:[%s7471 + $0x30] sm:$0xf]
    %v7485 = vld [vmem:[%s7471 + $0x34] sm:$0xf]
    %v7486 = vld [vmem:[%s7471 + $0x38] sm:$0xf]
    %v7487 = vld [vmem:[%s7471 + $0x3c] sm:$0xf]
    %v7488 = vld [vmem:[%s7471 + $0x40] sm:$0xf]
    %v7489 = vld [vmem:[%s7471 + $0x44] sm:$0xf]
    %v7490 = vld [vmem:[%s7471 + $0x48] sm:$0xf]
    %v7491 = vld [vmem:[%s7471 + $0x4c] sm:$0xf]
    %v7492 = vld [vmem:[%s7471 + $0x50] sm:$0xf]
    %v7493 = vld [vmem:[%s7471 + $0x54] sm:$0xf]
    %v7494 = vld [vmem:[%s7471 + $0x58] sm:$0xf]
    %v7495 = vld [vmem:[%s7471 + $0x5c] sm:$0xf]
    %v7496 = vld [vmem:[%s7471 + $0x60] sm:$0xf]
    %v7497 = vld [vmem:[%s7471 + $0x64] sm:$0xf]
    %v7498 = vld [vmem:[%s7471 + $0x68] sm:$0xf]
    %v7499 = vld [vmem:[%s7471 + $0x6c] sm:$0xf]
    %v7500 = vld [vmem:[%s7471 + $0x70] sm:$0xf]
    %v7501 = vld [vmem:[%s7471 + $0x74] sm:$0xf]
    %v7502 = vld [vmem:[%s7471 + $0x78] sm:$0xf]
    %v7503 = vld [vmem:[%s7471 + $0x7c] sm:$0xf]
    %v7504 = vld [vmem:[%s7471 + $0x80] sm:$0xf]
    %v7505 = vld [vmem:[%s7471 + $0x84] sm:$0xf]
    %v7506 = vld [vmem:[%s7471 + $0x88] sm:$0xf]
    %v7507 = vld [vmem:[%s7471 + $0x8c] sm:$0xf]
    %v7508 = vld [vmem:[%s7471 + $0x90] sm:$0xf]
    %v7509 = vld [vmem:[%s7471 + $0x94] sm:$0xf]
    %v7510 = vld [vmem:[%s7471 + $0x98] sm:$0xf]
    %v7511 = vld [vmem:[%s7471 + $0x9c] sm:$0xf]
    %v7512 = vld [vmem:[%s7471 + $0xa0] sm:$0xf]
    %v7513 = vld [vmem:[%s7471 + $0xa4] sm:$0xf]
    %v7514 = vld [vmem:[%s7471 + $0xa8] sm:$0xf]
    %v7515 = vld [vmem:[%s7471 + $0xac] sm:$0xf]
    %v7516 = vld [vmem:[%s7471 + $0xb0] sm:$0xf]
    %v7517 = vld [vmem:[%s7471 + $0xb4] sm:$0xf]
    %v7518 = vld [vmem:[%s7471 + $0xb8] sm:$0xf]
    %v7519 = vld [vmem:[%s7471 + $0xbc] sm:$0xf]
    %s7520 = scalar_lea.vmem [#allocation4], 11
    %v7521 = vld [vmem:[%s7520] sm:$0x1]
    %v7522 = vrot.slane %v7466, 4
    %v7523 = vsel %vm239, %v7522, %v7470
    %v7524 = vrot.slane %v7467, 4
    %v7525 = vrot.slane %v7468, 4
    %v7526 = vrot.slane %v7469, 4
    %v7527 = vrot.slane %v7523, 4
    %v7528 = vsel %vm239, %v7524, %v7522
    %v7529 = vsel %vm239, %v7525, %v7524
    %v7530 = vsel %vm239, %v7526, %v7525
    %v7531 = vsel %vm239, %v7527, %v7526
    %v7537 = vrot.slane %v7466, 5
    %v7538 = vrot.slane %v7467, 5
    %v7539 = vsel %vm255, %v7537, %v7538
    %v7540 = vrot.slane %v7468, 5
    %v7541 = vsel %vm255, %v7538, %v7540
    %v7542 = vrot.slane %v7469, 5
    %v7543 = vsel %vm255, %v7540, %v7542
    %v7544 = vrot.slane %v7470, 5
    %v7545 = vsel %vm255, %v7542, %v7544
    %v7552 = vrot.slane %v7466, 6
    %v7553 = vrot.slane %v7467, 6
    %v7554 = vsel %vm271, %v7552, %v7553
    %v7555 = vrot.slane %v7468, 6
    %v7556 = vsel %vm271, %v7553, %v7555
    %v7557 = vrot.slane %v7469, 6
    %v7558 = vsel %vm271, %v7555, %v7557
    %v7559 = vrot.slane %v7523, 6
    %v7560 = vsel %vm271, %v7557, %v7559
    %v7566 = vpack.c.bf16 %v7528, %v7523
    %v7567 = vpack.c.bf16 %v7539, %v7537
    %v7568 = vpack.c.bf16 %v7554, %v7552
    %v7569 = vpack.c.bf16 %v7530, %v7529
    %v7570 = vpack.c.bf16 %v7543, %v7541
    %v7571 = vpack.c.bf16 %v7558, %v7556
    %v7572 = vpack.c.bf16 %v7531, %v7531
    %v7573 = vpack.c.bf16 %v7545, %v7545
    %v7574 = vpack.c.bf16 %v7560, %v7560
    %v7576 = vperm.slane %v7521, 0
    %v7579 = vshrl.u32 %v7566, 16
    %v7581 = vrot.slane %v7579, 1
    %v7582 = vshll.u32 %v7566, 16
    %v7584 = vrot.slane %v7582, 2
    %v7585 = vor.u32 %v7581, %v7584
    %v7587 = vshrl.u32 %v7569, 16
    %v7589 = vrot.slane %v7587, 1
    %v7590 = vshll.u32 %v7569, 16
    %v7592 = vrot.slane %v7590, 2
    %v7593 = vor.u32 %v7589, %v7592
    %v7594 = vsel %vm298, %v7585, %v7593
    %v7596 = vshrl.u32 %v7567, 16
    %v7598 = vrot.slane %v7596, 1
    %v7599 = vshll.u32 %v7567, 16
    %v7601 = vrot.slane %v7599, 2
    %v7602 = vor.u32 %v7598, %v7601
    %v7604 = vshrl.u32 %v7570, 16
    %v7606 = vrot.slane %v7604, 1
    %v7607 = vshll.u32 %v7570, 16
    %v7609 = vrot.slane %v7607, 2
    %v7610 = vor.u32 %v7606, %v7609
    %v7611 = vsel %vm298, %v7602, %v7610
    %v7613 = vshrl.u32 %v7568, 16
    %v7615 = vrot.slane %v7613, 1
    %v7616 = vshll.u32 %v7568, 16
    %v7618 = vrot.slane %v7616, 2
    %v7619 = vor.u32 %v7615, %v7618
    %v7621 = vshrl.u32 %v7571, 16
    %v7623 = vrot.slane %v7621, 1
    %v7624 = vshll.u32 %v7571, 16
    %v7626 = vrot.slane %v7624, 2
    %v7627 = vor.u32 %v7623, %v7626
    %v7628 = vsel %vm298, %v7619, %v7627
    %v7630 = vshrl.u32 %v7572, 16
    %v7632 = vrot.slane %v7630, 1
    %v7633 = vshll.u32 %v7572, 16
    %v7635 = vrot.slane %v7633, 2
    %v7636 = vor.u32 %v7632, %v7635
    %v7637 = vsel %vm298, %v7593, %v7636
    %v7639 = vshrl.u32 %v7573, 16
    %v7641 = vrot.slane %v7639, 1
    %v7642 = vshll.u32 %v7573, 16
    %v7644 = vrot.slane %v7642, 2
    %v7645 = vor.u32 %v7641, %v7644
    %v7646 = vsel %vm298, %v7610, %v7645
    %v7648 = vshrl.u32 %v7574, 16
    %v7650 = vrot.slane %v7648, 1
    %v7651 = vshll.u32 %v7574, 16
    %v7653 = vrot.slane %v7651, 2
    %v7654 = vor.u32 %v7650, %v7653
    %v7655 = vsel %vm298, %v7627, %v7654
    %v7713 = vunpack.c.l.b16 %v7472
    %v7714 = vunpack.c.l.b16 %v7473
    %v7715 = vunpack.c.l.b16 %v7474
    %v7716 = vunpack.c.l.b16 %v7475
    %v7717 = vunpack.c.l.b16 %v7476
    %v7718 = vunpack.c.l.b16 %v7477
    %v7719 = vunpack.c.l.b16 %v7478
    %v7720 = vunpack.c.l.b16 %v7479
    %v7721 = vunpack.c.l.b16 %v7480
    %v7722 = vunpack.c.l.b16 %v7481
    %v7723 = vunpack.c.l.b16 %v7482
    %v7724 = vunpack.c.l.b16 %v7483
    %v7725 = vunpack.c.l.b16 %v7484
    %v7726 = vunpack.c.l.b16 %v7485
    %v7727 = vunpack.c.l.b16 %v7486
    %v7728 = vunpack.c.l.b16 %v7487
    %v7729 = vunpack.c.l.b16 %v7488
    %v7730 = vunpack.c.l.b16 %v7489
    %v7731 = vunpack.c.l.b16 %v7490
    %v7732 = vunpack.c.l.b16 %v7491
    %v7733 = vunpack.c.l.b16 %v7492
    %v7734 = vunpack.c.l.b16 %v7493
    %v7735 = vunpack.c.l.b16 %v7494
    %v7736 = vunpack.c.l.b16 %v7495
    %v7737 = vunpack.c.l.b16 %v7496
    %v7738 = vunpack.c.l.b16 %v7497
    %v7739 = vunpack.c.l.b16 %v7498
    %v7740 = vunpack.c.l.b16 %v7499
    %v7741 = vunpack.c.l.b16 %v7500
    %v7742 = vunpack.c.l.b16 %v7501
    %v7743 = vunpack.c.l.b16 %v7502
    %v7744 = vunpack.c.l.b16 %v7503
    %v7745 = vunpack.c.l.b16 %v7504
    %v7746 = vunpack.c.l.b16 %v7505
    %v7747 = vunpack.c.l.b16 %v7506
    %v7748 = vunpack.c.l.b16 %v7507
    %v7749 = vunpack.c.l.b16 %v7508
    %v7750 = vunpack.c.l.b16 %v7509
    %v7751 = vunpack.c.l.b16 %v7510
    %v7752 = vunpack.c.l.b16 %v7511
    %v7753 = vunpack.c.l.b16 %v7512
    %v7754 = vunpack.c.l.b16 %v7513
    %v7755 = vunpack.c.l.b16 %v7514
    %v7756 = vunpack.c.l.b16 %v7515
    %v7757 = vunpack.c.l.b16 %v7516
    %v7758 = vunpack.c.l.b16 %v7517
    %v7759 = vunpack.c.l.b16 %v7518
    %v7760 = vunpack.c.l.b16 %v7519
    %v7761 = vpack.c.b16 %v7714, %v7713
    %v7762 = vpack.c.b16 %v7716, %v7715
    %v7763 = vpack.c.b16 %v7718, %v7717
    %v7764 = vpack.c.b16 %v7720, %v7719
    %v7765 = vpack.c.b16 %v7722, %v7721
    %v7766 = vpack.c.b16 %v7724, %v7723
    %v7767 = vpack.c.b16 %v7726, %v7725
    %v7768 = vpack.c.b16 %v7728, %v7727
    %v7769 = vpack.c.b16 %v7730, %v7729
    %v7770 = vpack.c.b16 %v7732, %v7731
    %v7771 = vpack.c.b16 %v7734, %v7733
    %v7772 = vpack.c.b16 %v7736, %v7735
    %v7773 = vpack.c.b16 %v7738, %v7737
    %v7774 = vpack.c.b16 %v7740, %v7739
    %v7775 = vpack.c.b16 %v7742, %v7741
    %v7776 = vpack.c.b16 %v7744, %v7743
    %v7777 = vpack.c.b16 %v7746, %v7745
    %v7778 = vpack.c.b16 %v7748, %v7747
    %v7779 = vpack.c.b16 %v7750, %v7749
    %v7780 = vpack.c.b16 %v7752, %v7751
    %v7781 = vpack.c.b16 %v7754, %v7753
    %v7782 = vpack.c.b16 %v7756, %v7755
    %v7783 = vpack.c.b16 %v7758, %v7757
    %v7784 = vpack.c.b16 %v7760, %v7759
    %7809 = vmatpush.bf16.msra.mxu0 %v7768
    %7810 = vmatpush.bf16.msra.mxu0 %v7767
    %7811 = vmatpush.bf16.msra.mxu0 %v7766
    %7812 = vmatpush.bf16.msra.mxu0 %v7765
    %7813 = vmatpush.bf16.msra.mxu0 %v7764
    %7814 = vmatpush.bf16.msra.mxu0 %v7763
    %7815 = vmatpush.bf16.msra.mxu0 %v7762
    %7816 = vmatpush.bf16.msra.mxu0 %v7761
    %7817 = vmatmul.bf16.gmra.mxu0 %v7594
    %v7818 = vpop.f32.mrf.mxu0
    %v7819 = vadd.f32 %v7576, %v7818
    %v7820 = vpop.f32.mrf.mxu0
    %v7821 = vadd.f32 %v7576, %v7820
    %7822 = vmatmul.bf16.gmra.mxu0 %v7637
    %v7823 = vpop.f32.mrf.mxu0
    %v7824 = vadd.f32 %v7576, %v7823
    %v7825 = vpop.f32.mrf.mxu0
    %v7826 = vadd.f32 %v7576, %v7825
    %7827 = vmatmul.bf16.gmra.mxu0 %v7636
    %v7828 = vpop.f32.mrf.mxu0
    %v7829 = vadd.f32 %v7576, %v7828
    %v7830 = vpop.f32.mrf.mxu0
    %7831 = vdwg.mxu0
    %7832 = vmatpush.bf16.msra.mxu0 %v7776
    %7833 = vmatpush.bf16.msra.mxu0 %v7775
    %7834 = vmatpush.bf16.msra.mxu0 %v7774
    %7835 = vmatpush.bf16.msra.mxu0 %v7773
    %7836 = vmatpush.bf16.msra.mxu0 %v7772
    %7837 = vmatpush.bf16.msra.mxu0 %v7771
    %7838 = vmatpush.bf16.msra.mxu0 %v7770
    %7839 = vmatpush.bf16.msra.mxu0 %v7769
    %7840 = vmatmul.bf16.gmra.mxu0 %v7611
    %v7841 = vpop.f32.mrf.mxu0
    %v7842 = vadd.f32 %v7819, %v7841
    %v7843 = vpop.f32.mrf.mxu0
    %v7844 = vadd.f32 %v7821, %v7843
    %7845 = vmatmul.bf16.gmra.mxu0 %v7646
    %v7846 = vpop.f32.mrf.mxu0
    %v7847 = vadd.f32 %v7824, %v7846
    %v7848 = vpop.f32.mrf.mxu0
    %v7849 = vadd.f32 %v7826, %v7848
    %7850 = vmatmul.bf16.gmra.mxu0 %v7645
    %v7851 = vpop.f32.mrf.mxu0
    %v7852 = vadd.f32 %v7829, %v7851
    %v7853 = vpop.f32.mrf.mxu0
    %7854 = vdwg.mxu0
    %7855 = vmatpush.bf16.msra.mxu0 %v7784
    %7856 = vmatpush.bf16.msra.mxu0 %v7783
    %7857 = vmatpush.bf16.msra.mxu0 %v7782
    %7858 = vmatpush.bf16.msra.mxu0 %v7781
    %7859 = vmatpush.bf16.msra.mxu0 %v7780
    %7860 = vmatpush.bf16.msra.mxu0 %v7779
    %7861 = vmatpush.bf16.msra.mxu0 %v7778
    %7862 = vmatpush.bf16.msra.mxu0 %v7777
    %7863 = vmatmul.bf16.gmra.mxu0 %v7628
    %v7864 = vpop.f32.mrf.mxu0
    %v7865 = vadd.f32 %v7842, %v7864
    %v7866 = vpop.f32.mrf.mxu0
    %v7867 = vadd.f32 %v7844, %v7866
    %7868 = vmatmul.bf16.gmra.mxu0 %v7655
    %v7869 = vpop.f32.mrf.mxu0
    %v7870 = vadd.f32 %v7847, %v7869
    %v7871 = vpop.f32.mrf.mxu0
    %v7872 = vadd.f32 %v7849, %v7871
    %7873 = vmatmul.bf16.gmra.mxu0 %v7654
    %v7874 = vpop.f32.mrf.mxu0
    %v7875 = vadd.f32 %v7852, %v7874
    %v7876 = vpop.f32.mrf.mxu0
    %7877 = vdwg.mxu0
    %v7878 = vmax.f32 %v7865, 0.0
    %v7879 = vmax.f32 %v7867, 0.0
    %v7880 = vmax.f32 %v7870, 0.0
    %v7881 = vmax.f32 %v7872, 0.0
    %v7882 = vmax.f32 %v7875, 0.0
    %v7883 = vmul.f32 %v7878, %v177
    %v7884 = vmul.f32 %v7879, %v178
    %v7885 = vmul.f32 %v7880, %v179
    %v7886 = vmul.f32 %v7881, %v180
    %v7887 = vmul.f32 %v7882, %v181
    %s7888 = scalar_lea.vmem [#allocation2], 2304
    %v7889 = vld [vmem:[%s7888] sm:$0xf]
    %v7890 = vld [vmem:[%s7888 + $0x4] sm:$0xf]
    %v7891 = vld [vmem:[%s7888 + $0x8] sm:$0xf]
    %v7892 = vld [vmem:[%s7888 + $0xc] sm:$0xf]
    %v7893 = vld [vmem:[%s7888 + $0x10] sm:$0xf]
    %v7894 = vld [vmem:[%s7888 + $0x14] sm:$0xf]
    %v7895 = vld [vmem:[%s7888 + $0x18] sm:$0xf]
    %v7896 = vld [vmem:[%s7888 + $0x1c] sm:$0xf]
    %v7897 = vld [vmem:[%s7888 + $0x20] sm:$0xf]
    %v7898 = vld [vmem:[%s7888 + $0x24] sm:$0xf]
    %v7899 = vld [vmem:[%s7888 + $0x28] sm:$0xf]
    %v7900 = vld [vmem:[%s7888 + $0x2c] sm:$0xf]
    %v7901 = vld [vmem:[%s7888 + $0x30] sm:$0xf]
    %v7902 = vld [vmem:[%s7888 + $0x34] sm:$0xf]
    %v7903 = vld [vmem:[%s7888 + $0x38] sm:$0xf]
    %v7904 = vld [vmem:[%s7888 + $0x3c] sm:$0xf]
    %v7905 = vld [vmem:[%s7888 + $0x40] sm:$0xf]
    %v7906 = vld [vmem:[%s7888 + $0x44] sm:$0xf]
    %v7907 = vld [vmem:[%s7888 + $0x48] sm:$0xf]
    %v7908 = vld [vmem:[%s7888 + $0x4c] sm:$0xf]
    %v7909 = vld [vmem:[%s7888 + $0x50] sm:$0xf]
    %v7910 = vld [vmem:[%s7888 + $0x54] sm:$0xf]
    %v7911 = vld [vmem:[%s7888 + $0x58] sm:$0xf]
    %v7912 = vld [vmem:[%s7888 + $0x5c] sm:$0xf]
    %v7913 = vld [vmem:[%s7888 + $0x60] sm:$0xf]
    %v7914 = vld [vmem:[%s7888 + $0x64] sm:$0xf]
    %v7915 = vld [vmem:[%s7888 + $0x68] sm:$0xf]
    %v7916 = vld [vmem:[%s7888 + $0x6c] sm:$0xf]
    %v7917 = vld [vmem:[%s7888 + $0x70] sm:$0xf]
    %v7918 = vld [vmem:[%s7888 + $0x74] sm:$0xf]
    %v7919 = vld [vmem:[%s7888 + $0x78] sm:$0xf]
    %v7920 = vld [vmem:[%s7888 + $0x7c] sm:$0xf]
    %v7921 = vld [vmem:[%s7888 + $0x80] sm:$0xf]
    %v7922 = vld [vmem:[%s7888 + $0x84] sm:$0xf]
    %v7923 = vld [vmem:[%s7888 + $0x88] sm:$0xf]
    %v7924 = vld [vmem:[%s7888 + $0x8c] sm:$0xf]
    %v7925 = vld [vmem:[%s7888 + $0x90] sm:$0xf]
    %v7926 = vld [vmem:[%s7888 + $0x94] sm:$0xf]
    %v7927 = vld [vmem:[%s7888 + $0x98] sm:$0xf]
    %v7928 = vld [vmem:[%s7888 + $0x9c] sm:$0xf]
    %v7929 = vld [vmem:[%s7888 + $0xa0] sm:$0xf]
    %v7930 = vld [vmem:[%s7888 + $0xa4] sm:$0xf]
    %v7931 = vld [vmem:[%s7888 + $0xa8] sm:$0xf]
    %v7932 = vld [vmem:[%s7888 + $0xac] sm:$0xf]
    %v7933 = vld [vmem:[%s7888 + $0xb0] sm:$0xf]
    %v7934 = vld [vmem:[%s7888 + $0xb4] sm:$0xf]
    %v7935 = vld [vmem:[%s7888 + $0xb8] sm:$0xf]
    %v7936 = vld [vmem:[%s7888 + $0xbc] sm:$0xf]
    %s7937 = scalar_lea.vmem [#allocation4], 12
    %v7938 = vld [vmem:[%s7937] sm:$0x1]
    %v7939 = vrot.slane %v7883, 4
    %v7940 = vsel %vm239, %v7939, %v7887
    %v7941 = vrot.slane %v7884, 4
    %v7942 = vrot.slane %v7885, 4
    %v7943 = vrot.slane %v7886, 4
    %v7944 = vrot.slane %v7940, 4
    %v7945 = vsel %vm239, %v7941, %v7939
    %v7946 = vsel %vm239, %v7942, %v7941
    %v7947 = vsel %vm239, %v7943, %v7942
    %v7948 = vsel %vm239, %v7944, %v7943
    %v7954 = vrot.slane %v7883, 5
    %v7955 = vrot.slane %v7884, 5
    %v7956 = vsel %vm255, %v7954, %v7955
    %v7957 = vrot.slane %v7885, 5
    %v7958 = vsel %vm255, %v7955, %v7957
    %v7959 = vrot.slane %v7886, 5
    %v7960 = vsel %vm255, %v7957, %v7959
    %v7961 = vrot.slane %v7887, 5
    %v7962 = vsel %vm255, %v7959, %v7961
    %v7969 = vrot.slane %v7883, 6
    %v7970 = vrot.slane %v7884, 6
    %v7971 = vsel %vm271, %v7969, %v7970
    %v7972 = vrot.slane %v7885, 6
    %v7973 = vsel %vm271, %v7970, %v7972
    %v7974 = vrot.slane %v7886, 6
    %v7975 = vsel %vm271, %v7972, %v7974
    %v7976 = vrot.slane %v7940, 6
    %v7977 = vsel %vm271, %v7974, %v7976
    %v7983 = vpack.c.bf16 %v7945, %v7940
    %v7984 = vpack.c.bf16 %v7956, %v7954
    %v7985 = vpack.c.bf16 %v7971, %v7969
    %v7986 = vpack.c.bf16 %v7947, %v7946
    %v7987 = vpack.c.bf16 %v7960, %v7958
    %v7988 = vpack.c.bf16 %v7975, %v7973
    %v7989 = vpack.c.bf16 %v7948, %v7948
    %v7990 = vpack.c.bf16 %v7962, %v7962
    %v7991 = vpack.c.bf16 %v7977, %v7977
    %v7993 = vperm.slane %v7938, 0
    %v7996 = vshrl.u32 %v7983, 16
    %v7998 = vrot.slane %v7996, 1
    %v7999 = vshll.u32 %v7983, 16
    %v8001 = vrot.slane %v7999, 2
    %v8002 = vor.u32 %v7998, %v8001
    %v8004 = vshrl.u32 %v7986, 16
    %v8006 = vrot.slane %v8004, 1
    %v8007 = vshll.u32 %v7986, 16
    %v8009 = vrot.slane %v8007, 2
    %v8010 = vor.u32 %v8006, %v8009
    %v8011 = vsel %vm298, %v8002, %v8010
    %v8013 = vshrl.u32 %v7984, 16
    %v8015 = vrot.slane %v8013, 1
    %v8016 = vshll.u32 %v7984, 16
    %v8018 = vrot.slane %v8016, 2
    %v8019 = vor.u32 %v8015, %v8018
    %v8021 = vshrl.u32 %v7987, 16
    %v8023 = vrot.slane %v8021, 1
    %v8024 = vshll.u32 %v7987, 16
    %v8026 = vrot.slane %v8024, 2
    %v8027 = vor.u32 %v8023, %v8026
    %v8028 = vsel %vm298, %v8019, %v8027
    %v8030 = vshrl.u32 %v7985, 16
    %v8032 = vrot.slane %v8030, 1
    %v8033 = vshll.u32 %v7985, 16
    %v8035 = vrot.slane %v8033, 2
    %v8036 = vor.u32 %v8032, %v8035
    %v8038 = vshrl.u32 %v7988, 16
    %v8040 = vrot.slane %v8038, 1
    %v8041 = vshll.u32 %v7988, 16
    %v8043 = vrot.slane %v8041, 2
    %v8044 = vor.u32 %v8040, %v8043
    %v8045 = vsel %vm298, %v8036, %v8044
    %v8047 = vshrl.u32 %v7989, 16
    %v8049 = vrot.slane %v8047, 1
    %v8050 = vshll.u32 %v7989, 16
    %v8052 = vrot.slane %v8050, 2
    %v8053 = vor.u32 %v8049, %v8052
    %v8054 = vsel %vm298, %v8010, %v8053
    %v8056 = vshrl.u32 %v7990, 16
    %v8058 = vrot.slane %v8056, 1
    %v8059 = vshll.u32 %v7990, 16
    %v8061 = vrot.slane %v8059, 2
    %v8062 = vor.u32 %v8058, %v8061
    %v8063 = vsel %vm298, %v8027, %v8062
    %v8065 = vshrl.u32 %v7991, 16
    %v8067 = vrot.slane %v8065, 1
    %v8068 = vshll.u32 %v7991, 16
    %v8070 = vrot.slane %v8068, 2
    %v8071 = vor.u32 %v8067, %v8070
    %v8072 = vsel %vm298, %v8044, %v8071
    %v8130 = vunpack.c.l.b16 %v7889
    %v8131 = vunpack.c.l.b16 %v7890
    %v8132 = vunpack.c.l.b16 %v7891
    %v8133 = vunpack.c.l.b16 %v7892
    %v8134 = vunpack.c.l.b16 %v7893
    %v8135 = vunpack.c.l.b16 %v7894
    %v8136 = vunpack.c.l.b16 %v7895
    %v8137 = vunpack.c.l.b16 %v7896
    %v8138 = vunpack.c.l.b16 %v7897
    %v8139 = vunpack.c.l.b16 %v7898
    %v8140 = vunpack.c.l.b16 %v7899
    %v8141 = vunpack.c.l.b16 %v7900
    %v8142 = vunpack.c.l.b16 %v7901
    %v8143 = vunpack.c.l.b16 %v7902
    %v8144 = vunpack.c.l.b16 %v7903
    %v8145 = vunpack.c.l.b16 %v7904
    %v8146 = vunpack.c.l.b16 %v7905
    %v8147 = vunpack.c.l.b16 %v7906
    %v8148 = vunpack.c.l.b16 %v7907
    %v8149 = vunpack.c.l.b16 %v7908
    %v8150 = vunpack.c.l.b16 %v7909
    %v8151 = vunpack.c.l.b16 %v7910
    %v8152 = vunpack.c.l.b16 %v7911
    %v8153 = vunpack.c.l.b16 %v7912
    %v8154 = vunpack.c.l.b16 %v7913
    %v8155 = vunpack.c.l.b16 %v7914
    %v8156 = vunpack.c.l.b16 %v7915
    %v8157 = vunpack.c.l.b16 %v7916
    %v8158 = vunpack.c.l.b16 %v7917
    %v8159 = vunpack.c.l.b16 %v7918
    %v8160 = vunpack.c.l.b16 %v7919
    %v8161 = vunpack.c.l.b16 %v7920
    %v8162 = vunpack.c.l.b16 %v7921
    %v8163 = vunpack.c.l.b16 %v7922
    %v8164 = vunpack.c.l.b16 %v7923
    %v8165 = vunpack.c.l.b16 %v7924
    %v8166 = vunpack.c.l.b16 %v7925
    %v8167 = vunpack.c.l.b16 %v7926
    %v8168 = vunpack.c.l.b16 %v7927
    %v8169 = vunpack.c.l.b16 %v7928
    %v8170 = vunpack.c.l.b16 %v7929
    %v8171 = vunpack.c.l.b16 %v7930
    %v8172 = vunpack.c.l.b16 %v7931
    %v8173 = vunpack.c.l.b16 %v7932
    %v8174 = vunpack.c.l.b16 %v7933
    %v8175 = vunpack.c.l.b16 %v7934
    %v8176 = vunpack.c.l.b16 %v7935
    %v8177 = vunpack.c.l.b16 %v7936
    %v8178 = vpack.c.b16 %v8131, %v8130
    %v8179 = vpack.c.b16 %v8133, %v8132
    %v8180 = vpack.c.b16 %v8135, %v8134
    %v8181 = vpack.c.b16 %v8137, %v8136
    %v8182 = vpack.c.b16 %v8139, %v8138
    %v8183 = vpack.c.b16 %v8141, %v8140
    %v8184 = vpack.c.b16 %v8143, %v8142
    %v8185 = vpack.c.b16 %v8145, %v8144
    %v8186 = vpack.c.b16 %v8147, %v8146
    %v8187 = vpack.c.b16 %v8149, %v8148
    %v8188 = vpack.c.b16 %v8151, %v8150
    %v8189 = vpack.c.b16 %v8153, %v8152
    %v8190 = vpack.c.b16 %v8155, %v8154
    %v8191 = vpack.c.b16 %v8157, %v8156
    %v8192 = vpack.c.b16 %v8159, %v8158
    %v8193 = vpack.c.b16 %v8161, %v8160
    %v8194 = vpack.c.b16 %v8163, %v8162
    %v8195 = vpack.c.b16 %v8165, %v8164
    %v8196 = vpack.c.b16 %v8167, %v8166
    %v8197 = vpack.c.b16 %v8169, %v8168
    %v8198 = vpack.c.b16 %v8171, %v8170
    %v8199 = vpack.c.b16 %v8173, %v8172
    %v8200 = vpack.c.b16 %v8175, %v8174
    %v8201 = vpack.c.b16 %v8177, %v8176
    %8226 = vmatpush.bf16.msra.mxu0 %v8185
    %8227 = vmatpush.bf16.msra.mxu0 %v8184
    %8228 = vmatpush.bf16.msra.mxu0 %v8183
    %8229 = vmatpush.bf16.msra.mxu0 %v8182
    %8230 = vmatpush.bf16.msra.mxu0 %v8181
    %8231 = vmatpush.bf16.msra.mxu0 %v8180
    %8232 = vmatpush.bf16.msra.mxu0 %v8179
    %8233 = vmatpush.bf16.msra.mxu0 %v8178
    %8234 = vmatmul.bf16.gmra.mxu0 %v8011
    %v8235 = vpop.f32.mrf.mxu0
    %v8236 = vadd.f32 %v7993, %v8235
    %v8237 = vpop.f32.mrf.mxu0
    %v8238 = vadd.f32 %v7993, %v8237
    %8239 = vmatmul.bf16.gmra.mxu0 %v8054
    %v8240 = vpop.f32.mrf.mxu0
    %v8241 = vadd.f32 %v7993, %v8240
    %v8242 = vpop.f32.mrf.mxu0
    %v8243 = vadd.f32 %v7993, %v8242
    %8244 = vmatmul.bf16.gmra.mxu0 %v8053
    %v8245 = vpop.f32.mrf.mxu0
    %v8246 = vadd.f32 %v7993, %v8245
    %v8247 = vpop.f32.mrf.mxu0
    %8248 = vdwg.mxu0
    %8249 = vmatpush.bf16.msra.mxu0 %v8193
    %8250 = vmatpush.bf16.msra.mxu0 %v8192
    %8251 = vmatpush.bf16.msra.mxu0 %v8191
    %8252 = vmatpush.bf16.msra.mxu0 %v8190
    %8253 = vmatpush.bf16.msra.mxu0 %v8189
    %8254 = vmatpush.bf16.msra.mxu0 %v8188
    %8255 = vmatpush.bf16.msra.mxu0 %v8187
    %8256 = vmatpush.bf16.msra.mxu0 %v8186
    %8257 = vmatmul.bf16.gmra.mxu0 %v8028
    %v8258 = vpop.f32.mrf.mxu0
    %v8259 = vadd.f32 %v8236, %v8258
    %v8260 = vpop.f32.mrf.mxu0
    %v8261 = vadd.f32 %v8238, %v8260
    %8262 = vmatmul.bf16.gmra.mxu0 %v8063
    %v8263 = vpop.f32.mrf.mxu0
    %v8264 = vadd.f32 %v8241, %v8263
    %v8265 = vpop.f32.mrf.mxu0
    %v8266 = vadd.f32 %v8243, %v8265
    %8267 = vmatmul.bf16.gmra.mxu0 %v8062
    %v8268 = vpop.f32.mrf.mxu0
    %v8269 = vadd.f32 %v8246, %v8268
    %v8270 = vpop.f32.mrf.mxu0
    %8271 = vdwg.mxu0
    %8272 = vmatpush.bf16.msra.mxu0 %v8201
    %8273 = vmatpush.bf16.msra.mxu0 %v8200
    %8274 = vmatpush.bf16.msra.mxu0 %v8199
    %8275 = vmatpush.bf16.msra.mxu0 %v8198
    %8276 = vmatpush.bf16.msra.mxu0 %v8197
    %8277 = vmatpush.bf16.msra.mxu0 %v8196
    %8278 = vmatpush.bf16.msra.mxu0 %v8195
    %8279 = vmatpush.bf16.msra.mxu0 %v8194
    %8280 = vmatmul.bf16.gmra.mxu0 %v8045
    %v8281 = vpop.f32.mrf.mxu0
    %v8282 = vadd.f32 %v8259, %v8281
    %v8283 = vpop.f32.mrf.mxu0
    %v8284 = vadd.f32 %v8261, %v8283
    %8285 = vmatmul.bf16.gmra.mxu0 %v8072
    %v8286 = vpop.f32.mrf.mxu0
    %v8287 = vadd.f32 %v8264, %v8286
    %v8288 = vpop.f32.mrf.mxu0
    %v8289 = vadd.f32 %v8266, %v8288
    %8290 = vmatmul.bf16.gmra.mxu0 %v8071
    %v8291 = vpop.f32.mrf.mxu0
    %v8292 = vadd.f32 %v8269, %v8291
    %v8293 = vpop.f32.mrf.mxu0
    %8294 = vdwg.mxu0
    %v8295 = vmul.f32 %v8282, %v177
    %v8296 = vmul.f32 %v8284, %v178
    %v8297 = vmul.f32 %v8287, %v179
    %v8298 = vmul.f32 %v8289, %v180
    %v8299 = vmul.f32 %v8292, %v181
    %v8300 = vadd.f32 %v8295, %v7466
    %v8301 = vadd.f32 %v8296, %v7467
    %v8302 = vadd.f32 %v8297, %v7468
    %v8303 = vadd.f32 %v8298, %v7469
    %v8304 = vadd.f32 %v8299, %v7470
    %s8305 = scalar_lea.vmem [#allocation2], 2496
    %v8306 = vld [vmem:[%s8305] sm:$0xf]
    %v8307 = vld [vmem:[%s8305 + $0x4] sm:$0xf]
    %v8308 = vld [vmem:[%s8305 + $0x8] sm:$0xf]
    %v8309 = vld [vmem:[%s8305 + $0xc] sm:$0xf]
    %v8310 = vld [vmem:[%s8305 + $0x10] sm:$0xf]
    %v8311 = vld [vmem:[%s8305 + $0x14] sm:$0xf]
    %v8312 = vld [vmem:[%s8305 + $0x18] sm:$0xf]
    %v8313 = vld [vmem:[%s8305 + $0x1c] sm:$0xf]
    %v8314 = vld [vmem:[%s8305 + $0x20] sm:$0xf]
    %v8315 = vld [vmem:[%s8305 + $0x24] sm:$0xf]
    %v8316 = vld [vmem:[%s8305 + $0x28] sm:$0xf]
    %v8317 = vld [vmem:[%s8305 + $0x2c] sm:$0xf]
    %v8318 = vld [vmem:[%s8305 + $0x30] sm:$0xf]
    %v8319 = vld [vmem:[%s8305 + $0x34] sm:$0xf]
    %v8320 = vld [vmem:[%s8305 + $0x38] sm:$0xf]
    %v8321 = vld [vmem:[%s8305 + $0x3c] sm:$0xf]
    %v8322 = vld [vmem:[%s8305 + $0x40] sm:$0xf]
    %v8323 = vld [vmem:[%s8305 + $0x44] sm:$0xf]
    %v8324 = vld [vmem:[%s8305 + $0x48] sm:$0xf]
    %v8325 = vld [vmem:[%s8305 + $0x4c] sm:$0xf]
    %v8326 = vld [vmem:[%s8305 + $0x50] sm:$0xf]
    %v8327 = vld [vmem:[%s8305 + $0x54] sm:$0xf]
    %v8328 = vld [vmem:[%s8305 + $0x58] sm:$0xf]
    %v8329 = vld [vmem:[%s8305 + $0x5c] sm:$0xf]
    %v8330 = vld [vmem:[%s8305 + $0x60] sm:$0xf]
    %v8331 = vld [vmem:[%s8305 + $0x64] sm:$0xf]
    %v8332 = vld [vmem:[%s8305 + $0x68] sm:$0xf]
    %v8333 = vld [vmem:[%s8305 + $0x6c] sm:$0xf]
    %v8334 = vld [vmem:[%s8305 + $0x70] sm:$0xf]
    %v8335 = vld [vmem:[%s8305 + $0x74] sm:$0xf]
    %v8336 = vld [vmem:[%s8305 + $0x78] sm:$0xf]
    %v8337 = vld [vmem:[%s8305 + $0x7c] sm:$0xf]
    %v8338 = vld [vmem:[%s8305 + $0x80] sm:$0xf]
    %v8339 = vld [vmem:[%s8305 + $0x84] sm:$0xf]
    %v8340 = vld [vmem:[%s8305 + $0x88] sm:$0xf]
    %v8341 = vld [vmem:[%s8305 + $0x8c] sm:$0xf]
    %v8342 = vld [vmem:[%s8305 + $0x90] sm:$0xf]
    %v8343 = vld [vmem:[%s8305 + $0x94] sm:$0xf]
    %v8344 = vld [vmem:[%s8305 + $0x98] sm:$0xf]
    %v8345 = vld [vmem:[%s8305 + $0x9c] sm:$0xf]
    %v8346 = vld [vmem:[%s8305 + $0xa0] sm:$0xf]
    %v8347 = vld [vmem:[%s8305 + $0xa4] sm:$0xf]
    %v8348 = vld [vmem:[%s8305 + $0xa8] sm:$0xf]
    %v8349 = vld [vmem:[%s8305 + $0xac] sm:$0xf]
    %v8350 = vld [vmem:[%s8305 + $0xb0] sm:$0xf]
    %v8351 = vld [vmem:[%s8305 + $0xb4] sm:$0xf]
    %v8352 = vld [vmem:[%s8305 + $0xb8] sm:$0xf]
    %v8353 = vld [vmem:[%s8305 + $0xbc] sm:$0xf]
    %s8354 = scalar_lea.vmem [#allocation4], 13
    %v8355 = vld [vmem:[%s8354] sm:$0x1]
    %v8356 = vrot.slane %v8300, 4
    %v8357 = vsel %vm239, %v8356, %v8304
    %v8358 = vrot.slane %v8301, 4
    %v8359 = vrot.slane %v8302, 4
    %v8360 = vrot.slane %v8303, 4
    %v8361 = vrot.slane %v8357, 4
    %v8362 = vsel %vm239, %v8358, %v8356
    %v8363 = vsel %vm239, %v8359, %v8358
    %v8364 = vsel %vm239, %v8360, %v8359
    %v8365 = vsel %vm239, %v8361, %v8360
    %v8371 = vrot.slane %v8300, 5
    %v8372 = vrot.slane %v8301, 5
    %v8373 = vsel %vm255, %v8371, %v8372
    %v8374 = vrot.slane %v8302, 5
    %v8375 = vsel %vm255, %v8372, %v8374
    %v8376 = vrot.slane %v8303, 5
    %v8377 = vsel %vm255, %v8374, %v8376
    %v8378 = vrot.slane %v8304, 5
    %v8379 = vsel %vm255, %v8376, %v8378
    %v8386 = vrot.slane %v8300, 6
    %v8387 = vrot.slane %v8301, 6
    %v8388 = vsel %vm271, %v8386, %v8387
    %v8389 = vrot.slane %v8302, 6
    %v8390 = vsel %vm271, %v8387, %v8389
    %v8391 = vrot.slane %v8303, 6
    %v8392 = vsel %vm271, %v8389, %v8391
    %v8393 = vrot.slane %v8357, 6
    %v8394 = vsel %vm271, %v8391, %v8393
    %v8400 = vpack.c.bf16 %v8362, %v8357
    %v8401 = vpack.c.bf16 %v8373, %v8371
    %v8402 = vpack.c.bf16 %v8388, %v8386
    %v8403 = vpack.c.bf16 %v8364, %v8363
    %v8404 = vpack.c.bf16 %v8377, %v8375
    %v8405 = vpack.c.bf16 %v8392, %v8390
    %v8406 = vpack.c.bf16 %v8365, %v8365
    %v8407 = vpack.c.bf16 %v8379, %v8379
    %v8408 = vpack.c.bf16 %v8394, %v8394
    %v8410 = vperm.slane %v8355, 0
    %v8413 = vshrl.u32 %v8400, 16
    %v8415 = vrot.slane %v8413, 1
    %v8416 = vshll.u32 %v8400, 16
    %v8418 = vrot.slane %v8416, 2
    %v8419 = vor.u32 %v8415, %v8418
    %v8421 = vshrl.u32 %v8403, 16
    %v8423 = vrot.slane %v8421, 1
    %v8424 = vshll.u32 %v8403, 16
    %v8426 = vrot.slane %v8424, 2
    %v8427 = vor.u32 %v8423, %v8426
    %v8428 = vsel %vm298, %v8419, %v8427
    %v8430 = vshrl.u32 %v8401, 16
    %v8432 = vrot.slane %v8430, 1
    %v8433 = vshll.u32 %v8401, 16
    %v8435 = vrot.slane %v8433, 2
    %v8436 = vor.u32 %v8432, %v8435
    %v8438 = vshrl.u32 %v8404, 16
    %v8440 = vrot.slane %v8438, 1
    %v8441 = vshll.u32 %v8404, 16
    %v8443 = vrot.slane %v8441, 2
    %v8444 = vor.u32 %v8440, %v8443
    %v8445 = vsel %vm298, %v8436, %v8444
    %v8447 = vshrl.u32 %v8402, 16
    %v8449 = vrot.slane %v8447, 1
    %v8450 = vshll.u32 %v8402, 16
    %v8452 = vrot.slane %v8450, 2
    %v8453 = vor.u32 %v8449, %v8452
    %v8455 = vshrl.u32 %v8405, 16
    %v8457 = vrot.slane %v8455, 1
    %v8458 = vshll.u32 %v8405, 16
    %v8460 = vrot.slane %v8458, 2
    %v8461 = vor.u32 %v8457, %v8460
    %v8462 = vsel %vm298, %v8453, %v8461
    %v8464 = vshrl.u32 %v8406, 16
    %v8466 = vrot.slane %v8464, 1
    %v8467 = vshll.u32 %v8406, 16
    %v8469 = vrot.slane %v8467, 2
    %v8470 = vor.u32 %v8466, %v8469
    %v8471 = vsel %vm298, %v8427, %v8470
    %v8473 = vshrl.u32 %v8407, 16
    %v8475 = vrot.slane %v8473, 1
    %v8476 = vshll.u32 %v8407, 16
    %v8478 = vrot.slane %v8476, 2
    %v8479 = vor.u32 %v8475, %v8478
    %v8480 = vsel %vm298, %v8444, %v8479
    %v8482 = vshrl.u32 %v8408, 16
    %v8484 = vrot.slane %v8482, 1
    %v8485 = vshll.u32 %v8408, 16
    %v8487 = vrot.slane %v8485, 2
    %v8488 = vor.u32 %v8484, %v8487
    %v8489 = vsel %vm298, %v8461, %v8488
    %v8547 = vunpack.c.l.b16 %v8306
    %v8548 = vunpack.c.l.b16 %v8307
    %v8549 = vunpack.c.l.b16 %v8308
    %v8550 = vunpack.c.l.b16 %v8309
    %v8551 = vunpack.c.l.b16 %v8310
    %v8552 = vunpack.c.l.b16 %v8311
    %v8553 = vunpack.c.l.b16 %v8312
    %v8554 = vunpack.c.l.b16 %v8313
    %v8555 = vunpack.c.l.b16 %v8314
    %v8556 = vunpack.c.l.b16 %v8315
    %v8557 = vunpack.c.l.b16 %v8316
    %v8558 = vunpack.c.l.b16 %v8317
    %v8559 = vunpack.c.l.b16 %v8318
    %v8560 = vunpack.c.l.b16 %v8319
    %v8561 = vunpack.c.l.b16 %v8320
    %v8562 = vunpack.c.l.b16 %v8321
    %v8563 = vunpack.c.l.b16 %v8322
    %v8564 = vunpack.c.l.b16 %v8323
    %v8565 = vunpack.c.l.b16 %v8324
    %v8566 = vunpack.c.l.b16 %v8325
    %v8567 = vunpack.c.l.b16 %v8326
    %v8568 = vunpack.c.l.b16 %v8327
    %v8569 = vunpack.c.l.b16 %v8328
    %v8570 = vunpack.c.l.b16 %v8329
    %v8571 = vunpack.c.l.b16 %v8330
    %v8572 = vunpack.c.l.b16 %v8331
    %v8573 = vunpack.c.l.b16 %v8332
    %v8574 = vunpack.c.l.b16 %v8333
    %v8575 = vunpack.c.l.b16 %v8334
    %v8576 = vunpack.c.l.b16 %v8335
    %v8577 = vunpack.c.l.b16 %v8336
    %v8578 = vunpack.c.l.b16 %v8337
    %v8579 = vunpack.c.l.b16 %v8338
    %v8580 = vunpack.c.l.b16 %v8339
    %v8581 = vunpack.c.l.b16 %v8340
    %v8582 = vunpack.c.l.b16 %v8341
    %v8583 = vunpack.c.l.b16 %v8342
    %v8584 = vunpack.c.l.b16 %v8343
    %v8585 = vunpack.c.l.b16 %v8344
    %v8586 = vunpack.c.l.b16 %v8345
    %v8587 = vunpack.c.l.b16 %v8346
    %v8588 = vunpack.c.l.b16 %v8347
    %v8589 = vunpack.c.l.b16 %v8348
    %v8590 = vunpack.c.l.b16 %v8349
    %v8591 = vunpack.c.l.b16 %v8350
    %v8592 = vunpack.c.l.b16 %v8351
    %v8593 = vunpack.c.l.b16 %v8352
    %v8594 = vunpack.c.l.b16 %v8353
    %v8595 = vpack.c.b16 %v8548, %v8547
    %v8596 = vpack.c.b16 %v8550, %v8549
    %v8597 = vpack.c.b16 %v8552, %v8551
    %v8598 = vpack.c.b16 %v8554, %v8553
    %v8599 = vpack.c.b16 %v8556, %v8555
    %v8600 = vpack.c.b16 %v8558, %v8557
    %v8601 = vpack.c.b16 %v8560, %v8559
    %v8602 = vpack.c.b16 %v8562, %v8561
    %v8603 = vpack.c.b16 %v8564, %v8563
    %v8604 = vpack.c.b16 %v8566, %v8565
    %v8605 = vpack.c.b16 %v8568, %v8567
    %v8606 = vpack.c.b16 %v8570, %v8569
    %v8607 = vpack.c.b16 %v8572, %v8571
    %v8608 = vpack.c.b16 %v8574, %v8573
    %v8609 = vpack.c.b16 %v8576, %v8575
    %v8610 = vpack.c.b16 %v8578, %v8577
    %v8611 = vpack.c.b16 %v8580, %v8579
    %v8612 = vpack.c.b16 %v8582, %v8581
    %v8613 = vpack.c.b16 %v8584, %v8583
    %v8614 = vpack.c.b16 %v8586, %v8585
    %v8615 = vpack.c.b16 %v8588, %v8587
    %v8616 = vpack.c.b16 %v8590, %v8589
    %v8617 = vpack.c.b16 %v8592, %v8591
    %v8618 = vpack.c.b16 %v8594, %v8593
    %8643 = vmatpush.bf16.msra.mxu0 %v8602
    %8644 = vmatpush.bf16.msra.mxu0 %v8601
    %8645 = vmatpush.bf16.msra.mxu0 %v8600
    %8646 = vmatpush.bf16.msra.mxu0 %v8599
    %8647 = vmatpush.bf16.msra.mxu0 %v8598
    %8648 = vmatpush.bf16.msra.mxu0 %v8597
    %8649 = vmatpush.bf16.msra.mxu0 %v8596
    %8650 = vmatpush.bf16.msra.mxu0 %v8595
    %8651 = vmatmul.bf16.gmra.mxu0 %v8428
    %v8652 = vpop.f32.mrf.mxu0
    %v8653 = vadd.f32 %v8410, %v8652
    %v8654 = vpop.f32.mrf.mxu0
    %v8655 = vadd.f32 %v8410, %v8654
    %8656 = vmatmul.bf16.gmra.mxu0 %v8471
    %v8657 = vpop.f32.mrf.mxu0
    %v8658 = vadd.f32 %v8410, %v8657
    %v8659 = vpop.f32.mrf.mxu0
    %v8660 = vadd.f32 %v8410, %v8659
    %8661 = vmatmul.bf16.gmra.mxu0 %v8470
    %v8662 = vpop.f32.mrf.mxu0
    %v8663 = vadd.f32 %v8410, %v8662
    %v8664 = vpop.f32.mrf.mxu0
    %8665 = vdwg.mxu0
    %8666 = vmatpush.bf16.msra.mxu0 %v8610
    %8667 = vmatpush.bf16.msra.mxu0 %v8609
    %8668 = vmatpush.bf16.msra.mxu0 %v8608
    %8669 = vmatpush.bf16.msra.mxu0 %v8607
    %8670 = vmatpush.bf16.msra.mxu0 %v8606
    %8671 = vmatpush.bf16.msra.mxu0 %v8605
    %8672 = vmatpush.bf16.msra.mxu0 %v8604
    %8673 = vmatpush.bf16.msra.mxu0 %v8603
    %8674 = vmatmul.bf16.gmra.mxu0 %v8445
    %v8675 = vpop.f32.mrf.mxu0
    %v8676 = vadd.f32 %v8653, %v8675
    %v8677 = vpop.f32.mrf.mxu0
    %v8678 = vadd.f32 %v8655, %v8677
    %8679 = vmatmul.bf16.gmra.mxu0 %v8480
    %v8680 = vpop.f32.mrf.mxu0
    %v8681 = vadd.f32 %v8658, %v8680
    %v8682 = vpop.f32.mrf.mxu0
    %v8683 = vadd.f32 %v8660, %v8682
    %8684 = vmatmul.bf16.gmra.mxu0 %v8479
    %v8685 = vpop.f32.mrf.mxu0
    %v8686 = vadd.f32 %v8663, %v8685
    %v8687 = vpop.f32.mrf.mxu0
    %8688 = vdwg.mxu0
    %8689 = vmatpush.bf16.msra.mxu0 %v8618
    %8690 = vmatpush.bf16.msra.mxu0 %v8617
    %8691 = vmatpush.bf16.msra.mxu0 %v8616
    %8692 = vmatpush.bf16.msra.mxu0 %v8615
    %8693 = vmatpush.bf16.msra.mxu0 %v8614
    %8694 = vmatpush.bf16.msra.mxu0 %v8613
    %8695 = vmatpush.bf16.msra.mxu0 %v8612
    %8696 = vmatpush.bf16.msra.mxu0 %v8611
    %8697 = vmatmul.bf16.gmra.mxu0 %v8462
    %v8698 = vpop.f32.mrf.mxu0
    %v8699 = vadd.f32 %v8676, %v8698
    %v8700 = vpop.f32.mrf.mxu0
    %v8701 = vadd.f32 %v8678, %v8700
    %8702 = vmatmul.bf16.gmra.mxu0 %v8489
    %v8703 = vpop.f32.mrf.mxu0
    %v8704 = vadd.f32 %v8681, %v8703
    %v8705 = vpop.f32.mrf.mxu0
    %v8706 = vadd.f32 %v8683, %v8705
    %8707 = vmatmul.bf16.gmra.mxu0 %v8488
    %v8708 = vpop.f32.mrf.mxu0
    %v8709 = vadd.f32 %v8686, %v8708
    %v8710 = vpop.f32.mrf.mxu0
    %8711 = vdwg.mxu0
    %v8712 = vmax.f32 %v8699, 0.0
    %v8713 = vmax.f32 %v8701, 0.0
    %v8714 = vmax.f32 %v8704, 0.0
    %v8715 = vmax.f32 %v8706, 0.0
    %v8716 = vmax.f32 %v8709, 0.0
    %v8717 = vmul.f32 %v8712, %v177
    %v8718 = vmul.f32 %v8713, %v178
    %v8719 = vmul.f32 %v8714, %v179
    %v8720 = vmul.f32 %v8715, %v180
    %v8721 = vmul.f32 %v8716, %v181
    %s8722 = scalar_lea.vmem [#allocation2], 2688
    %v8723 = vld [vmem:[%s8722] sm:$0xf]
    %v8724 = vld [vmem:[%s8722 + $0x4] sm:$0xf]
    %v8725 = vld [vmem:[%s8722 + $0x8] sm:$0xf]
    %v8726 = vld [vmem:[%s8722 + $0xc] sm:$0xf]
    %v8727 = vld [vmem:[%s8722 + $0x10] sm:$0xf]
    %v8728 = vld [vmem:[%s8722 + $0x14] sm:$0xf]
    %v8729 = vld [vmem:[%s8722 + $0x18] sm:$0xf]
    %v8730 = vld [vmem:[%s8722 + $0x1c] sm:$0xf]
    %v8731 = vld [vmem:[%s8722 + $0x20] sm:$0xf]
    %v8732 = vld [vmem:[%s8722 + $0x24] sm:$0xf]
    %v8733 = vld [vmem:[%s8722 + $0x28] sm:$0xf]
    %v8734 = vld [vmem:[%s8722 + $0x2c] sm:$0xf]
    %v8735 = vld [vmem:[%s8722 + $0x30] sm:$0xf]
    %v8736 = vld [vmem:[%s8722 + $0x34] sm:$0xf]
    %v8737 = vld [vmem:[%s8722 + $0x38] sm:$0xf]
    %v8738 = vld [vmem:[%s8722 + $0x3c] sm:$0xf]
    %v8739 = vld [vmem:[%s8722 + $0x40] sm:$0xf]
    %v8740 = vld [vmem:[%s8722 + $0x44] sm:$0xf]
    %v8741 = vld [vmem:[%s8722 + $0x48] sm:$0xf]
    %v8742 = vld [vmem:[%s8722 + $0x4c] sm:$0xf]
    %v8743 = vld [vmem:[%s8722 + $0x50] sm:$0xf]
    %v8744 = vld [vmem:[%s8722 + $0x54] sm:$0xf]
    %v8745 = vld [vmem:[%s8722 + $0x58] sm:$0xf]
    %v8746 = vld [vmem:[%s8722 + $0x5c] sm:$0xf]
    %v8747 = vld [vmem:[%s8722 + $0x60] sm:$0xf]
    %v8748 = vld [vmem:[%s8722 + $0x64] sm:$0xf]
    %v8749 = vld [vmem:[%s8722 + $0x68] sm:$0xf]
    %v8750 = vld [vmem:[%s8722 + $0x6c] sm:$0xf]
    %v8751 = vld [vmem:[%s8722 + $0x70] sm:$0xf]
    %v8752 = vld [vmem:[%s8722 + $0x74] sm:$0xf]
    %v8753 = vld [vmem:[%s8722 + $0x78] sm:$0xf]
    %v8754 = vld [vmem:[%s8722 + $0x7c] sm:$0xf]
    %v8755 = vld [vmem:[%s8722 + $0x80] sm:$0xf]
    %v8756 = vld [vmem:[%s8722 + $0x84] sm:$0xf]
    %v8757 = vld [vmem:[%s8722 + $0x88] sm:$0xf]
    %v8758 = vld [vmem:[%s8722 + $0x8c] sm:$0xf]
    %v8759 = vld [vmem:[%s8722 + $0x90] sm:$0xf]
    %v8760 = vld [vmem:[%s8722 + $0x94] sm:$0xf]
    %v8761 = vld [vmem:[%s8722 + $0x98] sm:$0xf]
    %v8762 = vld [vmem:[%s8722 + $0x9c] sm:$0xf]
    %v8763 = vld [vmem:[%s8722 + $0xa0] sm:$0xf]
    %v8764 = vld [vmem:[%s8722 + $0xa4] sm:$0xf]
    %v8765 = vld [vmem:[%s8722 + $0xa8] sm:$0xf]
    %v8766 = vld [vmem:[%s8722 + $0xac] sm:$0xf]
    %v8767 = vld [vmem:[%s8722 + $0xb0] sm:$0xf]
    %v8768 = vld [vmem:[%s8722 + $0xb4] sm:$0xf]
    %v8769 = vld [vmem:[%s8722 + $0xb8] sm:$0xf]
    %v8770 = vld [vmem:[%s8722 + $0xbc] sm:$0xf]
    %s8771 = scalar_lea.vmem [#allocation4], 14
    %v8772 = vld [vmem:[%s8771] sm:$0x1]
    %v8773 = vrot.slane %v8717, 4
    %v8774 = vsel %vm239, %v8773, %v8721
    %v8775 = vrot.slane %v8718, 4
    %v8776 = vrot.slane %v8719, 4
    %v8777 = vrot.slane %v8720, 4
    %v8778 = vrot.slane %v8774, 4
    %v8779 = vsel %vm239, %v8775, %v8773
    %v8780 = vsel %vm239, %v8776, %v8775
    %v8781 = vsel %vm239, %v8777, %v8776
    %v8782 = vsel %vm239, %v8778, %v8777
    %v8788 = vrot.slane %v8717, 5
    %v8789 = vrot.slane %v8718, 5
    %v8790 = vsel %vm255, %v8788, %v8789
    %v8791 = vrot.slane %v8719, 5
    %v8792 = vsel %vm255, %v8789, %v8791
    %v8793 = vrot.slane %v8720, 5
    %v8794 = vsel %vm255, %v8791, %v8793
    %v8795 = vrot.slane %v8721, 5
    %v8796 = vsel %vm255, %v8793, %v8795
    %v8803 = vrot.slane %v8717, 6
    %v8804 = vrot.slane %v8718, 6
    %v8805 = vsel %vm271, %v8803, %v8804
    %v8806 = vrot.slane %v8719, 6
    %v8807 = vsel %vm271, %v8804, %v8806
    %v8808 = vrot.slane %v8720, 6
    %v8809 = vsel %vm271, %v8806, %v8808
    %v8810 = vrot.slane %v8774, 6
    %v8811 = vsel %vm271, %v8808, %v8810
    %v8817 = vpack.c.bf16 %v8779, %v8774
    %v8818 = vpack.c.bf16 %v8790, %v8788
    %v8819 = vpack.c.bf16 %v8805, %v8803
    %v8820 = vpack.c.bf16 %v8781, %v8780
    %v8821 = vpack.c.bf16 %v8794, %v8792
    %v8822 = vpack.c.bf16 %v8809, %v8807
    %v8823 = vpack.c.bf16 %v8782, %v8782
    %v8824 = vpack.c.bf16 %v8796, %v8796
    %v8825 = vpack.c.bf16 %v8811, %v8811
    %v8827 = vperm.slane %v8772, 0
    %v8830 = vshrl.u32 %v8817, 16
    %v8832 = vrot.slane %v8830, 1
    %v8833 = vshll.u32 %v8817, 16
    %v8835 = vrot.slane %v8833, 2
    %v8836 = vor.u32 %v8832, %v8835
    %v8838 = vshrl.u32 %v8820, 16
    %v8840 = vrot.slane %v8838, 1
    %v8841 = vshll.u32 %v8820, 16
    %v8843 = vrot.slane %v8841, 2
    %v8844 = vor.u32 %v8840, %v8843
    %v8845 = vsel %vm298, %v8836, %v8844
    %v8847 = vshrl.u32 %v8818, 16
    %v8849 = vrot.slane %v8847, 1
    %v8850 = vshll.u32 %v8818, 16
    %v8852 = vrot.slane %v8850, 2
    %v8853 = vor.u32 %v8849, %v8852
    %v8855 = vshrl.u32 %v8821, 16
    %v8857 = vrot.slane %v8855, 1
    %v8858 = vshll.u32 %v8821, 16
    %v8860 = vrot.slane %v8858, 2
    %v8861 = vor.u32 %v8857, %v8860
    %v8862 = vsel %vm298, %v8853, %v8861
    %v8864 = vshrl.u32 %v8819, 16
    %v8866 = vrot.slane %v8864, 1
    %v8867 = vshll.u32 %v8819, 16
    %v8869 = vrot.slane %v8867, 2
    %v8870 = vor.u32 %v8866, %v8869
    %v8872 = vshrl.u32 %v8822, 16
    %v8874 = vrot.slane %v8872, 1
    %v8875 = vshll.u32 %v8822, 16
    %v8877 = vrot.slane %v8875, 2
    %v8878 = vor.u32 %v8874, %v8877
    %v8879 = vsel %vm298, %v8870, %v8878
    %v8881 = vshrl.u32 %v8823, 16
    %v8883 = vrot.slane %v8881, 1
    %v8884 = vshll.u32 %v8823, 16
    %v8886 = vrot.slane %v8884, 2
    %v8887 = vor.u32 %v8883, %v8886
    %v8888 = vsel %vm298, %v8844, %v8887
    %v8890 = vshrl.u32 %v8824, 16
    %v8892 = vrot.slane %v8890, 1
    %v8893 = vshll.u32 %v8824, 16
    %v8895 = vrot.slane %v8893, 2
    %v8896 = vor.u32 %v8892, %v8895
    %v8897 = vsel %vm298, %v8861, %v8896
    %v8899 = vshrl.u32 %v8825, 16
    %v8901 = vrot.slane %v8899, 1
    %v8902 = vshll.u32 %v8825, 16
    %v8904 = vrot.slane %v8902, 2
    %v8905 = vor.u32 %v8901, %v8904
    %v8906 = vsel %vm298, %v8878, %v8905
    %v8964 = vunpack.c.l.b16 %v8723
    %v8965 = vunpack.c.l.b16 %v8724
    %v8966 = vunpack.c.l.b16 %v8725
    %v8967 = vunpack.c.l.b16 %v8726
    %v8968 = vunpack.c.l.b16 %v8727
    %v8969 = vunpack.c.l.b16 %v8728
    %v8970 = vunpack.c.l.b16 %v8729
    %v8971 = vunpack.c.l.b16 %v8730
    %v8972 = vunpack.c.l.b16 %v8731
    %v8973 = vunpack.c.l.b16 %v8732
    %v8974 = vunpack.c.l.b16 %v8733
    %v8975 = vunpack.c.l.b16 %v8734
    %v8976 = vunpack.c.l.b16 %v8735
    %v8977 = vunpack.c.l.b16 %v8736
    %v8978 = vunpack.c.l.b16 %v8737
    %v8979 = vunpack.c.l.b16 %v8738
    %v8980 = vunpack.c.l.b16 %v8739
    %v8981 = vunpack.c.l.b16 %v8740
    %v8982 = vunpack.c.l.b16 %v8741
    %v8983 = vunpack.c.l.b16 %v8742
    %v8984 = vunpack.c.l.b16 %v8743
    %v8985 = vunpack.c.l.b16 %v8744
    %v8986 = vunpack.c.l.b16 %v8745
    %v8987 = vunpack.c.l.b16 %v8746
    %v8988 = vunpack.c.l.b16 %v8747
    %v8989 = vunpack.c.l.b16 %v8748
    %v8990 = vunpack.c.l.b16 %v8749
    %v8991 = vunpack.c.l.b16 %v8750
    %v8992 = vunpack.c.l.b16 %v8751
    %v8993 = vunpack.c.l.b16 %v8752
    %v8994 = vunpack.c.l.b16 %v8753
    %v8995 = vunpack.c.l.b16 %v8754
    %v8996 = vunpack.c.l.b16 %v8755
    %v8997 = vunpack.c.l.b16 %v8756
    %v8998 = vunpack.c.l.b16 %v8757
    %v8999 = vunpack.c.l.b16 %v8758
    %v9000 = vunpack.c.l.b16 %v8759
    %v9001 = vunpack.c.l.b16 %v8760
    %v9002 = vunpack.c.l.b16 %v8761
    %v9003 = vunpack.c.l.b16 %v8762
    %v9004 = vunpack.c.l.b16 %v8763
    %v9005 = vunpack.c.l.b16 %v8764
    %v9006 = vunpack.c.l.b16 %v8765
    %v9007 = vunpack.c.l.b16 %v8766
    %v9008 = vunpack.c.l.b16 %v8767
    %v9009 = vunpack.c.l.b16 %v8768
    %v9010 = vunpack.c.l.b16 %v8769
    %v9011 = vunpack.c.l.b16 %v8770
    %v9012 = vpack.c.b16 %v8965, %v8964
    %v9013 = vpack.c.b16 %v8967, %v8966
    %v9014 = vpack.c.b16 %v8969, %v8968
    %v9015 = vpack.c.b16 %v8971, %v8970
    %v9016 = vpack.c.b16 %v8973, %v8972
    %v9017 = vpack.c.b16 %v8975, %v8974
    %v9018 = vpack.c.b16 %v8977, %v8976
    %v9019 = vpack.c.b16 %v8979, %v8978
    %v9020 = vpack.c.b16 %v8981, %v8980
    %v9021 = vpack.c.b16 %v8983, %v8982
    %v9022 = vpack.c.b16 %v8985, %v8984
    %v9023 = vpack.c.b16 %v8987, %v8986
    %v9024 = vpack.c.b16 %v8989, %v8988
    %v9025 = vpack.c.b16 %v8991, %v8990
    %v9026 = vpack.c.b16 %v8993, %v8992
    %v9027 = vpack.c.b16 %v8995, %v8994
    %v9028 = vpack.c.b16 %v8997, %v8996
    %v9029 = vpack.c.b16 %v8999, %v8998
    %v9030 = vpack.c.b16 %v9001, %v9000
    %v9031 = vpack.c.b16 %v9003, %v9002
    %v9032 = vpack.c.b16 %v9005, %v9004
    %v9033 = vpack.c.b16 %v9007, %v9006
    %v9034 = vpack.c.b16 %v9009, %v9008
    %v9035 = vpack.c.b16 %v9011, %v9010
    %9060 = vmatpush.bf16.msra.mxu0 %v9019
    %9061 = vmatpush.bf16.msra.mxu0 %v9018
    %9062 = vmatpush.bf16.msra.mxu0 %v9017
    %9063 = vmatpush.bf16.msra.mxu0 %v9016
    %9064 = vmatpush.bf16.msra.mxu0 %v9015
    %9065 = vmatpush.bf16.msra.mxu0 %v9014
    %9066 = vmatpush.bf16.msra.mxu0 %v9013
    %9067 = vmatpush.bf16.msra.mxu0 %v9012
    %9068 = vmatmul.bf16.gmra.mxu0 %v8845
    %v9069 = vpop.f32.mrf.mxu0
    %v9070 = vadd.f32 %v8827, %v9069
    %v9071 = vpop.f32.mrf.mxu0
    %v9072 = vadd.f32 %v8827, %v9071
    %9073 = vmatmul.bf16.gmra.mxu0 %v8888
    %v9074 = vpop.f32.mrf.mxu0
    %v9075 = vadd.f32 %v8827, %v9074
    %v9076 = vpop.f32.mrf.mxu0
    %v9077 = vadd.f32 %v8827, %v9076
    %9078 = vmatmul.bf16.gmra.mxu0 %v8887
    %v9079 = vpop.f32.mrf.mxu0
    %v9080 = vadd.f32 %v8827, %v9079
    %v9081 = vpop.f32.mrf.mxu0
    %9082 = vdwg.mxu0
    %9083 = vmatpush.bf16.msra.mxu0 %v9027
    %9084 = vmatpush.bf16.msra.mxu0 %v9026
    %9085 = vmatpush.bf16.msra.mxu0 %v9025
    %9086 = vmatpush.bf16.msra.mxu0 %v9024
    %9087 = vmatpush.bf16.msra.mxu0 %v9023
    %9088 = vmatpush.bf16.msra.mxu0 %v9022
    %9089 = vmatpush.bf16.msra.mxu0 %v9021
    %9090 = vmatpush.bf16.msra.mxu0 %v9020
    %9091 = vmatmul.bf16.gmra.mxu0 %v8862
    %v9092 = vpop.f32.mrf.mxu0
    %v9093 = vadd.f32 %v9070, %v9092
    %v9094 = vpop.f32.mrf.mxu0
    %v9095 = vadd.f32 %v9072, %v9094
    %9096 = vmatmul.bf16.gmra.mxu0 %v8897
    %v9097 = vpop.f32.mrf.mxu0
    %v9098 = vadd.f32 %v9075, %v9097
    %v9099 = vpop.f32.mrf.mxu0
    %v9100 = vadd.f32 %v9077, %v9099
    %9101 = vmatmul.bf16.gmra.mxu0 %v8896
    %v9102 = vpop.f32.mrf.mxu0
    %v9103 = vadd.f32 %v9080, %v9102
    %v9104 = vpop.f32.mrf.mxu0
    %9105 = vdwg.mxu0
    %9106 = vmatpush.bf16.msra.mxu0 %v9035
    %9107 = vmatpush.bf16.msra.mxu0 %v9034
    %9108 = vmatpush.bf16.msra.mxu0 %v9033
    %9109 = vmatpush.bf16.msra.mxu0 %v9032
    %9110 = vmatpush.bf16.msra.mxu0 %v9031
    %9111 = vmatpush.bf16.msra.mxu0 %v9030
    %9112 = vmatpush.bf16.msra.mxu0 %v9029
    %9113 = vmatpush.bf16.msra.mxu0 %v9028
    %9114 = vmatmul.bf16.gmra.mxu0 %v8879
    %v9115 = vpop.f32.mrf.mxu0
    %v9116 = vadd.f32 %v9093, %v9115
    %v9117 = vpop.f32.mrf.mxu0
    %v9118 = vadd.f32 %v9095, %v9117
    %9119 = vmatmul.bf16.gmra.mxu0 %v8906
    %v9120 = vpop.f32.mrf.mxu0
    %v9121 = vadd.f32 %v9098, %v9120
    %v9122 = vpop.f32.mrf.mxu0
    %v9123 = vadd.f32 %v9100, %v9122
    %9124 = vmatmul.bf16.gmra.mxu0 %v8905
    %v9125 = vpop.f32.mrf.mxu0
    %v9126 = vadd.f32 %v9103, %v9125
    %v9127 = vpop.f32.mrf.mxu0
    %9128 = vdwg.mxu0
    %v9129 = vmul.f32 %v9116, %v177
    %v9130 = vmul.f32 %v9118, %v178
    %v9131 = vmul.f32 %v9121, %v179
    %v9132 = vmul.f32 %v9123, %v180
    %v9133 = vmul.f32 %v9126, %v181
    %v9134 = vadd.f32 %v9129, %v8300
    %v9135 = vadd.f32 %v9130, %v8301
    %v9136 = vadd.f32 %v9131, %v8302
    %v9137 = vadd.f32 %v9132, %v8303
    %v9138 = vadd.f32 %v9133, %v8304
    %s9139 = scalar_lea.vmem [#allocation2], 2880
    %v9140 = vld [vmem:[%s9139] sm:$0xf]
    %v9141 = vld [vmem:[%s9139 + $0x4] sm:$0xf]
    %v9142 = vld [vmem:[%s9139 + $0x8] sm:$0xf]
    %v9143 = vld [vmem:[%s9139 + $0xc] sm:$0xf]
    %v9144 = vld [vmem:[%s9139 + $0x10] sm:$0xf]
    %v9145 = vld [vmem:[%s9139 + $0x14] sm:$0xf]
    %v9146 = vld [vmem:[%s9139 + $0x18] sm:$0xf]
    %v9147 = vld [vmem:[%s9139 + $0x1c] sm:$0xf]
    %v9148 = vld [vmem:[%s9139 + $0x20] sm:$0xf]
    %v9149 = vld [vmem:[%s9139 + $0x24] sm:$0xf]
    %v9150 = vld [vmem:[%s9139 + $0x28] sm:$0xf]
    %v9151 = vld [vmem:[%s9139 + $0x2c] sm:$0xf]
    %v9152 = vld [vmem:[%s9139 + $0x30] sm:$0xf]
    %v9153 = vld [vmem:[%s9139 + $0x34] sm:$0xf]
    %v9154 = vld [vmem:[%s9139 + $0x38] sm:$0xf]
    %v9155 = vld [vmem:[%s9139 + $0x3c] sm:$0xf]
    %v9156 = vld [vmem:[%s9139 + $0x40] sm:$0xf]
    %v9157 = vld [vmem:[%s9139 + $0x44] sm:$0xf]
    %v9158 = vld [vmem:[%s9139 + $0x48] sm:$0xf]
    %v9159 = vld [vmem:[%s9139 + $0x4c] sm:$0xf]
    %v9160 = vld [vmem:[%s9139 + $0x50] sm:$0xf]
    %v9161 = vld [vmem:[%s9139 + $0x54] sm:$0xf]
    %v9162 = vld [vmem:[%s9139 + $0x58] sm:$0xf]
    %v9163 = vld [vmem:[%s9139 + $0x5c] sm:$0xf]
    %v9164 = vld [vmem:[%s9139 + $0x60] sm:$0xf]
    %v9165 = vld [vmem:[%s9139 + $0x64] sm:$0xf]
    %v9166 = vld [vmem:[%s9139 + $0x68] sm:$0xf]
    %v9167 = vld [vmem:[%s9139 + $0x6c] sm:$0xf]
    %v9168 = vld [vmem:[%s9139 + $0x70] sm:$0xf]
    %v9169 = vld [vmem:[%s9139 + $0x74] sm:$0xf]
    %v9170 = vld [vmem:[%s9139 + $0x78] sm:$0xf]
    %v9171 = vld [vmem:[%s9139 + $0x7c] sm:$0xf]
    %v9172 = vld [vmem:[%s9139 + $0x80] sm:$0xf]
    %v9173 = vld [vmem:[%s9139 + $0x84] sm:$0xf]
    %v9174 = vld [vmem:[%s9139 + $0x88] sm:$0xf]
    %v9175 = vld [vmem:[%s9139 + $0x8c] sm:$0xf]
    %v9176 = vld [vmem:[%s9139 + $0x90] sm:$0xf]
    %v9177 = vld [vmem:[%s9139 + $0x94] sm:$0xf]
    %v9178 = vld [vmem:[%s9139 + $0x98] sm:$0xf]
    %v9179 = vld [vmem:[%s9139 + $0x9c] sm:$0xf]
    %v9180 = vld [vmem:[%s9139 + $0xa0] sm:$0xf]
    %v9181 = vld [vmem:[%s9139 + $0xa4] sm:$0xf]
    %v9182 = vld [vmem:[%s9139 + $0xa8] sm:$0xf]
    %v9183 = vld [vmem:[%s9139 + $0xac] sm:$0xf]
    %v9184 = vld [vmem:[%s9139 + $0xb0] sm:$0xf]
    %v9185 = vld [vmem:[%s9139 + $0xb4] sm:$0xf]
    %v9186 = vld [vmem:[%s9139 + $0xb8] sm:$0xf]
    %v9187 = vld [vmem:[%s9139 + $0xbc] sm:$0xf]
    %s9188 = scalar_lea.vmem [#allocation4], 15
    %v9189 = vld [vmem:[%s9188] sm:$0x1]
    %v9190 = vrot.slane %v9134, 4
    %v9191 = vsel %vm239, %v9190, %v9138
    %v9192 = vrot.slane %v9135, 4
    %v9193 = vrot.slane %v9136, 4
    %v9194 = vrot.slane %v9137, 4
    %v9195 = vrot.slane %v9191, 4
    %v9196 = vsel %vm239, %v9192, %v9190
    %v9197 = vsel %vm239, %v9193, %v9192
    %v9198 = vsel %vm239, %v9194, %v9193
    %v9199 = vsel %vm239, %v9195, %v9194
    %v9205 = vrot.slane %v9134, 5
    %v9206 = vrot.slane %v9135, 5
    %v9207 = vsel %vm255, %v9205, %v9206
    %v9208 = vrot.slane %v9136, 5
    %v9209 = vsel %vm255, %v9206, %v9208
    %v9210 = vrot.slane %v9137, 5
    %v9211 = vsel %vm255, %v9208, %v9210
    %v9212 = vrot.slane %v9138, 5
    %v9213 = vsel %vm255, %v9210, %v9212
    %v9220 = vrot.slane %v9134, 6
    %v9221 = vrot.slane %v9135, 6
    %v9222 = vsel %vm271, %v9220, %v9221
    %v9223 = vrot.slane %v9136, 6
    %v9224 = vsel %vm271, %v9221, %v9223
    %v9225 = vrot.slane %v9137, 6
    %v9226 = vsel %vm271, %v9223, %v9225
    %v9227 = vrot.slane %v9191, 6
    %v9228 = vsel %vm271, %v9225, %v9227
    %v9234 = vpack.c.bf16 %v9196, %v9191
    %v9235 = vpack.c.bf16 %v9207, %v9205
    %v9236 = vpack.c.bf16 %v9222, %v9220
    %v9237 = vpack.c.bf16 %v9198, %v9197
    %v9238 = vpack.c.bf16 %v9211, %v9209
    %v9239 = vpack.c.bf16 %v9226, %v9224
    %v9240 = vpack.c.bf16 %v9199, %v9199
    %v9241 = vpack.c.bf16 %v9213, %v9213
    %v9242 = vpack.c.bf16 %v9228, %v9228
    %v9244 = vperm.slane %v9189, 0
    %v9247 = vshrl.u32 %v9234, 16
    %v9249 = vrot.slane %v9247, 1
    %v9250 = vshll.u32 %v9234, 16
    %v9252 = vrot.slane %v9250, 2
    %v9253 = vor.u32 %v9249, %v9252
    %v9255 = vshrl.u32 %v9237, 16
    %v9257 = vrot.slane %v9255, 1
    %v9258 = vshll.u32 %v9237, 16
    %v9260 = vrot.slane %v9258, 2
    %v9261 = vor.u32 %v9257, %v9260
    %v9262 = vsel %vm298, %v9253, %v9261
    %v9264 = vshrl.u32 %v9235, 16
    %v9266 = vrot.slane %v9264, 1
    %v9267 = vshll.u32 %v9235, 16
    %v9269 = vrot.slane %v9267, 2
    %v9270 = vor.u32 %v9266, %v9269
    %v9272 = vshrl.u32 %v9238, 16
    %v9274 = vrot.slane %v9272, 1
    %v9275 = vshll.u32 %v9238, 16
    %v9277 = vrot.slane %v9275, 2
    %v9278 = vor.u32 %v9274, %v9277
    %v9279 = vsel %vm298, %v9270, %v9278
    %v9281 = vshrl.u32 %v9236, 16
    %v9283 = vrot.slane %v9281, 1
    %v9284 = vshll.u32 %v9236, 16
    %v9286 = vrot.slane %v9284, 2
    %v9287 = vor.u32 %v9283, %v9286
    %v9289 = vshrl.u32 %v9239, 16
    %v9291 = vrot.slane %v9289, 1
    %v9292 = vshll.u32 %v9239, 16
    %v9294 = vrot.slane %v9292, 2
    %v9295 = vor.u32 %v9291, %v9294
    %v9296 = vsel %vm298, %v9287, %v9295
    %v9298 = vshrl.u32 %v9240, 16
    %v9300 = vrot.slane %v9298, 1
    %v9301 = vshll.u32 %v9240, 16
    %v9303 = vrot.slane %v9301, 2
    %v9304 = vor.u32 %v9300, %v9303
    %v9305 = vsel %vm298, %v9261, %v9304
    %v9307 = vshrl.u32 %v9241, 16
    %v9309 = vrot.slane %v9307, 1
    %v9310 = vshll.u32 %v9241, 16
    %v9312 = vrot.slane %v9310, 2
    %v9313 = vor.u32 %v9309, %v9312
    %v9314 = vsel %vm298, %v9278, %v9313
    %v9316 = vshrl.u32 %v9242, 16
    %v9318 = vrot.slane %v9316, 1
    %v9319 = vshll.u32 %v9242, 16
    %v9321 = vrot.slane %v9319, 2
    %v9322 = vor.u32 %v9318, %v9321
    %v9323 = vsel %vm298, %v9295, %v9322
    %v9381 = vunpack.c.l.b16 %v9140
    %v9382 = vunpack.c.l.b16 %v9141
    %v9383 = vunpack.c.l.b16 %v9142
    %v9384 = vunpack.c.l.b16 %v9143
    %v9385 = vunpack.c.l.b16 %v9144
    %v9386 = vunpack.c.l.b16 %v9145
    %v9387 = vunpack.c.l.b16 %v9146
    %v9388 = vunpack.c.l.b16 %v9147
    %v9389 = vunpack.c.l.b16 %v9148
    %v9390 = vunpack.c.l.b16 %v9149
    %v9391 = vunpack.c.l.b16 %v9150
    %v9392 = vunpack.c.l.b16 %v9151
    %v9393 = vunpack.c.l.b16 %v9152
    %v9394 = vunpack.c.l.b16 %v9153
    %v9395 = vunpack.c.l.b16 %v9154
    %v9396 = vunpack.c.l.b16 %v9155
    %v9397 = vunpack.c.l.b16 %v9156
    %v9398 = vunpack.c.l.b16 %v9157
    %v9399 = vunpack.c.l.b16 %v9158
    %v9400 = vunpack.c.l.b16 %v9159
    %v9401 = vunpack.c.l.b16 %v9160
    %v9402 = vunpack.c.l.b16 %v9161
    %v9403 = vunpack.c.l.b16 %v9162
    %v9404 = vunpack.c.l.b16 %v9163
    %v9405 = vunpack.c.l.b16 %v9164
    %v9406 = vunpack.c.l.b16 %v9165
    %v9407 = vunpack.c.l.b16 %v9166
    %v9408 = vunpack.c.l.b16 %v9167
    %v9409 = vunpack.c.l.b16 %v9168
    %v9410 = vunpack.c.l.b16 %v9169
    %v9411 = vunpack.c.l.b16 %v9170
    %v9412 = vunpack.c.l.b16 %v9171
    %v9413 = vunpack.c.l.b16 %v9172
    %v9414 = vunpack.c.l.b16 %v9173
    %v9415 = vunpack.c.l.b16 %v9174
    %v9416 = vunpack.c.l.b16 %v9175
    %v9417 = vunpack.c.l.b16 %v9176
    %v9418 = vunpack.c.l.b16 %v9177
    %v9419 = vunpack.c.l.b16 %v9178
    %v9420 = vunpack.c.l.b16 %v9179
    %v9421 = vunpack.c.l.b16 %v9180
    %v9422 = vunpack.c.l.b16 %v9181
    %v9423 = vunpack.c.l.b16 %v9182
    %v9424 = vunpack.c.l.b16 %v9183
    %v9425 = vunpack.c.l.b16 %v9184
    %v9426 = vunpack.c.l.b16 %v9185
    %v9427 = vunpack.c.l.b16 %v9186
    %v9428 = vunpack.c.l.b16 %v9187
    %v9429 = vpack.c.b16 %v9382, %v9381
    %v9430 = vpack.c.b16 %v9384, %v9383
    %v9431 = vpack.c.b16 %v9386, %v9385
    %v9432 = vpack.c.b16 %v9388, %v9387
    %v9433 = vpack.c.b16 %v9390, %v9389
    %v9434 = vpack.c.b16 %v9392, %v9391
    %v9435 = vpack.c.b16 %v9394, %v9393
    %v9436 = vpack.c.b16 %v9396, %v9395
    %v9437 = vpack.c.b16 %v9398, %v9397
    %v9438 = vpack.c.b16 %v9400, %v9399
    %v9439 = vpack.c.b16 %v9402, %v9401
    %v9440 = vpack.c.b16 %v9404, %v9403
    %v9441 = vpack.c.b16 %v9406, %v9405
    %v9442 = vpack.c.b16 %v9408, %v9407
    %v9443 = vpack.c.b16 %v9410, %v9409
    %v9444 = vpack.c.b16 %v9412, %v9411
    %v9445 = vpack.c.b16 %v9414, %v9413
    %v9446 = vpack.c.b16 %v9416, %v9415
    %v9447 = vpack.c.b16 %v9418, %v9417
    %v9448 = vpack.c.b16 %v9420, %v9419
    %v9449 = vpack.c.b16 %v9422, %v9421
    %v9450 = vpack.c.b16 %v9424, %v9423
    %v9451 = vpack.c.b16 %v9426, %v9425
    %v9452 = vpack.c.b16 %v9428, %v9427
    %9477 = vmatpush.bf16.msra.mxu0 %v9436
    %9478 = vmatpush.bf16.msra.mxu0 %v9435
    %9479 = vmatpush.bf16.msra.mxu0 %v9434
    %9480 = vmatpush.bf16.msra.mxu0 %v9433
    %9481 = vmatpush.bf16.msra.mxu0 %v9432
    %9482 = vmatpush.bf16.msra.mxu0 %v9431
    %9483 = vmatpush.bf16.msra.mxu0 %v9430
    %9484 = vmatpush.bf16.msra.mxu0 %v9429
    %9485 = vmatmul.bf16.gmra.mxu0 %v9262
    %v9486 = vpop.f32.mrf.mxu0
    %v9487 = vadd.f32 %v9244, %v9486
    %v9488 = vpop.f32.mrf.mxu0
    %v9489 = vadd.f32 %v9244, %v9488
    %9490 = vmatmul.bf16.gmra.mxu0 %v9305
    %v9491 = vpop.f32.mrf.mxu0
    %v9492 = vadd.f32 %v9244, %v9491
    %v9493 = vpop.f32.mrf.mxu0
    %v9494 = vadd.f32 %v9244, %v9493
    %9495 = vmatmul.bf16.gmra.mxu0 %v9304
    %v9496 = vpop.f32.mrf.mxu0
    %v9497 = vadd.f32 %v9244, %v9496
    %v9498 = vpop.f32.mrf.mxu0
    %9499 = vdwg.mxu0
    %9500 = vmatpush.bf16.msra.mxu0 %v9444
    %9501 = vmatpush.bf16.msra.mxu0 %v9443
    %9502 = vmatpush.bf16.msra.mxu0 %v9442
    %9503 = vmatpush.bf16.msra.mxu0 %v9441
    %9504 = vmatpush.bf16.msra.mxu0 %v9440
    %9505 = vmatpush.bf16.msra.mxu0 %v9439
    %9506 = vmatpush.bf16.msra.mxu0 %v9438
    %9507 = vmatpush.bf16.msra.mxu0 %v9437
    %9508 = vmatmul.bf16.gmra.mxu0 %v9279
    %v9509 = vpop.f32.mrf.mxu0
    %v9510 = vadd.f32 %v9487, %v9509
    %v9511 = vpop.f32.mrf.mxu0
    %v9512 = vadd.f32 %v9489, %v9511
    %9513 = vmatmul.bf16.gmra.mxu0 %v9314
    %v9514 = vpop.f32.mrf.mxu0
    %v9515 = vadd.f32 %v9492, %v9514
    %v9516 = vpop.f32.mrf.mxu0
    %v9517 = vadd.f32 %v9494, %v9516
    %9518 = vmatmul.bf16.gmra.mxu0 %v9313
    %v9519 = vpop.f32.mrf.mxu0
    %v9520 = vadd.f32 %v9497, %v9519
    %v9521 = vpop.f32.mrf.mxu0
    %9522 = vdwg.mxu0
    %9523 = vmatpush.bf16.msra.mxu0 %v9452
    %9524 = vmatpush.bf16.msra.mxu0 %v9451
    %9525 = vmatpush.bf16.msra.mxu0 %v9450
    %9526 = vmatpush.bf16.msra.mxu0 %v9449
    %9527 = vmatpush.bf16.msra.mxu0 %v9448
    %9528 = vmatpush.bf16.msra.mxu0 %v9447
    %9529 = vmatpush.bf16.msra.mxu0 %v9446
    %9530 = vmatpush.bf16.msra.mxu0 %v9445
    %9531 = vmatmul.bf16.gmra.mxu0 %v9296
    %v9532 = vpop.f32.mrf.mxu0
    %v9533 = vadd.f32 %v9510, %v9532
    %v9534 = vpop.f32.mrf.mxu0
    %v9535 = vadd.f32 %v9512, %v9534
    %9536 = vmatmul.bf16.gmra.mxu0 %v9323
    %v9537 = vpop.f32.mrf.mxu0
    %v9538 = vadd.f32 %v9515, %v9537
    %v9539 = vpop.f32.mrf.mxu0
    %v9540 = vadd.f32 %v9517, %v9539
    %9541 = vmatmul.bf16.gmra.mxu0 %v9322
    %v9542 = vpop.f32.mrf.mxu0
    %v9543 = vadd.f32 %v9520, %v9542
    %v9544 = vpop.f32.mrf.mxu0
    %9545 = vdwg.mxu0
    %v9546 = vmul.f32 %v9533, %v177
    %v9547 = vmul.f32 %v9535, %v178
    %v9548 = vmul.f32 %v9538, %v179
    %v9549 = vmul.f32 %v9540, %v180
    %v9550 = vmul.f32 %v9543, %v181
    %9551 = vst [vmem:[%s11] sm:$0xff] %v9546
    %9552 = vst [vmem:[%s11 + $0x8] sm:$0xff] %v9547
    %9553 = vst [vmem:[%s11 + $0x10] sm:$0xff] %v9548
    %9554 = vst [vmem:[%s11 + $0x18] sm:$0xff] %v9549
    %9555 = vst [vmem:[%s11 + $0x20] sm:$0xf] %v9550
    // Predicated region
    $region82: #{resgroup_forward.1} parent=1 // pred_check
      _
    $region83: #{resgroup_forward.1} parent=1 // pred_check_branch
      %9557 = sbr.rel (0) target = $region85
    $region84: #{resgroup_forward.1} parent=1 // pred_region
      _
    $region85: #{resgroup_forward.1} parent=1 // pred_fallthru
      _
    // Predicated region
    $region86: #{resgroup_forward.1} parent=1 // pred_check
      _
    $region87: #{resgroup_forward.1} parent=1 // pred_check_branch
      %9559 = sbr.rel (0) target = $region89
    $region88: #{resgroup_forward.1} parent=1 // pred_region
      _
    $region89: #{resgroup_forward.1} parent=1 // pred_fallthru
      _
    %9560 = vsyncpa [#allocation3], 1
    %9561 = vsyncpa [#allocation5], 1
    %9562 = vsyncpa [#allocation8], 1
    %9563 = vsyncpa [#allocation11], 1
    %9564 = vsyncpa [#allocation14], 1

</llo_original>
